<compile_context>
chip_gen: v6e
topology: v6e:2x2x1
jax: 0.10.0
libtpu: 0.0.40
codegen_flags: <defaults>
</compile_context>

<pallas_src>
import jax
import jax.numpy as jnp
from jax.experimental import pallas as pl
from jax.experimental.pallas import tpu as pltpu


def _round_up(n, m):
    return ((n + m - 1) // m) * m


def _block_spec(shape, index_map, buffer_count=None):
    """BlockSpec with optional pipeline_mode=pl.Buffered(n); falls back to a
    plain BlockSpec if this JAX build does not accept pipeline_mode."""
    if buffer_count is not None and hasattr(pl, "Buffered"):
        try:
            return pl.BlockSpec(shape, index_map,
                                pipeline_mode=pl.Buffered(buffer_count))
        except TypeError:
            pass
    return pl.BlockSpec(shape, index_map)


def autoencoder_kernel(x_ref,
                       w1, b1, w2, b2, w3, b3,   # encoder: 1024->512->128->128(pad of 32)
                       w4, b4, w5, b5, w6, b6,   # decoder: 128(pad)->128->512->1024
                       out_ref):
    def layer(h, w_ref, b_ref, relu):
        # Cast activations to the weight dtype (f32 or bf16) on the VPU so the
        # MXU runs in the narrow dtype; accumulate + bias add + ReLU in f32.
        y = jnp.dot(h.astype(w_ref.dtype), w_ref[...],
                    preferred_element_type=jnp.float32) + b_ref[...]
        return jnp.maximum(y, 0.0) if relu else y

    h = x_ref[...]
    # ---- encoder ----
    h = layer(h, w1, b1, True)
    h = layer(h, w2, b2, True)
    z = layer(h, w3, b3, False)      # latent (padded lanes are exactly zero)
    # ---- decoder ----  (w3/w4 could be pre-folded since there is no ReLU in
    # between, but the padded-latent path keeps semantics exact; <3% of FLOPs.)
    h = layer(z, w4, b4, True)
    h = layer(h, w5, b5, True)
    y = layer(h, w6, b6, False)

    out_ref[...] = y.astype(out_ref.dtype)


def make_params(key, input_dim=1024, latent_dim=32, dtype=jnp.float32):
    """Deterministic synthetic parameters matching nn.Linear shapes.

    PyTorch Linear(in, out) stores weight (out, in); we keep that convention
    for init and transpose to (in, out) for the kernel (glue only).
    """
    dims = [
        (input_dim, 512), (512, 128), (128, latent_dim),      # encoder
        (latent_dim, 128), (128, 512), (512, input_dim),      # decoder
    ]
    params = []
    for (d_in, d_out) in dims:
        key, kw, kb = jax.random.split(key, 3)
        bound = 1.0 / (d_in ** 0.5)  # same scale family as PyTorch default init
        w_torch = jax.random.uniform(kw, (d_out, d_in), dtype, -bound, bound)
        b = jax.random.uniform(kb, (d_out,), dtype, -bound, bound)
        params.append((w_torch.T, b.reshape(1, d_out)))  # (in,out), (1,out)
    return params


def _pad_latent(params, pad_to=128):
    """Zero-pad the narrow latent to `pad_to` lanes (output is unchanged)."""
    (w1, b1), (w2, b2), (w3, b3), (w4, b4), (w5, b5), (w6, b6) = params
    latent = w3.shape[1]
    if latent < pad_to:
        pad = pad_to - latent
        w3 = jnp.pad(w3, ((0, 0), (0, pad)))
        b3 = jnp.pad(b3, ((0, 0), (0, pad)))
        w4 = jnp.pad(w4, ((0, pad), (0, 0)))
    return [(w1, b1), (w2, b2), (w3, b3), (w4, b4), (w5, b5), (w6, b6)]


def autoencoder_forward(x, params, *, batch_tile=512, compute_dtype=None,
                        out_dtype=None, vmem_limit_bytes=None):
    B, input_dim = x.shape
    out_dtype = x.dtype if out_dtype is None else jnp.dtype(out_dtype)

    # Lane-dense latent: pad 32 -> 128 (zeros contribute nothing to the output).
    params = _pad_latent(params)

    # bf16 compute path: cast ONLY the weights.  x stays in the caller's dtype
    # (cast happens in-kernel -> no extra HBM round-trip of x), and biases stay
    # f32 so bias/ReLU run on the f32 accumulator (works on v5e: no bf16 VPU).
    if compute_dtype is not None:
        params = [(w.astype(compute_dtype), b) for (w, b) in params]

    # Batch tiling.  16-row alignment whenever a 2-byte dtype is involved
    # (bf16 sublane packing), else 8.  Cap the tile at ceil(B/2) when the
    # batch allows it so the grid has >=2 steps and both v7x TCs get work.
    two_byte = (x.dtype.itemsize == 2
                or jnp.dtype(out_dtype).itemsize == 2
                or (compute_dtype is not None
                    and jnp.dtype(compute_dtype).itemsize == 2))
    row_align = 16 if two_byte else 8
    bt = min(batch_tile, _round_up(B, row_align))
    if B >= 2 * row_align:
        bt = min(bt, _round_up(pl.cdiv(B, 2), row_align))
    bt = _round_up(max(bt, row_align), row_align)
    B_pad = _round_up(B, bt)
    if B_pad != B:
        x = jnp.pad(x, ((0, B_pad - B), (0, 0)))
    grid_steps = B_pad // bt

    # Input spec: deepen buffering to 3 when there are enough steps to hide
    # DMA/writeback jitter; output stays double-buffered (lane-dense, 1024).
    x_spec = _block_spec((bt, input_dim), lambda i: (i, 0),
                         buffer_count=3 if grid_steps >= 3 else None)
    out_spec = pl.BlockSpec((bt, input_dim), lambda i: (i, 0))

    # Weights/biases: full-array blocks, grid-invariant index map -> fetched
    # once and VMEM-resident; a single buffer suffices (block never changes).
    param_specs = []
    flat_params = []
    for (w, b) in params:
        param_specs.append(_block_spec(w.shape, lambda i: (0, 0), buffer_count=1))
        param_specs.append(_block_spec(b.shape, lambda i: (0, 0), buffer_count=1))
        flat_params.extend([w, b])

    param_bytes = sum(a.size * a.dtype.itemsize for a in flat_params)
    in_tile_bytes = bt * input_dim * x.dtype.itemsize
    out_tile_bytes = bt * input_dim * jnp.dtype(out_dtype).itemsize
    if vmem_limit_bytes is None:
        # Footprint: weights (x2 in case Buffered(1) is unavailable) +
        # pipelined I/O tiles + f32 activation temporaries, with 2x slack;
        # capped at 48 MiB to stay under v7x's 64 MiB physical per-TC VMEM.
        est = (2 * param_bytes
               + 3 * in_tile_bytes + 2 * out_tile_bytes
               + 4 * bt * 1024 * 4)
        vmem_limit_bytes = min(max(2 * est, 32 * 1024 * 1024), 48 * 1024 * 1024)

    flops = 2 * B_pad * sum(w.shape[0] * w.shape[1] for (w, _) in params)
    bytes_accessed = int(B_pad * input_dim * x.dtype.itemsize
                         + B_pad * input_dim * jnp.dtype(out_dtype).itemsize
                         + param_bytes)

    out = pl.pallas_call(
        autoencoder_kernel,
        out_shape=jax.ShapeDtypeStruct((B_pad, input_dim), out_dtype),
        grid_spec=pltpu.PrefetchScalarGridSpec(
            num_scalar_prefetch=0,
            grid=(grid_steps,),
            in_specs=[x_spec] + param_specs,
            out_specs=out_spec,
        ),
        compiler_params=pltpu.CompilerParams(
            dimension_semantics=("parallel",),   # batch tiles shard across TCs (v7x)
            vmem_limit_bytes=int(vmem_limit_bytes),
        ),
        cost_estimate=pl.CostEstimate(
            flops=flops, transcendentals=0, bytes_accessed=bytes_accessed),
    )(x, *flat_params)

    return out[:B] if B_pad != B else out


def autoencoder_ref(x, params):
    """Pure-JAX reference for correctness checking (unpadded params)."""
    (w1, b1), (w2, b2), (w3, b3), (w4, b4), (w5, b5), (w6, b6) = params
    h = jnp.maximum(x @ w1 + b1, 0.0)
    h = jnp.maximum(h @ w2 + b2, 0.0)
    z = h @ w3 + b3
    h = jnp.maximum(z @ w4 + b4, 0.0)
    h = jnp.maximum(h @ w5 + b5, 0.0)
    return h @ w6 + b6


if __name__ == "__main__":
    input_dim = 1024
    latent_dim = 32
    batch = 256          # splits into 2 batch tiles -> exercises the TC-sharded grid

    key = jax.random.PRNGKey(0)
    key, kx = jax.random.split(key)
    x = jax.random.normal(kx, (batch, input_dim), jnp.float32)

    params = make_params(key, input_dim=input_dim, latent_dim=latent_dim)
    y_ref = autoencoder_ref(x, params)

    # f32 path (exact semantics of the PyTorch module)
    y = jax.block_until_ready(autoencoder_forward(x, params))
    assert y.shape == (batch, input_dim) and y.dtype == jnp.float32
    assert jnp.allclose(y, y_ref, atol=1e-4, rtol=1e-4), "f32 mismatch vs reference"

    # Ragged small batch -> exercises batch padding + slicing
    xr = x[:40]
    yr = jax.block_until_ready(autoencoder_forward(xr, params))
    assert yr.shape == (40, input_dim)
    assert jnp.allclose(yr, y_ref[:40], atol=1e-4, rtol=1e-4), "ragged mismatch"

    # bf16 MXU path (all generations), f32 output: f32 accumulation throughout
    y_bf16 = jax.block_until_ready(
        autoencoder_forward(x, params, compute_dtype=jnp.bfloat16))
    assert y_bf16.dtype == jnp.float32
    assert jnp.allclose(y_bf16, y_ref, atol=5e-2, rtol=5e-2), "bf16 mismatch"

    # bf16 compute + bf16 output (halves the write-back stream on v6e/v7x)
    y_bf16o = jax.block_until_ready(
        autoencoder_forward(x, params, compute_dtype=jnp.bfloat16,
                            out_dtype=jnp.bfloat16))
    assert y_bf16o.dtype == jnp.bfloat16
    assert jnp.allclose(y_bf16o.astype(jnp.float32), y_ref,
                        atol=1e-1, rtol=1e-1), "bf16-out mismatch"

    print("KERNEL_OK")
</pallas_src>

<mosaic_0001>
module attributes {stable_mosaic.version = 11 : i64} {
  func.func @autoencoder_kernel(%arg0: i32, %arg1: memref<128x1024xf32, #tpu.memory_space<vmem>>, %arg2: memref<1024x512xf32, #tpu.memory_space<vmem>>, %arg3: memref<1x512xf32, #tpu.memory_space<vmem>>, %arg4: memref<512x128xf32, #tpu.memory_space<vmem>>, %arg5: memref<1x128xf32, #tpu.memory_space<vmem>>, %arg6: memref<128x128xf32, #tpu.memory_space<vmem>>, %arg7: memref<1x128xf32, #tpu.memory_space<vmem>>, %arg8: memref<128x128xf32, #tpu.memory_space<vmem>>, %arg9: memref<1x128xf32, #tpu.memory_space<vmem>>, %arg10: memref<128x512xf32, #tpu.memory_space<vmem>>, %arg11: memref<1x512xf32, #tpu.memory_space<vmem>>, %arg12: memref<512x1024xf32, #tpu.memory_space<vmem>>, %arg13: memref<1x1024xf32, #tpu.memory_space<vmem>>, %arg14: memref<128x1024xf32, #tpu.memory_space<vmem>>) attributes {dimension_semantics = [#tpu.dimension_semantics<parallel>], iteration_bounds = array<i64: 2>, scalar_prefetch = 0 : i64, scratch_operands = 0 : i64, tpu.core_type = #tpu.core_type<tc>, window_params = [{transform_indices = @transform_0, window_bounds = array<i64: 128, 1024>}, {pipeline_mode = #tpu.pipeline_mode<synchronous>, transform_indices = @transform_1, window_bounds = array<i64: 1024, 512>}, {pipeline_mode = #tpu.pipeline_mode<synchronous>, transform_indices = @transform_2, window_bounds = array<i64: 1, 512>}, {pipeline_mode = #tpu.pipeline_mode<synchronous>, transform_indices = @transform_3, window_bounds = array<i64: 512, 128>}, {pipeline_mode = #tpu.pipeline_mode<synchronous>, transform_indices = @transform_4, window_bounds = array<i64: 1, 128>}, {pipeline_mode = #tpu.pipeline_mode<synchronous>, transform_indices = @transform_5, window_bounds = array<i64: 128, 128>}, {pipeline_mode = #tpu.pipeline_mode<synchronous>, transform_indices = @transform_6, window_bounds = array<i64: 1, 128>}, {pipeline_mode = #tpu.pipeline_mode<synchronous>, transform_indices = @transform_7, window_bounds = array<i64: 128, 128>}, {pipeline_mode = #tpu.pipeline_mode<synchronous>, transform_indices = @transform_8, window_bounds = array<i64: 1, 128>}, {pipeline_mode = #tpu.pipeline_mode<synchronous>, transform_indices = @transform_9, window_bounds = array<i64: 128, 512>}, {pipeline_mode = #tpu.pipeline_mode<synchronous>, transform_indices = @transform_10, window_bounds = array<i64: 1, 512>}, {pipeline_mode = #tpu.pipeline_mode<synchronous>, transform_indices = @transform_11, window_bounds = array<i64: 512, 1024>}, {pipeline_mode = #tpu.pipeline_mode<synchronous>, transform_indices = @transform_12, window_bounds = array<i64: 1, 1024>}, {transform_indices = @transform_13, window_bounds = array<i64: 128, 1024>}]} {
    %c0 = arith.constant 0 : index
    %c0_0 = arith.constant 0 : index
    %0 = vector.load %arg1[%c0, %c0_0] : memref<128x1024xf32, #tpu.memory_space<vmem>>, vector<128x1024xf32>
    %c0_1 = arith.constant 0 : index
    %c0_2 = arith.constant 0 : index
    %1 = vector.load %arg2[%c0_1, %c0_2] : memref<1024x512xf32, #tpu.memory_space<vmem>>, vector<1024x512xf32>
    %cst = arith.constant dense<0.000000e+00> : vector<128x512xf32>
    %2 = tpu.matmul %0, %1, %cst {dimension_numbers = #tpu.dot_dimension_numbers<[1], [0], [0], [1], [0, 0, 1, 1], [], []>} : vector<128x1024xf32>, vector<1024x512xf32>, vector<128x512xf32> -> vector<128x512xf32>
    %c0_3 = arith.constant 0 : index
    %c0_4 = arith.constant 0 : index
    %3 = vector.load %arg3[%c0_3, %c0_4] : memref<1x512xf32, #tpu.memory_space<vmem>>, vector<1x512xf32>
    %4 = vector.broadcast %3 : vector<1x512xf32> to vector<128x512xf32>
    %5 = arith.addf %2, %4 : vector<128x512xf32>
    %cst_5 = arith.constant 0.000000e+00 : f32
    %6 = vector.broadcast %cst_5 : f32 to vector<128x512xf32>
    %7 = arith.maximumf %5, %6 : vector<128x512xf32>
    %c0_6 = arith.constant 0 : index
    %c0_7 = arith.constant 0 : index
    %8 = vector.load %arg4[%c0_6, %c0_7] : memref<512x128xf32, #tpu.memory_space<vmem>>, vector<512x128xf32>
    %cst_8 = arith.constant dense<0.000000e+00> : vector<128x128xf32>
    %9 = tpu.matmul %7, %8, %cst_8 {dimension_numbers = #tpu.dot_dimension_numbers<[1], [0], [0], [1], [0, 0, 1, 1], [], []>} : vector<128x512xf32>, vector<512x128xf32>, vector<128x128xf32> -> vector<128x128xf32>
    %c0_9 = arith.constant 0 : index
    %c0_10 = arith.constant 0 : index
    %10 = vector.load %arg5[%c0_9, %c0_10] : memref<1x128xf32, #tpu.memory_space<vmem>>, vector<1x128xf32>
    %11 = vector.broadcast %10 : vector<1x128xf32> to vector<128x128xf32>
    %12 = arith.addf %9, %11 : vector<128x128xf32>
    %cst_11 = arith.constant 0.000000e+00 : f32
    %13 = vector.broadcast %cst_11 : f32 to vector<128x128xf32>
    %14 = arith.maximumf %12, %13 : vector<128x128xf32>
    %c0_12 = arith.constant 0 : index
    %c0_13 = arith.constant 0 : index
    %15 = vector.load %arg6[%c0_12, %c0_13] : memref<128x128xf32, #tpu.memory_space<vmem>>, vector<128x128xf32>
    %cst_14 = arith.constant dense<0.000000e+00> : vector<128x128xf32>
    %16 = tpu.matmul %14, %15, %cst_14 {dimension_numbers = #tpu.dot_dimension_numbers<[1], [0], [0], [1], [0, 0, 1, 1], [], []>} : vector<128x128xf32>, vector<128x128xf32>, vector<128x128xf32> -> vector<128x128xf32>
    %c0_15 = arith.constant 0 : index
    %c0_16 = arith.constant 0 : index
    %17 = vector.load %arg7[%c0_15, %c0_16] : memref<1x128xf32, #tpu.memory_space<vmem>>, vector<1x128xf32>
    %18 = vector.broadcast %17 : vector<1x128xf32> to vector<128x128xf32>
    %19 = arith.addf %16, %18 : vector<128x128xf32>
    %c0_17 = arith.constant 0 : index
    %c0_18 = arith.constant 0 : index
    %20 = vector.load %arg8[%c0_17, %c0_18] : memref<128x128xf32, #tpu.memory_space<vmem>>, vector<128x128xf32>
    %cst_19 = arith.constant dense<0.000000e+00> : vector<128x128xf32>
    %21 = tpu.matmul %19, %20, %cst_19 {dimension_numbers = #tpu.dot_dimension_numbers<[1], [0], [0], [1], [0, 0, 1, 1], [], []>} : vector<128x128xf32>, vector<128x128xf32>, vector<128x128xf32> -> vector<128x128xf32>
    %c0_20 = arith.constant 0 : index
    %c0_21 = arith.constant 0 : index
    %22 = vector.load %arg9[%c0_20, %c0_21] : memref<1x128xf32, #tpu.memory_space<vmem>>, vector<1x128xf32>
    %23 = vector.broadcast %22 : vector<1x128xf32> to vector<128x128xf32>
    %24 = arith.addf %21, %23 : vector<128x128xf32>
    %cst_22 = arith.constant 0.000000e+00 : f32
    %25 = vector.broadcast %cst_22 : f32 to vector<128x128xf32>
    %26 = arith.maximumf %24, %25 : vector<128x128xf32>
    %c0_23 = arith.constant 0 : index
    %c0_24 = arith.constant 0 : index
    %27 = vector.load %arg10[%c0_23, %c0_24] : memref<128x512xf32, #tpu.memory_space<vmem>>, vector<128x512xf32>
    %cst_25 = arith.constant dense<0.000000e+00> : vector<128x512xf32>
    %28 = tpu.matmul %26, %27, %cst_25 {dimension_numbers = #tpu.dot_dimension_numbers<[1], [0], [0], [1], [0, 0, 1, 1], [], []>} : vector<128x128xf32>, vector<128x512xf32>, vector<128x512xf32> -> vector<128x512xf32>
    %c0_26 = arith.constant 0 : index
    %c0_27 = arith.constant 0 : index
    %29 = vector.load %arg11[%c0_26, %c0_27] : memref<1x512xf32, #tpu.memory_space<vmem>>, vector<1x512xf32>
    %30 = vector.broadcast %29 : vector<1x512xf32> to vector<128x512xf32>
    %31 = arith.addf %28, %30 : vector<128x512xf32>
    %cst_28 = arith.constant 0.000000e+00 : f32
    %32 = vector.broadcast %cst_28 : f32 to vector<128x512xf32>
    %33 = arith.maximumf %31, %32 : vector<128x512xf32>
    %c0_29 = arith.constant 0 : index
    %c0_30 = arith.constant 0 : index
    %34 = vector.load %arg12[%c0_29, %c0_30] : memref<512x1024xf32, #tpu.memory_space<vmem>>, vector<512x1024xf32>
    %cst_31 = arith.constant dense<0.000000e+00> : vector<128x1024xf32>
    %35 = tpu.matmul %33, %34, %cst_31 {dimension_numbers = #tpu.dot_dimension_numbers<[1], [0], [0], [1], [0, 0, 1, 1], [], []>} : vector<128x512xf32>, vector<512x1024xf32>, vector<128x1024xf32> -> vector<128x1024xf32>
    %c0_32 = arith.constant 0 : index
    %c0_33 = arith.constant 0 : index
    %36 = vector.load %arg13[%c0_32, %c0_33] : memref<1x1024xf32, #tpu.memory_space<vmem>>, vector<1x1024xf32>
    %37 = vector.broadcast %36 : vector<1x1024xf32> to vector<128x1024xf32>
    %38 = arith.addf %35, %37 : vector<128x1024xf32>
    %c0_34 = arith.constant 0 : index
    %c0_35 = arith.constant 0 : index
    %39 = vector.load %arg14[%c0_34, %c0_35] : memref<128x1024xf32, #tpu.memory_space<vmem>>, vector<128x1024xf32>
    tpu.vector_store %arg14[%c0_34, %c0_35], %38 {strides = array<i32>} : memref<128x1024xf32, #tpu.memory_space<vmem>>, vector<128x1024xf32>,
    return
  }
  func.func @transform_0(%arg0: i32) -> (i32, i32) {
    %c0_i32 = arith.constant 0 : i32
    %c0_i32_0 = arith.constant 0 : i32
    return %arg0, %c0_i32 : i32, i32
  }
  func.func @transform_1(%arg0: i32) -> (i32, i32) {
    %c0_i32 = arith.constant 0 : i32
    %c0_i32_0 = arith.constant 0 : i32
    %c0_i32_1 = arith.constant 0 : i32
    return %c0_i32, %c0_i32_0 : i32, i32
  }
  func.func @transform_2(%arg0: i32) -> (i32, i32) {
    %c0_i32 = arith.constant 0 : i32
    %c0_i32_0 = arith.constant 0 : i32
    %c0_i32_1 = arith.constant 0 : i32
    return %c0_i32, %c0_i32_0 : i32, i32
  }
  func.func @transform_3(%arg0: i32) -> (i32, i32) {
    %c0_i32 = arith.constant 0 : i32
    %c0_i32_0 = arith.constant 0 : i32
    %c0_i32_1 = arith.constant 0 : i32
    return %c0_i32, %c0_i32_0 : i32, i32
  }
  func.func @transform_4(%arg0: i32) -> (i32, i32) {
    %c0_i32 = arith.constant 0 : i32
    %c0_i32_0 = arith.constant 0 : i32
    %c0_i32_1 = arith.constant 0 : i32
    return %c0_i32, %c0_i32_0 : i32, i32
  }
  func.func @transform_5(%arg0: i32) -> (i32, i32) {
    %c0_i32 = arith.constant 0 : i32
    %c0_i32_0 = arith.constant 0 : i32
    %c0_i32_1 = arith.constant 0 : i32
    return %c0_i32, %c0_i32_0 : i32, i32
  }
  func.func @transform_6(%arg0: i32) -> (i32, i32) {
    %c0_i32 = arith.constant 0 : i32
    %c0_i32_0 = arith.constant 0 : i32
    %c0_i32_1 = arith.constant 0 : i32
    return %c0_i32, %c0_i32_0 : i32, i32
  }
  func.func @transform_7(%arg0: i32) -> (i32, i32) {
    %c0_i32 = arith.constant 0 : i32
    %c0_i32_0 = arith.constant 0 : i32
    %c0_i32_1 = arith.constant 0 : i32
    return %c0_i32, %c0_i32_0 : i32, i32
  }
  func.func @transform_8(%arg0: i32) -> (i32, i32) {
    %c0_i32 = arith.constant 0 : i32
    %c0_i32_0 = arith.constant 0 : i32
    %c0_i32_1 = arith.constant 0 : i32
    return %c0_i32, %c0_i32_0 : i32, i32
  }
  func.func @transform_9(%arg0: i32) -> (i32, i32) {
    %c0_i32 = arith.constant 0 : i32
    %c0_i32_0 = arith.constant 0 : i32
    %c0_i32_1 = arith.constant 0 : i32
    return %c0_i32, %c0_i32_0 : i32, i32
  }
  func.func @transform_10(%arg0: i32) -> (i32, i32) {
    %c0_i32 = arith.constant 0 : i32
    %c0_i32_0 = arith.constant 0 : i32
    %c0_i32_1 = arith.constant 0 : i32
    return %c0_i32, %c0_i32_0 : i32, i32
  }
  func.func @transform_11(%arg0: i32) -> (i32, i32) {
    %c0_i32 = arith.constant 0 : i32
    %c0_i32_0 = arith.constant 0 : i32
    %c0_i32_1 = arith.constant 0 : i32
    return %c0_i32, %c0_i32_0 : i32, i32
  }
  func.func @transform_12(%arg0: i32) -> (i32, i32) {
    %c0_i32 = arith.constant 0 : i32
    %c0_i32_0 = arith.constant 0 : i32
    %c0_i32_1 = arith.constant 0 : i32
    return %c0_i32, %c0_i32_0 : i32, i32
  }
  func.func @transform_13(%arg0: i32) -> (i32, i32) {
    %c0_i32 = arith.constant 0 : i32
    %c0_i32_0 = arith.constant 0 : i32
    return %arg0, %c0_i32 : i32, i32
  }
}

</mosaic_0001>

<llo_original>
// kernel: tpu_custom_call.1
$region0: #{tpu_custom_call.1}
  #allocation0 [shape = 'u32[]', space=smem, size = 0x4, offset = 0x4, fixed_abs, tag = 'smem constant byte address 0x4 - core index']
  #allocation1 [shape = 'u32[144,128]{1,0:T(1,128)}', space=vmem, size = 0x12000, scoped, tag = 'internal scratch']
  %s0 = inlined_call_operand.hbm [shape: f32[256,1024], index: 0, kind: input, shape index: {}]
  %s1 = inlined_call_operand.hbm [shape: f32[1024,512], index: 1, kind: input, shape index: {}]
  %s2 = inlined_call_operand.hbm [shape: f32[1,512], index: 2, kind: input, shape index: {}]
  %s3 = inlined_call_operand.hbm [shape: f32[512,128], index: 3, kind: input, shape index: {}]
  %s4 = inlined_call_operand.hbm [shape: f32[1,128], index: 4, kind: input, shape index: {}]
  %s5 = inlined_call_operand.hbm [shape: f32[128,128], index: 5, kind: input, shape index: {}]
  %s6 = inlined_call_operand.hbm [shape: f32[1,128], index: 6, kind: input, shape index: {}]
  %s7 = inlined_call_operand.hbm [shape: f32[128,128], index: 7, kind: input, shape index: {}]
  %s8 = inlined_call_operand.hbm [shape: f32[1,128], index: 8, kind: input, shape index: {}]
  %s9 = inlined_call_operand.hbm [shape: f32[128,512], index: 9, kind: input, shape index: {}]
  %s10 = inlined_call_operand.hbm [shape: f32[1,512], index: 10, kind: input, shape index: {}]
  %s11 = inlined_call_operand.hbm [shape: f32[512,1024], index: 11, kind: input, shape index: {}]
  %s12 = inlined_call_operand.hbm [shape: f32[1,1024], index: 12, kind: input, shape index: {}]
  %s13 = inlined_call_operand.hbm [shape: f32[256,1024], index: 13, kind: output, shape index: {}]
  %s14 = sld [smem:[#allocation0]]
  $region137: #{tpu_custom_call.1} parent=0
    _
  %s16 = ssub.s32 1, %s14
  %s17 = scalar_select 0, %s16, %s14
  $region1: #{tpu_custom_call.1} parent=0
    #allocation2 [shape = 'u8[1048576]{0}', space=vmem, size = 0x100000, scoped, tag = 'input window, operand 0']
    #allocation3 [shape = 's32[2]{0}', space=sflag, size = 0x8, scoped, tag = 'scoped memory for tpu_custom_call.1']
    #allocation4 [shape = 's32[2]{0}', space=sflag, size = 0x8, scoped, tag = 'scoped memory for tpu_custom_call.1']
    #allocation5 [shape = 'u8[2097152]{0}', space=vmem, size = 0x200000, scoped, tag = 'input window, operand 1, single buffered']
    #allocation6 [shape = 's32[1]{0}', space=sflag, size = 0x4, scoped, tag = 'scoped memory for tpu_custom_call.1']
    #allocation7 [shape = 'u8[2048]{0}', space=vmem, size = 0x800, scoped, tag = 'input window, operand 2, single buffered']
    #allocation8 [shape = 'u8[262144]{0}', space=vmem, size = 0x40000, scoped, tag = 'input window, operand 3, single buffered']
    #allocation9 [shape = 's32[1]{0}', space=sflag, size = 0x4, scoped, tag = 'scoped memory for tpu_custom_call.1']
    #allocation10 [shape = 'u8[512]{0}', space=vmem, size = 0x400, scoped, tag = 'input window, operand 4, single buffered']
    #allocation11 [shape = 'u8[65536]{0}', space=vmem, size = 0x10000, scoped, tag = 'input window, operand 5, single buffered']
    #allocation12 [shape = 's32[1]{0}', space=sflag, size = 0x4, scoped, tag = 'scoped memory for tpu_custom_call.1']
    #allocation13 [shape = 'u8[512]{0}', space=vmem, size = 0x400, scoped, tag = 'input window, operand 6, single buffered']
    #allocation14 [shape = 'u8[65536]{0}', space=vmem, size = 0x10000, scoped, tag = 'input window, operand 7, single buffered']
    #allocation15 [shape = 's32[1]{0}', space=sflag, size = 0x4, scoped, tag = 'scoped memory for tpu_custom_call.1']
    #allocation16 [shape = 'u8[512]{0}', space=vmem, size = 0x400, scoped, tag = 'input window, operand 8, single buffered']
    #allocation17 [shape = 'u8[262144]{0}', space=vmem, size = 0x40000, scoped, tag = 'input window, operand 9, single buffered']
    #allocation18 [shape = 's32[1]{0}', space=sflag, size = 0x4, scoped, tag = 'scoped memory for tpu_custom_call.1']
    #allocation19 [shape = 'u8[2048]{0}', space=vmem, size = 0x800, scoped, tag = 'input window, operand 10, single buffered']
    #allocation20 [shape = 'u8[2097152]{0}', space=vmem, size = 0x200000, scoped, tag = 'input window, operand 11, single buffered']
    #allocation21 [shape = 's32[1]{0}', space=sflag, size = 0x4, scoped, tag = 'scoped memory for tpu_custom_call.1']
    #allocation22 [shape = 'u8[4096]{0}', space=vmem, size = 0x1000, scoped, tag = 'input window, operand 12, single buffered']
    #allocation23 [shape = 'u8[1048576]{0}', space=vmem, size = 0x100000, scoped, tag = 'output window, operand 0']
    %18 = vsyncpa [#allocation3], 0
    %s19 = scalar_lea.sflag [#allocation3], 1
    %20 = vsyncpa %s19, 0
    %21 = vsyncpa [#allocation6], 0
    %22 = vsyncpa [#allocation9], 0
    %23 = vsyncpa [#allocation12], 0
    %24 = vsyncpa [#allocation15], 0
    %25 = vsyncpa [#allocation18], 0
    %26 = vsyncpa [#allocation21], 0
    %27 = vsyncpa [#allocation4], 0
    %s28 = scalar_lea.sflag [#allocation4], 1
    %29 = vsyncpa %s28, 0
    loop: start=0, step=1, limit=4
    $region2: #{tpu_custom_call.1} parent=1 // loop_pre_header
      _
    $region3: #{tpu_custom_call.1} parent=1 // loop_header
      %s31 = sphi 0, %s35
      %p32 = scmp.ge.s32.totalorder %s31, 4
      %s41 = sphi 0, %s43
      %s44 = sphi 0, %s41
      %s45 = sphi 0, %s44
      %s61 = sphi 0, %s45
      %s65 = sphi 0, %s65
      %s67 = sphi 0, %s65
      %s68 = sphi 0, %s67
      %s82 = sphi 0, %s68
      %s86 = sphi 0, %s86
      %s88 = sphi 0, %s86
      %s89 = sphi 0, %s88
      %s103 = sphi 0, %s89
      %s107 = sphi 0, %s107
      %s109 = sphi 0, %s107
      %s110 = sphi 0, %s109
      %s124 = sphi 0, %s110
      %s128 = sphi 0, %s128
      %s130 = sphi 0, %s128
      %s131 = sphi 0, %s130
      %s145 = sphi 0, %s131
      %s149 = sphi 0, %s149
      %s151 = sphi 0, %s149
      %s152 = sphi 0, %s151
      %s166 = sphi 0, %s152
      %s170 = sphi 0, %s170
      %s172 = sphi 0, %s170
      %s173 = sphi 0, %s172
      %s187 = sphi 0, %s173
      %s191 = sphi 0, %s191
      %s193 = sphi 0, %s191
      %s194 = sphi 0, %s193
      %s208 = sphi 0, %s194
      %s212 = sphi 0, %s212
      %s214 = sphi 0, %s212
      %s215 = sphi 0, %s214
      %s229 = sphi 0, %s215
      %s233 = sphi 0, %s233
      %s235 = sphi 0, %s233
      %s236 = sphi 0, %s235
      %s250 = sphi 0, %s236
      %s254 = sphi 0, %s254
      %s256 = sphi 0, %s254
      %s257 = sphi 0, %s256
      %s271 = sphi 0, %s257
      %s275 = sphi 0, %s275
      %s277 = sphi 0, %s275
      %s278 = sphi 0, %s277
      %s292 = sphi 0, %s278
      %s296 = sphi 0, %s296
      %s298 = sphi 0, %s296
      %s299 = sphi 0, %s298
      %s313 = sphi 0, %s299
      %s319 = sphi 0, %s321
      %s322 = sphi 0, %s319
      %s323 = sphi 0, %s322
      %s339 = sphi 0, %s323
    $region4: #{tpu_custom_call.1} parent=1 // loop_header_branch
      %34 = sbr.rel (%p32) target = $region8
    $region5: #{tpu_custom_call.1} parent=1 // loop_body
      %s36 = ssub.s32 %s31, 1
      %s37 = ssub.s32 %s31, 2
      %s38 = sadd.s32 %s31, 1
      %s39 = ssub.s32 %s31, %s38
      %p40 = scmp.eq.s32.totalorder %s39, 0
      %s42 = sadd.s32 %s41, 1
      %s43 = scalar_select %p40, %s41, %s42
      %p46 = pneg %p40
      %p47 = scmp.eq.s32.totalorder %s31, 1
      %p48 = por %p46, %p47
      %p49 = scmp.ne.s32.totalorder %s41, %s44
      %p50 = scmp.eq.s32.totalorder %s31, 0
      %p51 = por %p49, %p50
      %p52 = scmp.ne.s32.totalorder %s41, %s44
      %p53 = scmp.eq.s32.totalorder %s36, 1
      %p54 = por %p52, %p53
      %p55 = scmp.ne.s32.totalorder %s44, %s45
      %p56 = scmp.eq.s32.totalorder %s36, 0
      %p57 = por %p55, %p56
      %p58 = scmp.ne.s32.totalorder %s44, %s45
      %p59 = scmp.eq.s32.totalorder %s37, 1
      %p60 = por %p58, %p59
      %p62 = scmp.ne.s32.totalorder %s45, %s61
      %p63 = scmp.eq.s32.totalorder %s37, 0
      %p64 = por %p62, %p63
      %s66 = sadd.s32 %s65, 1
      %p69 = scmp.eq.s32.totalorder %s31, 1
      %p70 = scmp.ne.s32.totalorder %s65, %s67
      %p71 = scmp.eq.s32.totalorder %s31, 0
      %p72 = por %p70, %p71
      %p73 = scmp.ne.s32.totalorder %s65, %s67
      %p74 = scmp.eq.s32.totalorder %s36, 1
      %p75 = por %p73, %p74
      %p76 = scmp.ne.s32.totalorder %s67, %s68
      %p77 = scmp.eq.s32.totalorder %s36, 0
      %p78 = por %p76, %p77
      %p79 = scmp.ne.s32.totalorder %s67, %s68
      %p80 = scmp.eq.s32.totalorder %s37, 1
      %p81 = por %p79, %p80
      %p83 = scmp.ne.s32.totalorder %s68, %s82
      %p84 = scmp.eq.s32.totalorder %s37, 0
      %p85 = por %p83, %p84
      %s87 = sadd.s32 %s86, 1
      %p90 = scmp.eq.s32.totalorder %s31, 1
      %p91 = scmp.ne.s32.totalorder %s86, %s88
      %p92 = scmp.eq.s32.totalorder %s31, 0
      %p93 = por %p91, %p92
      %p94 = scmp.ne.s32.totalorder %s86, %s88
      %p95 = scmp.eq.s32.totalorder %s36, 1
      %p96 = por %p94, %p95
      %p97 = scmp.ne.s32.totalorder %s88, %s89
      %p98 = scmp.eq.s32.totalorder %s36, 0
      %p99 = por %p97, %p98
      %p100 = scmp.ne.s32.totalorder %s88, %s89
      %p101 = scmp.eq.s32.totalorder %s37, 1
      %p102 = por %p100, %p101
      %p104 = scmp.ne.s32.totalorder %s89, %s103
      %p105 = scmp.eq.s32.totalorder %s37, 0
      %p106 = por %p104, %p105
      %s108 = sadd.s32 %s107, 1
      %p111 = scmp.eq.s32.totalorder %s31, 1
      %p112 = scmp.ne.s32.totalorder %s107, %s109
      %p113 = scmp.eq.s32.totalorder %s31, 0
      %p114 = por %p112, %p113
      %p115 = scmp.ne.s32.totalorder %s107, %s109
      %p116 = scmp.eq.s32.totalorder %s36, 1
      %p117 = por %p115, %p116
      %p118 = scmp.ne.s32.totalorder %s109, %s110
      %p119 = scmp.eq.s32.totalorder %s36, 0
      %p120 = por %p118, %p119
      %p121 = scmp.ne.s32.totalorder %s109, %s110
      %p122 = scmp.eq.s32.totalorder %s37, 1
      %p123 = por %p121, %p122
      %p125 = scmp.ne.s32.totalorder %s110, %s124
      %p126 = scmp.eq.s32.totalorder %s37, 0
      %p127 = por %p125, %p126
      %s129 = sadd.s32 %s128, 1
      %p132 = scmp.eq.s32.totalorder %s31, 1
      %p133 = scmp.ne.s32.totalorder %s128, %s130
      %p134 = scmp.eq.s32.totalorder %s31, 0
      %p135 = por %p133, %p134
      %p136 = scmp.ne.s32.totalorder %s128, %s130
      %p137 = scmp.eq.s32.totalorder %s36, 1
      %p138 = por %p136, %p137
      %p139 = scmp.ne.s32.totalorder %s130, %s131
      %p140 = scmp.eq.s32.totalorder %s36, 0
      %p141 = por %p139, %p140
      %p142 = scmp.ne.s32.totalorder %s130, %s131
      %p143 = scmp.eq.s32.totalorder %s37, 1
      %p144 = por %p142, %p143
      %p146 = scmp.ne.s32.totalorder %s131, %s145
      %p147 = scmp.eq.s32.totalorder %s37, 0
      %p148 = por %p146, %p147
      %s150 = sadd.s32 %s149, 1
      %p153 = scmp.eq.s32.totalorder %s31, 1
      %p154 = scmp.ne.s32.totalorder %s149, %s151
      %p155 = scmp.eq.s32.totalorder %s31, 0
      %p156 = por %p154, %p155
      %p157 = scmp.ne.s32.totalorder %s149, %s151
      %p158 = scmp.eq.s32.totalorder %s36, 1
      %p159 = por %p157, %p158
      %p160 = scmp.ne.s32.totalorder %s151, %s152
      %p161 = scmp.eq.s32.totalorder %s36, 0
      %p162 = por %p160, %p161
      %p163 = scmp.ne.s32.totalorder %s151, %s152
      %p164 = scmp.eq.s32.totalorder %s37, 1
      %p165 = por %p163, %p164
      %p167 = scmp.ne.s32.totalorder %s152, %s166
      %p168 = scmp.eq.s32.totalorder %s37, 0
      %p169 = por %p167, %p168
      %s171 = sadd.s32 %s170, 1
      %p174 = scmp.eq.s32.totalorder %s31, 1
      %p175 = scmp.ne.s32.totalorder %s170, %s172
      %p176 = scmp.eq.s32.totalorder %s31, 0
      %p177 = por %p175, %p176
      %p178 = scmp.ne.s32.totalorder %s170, %s172
      %p179 = scmp.eq.s32.totalorder %s36, 1
      %p180 = por %p178, %p179
      %p181 = scmp.ne.s32.totalorder %s172, %s173
      %p182 = scmp.eq.s32.totalorder %s36, 0
      %p183 = por %p181, %p182
      %p184 = scmp.ne.s32.totalorder %s172, %s173
      %p185 = scmp.eq.s32.totalorder %s37, 1
      %p186 = por %p184, %p185
      %p188 = scmp.ne.s32.totalorder %s173, %s187
      %p189 = scmp.eq.s32.totalorder %s37, 0
      %p190 = por %p188, %p189
      %s192 = sadd.s32 %s191, 1
      %p195 = scmp.eq.s32.totalorder %s31, 1
      %p196 = scmp.ne.s32.totalorder %s191, %s193
      %p197 = scmp.eq.s32.totalorder %s31, 0
      %p198 = por %p196, %p197
      %p199 = scmp.ne.s32.totalorder %s191, %s193
      %p200 = scmp.eq.s32.totalorder %s36, 1
      %p201 = por %p199, %p200
      %p202 = scmp.ne.s32.totalorder %s193, %s194
      %p203 = scmp.eq.s32.totalorder %s36, 0
      %p204 = por %p202, %p203
      %p205 = scmp.ne.s32.totalorder %s193, %s194
      %p206 = scmp.eq.s32.totalorder %s37, 1
      %p207 = por %p205, %p206
      %p209 = scmp.ne.s32.totalorder %s194, %s208
      %p210 = scmp.eq.s32.totalorder %s37, 0
      %p211 = por %p209, %p210
      %s213 = sadd.s32 %s212, 1
      %p216 = scmp.eq.s32.totalorder %s31, 1
      %p217 = scmp.ne.s32.totalorder %s212, %s214
      %p218 = scmp.eq.s32.totalorder %s31, 0
      %p219 = por %p217, %p218
      %p220 = scmp.ne.s32.totalorder %s212, %s214
      %p221 = scmp.eq.s32.totalorder %s36, 1
      %p222 = por %p220, %p221
      %p223 = scmp.ne.s32.totalorder %s214, %s215
      %p224 = scmp.eq.s32.totalorder %s36, 0
      %p225 = por %p223, %p224
      %p226 = scmp.ne.s32.totalorder %s214, %s215
      %p227 = scmp.eq.s32.totalorder %s37, 1
      %p228 = por %p226, %p227
      %p230 = scmp.ne.s32.totalorder %s215, %s229
      %p231 = scmp.eq.s32.totalorder %s37, 0
      %p232 = por %p230, %p231
      %s234 = sadd.s32 %s233, 1
      %p237 = scmp.eq.s32.totalorder %s31, 1
      %p238 = scmp.ne.s32.totalorder %s233, %s235
      %p239 = scmp.eq.s32.totalorder %s31, 0
      %p240 = por %p238, %p239
      %p241 = scmp.ne.s32.totalorder %s233, %s235
      %p242 = scmp.eq.s32.totalorder %s36, 1
      %p243 = por %p241, %p242
      %p244 = scmp.ne.s32.totalorder %s235, %s236
      %p245 = scmp.eq.s32.totalorder %s36, 0
      %p246 = por %p244, %p245
      %p247 = scmp.ne.s32.totalorder %s235, %s236
      %p248 = scmp.eq.s32.totalorder %s37, 1
      %p249 = por %p247, %p248
      %p251 = scmp.ne.s32.totalorder %s236, %s250
      %p252 = scmp.eq.s32.totalorder %s37, 0
      %p253 = por %p251, %p252
      %s255 = sadd.s32 %s254, 1
      %p258 = scmp.eq.s32.totalorder %s31, 1
      %p259 = scmp.ne.s32.totalorder %s254, %s256
      %p260 = scmp.eq.s32.totalorder %s31, 0
      %p261 = por %p259, %p260
      %p262 = scmp.ne.s32.totalorder %s254, %s256
      %p263 = scmp.eq.s32.totalorder %s36, 1
      %p264 = por %p262, %p263
      %p265 = scmp.ne.s32.totalorder %s256, %s257
      %p266 = scmp.eq.s32.totalorder %s36, 0
      %p267 = por %p265, %p266
      %p268 = scmp.ne.s32.totalorder %s256, %s257
      %p269 = scmp.eq.s32.totalorder %s37, 1
      %p270 = por %p268, %p269
      %p272 = scmp.ne.s32.totalorder %s257, %s271
      %p273 = scmp.eq.s32.totalorder %s37, 0
      %p274 = por %p272, %p273
      %s276 = sadd.s32 %s275, 1
      %p279 = scmp.eq.s32.totalorder %s31, 1
      %p280 = scmp.ne.s32.totalorder %s275, %s277
      %p281 = scmp.eq.s32.totalorder %s31, 0
      %p282 = por %p280, %p281
      %p283 = scmp.ne.s32.totalorder %s275, %s277
      %p284 = scmp.eq.s32.totalorder %s36, 1
      %p285 = por %p283, %p284
      %p286 = scmp.ne.s32.totalorder %s277, %s278
      %p287 = scmp.eq.s32.totalorder %s36, 0
      %p288 = por %p286, %p287
      %p289 = scmp.ne.s32.totalorder %s277, %s278
      %p290 = scmp.eq.s32.totalorder %s37, 1
      %p291 = por %p289, %p290
      %p293 = scmp.ne.s32.totalorder %s278, %s292
      %p294 = scmp.eq.s32.totalorder %s37, 0
      %p295 = por %p293, %p294
      %s297 = sadd.s32 %s296, 1
      %p300 = scmp.eq.s32.totalorder %s31, 1
      %p301 = scmp.ne.s32.totalorder %s296, %s298
      %p302 = scmp.eq.s32.totalorder %s31, 0
      %p303 = por %p301, %p302
      %p304 = scmp.ne.s32.totalorder %s296, %s298
      %p305 = scmp.eq.s32.totalorder %s36, 1
      %p306 = por %p304, %p305
      %p307 = scmp.ne.s32.totalorder %s298, %s299
      %p308 = scmp.eq.s32.totalorder %s36, 0
      %p309 = por %p307, %p308
      %p310 = scmp.ne.s32.totalorder %s298, %s299
      %p311 = scmp.eq.s32.totalorder %s37, 1
      %p312 = por %p310, %p311
      %p314 = scmp.ne.s32.totalorder %s299, %s313
      %p315 = scmp.eq.s32.totalorder %s37, 0
      %p316 = por %p314, %p315
      %s317 = ssub.s32 %s31, %s38
      %p318 = scmp.eq.s32.totalorder %s317, 0
      %s320 = sadd.s32 %s319, 1
      %s321 = scalar_select %p318, %s319, %s320
      %p324 = pneg %p318
      %p325 = scmp.eq.s32.totalorder %s31, 1
      %p326 = por %p324, %p325
      %p327 = scmp.ne.s32.totalorder %s319, %s322
      %p328 = scmp.eq.s32.totalorder %s31, 0
      %p329 = por %p327, %p328
      %p330 = scmp.ne.s32.totalorder %s319, %s322
      %p331 = scmp.eq.s32.totalorder %s36, 1
      %p332 = por %p330, %p331
      %p333 = scmp.ne.s32.totalorder %s322, %s323
      %p334 = scmp.eq.s32.totalorder %s36, 0
      %p335 = por %p333, %p334
      %p336 = scmp.ne.s32.totalorder %s322, %s323
      %p337 = scmp.eq.s32.totalorder %s37, 1
      %p338 = por %p336, %p337
      %p340 = scmp.ne.s32.totalorder %s323, %s339
      %p341 = scmp.eq.s32.totalorder %s37, 0
      %p342 = por %p340, %p341
      %p343 = scmp.le.s32.totalorder 1, %s31
      %p344 = scmp.lt.s32.totalorder %s31, 3
      %p345 = pnand %p343, %p344
      %p346 = pneg %p345
      // Predicated region
      $region9: #{tpu_custom_call.1} parent=5 // pred_check
        _
      $region10: #{tpu_custom_call.1} parent=5 // pred_check_branch
        %348 = sbr.rel (%p345) target = $region12
      $region11: #{tpu_custom_call.1} parent=5 // pred_region
        %s349 = ssub.s32 %s31, 1
        // Predicated region
        $region13: #{tpu_custom_call.1} parent=11 // pred_check
          %p350 = pneg %p78
        $region14: #{tpu_custom_call.1} parent=11 // pred_check_branch
          %352 = sbr.rel (%p350) target = $region16
        $region15: #{tpu_custom_call.1} parent=11 // pred_region
          %s354 = ssub.s32 65536, 65536
          %355 = vsyncadd [#allocation6], %s354
          %s356 = sshll.u32 [#allocation5], 4
          %s357 = int_to_ptr.vmem [resolvable:$true] %s356
          %362 = dma.hbm_to_vmem [thread:$0]  %s1, 65536, %s357, [#allocation6], 512, 512, 32
        $region16: #{tpu_custom_call.1} parent=11 // pred_fallthru
          _
        // Predicated region
        $region17: #{tpu_custom_call.1} parent=11 // pred_check
          %p363 = pneg %p99
        $region18: #{tpu_custom_call.1} parent=11 // pred_check_branch
          %365 = sbr.rel (%p363) target = $region20
        $region19: #{tpu_custom_call.1} parent=11 // pred_region
          %s367 = ssub.s32 64, 64
          %368 = vsyncadd [#allocation6], %s367
          %s370 = sshll.u32 [#allocation7], 4
          %s371 = int_to_ptr.vmem [resolvable:$true] %s370
          %373 = dma.hbm_to_vmem [thread:$0]  %s2, 64, %s371, [#allocation6]
        $region20: #{tpu_custom_call.1} parent=11 // pred_fallthru
          _
        // Predicated region
        $region21: #{tpu_custom_call.1} parent=11 // pred_check
          %p374 = pneg %p120
        $region22: #{tpu_custom_call.1} parent=11 // pred_check_branch
          %376 = sbr.rel (%p374) target = $region24
        $region23: #{tpu_custom_call.1} parent=11 // pred_region
          %s378 = ssub.s32 8192, 8192
          %379 = vsyncadd [#allocation9], %s378
          %s380 = sshll.u32 [#allocation8], 4
          %s381 = int_to_ptr.vmem [resolvable:$true] %s380
          %386 = dma.hbm_to_vmem [thread:$0]  %s3, 8192, %s381, [#allocation9], 128, 128, 8
        $region24: #{tpu_custom_call.1} parent=11 // pred_fallthru
          _
        // Predicated region
        $region25: #{tpu_custom_call.1} parent=11 // pred_check
          %p387 = pneg %p141
        $region26: #{tpu_custom_call.1} parent=11 // pred_check_branch
          %389 = sbr.rel (%p387) target = $region28
        $region27: #{tpu_custom_call.1} parent=11 // pred_region
          %s391 = ssub.s32 16, 16
          %392 = vsyncadd [#allocation9], %s391
          %s394 = sshll.u32 [#allocation10], 4
          %s395 = int_to_ptr.vmem [resolvable:$true] %s394
          %397 = dma.hbm_to_vmem [thread:$0]  %s4, 16, %s395, [#allocation9]
        $region28: #{tpu_custom_call.1} parent=11 // pred_fallthru
          _
        // Predicated region
        $region29: #{tpu_custom_call.1} parent=11 // pred_check
          %p398 = pneg %p162
        $region30: #{tpu_custom_call.1} parent=11 // pred_check_branch
          %400 = sbr.rel (%p398) target = $region32
        $region31: #{tpu_custom_call.1} parent=11 // pred_region
          %s402 = ssub.s32 2048, 2048
          %403 = vsyncadd [#allocation12], %s402
          %s404 = sshll.u32 [#allocation11], 4
          %s405 = int_to_ptr.vmem [resolvable:$true] %s404
          %410 = dma.hbm_to_vmem [thread:$0]  %s5, 2048, %s405, [#allocation12], 128, 128, 8
        $region32: #{tpu_custom_call.1} parent=11 // pred_fallthru
          _
        // Predicated region
        $region33: #{tpu_custom_call.1} parent=11 // pred_check
          %p411 = pneg %p183
        $region34: #{tpu_custom_call.1} parent=11 // pred_check_branch
          %413 = sbr.rel (%p411) target = $region36
        $region35: #{tpu_custom_call.1} parent=11 // pred_region
          %s415 = ssub.s32 16, 16
          %416 = vsyncadd [#allocation12], %s415
          %s418 = sshll.u32 [#allocation13], 4
          %s419 = int_to_ptr.vmem [resolvable:$true] %s418
          %421 = dma.hbm_to_vmem [thread:$0]  %s6, 16, %s419, [#allocation12]
        $region36: #{tpu_custom_call.1} parent=11 // pred_fallthru
          _
        // Predicated region
        $region37: #{tpu_custom_call.1} parent=11 // pred_check
          %p422 = pneg %p204
        $region38: #{tpu_custom_call.1} parent=11 // pred_check_branch
          %424 = sbr.rel (%p422) target = $region40
        $region39: #{tpu_custom_call.1} parent=11 // pred_region
          %s426 = ssub.s32 2048, 2048
          %427 = vsyncadd [#allocation15], %s426
          %s428 = sshll.u32 [#allocation14], 4
          %s429 = int_to_ptr.vmem [resolvable:$true] %s428
          %434 = dma.hbm_to_vmem [thread:$0]  %s7, 2048, %s429, [#allocation15], 128, 128, 8
        $region40: #{tpu_custom_call.1} parent=11 // pred_fallthru
          _
        // Predicated region
        $region41: #{tpu_custom_call.1} parent=11 // pred_check
          %p435 = pneg %p225
        $region42: #{tpu_custom_call.1} parent=11 // pred_check_branch
          %437 = sbr.rel (%p435) target = $region44
        $region43: #{tpu_custom_call.1} parent=11 // pred_region
          %s439 = ssub.s32 16, 16
          %440 = vsyncadd [#allocation15], %s439
          %s442 = sshll.u32 [#allocation16], 4
          %s443 = int_to_ptr.vmem [resolvable:$true] %s442
          %445 = dma.hbm_to_vmem [thread:$0]  %s8, 16, %s443, [#allocation15]
        $region44: #{tpu_custom_call.1} parent=11 // pred_fallthru
          _
        // Predicated region
        $region45: #{tpu_custom_call.1} parent=11 // pred_check
          %p446 = pneg %p246
        $region46: #{tpu_custom_call.1} parent=11 // pred_check_branch
          %448 = sbr.rel (%p446) target = $region48
        $region47: #{tpu_custom_call.1} parent=11 // pred_region
          %s450 = ssub.s32 8192, 8192
          %451 = vsyncadd [#allocation18], %s450
          %s452 = sshll.u32 [#allocation17], 4
          %s453 = int_to_ptr.vmem [resolvable:$true] %s452
          %458 = dma.hbm_to_vmem [thread:$0]  %s9, 8192, %s453, [#allocation18], 512, 512, 32
        $region48: #{tpu_custom_call.1} parent=11 // pred_fallthru
          _
        // Predicated region
        $region49: #{tpu_custom_call.1} parent=11 // pred_check
          %p459 = pneg %p267
        $region50: #{tpu_custom_call.1} parent=11 // pred_check_branch
          %461 = sbr.rel (%p459) target = $region52
        $region51: #{tpu_custom_call.1} parent=11 // pred_region
          %s463 = ssub.s32 64, 64
          %464 = vsyncadd [#allocation18], %s463
          %s466 = sshll.u32 [#allocation19], 4
          %s467 = int_to_ptr.vmem [resolvable:$true] %s466
          %469 = dma.hbm_to_vmem [thread:$0]  %s10, 64, %s467, [#allocation18]
        $region52: #{tpu_custom_call.1} parent=11 // pred_fallthru
          _
        // Predicated region
        $region53: #{tpu_custom_call.1} parent=11 // pred_check
          %p470 = pneg %p288
        $region54: #{tpu_custom_call.1} parent=11 // pred_check_branch
          %472 = sbr.rel (%p470) target = $region56
        $region55: #{tpu_custom_call.1} parent=11 // pred_region
          %s474 = ssub.s32 65536, 65536
          %475 = vsyncadd [#allocation21], %s474
          %s476 = sshll.u32 [#allocation20], 4
          %s477 = int_to_ptr.vmem [resolvable:$true] %s476
          %482 = dma.hbm_to_vmem [thread:$0]  %s11, 65536, %s477, [#allocation21], 1024, 1024, 64
        $region56: #{tpu_custom_call.1} parent=11 // pred_fallthru
          _
        // Predicated region
        $region57: #{tpu_custom_call.1} parent=11 // pred_check
          %p483 = pneg %p309
        $region58: #{tpu_custom_call.1} parent=11 // pred_check_branch
          %485 = sbr.rel (%p483) target = $region60
        $region59: #{tpu_custom_call.1} parent=11 // pred_region
          %s487 = ssub.s32 128, 128
          %488 = vsyncadd [#allocation21], %s487
          %s490 = sshll.u32 [#allocation22], 4
          %s491 = int_to_ptr.vmem [resolvable:$true] %s490
          %493 = dma.hbm_to_vmem [thread:$0]  %s12, 128, %s491, [#allocation21]
        $region60: #{tpu_custom_call.1} parent=11 // pred_fallthru
          _
      $region12: #{tpu_custom_call.1} parent=5 // pred_fallthru
        _
      %p494 = scmp.lt.s32.totalorder %s31, 2
      // Predicated region
      $region61: #{tpu_custom_call.1} parent=5 // pred_check
        %p495 = pneg %p494
      $region62: #{tpu_custom_call.1} parent=5 // pred_check_branch
        %497 = sbr.rel (%p495) target = $region64
      $region63: #{tpu_custom_call.1} parent=5 // pred_region
        // Predicated region
        $region65: #{tpu_custom_call.1} parent=63 // pred_check
          %p498 = pneg %p51
        $region66: #{tpu_custom_call.1} parent=63 // pred_check_branch
          %500 = sbr.rel (%p498) target = $region68
        $region67: #{tpu_custom_call.1} parent=63 // pred_region
          %s501 = sand.u32 %s41, 1
          %s502 = scalar_lea.sflag [#allocation3], %s501
          %s503 = sand.u32 %s41, 1
          %s504 = smul.addr %s503, 1024
          %s505 = scalar_lea.vmem [#allocation2], %s504
          %s506 = smul.u32 16, %s31
          %s508 = ssub.s32 16384, 16384
          %509 = vsyncadd %s502, %s508
          %s510 = smul.addr %s506, 8
          %s511 = smul.addr %s510, 128
          %s512 = scalar_lea.hbm %s0, %s511
          %s513 = sshll.u32 %s505, 4
          %s514 = int_to_ptr.vmem [resolvable:$true] %s513
          %519 = dma.hbm_to_vmem [thread:$0]  %s512, 16384, %s514, %s502, 1024, 1024, 64
        $region68: #{tpu_custom_call.1} parent=63 // pred_fallthru
          _
      $region64: #{tpu_custom_call.1} parent=5 // pred_fallthru
        _
      %p520 = scmp.le.s32.totalorder 1, %s31
      %p521 = scmp.lt.s32.totalorder %s31, 3
      %p522 = pnand %p520, %p521
      %p523 = pneg %p522
      // Predicated region
      $region69: #{tpu_custom_call.1} parent=5 // pred_check
        _
      $region70: #{tpu_custom_call.1} parent=5 // pred_check_branch
        %525 = sbr.rel (%p522) target = $region72
      $region71: #{tpu_custom_call.1} parent=5 // pred_region
        %s526 = ssub.s32 %s31, 1
        %s527 = sand.u32 %s44, 1
        %s528 = scalar_lea.sflag [#allocation3], %s527
        %s529 = sand.u32 %s44, 1
        %s530 = smul.addr %s529, 1024
        %s531 = scalar_lea.vmem [#allocation2], %s530
        // Predicated region
        $region73: #{tpu_custom_call.1} parent=71 // pred_check
          %p532 = pneg %p57
        $region74: #{tpu_custom_call.1} parent=71 // pred_check_branch
          %534 = sbr.rel (%p532) target = $region76
        $region75: #{tpu_custom_call.1} parent=71 // pred_region
          %535 = dma.done %s528, 16384
        $region76: #{tpu_custom_call.1} parent=71 // pred_fallthru
          _
        // Predicated region
        $region77: #{tpu_custom_call.1} parent=71 // pred_check
          %p536 = pneg %p78
        $region78: #{tpu_custom_call.1} parent=71 // pred_check_branch
          %538 = sbr.rel (%p536) target = $region80
        $region79: #{tpu_custom_call.1} parent=71 // pred_region
          %539 = dma.done [#allocation6], 65536
        $region80: #{tpu_custom_call.1} parent=71 // pred_fallthru
          _
        // Predicated region
        $region81: #{tpu_custom_call.1} parent=71 // pred_check
          %p540 = pneg %p99
        $region82: #{tpu_custom_call.1} parent=71 // pred_check_branch
          %542 = sbr.rel (%p540) target = $region84
        $region83: #{tpu_custom_call.1} parent=71 // pred_region
          %543 = dma.done [#allocation6], 64
        $region84: #{tpu_custom_call.1} parent=71 // pred_fallthru
          _
        // Predicated region
        $region85: #{tpu_custom_call.1} parent=71 // pred_check
          %p544 = pneg %p120
        $region86: #{tpu_custom_call.1} parent=71 // pred_check_branch
          %546 = sbr.rel (%p544) target = $region88
        $region87: #{tpu_custom_call.1} parent=71 // pred_region
          %547 = dma.done [#allocation9], 8192
        $region88: #{tpu_custom_call.1} parent=71 // pred_fallthru
          _
        // Predicated region
        $region89: #{tpu_custom_call.1} parent=71 // pred_check
          %p548 = pneg %p141
        $region90: #{tpu_custom_call.1} parent=71 // pred_check_branch
          %550 = sbr.rel (%p548) target = $region92
        $region91: #{tpu_custom_call.1} parent=71 // pred_region
          %551 = dma.done [#allocation9], 16
        $region92: #{tpu_custom_call.1} parent=71 // pred_fallthru
          _
        // Predicated region
        $region93: #{tpu_custom_call.1} parent=71 // pred_check
          %p552 = pneg %p162
        $region94: #{tpu_custom_call.1} parent=71 // pred_check_branch
          %554 = sbr.rel (%p552) target = $region96
        $region95: #{tpu_custom_call.1} parent=71 // pred_region
          %555 = dma.done [#allocation12], 2048
        $region96: #{tpu_custom_call.1} parent=71 // pred_fallthru
          _
        // Predicated region
        $region97: #{tpu_custom_call.1} parent=71 // pred_check
          %p556 = pneg %p183
        $region98: #{tpu_custom_call.1} parent=71 // pred_check_branch
          %558 = sbr.rel (%p556) target = $region100
        $region99: #{tpu_custom_call.1} parent=71 // pred_region
          %559 = dma.done [#allocation12], 16
        $region100: #{tpu_custom_call.1} parent=71 // pred_fallthru
          _
        // Predicated region
        $region101: #{tpu_custom_call.1} parent=71 // pred_check
          %p560 = pneg %p204
        $region102: #{tpu_custom_call.1} parent=71 // pred_check_branch
          %562 = sbr.rel (%p560) target = $region104
        $region103: #{tpu_custom_call.1} parent=71 // pred_region
          %563 = dma.done [#allocation15], 2048
        $region104: #{tpu_custom_call.1} parent=71 // pred_fallthru
          _
        // Predicated region
        $region105: #{tpu_custom_call.1} parent=71 // pred_check
          %p564 = pneg %p225
        $region106: #{tpu_custom_call.1} parent=71 // pred_check_branch
          %566 = sbr.rel (%p564) target = $region108
        $region107: #{tpu_custom_call.1} parent=71 // pred_region
          %567 = dma.done [#allocation15], 16
        $region108: #{tpu_custom_call.1} parent=71 // pred_fallthru
          _
        // Predicated region
        $region109: #{tpu_custom_call.1} parent=71 // pred_check
          %p568 = pneg %p246
        $region110: #{tpu_custom_call.1} parent=71 // pred_check_branch
          %570 = sbr.rel (%p568) target = $region112
        $region111: #{tpu_custom_call.1} parent=71 // pred_region
          %571 = dma.done [#allocation18], 8192
        $region112: #{tpu_custom_call.1} parent=71 // pred_fallthru
          _
        // Predicated region
        $region113: #{tpu_custom_call.1} parent=71 // pred_check
          %p572 = pneg %p267
        $region114: #{tpu_custom_call.1} parent=71 // pred_check_branch
          %574 = sbr.rel (%p572) target = $region116
        $region115: #{tpu_custom_call.1} parent=71 // pred_region
          %575 = dma.done [#allocation18], 64
        $region116: #{tpu_custom_call.1} parent=71 // pred_fallthru
          _
        // Predicated region
        $region117: #{tpu_custom_call.1} parent=71 // pred_check
          %p576 = pneg %p288
        $region118: #{tpu_custom_call.1} parent=71 // pred_check_branch
          %578 = sbr.rel (%p576) target = $region120
        $region119: #{tpu_custom_call.1} parent=71 // pred_region
          %579 = dma.done [#allocation21], 65536
        $region120: #{tpu_custom_call.1} parent=71 // pred_fallthru
          _
        // Predicated region
        $region121: #{tpu_custom_call.1} parent=71 // pred_check
          %p580 = pneg %p309
        $region122: #{tpu_custom_call.1} parent=71 // pred_check_branch
          %582 = sbr.rel (%p580) target = $region124
        $region123: #{tpu_custom_call.1} parent=71 // pred_region
          %583 = dma.done [#allocation21], 128
        $region124: #{tpu_custom_call.1} parent=71 // pred_fallthru
          _
        %s584 = sand.u32 %s44, 1
        %s585 = scalar_lea.sflag [#allocation3], %s584
        %s586 = sand.u32 %s44, 1
        %s587 = smul.addr %s586, 1024
        %s588 = scalar_lea.vmem [#allocation2], %s587
        %p589 = pneg %p57
        %p590 = pneg %p54
        %p591 = pneg %p78
        %p592 = pneg %p75
        %p593 = pneg %p99
        %p594 = pneg %p96
        %p595 = pneg %p120
        %p596 = pneg %p117
        %p597 = pneg %p141
        %p598 = pneg %p138
        %p599 = pneg %p162
        %p600 = pneg %p159
        %p601 = pneg %p183
        %p602 = pneg %p180
        %p603 = pneg %p204
        %p604 = pneg %p201
        %p605 = pneg %p225
        %p606 = pneg %p222
        %p607 = pneg %p246
        %p608 = pneg %p243
        %p609 = pneg %p267
        %p610 = pneg %p264
        %p611 = pneg %p288
        %p612 = pneg %p285
        %p613 = pneg %p309
        %p614 = pneg %p306
        %p615 = pneg %p335
        %p616 = pneg %p332
        %s617 = sand.u32 %s322, 1
        %s618 = scalar_lea.sflag [#allocation4], %s617
        %s619 = sand.u32 %s322, 1
        %s620 = smul.addr %s619, 1024
        %s621 = scalar_lea.vmem [#allocation23], %s620
        %s622 = smul.u32 16, %s36
        %s623 = smul.u32 16, %s36
        %v624 = vld [vmem:[%s531] sm:$0xff]
        %v625 = vld [vmem:[%s531 + $0x8] sm:$0xff]
        %v626 = vld [vmem:[%s531 + $0x10] sm:$0xff]
        %v627 = vld [vmem:[%s531 + $0x18] sm:$0xff]
        %v628 = vld [vmem:[%s531 + $0x20] sm:$0xff]
        %v629 = vld [vmem:[%s531 + $0x28] sm:$0xff]
        %v630 = vld [vmem:[%s531 + $0x30] sm:$0xff]
        %v631 = vld [vmem:[%s531 + $0x38] sm:$0xff]
        %v632 = vld [vmem:[%s531 + $0x40] sm:$0xff]
        %v633 = vld [vmem:[%s531 + $0x48] sm:$0xff]
        %v634 = vld [vmem:[%s531 + $0x50] sm:$0xff]
        %v635 = vld [vmem:[%s531 + $0x58] sm:$0xff]
        %v636 = vld [vmem:[%s531 + $0x60] sm:$0xff]
        %v637 = vld [vmem:[%s531 + $0x68] sm:$0xff]
        %v638 = vld [vmem:[%s531 + $0x70] sm:$0xff]
        %v639 = vld [vmem:[%s531 + $0x78] sm:$0xff]
        %v640 = vld [vmem:[%s531 + $0x80] sm:$0xff]
        %v641 = vld [vmem:[%s531 + $0x88] sm:$0xff]
        %v642 = vld [vmem:[%s531 + $0x90] sm:$0xff]
        %v643 = vld [vmem:[%s531 + $0x98] sm:$0xff]
        %v644 = vld [vmem:[%s531 + $0xa0] sm:$0xff]
        %v645 = vld [vmem:[%s531 + $0xa8] sm:$0xff]
        %v646 = vld [vmem:[%s531 + $0xb0] sm:$0xff]
        %v647 = vld [vmem:[%s531 + $0xb8] sm:$0xff]
        %v648 = vld [vmem:[%s531 + $0xc0] sm:$0xff]
        %v649 = vld [vmem:[%s531 + $0xc8] sm:$0xff]
        %v650 = vld [vmem:[%s531 + $0xd0] sm:$0xff]
        %v651 = vld [vmem:[%s531 + $0xd8] sm:$0xff]
        %v652 = vld [vmem:[%s531 + $0xe0] sm:$0xff]
        %v653 = vld [vmem:[%s531 + $0xe8] sm:$0xff]
        %v654 = vld [vmem:[%s531 + $0xf0] sm:$0xff]
        %v655 = vld [vmem:[%s531 + $0xf8] sm:$0xff]
        %v656 = vld [vmem:[%s531 + $0x100] sm:$0xff]
        %v657 = vld [vmem:[%s531 + $0x108] sm:$0xff]
        %v658 = vld [vmem:[%s531 + $0x110] sm:$0xff]
        %v659 = vld [vmem:[%s531 + $0x118] sm:$0xff]
        %v660 = vld [vmem:[%s531 + $0x120] sm:$0xff]
        %v661 = vld [vmem:[%s531 + $0x128] sm:$0xff]
        %v662 = vld [vmem:[%s531 + $0x130] sm:$0xff]
        %v663 = vld [vmem:[%s531 + $0x138] sm:$0xff]
        %v664 = vld [vmem:[%s531 + $0x140] sm:$0xff]
        %v665 = vld [vmem:[%s531 + $0x148] sm:$0xff]
        %v666 = vld [vmem:[%s531 + $0x150] sm:$0xff]
        %v667 = vld [vmem:[%s531 + $0x158] sm:$0xff]
        %v668 = vld [vmem:[%s531 + $0x160] sm:$0xff]
        %v669 = vld [vmem:[%s531 + $0x168] sm:$0xff]
        %v670 = vld [vmem:[%s531 + $0x170] sm:$0xff]
        %v671 = vld [vmem:[%s531 + $0x178] sm:$0xff]
        %v672 = vld [vmem:[%s531 + $0x180] sm:$0xff]
        %v673 = vld [vmem:[%s531 + $0x188] sm:$0xff]
        %v674 = vld [vmem:[%s531 + $0x190] sm:$0xff]
        %v675 = vld [vmem:[%s531 + $0x198] sm:$0xff]
        %v676 = vld [vmem:[%s531 + $0x1a0] sm:$0xff]
        %v677 = vld [vmem:[%s531 + $0x1a8] sm:$0xff]
        %v678 = vld [vmem:[%s531 + $0x1b0] sm:$0xff]
        %v679 = vld [vmem:[%s531 + $0x1b8] sm:$0xff]
        %v680 = vld [vmem:[%s531 + $0x1c0] sm:$0xff]
        %v681 = vld [vmem:[%s531 + $0x1c8] sm:$0xff]
        %v682 = vld [vmem:[%s531 + $0x1d0] sm:$0xff]
        %v683 = vld [vmem:[%s531 + $0x1d8] sm:$0xff]
        %v684 = vld [vmem:[%s531 + $0x1e0] sm:$0xff]
        %v685 = vld [vmem:[%s531 + $0x1e8] sm:$0xff]
        %v686 = vld [vmem:[%s531 + $0x1f0] sm:$0xff]
        %v687 = vld [vmem:[%s531 + $0x1f8] sm:$0xff]
        %v688 = vld [vmem:[%s531 + $0x200] sm:$0xff]
        %v689 = vld [vmem:[%s531 + $0x208] sm:$0xff]
        %v690 = vld [vmem:[%s531 + $0x210] sm:$0xff]
        %v691 = vld [vmem:[%s531 + $0x218] sm:$0xff]
        %v692 = vld [vmem:[%s531 + $0x220] sm:$0xff]
        %v693 = vld [vmem:[%s531 + $0x228] sm:$0xff]
        %v694 = vld [vmem:[%s531 + $0x230] sm:$0xff]
        %v695 = vld [vmem:[%s531 + $0x238] sm:$0xff]
        %v696 = vld [vmem:[%s531 + $0x240] sm:$0xff]
        %v697 = vld [vmem:[%s531 + $0x248] sm:$0xff]
        %v698 = vld [vmem:[%s531 + $0x250] sm:$0xff]
        %v699 = vld [vmem:[%s531 + $0x258] sm:$0xff]
        %v700 = vld [vmem:[%s531 + $0x260] sm:$0xff]
        %v701 = vld [vmem:[%s531 + $0x268] sm:$0xff]
        %v702 = vld [vmem:[%s531 + $0x270] sm:$0xff]
        %v703 = vld [vmem:[%s531 + $0x278] sm:$0xff]
        %v704 = vld [vmem:[%s531 + $0x280] sm:$0xff]
        %v705 = vld [vmem:[%s531 + $0x288] sm:$0xff]
        %v706 = vld [vmem:[%s531 + $0x290] sm:$0xff]
        %v707 = vld [vmem:[%s531 + $0x298] sm:$0xff]
        %v708 = vld [vmem:[%s531 + $0x2a0] sm:$0xff]
        %v709 = vld [vmem:[%s531 + $0x2a8] sm:$0xff]
        %v710 = vld [vmem:[%s531 + $0x2b0] sm:$0xff]
        %v711 = vld [vmem:[%s531 + $0x2b8] sm:$0xff]
        %v712 = vld [vmem:[%s531 + $0x2c0] sm:$0xff]
        %v713 = vld [vmem:[%s531 + $0x2c8] sm:$0xff]
        %v714 = vld [vmem:[%s531 + $0x2d0] sm:$0xff]
        %v715 = vld [vmem:[%s531 + $0x2d8] sm:$0xff]
        %v716 = vld [vmem:[%s531 + $0x2e0] sm:$0xff]
        %v717 = vld [vmem:[%s531 + $0x2e8] sm:$0xff]
        %v718 = vld [vmem:[%s531 + $0x2f0] sm:$0xff]
        %v719 = vld [vmem:[%s531 + $0x2f8] sm:$0xff]
        %v720 = vld [vmem:[%s531 + $0x300] sm:$0xff]
        %v721 = vld [vmem:[%s531 + $0x308] sm:$0xff]
        %v722 = vld [vmem:[%s531 + $0x310] sm:$0xff]
        %v723 = vld [vmem:[%s531 + $0x318] sm:$0xff]
        %v724 = vld [vmem:[%s531 + $0x320] sm:$0xff]
        %v725 = vld [vmem:[%s531 + $0x328] sm:$0xff]
        %v726 = vld [vmem:[%s531 + $0x330] sm:$0xff]
        %v727 = vld [vmem:[%s531 + $0x338] sm:$0xff]
        %v728 = vld [vmem:[%s531 + $0x340] sm:$0xff]
        %v729 = vld [vmem:[%s531 + $0x348] sm:$0xff]
        %v730 = vld [vmem:[%s531 + $0x350] sm:$0xff]
        %v731 = vld [vmem:[%s531 + $0x358] sm:$0xff]
        %v732 = vld [vmem:[%s531 + $0x360] sm:$0xff]
        %v733 = vld [vmem:[%s531 + $0x368] sm:$0xff]
        %v734 = vld [vmem:[%s531 + $0x370] sm:$0xff]
        %v735 = vld [vmem:[%s531 + $0x378] sm:$0xff]
        %v736 = vld [vmem:[%s531 + $0x380] sm:$0xff]
        %v737 = vld [vmem:[%s531 + $0x388] sm:$0xff]
        %v738 = vld [vmem:[%s531 + $0x390] sm:$0xff]
        %v739 = vld [vmem:[%s531 + $0x398] sm:$0xff]
        %v740 = vld [vmem:[%s531 + $0x3a0] sm:$0xff]
        %v741 = vld [vmem:[%s531 + $0x3a8] sm:$0xff]
        %v742 = vld [vmem:[%s531 + $0x3b0] sm:$0xff]
        %v743 = vld [vmem:[%s531 + $0x3b8] sm:$0xff]
        %v744 = vld [vmem:[%s531 + $0x3c0] sm:$0xff]
        %v745 = vld [vmem:[%s531 + $0x3c8] sm:$0xff]
        %v746 = vld [vmem:[%s531 + $0x3d0] sm:$0xff]
        %v747 = vld [vmem:[%s531 + $0x3d8] sm:$0xff]
        %v748 = vld [vmem:[%s531 + $0x3e0] sm:$0xff]
        %v749 = vld [vmem:[%s531 + $0x3e8] sm:$0xff]
        %v750 = vld [vmem:[%s531 + $0x3f0] sm:$0xff]
        %v751 = vld [vmem:[%s531 + $0x3f8] sm:$0xff]
        %v752 = vld [vmem:[#allocation5] sm:$0xff]
        %v753 = vld [vmem:[#allocation5 + $0x8] sm:$0xff]
        %v754 = vld [vmem:[#allocation5 + $0x10] sm:$0xff]
        %v755 = vld [vmem:[#allocation5 + $0x18] sm:$0xff]
        %v756 = vld [vmem:[#allocation5 + $0x20] sm:$0xff]
        %v757 = vld [vmem:[#allocation5 + $0x28] sm:$0xff]
        %v758 = vld [vmem:[#allocation5 + $0x30] sm:$0xff]
        %v759 = vld [vmem:[#allocation5 + $0x38] sm:$0xff]
        %v760 = vld [vmem:[#allocation5 + $0x40] sm:$0xff]
        %v761 = vld [vmem:[#allocation5 + $0x48] sm:$0xff]
        %v762 = vld [vmem:[#allocation5 + $0x50] sm:$0xff]
        %v763 = vld [vmem:[#allocation5 + $0x58] sm:$0xff]
        %v764 = vld [vmem:[#allocation5 + $0x60] sm:$0xff]
        %v765 = vld [vmem:[#allocation5 + $0x68] sm:$0xff]
        %v766 = vld [vmem:[#allocation5 + $0x70] sm:$0xff]
        %v767 = vld [vmem:[#allocation5 + $0x78] sm:$0xff]
        %v768 = vld [vmem:[#allocation5 + $0x80] sm:$0xff]
        %v769 = vld [vmem:[#allocation5 + $0x88] sm:$0xff]
        %v770 = vld [vmem:[#allocation5 + $0x90] sm:$0xff]
        %v771 = vld [vmem:[#allocation5 + $0x98] sm:$0xff]
        %v772 = vld [vmem:[#allocation5 + $0xa0] sm:$0xff]
        %v773 = vld [vmem:[#allocation5 + $0xa8] sm:$0xff]
        %v774 = vld [vmem:[#allocation5 + $0xb0] sm:$0xff]
        %v775 = vld [vmem:[#allocation5 + $0xb8] sm:$0xff]
        %v776 = vld [vmem:[#allocation5 + $0xc0] sm:$0xff]
        %v777 = vld [vmem:[#allocation5 + $0xc8] sm:$0xff]
        %v778 = vld [vmem:[#allocation5 + $0xd0] sm:$0xff]
        %v779 = vld [vmem:[#allocation5 + $0xd8] sm:$0xff]
        %v780 = vld [vmem:[#allocation5 + $0xe0] sm:$0xff]
        %v781 = vld [vmem:[#allocation5 + $0xe8] sm:$0xff]
        %v782 = vld [vmem:[#allocation5 + $0xf0] sm:$0xff]
        %v783 = vld [vmem:[#allocation5 + $0xf8] sm:$0xff]
        %v784 = vld [vmem:[#allocation5 + $0x100] sm:$0xff]
        %v785 = vld [vmem:[#allocation5 + $0x108] sm:$0xff]
        %v786 = vld [vmem:[#allocation5 + $0x110] sm:$0xff]
        %v787 = vld [vmem:[#allocation5 + $0x118] sm:$0xff]
        %v788 = vld [vmem:[#allocation5 + $0x120] sm:$0xff]
        %v789 = vld [vmem:[#allocation5 + $0x128] sm:$0xff]
        %v790 = vld [vmem:[#allocation5 + $0x130] sm:$0xff]
        %v791 = vld [vmem:[#allocation5 + $0x138] sm:$0xff]
        %v792 = vld [vmem:[#allocation5 + $0x140] sm:$0xff]
        %v793 = vld [vmem:[#allocation5 + $0x148] sm:$0xff]
        %v794 = vld [vmem:[#allocation5 + $0x150] sm:$0xff]
        %v795 = vld [vmem:[#allocation5 + $0x158] sm:$0xff]
        %v796 = vld [vmem:[#allocation5 + $0x160] sm:$0xff]
        %v797 = vld [vmem:[#allocation5 + $0x168] sm:$0xff]
        %v798 = vld [vmem:[#allocation5 + $0x170] sm:$0xff]
        %v799 = vld [vmem:[#allocation5 + $0x178] sm:$0xff]
        %v800 = vld [vmem:[#allocation5 + $0x180] sm:$0xff]
        %v801 = vld [vmem:[#allocation5 + $0x188] sm:$0xff]
        %v802 = vld [vmem:[#allocation5 + $0x190] sm:$0xff]
        %v803 = vld [vmem:[#allocation5 + $0x198] sm:$0xff]
        %v804 = vld [vmem:[#allocation5 + $0x1a0] sm:$0xff]
        %v805 = vld [vmem:[#allocation5 + $0x1a8] sm:$0xff]
        %v806 = vld [vmem:[#allocation5 + $0x1b0] sm:$0xff]
        %v807 = vld [vmem:[#allocation5 + $0x1b8] sm:$0xff]
        %v808 = vld [vmem:[#allocation5 + $0x1c0] sm:$0xff]
        %v809 = vld [vmem:[#allocation5 + $0x1c8] sm:$0xff]
        %v810 = vld [vmem:[#allocation5 + $0x1d0] sm:$0xff]
        %v811 = vld [vmem:[#allocation5 + $0x1d8] sm:$0xff]
        %v812 = vld [vmem:[#allocation5 + $0x1e0] sm:$0xff]
        %v813 = vld [vmem:[#allocation5 + $0x1e8] sm:$0xff]
        %v814 = vld [vmem:[#allocation5 + $0x1f0] sm:$0xff]
        %v815 = vld [vmem:[#allocation5 + $0x1f8] sm:$0xff]
        %v816 = vld [vmem:[#allocation5 + $0x200] sm:$0xff]
        %v817 = vld [vmem:[#allocation5 + $0x208] sm:$0xff]
        %v818 = vld [vmem:[#allocation5 + $0x210] sm:$0xff]
        %v819 = vld [vmem:[#allocation5 + $0x218] sm:$0xff]
        %v820 = vld [vmem:[#allocation5 + $0x220] sm:$0xff]
        %v821 = vld [vmem:[#allocation5 + $0x228] sm:$0xff]
        %v822 = vld [vmem:[#allocation5 + $0x230] sm:$0xff]
        %v823 = vld [vmem:[#allocation5 + $0x238] sm:$0xff]
        %v824 = vld [vmem:[#allocation5 + $0x240] sm:$0xff]
        %v825 = vld [vmem:[#allocation5 + $0x248] sm:$0xff]
        %v826 = vld [vmem:[#allocation5 + $0x250] sm:$0xff]
        %v827 = vld [vmem:[#allocation5 + $0x258] sm:$0xff]
        %v828 = vld [vmem:[#allocation5 + $0x260] sm:$0xff]
        %v829 = vld [vmem:[#allocation5 + $0x268] sm:$0xff]
        %v830 = vld [vmem:[#allocation5 + $0x270] sm:$0xff]
        %v831 = vld [vmem:[#allocation5 + $0x278] sm:$0xff]
        %v832 = vld [vmem:[#allocation5 + $0x280] sm:$0xff]
        %v833 = vld [vmem:[#allocation5 + $0x288] sm:$0xff]
        %v834 = vld [vmem:[#allocation5 + $0x290] sm:$0xff]
        %v835 = vld [vmem:[#allocation5 + $0x298] sm:$0xff]
        %v836 = vld [vmem:[#allocation5 + $0x2a0] sm:$0xff]
        %v837 = vld [vmem:[#allocation5 + $0x2a8] sm:$0xff]
        %v838 = vld [vmem:[#allocation5 + $0x2b0] sm:$0xff]
        %v839 = vld [vmem:[#allocation5 + $0x2b8] sm:$0xff]
        %v840 = vld [vmem:[#allocation5 + $0x2c0] sm:$0xff]
        %v841 = vld [vmem:[#allocation5 + $0x2c8] sm:$0xff]
        %v842 = vld [vmem:[#allocation5 + $0x2d0] sm:$0xff]
        %v843 = vld [vmem:[#allocation5 + $0x2d8] sm:$0xff]
        %v844 = vld [vmem:[#allocation5 + $0x2e0] sm:$0xff]
        %v845 = vld [vmem:[#allocation5 + $0x2e8] sm:$0xff]
        %v846 = vld [vmem:[#allocation5 + $0x2f0] sm:$0xff]
        %v847 = vld [vmem:[#allocation5 + $0x2f8] sm:$0xff]
        %v848 = vld [vmem:[#allocation5 + $0x300] sm:$0xff]
        %v849 = vld [vmem:[#allocation5 + $0x308] sm:$0xff]
        %v850 = vld [vmem:[#allocation5 + $0x310] sm:$0xff]
        %v851 = vld [vmem:[#allocation5 + $0x318] sm:$0xff]
        %v852 = vld [vmem:[#allocation5 + $0x320] sm:$0xff]
        %v853 = vld [vmem:[#allocation5 + $0x328] sm:$0xff]
        %v854 = vld [vmem:[#allocation5 + $0x330] sm:$0xff]
        %v855 = vld [vmem:[#allocation5 + $0x338] sm:$0xff]
        %v856 = vld [vmem:[#allocation5 + $0x340] sm:$0xff]
        %v857 = vld [vmem:[#allocation5 + $0x348] sm:$0xff]
        %v858 = vld [vmem:[#allocation5 + $0x350] sm:$0xff]
        %v859 = vld [vmem:[#allocation5 + $0x358] sm:$0xff]
        %v860 = vld [vmem:[#allocation5 + $0x360] sm:$0xff]
        %v861 = vld [vmem:[#allocation5 + $0x368] sm:$0xff]
        %v862 = vld [vmem:[#allocation5 + $0x370] sm:$0xff]
        %v863 = vld [vmem:[#allocation5 + $0x378] sm:$0xff]
        %v864 = vld [vmem:[#allocation5 + $0x380] sm:$0xff]
        %v865 = vld [vmem:[#allocation5 + $0x388] sm:$0xff]
        %v866 = vld [vmem:[#allocation5 + $0x390] sm:$0xff]
        %v867 = vld [vmem:[#allocation5 + $0x398] sm:$0xff]
        %v868 = vld [vmem:[#allocation5 + $0x3a0] sm:$0xff]
        %v869 = vld [vmem:[#allocation5 + $0x3a8] sm:$0xff]
        %v870 = vld [vmem:[#allocation5 + $0x3b0] sm:$0xff]
        %v871 = vld [vmem:[#allocation5 + $0x3b8] sm:$0xff]
        %v872 = vld [vmem:[#allocation5 + $0x3c0] sm:$0xff]
        %v873 = vld [vmem:[#allocation5 + $0x3c8] sm:$0xff]
        %v874 = vld [vmem:[#allocation5 + $0x3d0] sm:$0xff]
        %v875 = vld [vmem:[#allocation5 + $0x3d8] sm:$0xff]
        %v876 = vld [vmem:[#allocation5 + $0x3e0] sm:$0xff]
        %v877 = vld [vmem:[#allocation5 + $0x3e8] sm:$0xff]
        %v878 = vld [vmem:[#allocation5 + $0x3f0] sm:$0xff]
        %v879 = vld [vmem:[#allocation5 + $0x3f8] sm:$0xff]
        %v880 = vld [vmem:[#allocation5 + $0x400] sm:$0xff]
        %v881 = vld [vmem:[#allocation5 + $0x408] sm:$0xff]
        %v882 = vld [vmem:[#allocation5 + $0x410] sm:$0xff]
        %v883 = vld [vmem:[#allocation5 + $0x418] sm:$0xff]
        %v884 = vld [vmem:[#allocation5 + $0x420] sm:$0xff]
        %v885 = vld [vmem:[#allocation5 + $0x428] sm:$0xff]
        %v886 = vld [vmem:[#allocation5 + $0x430] sm:$0xff]
        %v887 = vld [vmem:[#allocation5 + $0x438] sm:$0xff]
        %v888 = vld [vmem:[#allocation5 + $0x440] sm:$0xff]
        %v889 = vld [vmem:[#allocation5 + $0x448] sm:$0xff]
        %v890 = vld [vmem:[#allocation5 + $0x450] sm:$0xff]
        %v891 = vld [vmem:[#allocation5 + $0x458] sm:$0xff]
        %v892 = vld [vmem:[#allocation5 + $0x460] sm:$0xff]
        %v893 = vld [vmem:[#allocation5 + $0x468] sm:$0xff]
        %v894 = vld [vmem:[#allocation5 + $0x470] sm:$0xff]
        %v895 = vld [vmem:[#allocation5 + $0x478] sm:$0xff]
        %v896 = vld [vmem:[#allocation5 + $0x480] sm:$0xff]
        %v897 = vld [vmem:[#allocation5 + $0x488] sm:$0xff]
        %v898 = vld [vmem:[#allocation5 + $0x490] sm:$0xff]
        %v899 = vld [vmem:[#allocation5 + $0x498] sm:$0xff]
        %v900 = vld [vmem:[#allocation5 + $0x4a0] sm:$0xff]
        %v901 = vld [vmem:[#allocation5 + $0x4a8] sm:$0xff]
        %v902 = vld [vmem:[#allocation5 + $0x4b0] sm:$0xff]
        %v903 = vld [vmem:[#allocation5 + $0x4b8] sm:$0xff]
        %v904 = vld [vmem:[#allocation5 + $0x4c0] sm:$0xff]
        %v905 = vld [vmem:[#allocation5 + $0x4c8] sm:$0xff]
        %v906 = vld [vmem:[#allocation5 + $0x4d0] sm:$0xff]
        %v907 = vld [vmem:[#allocation5 + $0x4d8] sm:$0xff]
        %v908 = vld [vmem:[#allocation5 + $0x4e0] sm:$0xff]
        %v909 = vld [vmem:[#allocation5 + $0x4e8] sm:$0xff]
        %v910 = vld [vmem:[#allocation5 + $0x4f0] sm:$0xff]
        %v911 = vld [vmem:[#allocation5 + $0x4f8] sm:$0xff]
        %v912 = vld [vmem:[#allocation5 + $0x500] sm:$0xff]
        %v913 = vld [vmem:[#allocation5 + $0x508] sm:$0xff]
        %v914 = vld [vmem:[#allocation5 + $0x510] sm:$0xff]
        %v915 = vld [vmem:[#allocation5 + $0x518] sm:$0xff]
        %v916 = vld [vmem:[#allocation5 + $0x520] sm:$0xff]
        %v917 = vld [vmem:[#allocation5 + $0x528] sm:$0xff]
        %v918 = vld [vmem:[#allocation5 + $0x530] sm:$0xff]
        %v919 = vld [vmem:[#allocation5 + $0x538] sm:$0xff]
        %v920 = vld [vmem:[#allocation5 + $0x540] sm:$0xff]
        %v921 = vld [vmem:[#allocation5 + $0x548] sm:$0xff]
        %v922 = vld [vmem:[#allocation5 + $0x550] sm:$0xff]
        %v923 = vld [vmem:[#allocation5 + $0x558] sm:$0xff]
        %v924 = vld [vmem:[#allocation5 + $0x560] sm:$0xff]
        %v925 = vld [vmem:[#allocation5 + $0x568] sm:$0xff]
        %v926 = vld [vmem:[#allocation5 + $0x570] sm:$0xff]
        %v927 = vld [vmem:[#allocation5 + $0x578] sm:$0xff]
        %v928 = vld [vmem:[#allocation5 + $0x580] sm:$0xff]
        %v929 = vld [vmem:[#allocation5 + $0x588] sm:$0xff]
        %v930 = vld [vmem:[#allocation5 + $0x590] sm:$0xff]
        %v931 = vld [vmem:[#allocation5 + $0x598] sm:$0xff]
        %v932 = vld [vmem:[#allocation5 + $0x5a0] sm:$0xff]
        %v933 = vld [vmem:[#allocation5 + $0x5a8] sm:$0xff]
        %v934 = vld [vmem:[#allocation5 + $0x5b0] sm:$0xff]
        %v935 = vld [vmem:[#allocation5 + $0x5b8] sm:$0xff]
        %v936 = vld [vmem:[#allocation5 + $0x5c0] sm:$0xff]
        %v937 = vld [vmem:[#allocation5 + $0x5c8] sm:$0xff]
        %v938 = vld [vmem:[#allocation5 + $0x5d0] sm:$0xff]
        %v939 = vld [vmem:[#allocation5 + $0x5d8] sm:$0xff]
        %v940 = vld [vmem:[#allocation5 + $0x5e0] sm:$0xff]
        %v941 = vld [vmem:[#allocation5 + $0x5e8] sm:$0xff]
        %v942 = vld [vmem:[#allocation5 + $0x5f0] sm:$0xff]
        %v943 = vld [vmem:[#allocation5 + $0x5f8] sm:$0xff]
        %v944 = vld [vmem:[#allocation5 + $0x600] sm:$0xff]
        %v945 = vld [vmem:[#allocation5 + $0x608] sm:$0xff]
        %v946 = vld [vmem:[#allocation5 + $0x610] sm:$0xff]
        %v947 = vld [vmem:[#allocation5 + $0x618] sm:$0xff]
        %v948 = vld [vmem:[#allocation5 + $0x620] sm:$0xff]
        %v949 = vld [vmem:[#allocation5 + $0x628] sm:$0xff]
        %v950 = vld [vmem:[#allocation5 + $0x630] sm:$0xff]
        %v951 = vld [vmem:[#allocation5 + $0x638] sm:$0xff]
        %v952 = vld [vmem:[#allocation5 + $0x640] sm:$0xff]
        %v953 = vld [vmem:[#allocation5 + $0x648] sm:$0xff]
        %v954 = vld [vmem:[#allocation5 + $0x650] sm:$0xff]
        %v955 = vld [vmem:[#allocation5 + $0x658] sm:$0xff]
        %v956 = vld [vmem:[#allocation5 + $0x660] sm:$0xff]
        %v957 = vld [vmem:[#allocation5 + $0x668] sm:$0xff]
        %v958 = vld [vmem:[#allocation5 + $0x670] sm:$0xff]
        %v959 = vld [vmem:[#allocation5 + $0x678] sm:$0xff]
        %v960 = vld [vmem:[#allocation5 + $0x680] sm:$0xff]
        %v961 = vld [vmem:[#allocation5 + $0x688] sm:$0xff]
        %v962 = vld [vmem:[#allocation5 + $0x690] sm:$0xff]
        %v963 = vld [vmem:[#allocation5 + $0x698] sm:$0xff]
        %v964 = vld [vmem:[#allocation5 + $0x6a0] sm:$0xff]
        %v965 = vld [vmem:[#allocation5 + $0x6a8] sm:$0xff]
        %v966 = vld [vmem:[#allocation5 + $0x6b0] sm:$0xff]
        %v967 = vld [vmem:[#allocation5 + $0x6b8] sm:$0xff]
        %v968 = vld [vmem:[#allocation5 + $0x6c0] sm:$0xff]
        %v969 = vld [vmem:[#allocation5 + $0x6c8] sm:$0xff]
        %v970 = vld [vmem:[#allocation5 + $0x6d0] sm:$0xff]
        %v971 = vld [vmem:[#allocation5 + $0x6d8] sm:$0xff]
        %v972 = vld [vmem:[#allocation5 + $0x6e0] sm:$0xff]
        %v973 = vld [vmem:[#allocation5 + $0x6e8] sm:$0xff]
        %v974 = vld [vmem:[#allocation5 + $0x6f0] sm:$0xff]
        %v975 = vld [vmem:[#allocation5 + $0x6f8] sm:$0xff]
        %v976 = vld [vmem:[#allocation5 + $0x700] sm:$0xff]
        %v977 = vld [vmem:[#allocation5 + $0x708] sm:$0xff]
        %v978 = vld [vmem:[#allocation5 + $0x710] sm:$0xff]
        %v979 = vld [vmem:[#allocation5 + $0x718] sm:$0xff]
        %v980 = vld [vmem:[#allocation5 + $0x720] sm:$0xff]
        %v981 = vld [vmem:[#allocation5 + $0x728] sm:$0xff]
        %v982 = vld [vmem:[#allocation5 + $0x730] sm:$0xff]
        %v983 = vld [vmem:[#allocation5 + $0x738] sm:$0xff]
        %v984 = vld [vmem:[#allocation5 + $0x740] sm:$0xff]
        %v985 = vld [vmem:[#allocation5 + $0x748] sm:$0xff]
        %v986 = vld [vmem:[#allocation5 + $0x750] sm:$0xff]
        %v987 = vld [vmem:[#allocation5 + $0x758] sm:$0xff]
        %v988 = vld [vmem:[#allocation5 + $0x760] sm:$0xff]
        %v989 = vld [vmem:[#allocation5 + $0x768] sm:$0xff]
        %v990 = vld [vmem:[#allocation5 + $0x770] sm:$0xff]
        %v991 = vld [vmem:[#allocation5 + $0x778] sm:$0xff]
        %v992 = vld [vmem:[#allocation5 + $0x780] sm:$0xff]
        %v993 = vld [vmem:[#allocation5 + $0x788] sm:$0xff]
        %v994 = vld [vmem:[#allocation5 + $0x790] sm:$0xff]
        %v995 = vld [vmem:[#allocation5 + $0x798] sm:$0xff]
        %v996 = vld [vmem:[#allocation5 + $0x7a0] sm:$0xff]
        %v997 = vld [vmem:[#allocation5 + $0x7a8] sm:$0xff]
        %v998 = vld [vmem:[#allocation5 + $0x7b0] sm:$0xff]
        %v999 = vld [vmem:[#allocation5 + $0x7b8] sm:$0xff]
        %v1000 = vld [vmem:[#allocation5 + $0x7c0] sm:$0xff]
        %v1001 = vld [vmem:[#allocation5 + $0x7c8] sm:$0xff]
        %v1002 = vld [vmem:[#allocation5 + $0x7d0] sm:$0xff]
        %v1003 = vld [vmem:[#allocation5 + $0x7d8] sm:$0xff]
        %v1004 = vld [vmem:[#allocation5 + $0x7e0] sm:$0xff]
        %v1005 = vld [vmem:[#allocation5 + $0x7e8] sm:$0xff]
        %v1006 = vld [vmem:[#allocation5 + $0x7f0] sm:$0xff]
        %v1007 = vld [vmem:[#allocation5 + $0x7f8] sm:$0xff]
        %v1008 = vld [vmem:[#allocation5 + $0x800] sm:$0xff]
        %v1009 = vld [vmem:[#allocation5 + $0x808] sm:$0xff]
        %v1010 = vld [vmem:[#allocation5 + $0x810] sm:$0xff]
        %v1011 = vld [vmem:[#allocation5 + $0x818] sm:$0xff]
        %v1012 = vld [vmem:[#allocation5 + $0x820] sm:$0xff]
        %v1013 = vld [vmem:[#allocation5 + $0x828] sm:$0xff]
        %v1014 = vld [vmem:[#allocation5 + $0x830] sm:$0xff]
        %v1015 = vld [vmem:[#allocation5 + $0x838] sm:$0xff]
        %v1016 = vld [vmem:[#allocation5 + $0x840] sm:$0xff]
        %v1017 = vld [vmem:[#allocation5 + $0x848] sm:$0xff]
        %v1018 = vld [vmem:[#allocation5 + $0x850] sm:$0xff]
        %v1019 = vld [vmem:[#allocation5 + $0x858] sm:$0xff]
        %v1020 = vld [vmem:[#allocation5 + $0x860] sm:$0xff]
        %v1021 = vld [vmem:[#allocation5 + $0x868] sm:$0xff]
        %v1022 = vld [vmem:[#allocation5 + $0x870] sm:$0xff]
        %v1023 = vld [vmem:[#allocation5 + $0x878] sm:$0xff]
        %v1024 = vld [vmem:[#allocation5 + $0x880] sm:$0xff]
        %v1025 = vld [vmem:[#allocation5 + $0x888] sm:$0xff]
        %v1026 = vld [vmem:[#allocation5 + $0x890] sm:$0xff]
        %v1027 = vld [vmem:[#allocation5 + $0x898] sm:$0xff]
        %v1028 = vld [vmem:[#allocation5 + $0x8a0] sm:$0xff]
        %v1029 = vld [vmem:[#allocation5 + $0x8a8] sm:$0xff]
        %v1030 = vld [vmem:[#allocation5 + $0x8b0] sm:$0xff]
        %v1031 = vld [vmem:[#allocation5 + $0x8b8] sm:$0xff]
        %v1032 = vld [vmem:[#allocation5 + $0x8c0] sm:$0xff]
        %v1033 = vld [vmem:[#allocation5 + $0x8c8] sm:$0xff]
        %v1034 = vld [vmem:[#allocation5 + $0x8d0] sm:$0xff]
        %v1035 = vld [vmem:[#allocation5 + $0x8d8] sm:$0xff]
        %v1036 = vld [vmem:[#allocation5 + $0x8e0] sm:$0xff]
        %v1037 = vld [vmem:[#allocation5 + $0x8e8] sm:$0xff]
        %v1038 = vld [vmem:[#allocation5 + $0x8f0] sm:$0xff]
        %v1039 = vld [vmem:[#allocation5 + $0x8f8] sm:$0xff]
        %v1040 = vld [vmem:[#allocation5 + $0x900] sm:$0xff]
        %v1041 = vld [vmem:[#allocation5 + $0x908] sm:$0xff]
        %v1042 = vld [vmem:[#allocation5 + $0x910] sm:$0xff]
        %v1043 = vld [vmem:[#allocation5 + $0x918] sm:$0xff]
        %v1044 = vld [vmem:[#allocation5 + $0x920] sm:$0xff]
        %v1045 = vld [vmem:[#allocation5 + $0x928] sm:$0xff]
        %v1046 = vld [vmem:[#allocation5 + $0x930] sm:$0xff]
        %v1047 = vld [vmem:[#allocation5 + $0x938] sm:$0xff]
        %v1048 = vld [vmem:[#allocation5 + $0x940] sm:$0xff]
        %v1049 = vld [vmem:[#allocation5 + $0x948] sm:$0xff]
        %v1050 = vld [vmem:[#allocation5 + $0x950] sm:$0xff]
        %v1051 = vld [vmem:[#allocation5 + $0x958] sm:$0xff]
        %v1052 = vld [vmem:[#allocation5 + $0x960] sm:$0xff]
        %v1053 = vld [vmem:[#allocation5 + $0x968] sm:$0xff]
        %v1054 = vld [vmem:[#allocation5 + $0x970] sm:$0xff]
        %v1055 = vld [vmem:[#allocation5 + $0x978] sm:$0xff]
        %v1056 = vld [vmem:[#allocation5 + $0x980] sm:$0xff]
        %v1057 = vld [vmem:[#allocation5 + $0x988] sm:$0xff]
        %v1058 = vld [vmem:[#allocation5 + $0x990] sm:$0xff]
        %v1059 = vld [vmem:[#allocation5 + $0x998] sm:$0xff]
        %v1060 = vld [vmem:[#allocation5 + $0x9a0] sm:$0xff]
        %v1061 = vld [vmem:[#allocation5 + $0x9a8] sm:$0xff]
        %v1062 = vld [vmem:[#allocation5 + $0x9b0] sm:$0xff]
        %v1063 = vld [vmem:[#allocation5 + $0x9b8] sm:$0xff]
        %v1064 = vld [vmem:[#allocation5 + $0x9c0] sm:$0xff]
        %v1065 = vld [vmem:[#allocation5 + $0x9c8] sm:$0xff]
        %v1066 = vld [vmem:[#allocation5 + $0x9d0] sm:$0xff]
        %v1067 = vld [vmem:[#allocation5 + $0x9d8] sm:$0xff]
        %v1068 = vld [vmem:[#allocation5 + $0x9e0] sm:$0xff]
        %v1069 = vld [vmem:[#allocation5 + $0x9e8] sm:$0xff]
        %v1070 = vld [vmem:[#allocation5 + $0x9f0] sm:$0xff]
        %v1071 = vld [vmem:[#allocation5 + $0x9f8] sm:$0xff]
        %v1072 = vld [vmem:[#allocation5 + $0xa00] sm:$0xff]
        %v1073 = vld [vmem:[#allocation5 + $0xa08] sm:$0xff]
        %v1074 = vld [vmem:[#allocation5 + $0xa10] sm:$0xff]
        %v1075 = vld [vmem:[#allocation5 + $0xa18] sm:$0xff]
        %v1076 = vld [vmem:[#allocation5 + $0xa20] sm:$0xff]
        %v1077 = vld [vmem:[#allocation5 + $0xa28] sm:$0xff]
        %v1078 = vld [vmem:[#allocation5 + $0xa30] sm:$0xff]
        %v1079 = vld [vmem:[#allocation5 + $0xa38] sm:$0xff]
        %v1080 = vld [vmem:[#allocation5 + $0xa40] sm:$0xff]
        %v1081 = vld [vmem:[#allocation5 + $0xa48] sm:$0xff]
        %v1082 = vld [vmem:[#allocation5 + $0xa50] sm:$0xff]
        %v1083 = vld [vmem:[#allocation5 + $0xa58] sm:$0xff]
        %v1084 = vld [vmem:[#allocation5 + $0xa60] sm:$0xff]
        %v1085 = vld [vmem:[#allocation5 + $0xa68] sm:$0xff]
        %v1086 = vld [vmem:[#allocation5 + $0xa70] sm:$0xff]
        %v1087 = vld [vmem:[#allocation5 + $0xa78] sm:$0xff]
        %v1088 = vld [vmem:[#allocation5 + $0xa80] sm:$0xff]
        %v1089 = vld [vmem:[#allocation5 + $0xa88] sm:$0xff]
        %v1090 = vld [vmem:[#allocation5 + $0xa90] sm:$0xff]
        %v1091 = vld [vmem:[#allocation5 + $0xa98] sm:$0xff]
        %v1092 = vld [vmem:[#allocation5 + $0xaa0] sm:$0xff]
        %v1093 = vld [vmem:[#allocation5 + $0xaa8] sm:$0xff]
        %v1094 = vld [vmem:[#allocation5 + $0xab0] sm:$0xff]
        %v1095 = vld [vmem:[#allocation5 + $0xab8] sm:$0xff]
        %v1096 = vld [vmem:[#allocation5 + $0xac0] sm:$0xff]
        %v1097 = vld [vmem:[#allocation5 + $0xac8] sm:$0xff]
        %v1098 = vld [vmem:[#allocation5 + $0xad0] sm:$0xff]
        %v1099 = vld [vmem:[#allocation5 + $0xad8] sm:$0xff]
        %v1100 = vld [vmem:[#allocation5 + $0xae0] sm:$0xff]
        %v1101 = vld [vmem:[#allocation5 + $0xae8] sm:$0xff]
        %v1102 = vld [vmem:[#allocation5 + $0xaf0] sm:$0xff]
        %v1103 = vld [vmem:[#allocation5 + $0xaf8] sm:$0xff]
        %v1104 = vld [vmem:[#allocation5 + $0xb00] sm:$0xff]
        %v1105 = vld [vmem:[#allocation5 + $0xb08] sm:$0xff]
        %v1106 = vld [vmem:[#allocation5 + $0xb10] sm:$0xff]
        %v1107 = vld [vmem:[#allocation5 + $0xb18] sm:$0xff]
        %v1108 = vld [vmem:[#allocation5 + $0xb20] sm:$0xff]
        %v1109 = vld [vmem:[#allocation5 + $0xb28] sm:$0xff]
        %v1110 = vld [vmem:[#allocation5 + $0xb30] sm:$0xff]
        %v1111 = vld [vmem:[#allocation5 + $0xb38] sm:$0xff]
        %v1112 = vld [vmem:[#allocation5 + $0xb40] sm:$0xff]
        %v1113 = vld [vmem:[#allocation5 + $0xb48] sm:$0xff]
        %v1114 = vld [vmem:[#allocation5 + $0xb50] sm:$0xff]
        %v1115 = vld [vmem:[#allocation5 + $0xb58] sm:$0xff]
        %v1116 = vld [vmem:[#allocation5 + $0xb60] sm:$0xff]
        %v1117 = vld [vmem:[#allocation5 + $0xb68] sm:$0xff]
        %v1118 = vld [vmem:[#allocation5 + $0xb70] sm:$0xff]
        %v1119 = vld [vmem:[#allocation5 + $0xb78] sm:$0xff]
        %v1120 = vld [vmem:[#allocation5 + $0xb80] sm:$0xff]
        %v1121 = vld [vmem:[#allocation5 + $0xb88] sm:$0xff]
        %v1122 = vld [vmem:[#allocation5 + $0xb90] sm:$0xff]
        %v1123 = vld [vmem:[#allocation5 + $0xb98] sm:$0xff]
        %v1124 = vld [vmem:[#allocation5 + $0xba0] sm:$0xff]
        %v1125 = vld [vmem:[#allocation5 + $0xba8] sm:$0xff]
        %v1126 = vld [vmem:[#allocation5 + $0xbb0] sm:$0xff]
        %v1127 = vld [vmem:[#allocation5 + $0xbb8] sm:$0xff]
        %v1128 = vld [vmem:[#allocation5 + $0xbc0] sm:$0xff]
        %v1129 = vld [vmem:[#allocation5 + $0xbc8] sm:$0xff]
        %v1130 = vld [vmem:[#allocation5 + $0xbd0] sm:$0xff]
        %v1131 = vld [vmem:[#allocation5 + $0xbd8] sm:$0xff]
        %v1132 = vld [vmem:[#allocation5 + $0xbe0] sm:$0xff]
        %v1133 = vld [vmem:[#allocation5 + $0xbe8] sm:$0xff]
        %v1134 = vld [vmem:[#allocation5 + $0xbf0] sm:$0xff]
        %v1135 = vld [vmem:[#allocation5 + $0xbf8] sm:$0xff]
        %v1136 = vld [vmem:[#allocation5 + $0xc00] sm:$0xff]
        %v1137 = vld [vmem:[#allocation5 + $0xc08] sm:$0xff]
        %v1138 = vld [vmem:[#allocation5 + $0xc10] sm:$0xff]
        %v1139 = vld [vmem:[#allocation5 + $0xc18] sm:$0xff]
        %v1140 = vld [vmem:[#allocation5 + $0xc20] sm:$0xff]
        %v1141 = vld [vmem:[#allocation5 + $0xc28] sm:$0xff]
        %v1142 = vld [vmem:[#allocation5 + $0xc30] sm:$0xff]
        %v1143 = vld [vmem:[#allocation5 + $0xc38] sm:$0xff]
        %v1144 = vld [vmem:[#allocation5 + $0xc40] sm:$0xff]
        %v1145 = vld [vmem:[#allocation5 + $0xc48] sm:$0xff]
        %v1146 = vld [vmem:[#allocation5 + $0xc50] sm:$0xff]
        %v1147 = vld [vmem:[#allocation5 + $0xc58] sm:$0xff]
        %v1148 = vld [vmem:[#allocation5 + $0xc60] sm:$0xff]
        %v1149 = vld [vmem:[#allocation5 + $0xc68] sm:$0xff]
        %v1150 = vld [vmem:[#allocation5 + $0xc70] sm:$0xff]
        %v1151 = vld [vmem:[#allocation5 + $0xc78] sm:$0xff]
        %v1152 = vld [vmem:[#allocation5 + $0xc80] sm:$0xff]
        %v1153 = vld [vmem:[#allocation5 + $0xc88] sm:$0xff]
        %v1154 = vld [vmem:[#allocation5 + $0xc90] sm:$0xff]
        %v1155 = vld [vmem:[#allocation5 + $0xc98] sm:$0xff]
        %v1156 = vld [vmem:[#allocation5 + $0xca0] sm:$0xff]
        %v1157 = vld [vmem:[#allocation5 + $0xca8] sm:$0xff]
        %v1158 = vld [vmem:[#allocation5 + $0xcb0] sm:$0xff]
        %v1159 = vld [vmem:[#allocation5 + $0xcb8] sm:$0xff]
        %v1160 = vld [vmem:[#allocation5 + $0xcc0] sm:$0xff]
        %v1161 = vld [vmem:[#allocation5 + $0xcc8] sm:$0xff]
        %v1162 = vld [vmem:[#allocation5 + $0xcd0] sm:$0xff]
        %v1163 = vld [vmem:[#allocation5 + $0xcd8] sm:$0xff]
        %v1164 = vld [vmem:[#allocation5 + $0xce0] sm:$0xff]
        %v1165 = vld [vmem:[#allocation5 + $0xce8] sm:$0xff]
        %v1166 = vld [vmem:[#allocation5 + $0xcf0] sm:$0xff]
        %v1167 = vld [vmem:[#allocation5 + $0xcf8] sm:$0xff]
        %v1168 = vld [vmem:[#allocation5 + $0xd00] sm:$0xff]
        %v1169 = vld [vmem:[#allocation5 + $0xd08] sm:$0xff]
        %v1170 = vld [vmem:[#allocation5 + $0xd10] sm:$0xff]
        %v1171 = vld [vmem:[#allocation5 + $0xd18] sm:$0xff]
        %v1172 = vld [vmem:[#allocation5 + $0xd20] sm:$0xff]
        %v1173 = vld [vmem:[#allocation5 + $0xd28] sm:$0xff]
        %v1174 = vld [vmem:[#allocation5 + $0xd30] sm:$0xff]
        %v1175 = vld [vmem:[#allocation5 + $0xd38] sm:$0xff]
        %v1176 = vld [vmem:[#allocation5 + $0xd40] sm:$0xff]
        %v1177 = vld [vmem:[#allocation5 + $0xd48] sm:$0xff]
        %v1178 = vld [vmem:[#allocation5 + $0xd50] sm:$0xff]
        %v1179 = vld [vmem:[#allocation5 + $0xd58] sm:$0xff]
        %v1180 = vld [vmem:[#allocation5 + $0xd60] sm:$0xff]
        %v1181 = vld [vmem:[#allocation5 + $0xd68] sm:$0xff]
        %v1182 = vld [vmem:[#allocation5 + $0xd70] sm:$0xff]
        %v1183 = vld [vmem:[#allocation5 + $0xd78] sm:$0xff]
        %v1184 = vld [vmem:[#allocation5 + $0xd80] sm:$0xff]
        %v1185 = vld [vmem:[#allocation5 + $0xd88] sm:$0xff]
        %v1186 = vld [vmem:[#allocation5 + $0xd90] sm:$0xff]
        %v1187 = vld [vmem:[#allocation5 + $0xd98] sm:$0xff]
        %v1188 = vld [vmem:[#allocation5 + $0xda0] sm:$0xff]
        %v1189 = vld [vmem:[#allocation5 + $0xda8] sm:$0xff]
        %v1190 = vld [vmem:[#allocation5 + $0xdb0] sm:$0xff]
        %v1191 = vld [vmem:[#allocation5 + $0xdb8] sm:$0xff]
        %v1192 = vld [vmem:[#allocation5 + $0xdc0] sm:$0xff]
        %v1193 = vld [vmem:[#allocation5 + $0xdc8] sm:$0xff]
        %v1194 = vld [vmem:[#allocation5 + $0xdd0] sm:$0xff]
        %v1195 = vld [vmem:[#allocation5 + $0xdd8] sm:$0xff]
        %v1196 = vld [vmem:[#allocation5 + $0xde0] sm:$0xff]
        %v1197 = vld [vmem:[#allocation5 + $0xde8] sm:$0xff]
        %v1198 = vld [vmem:[#allocation5 + $0xdf0] sm:$0xff]
        %v1199 = vld [vmem:[#allocation5 + $0xdf8] sm:$0xff]
        %v1200 = vld [vmem:[#allocation5 + $0xe00] sm:$0xff]
        %v1201 = vld [vmem:[#allocation5 + $0xe08] sm:$0xff]
        %v1202 = vld [vmem:[#allocation5 + $0xe10] sm:$0xff]
        %v1203 = vld [vmem:[#allocation5 + $0xe18] sm:$0xff]
        %v1204 = vld [vmem:[#allocation5 + $0xe20] sm:$0xff]
        %v1205 = vld [vmem:[#allocation5 + $0xe28] sm:$0xff]
        %v1206 = vld [vmem:[#allocation5 + $0xe30] sm:$0xff]
        %v1207 = vld [vmem:[#allocation5 + $0xe38] sm:$0xff]
        %v1208 = vld [vmem:[#allocation5 + $0xe40] sm:$0xff]
        %v1209 = vld [vmem:[#allocation5 + $0xe48] sm:$0xff]
        %v1210 = vld [vmem:[#allocation5 + $0xe50] sm:$0xff]
        %v1211 = vld [vmem:[#allocation5 + $0xe58] sm:$0xff]
        %v1212 = vld [vmem:[#allocation5 + $0xe60] sm:$0xff]
        %v1213 = vld [vmem:[#allocation5 + $0xe68] sm:$0xff]
        %v1214 = vld [vmem:[#allocation5 + $0xe70] sm:$0xff]
        %v1215 = vld [vmem:[#allocation5 + $0xe78] sm:$0xff]
        %v1216 = vld [vmem:[#allocation5 + $0xe80] sm:$0xff]
        %v1217 = vld [vmem:[#allocation5 + $0xe88] sm:$0xff]
        %v1218 = vld [vmem:[#allocation5 + $0xe90] sm:$0xff]
        %v1219 = vld [vmem:[#allocation5 + $0xe98] sm:$0xff]
        %v1220 = vld [vmem:[#allocation5 + $0xea0] sm:$0xff]
        %v1221 = vld [vmem:[#allocation5 + $0xea8] sm:$0xff]
        %v1222 = vld [vmem:[#allocation5 + $0xeb0] sm:$0xff]
        %v1223 = vld [vmem:[#allocation5 + $0xeb8] sm:$0xff]
        %v1224 = vld [vmem:[#allocation5 + $0xec0] sm:$0xff]
        %v1225 = vld [vmem:[#allocation5 + $0xec8] sm:$0xff]
        %v1226 = vld [vmem:[#allocation5 + $0xed0] sm:$0xff]
        %v1227 = vld [vmem:[#allocation5 + $0xed8] sm:$0xff]
        %v1228 = vld [vmem:[#allocation5 + $0xee0] sm:$0xff]
        %v1229 = vld [vmem:[#allocation5 + $0xee8] sm:$0xff]
        %v1230 = vld [vmem:[#allocation5 + $0xef0] sm:$0xff]
        %v1231 = vld [vmem:[#allocation5 + $0xef8] sm:$0xff]
        %v1232 = vld [vmem:[#allocation5 + $0xf00] sm:$0xff]
        %v1233 = vld [vmem:[#allocation5 + $0xf08] sm:$0xff]
        %v1234 = vld [vmem:[#allocation5 + $0xf10] sm:$0xff]
        %v1235 = vld [vmem:[#allocation5 + $0xf18] sm:$0xff]
        %v1236 = vld [vmem:[#allocation5 + $0xf20] sm:$0xff]
        %v1237 = vld [vmem:[#allocation5 + $0xf28] sm:$0xff]
        %v1238 = vld [vmem:[#allocation5 + $0xf30] sm:$0xff]
        %v1239 = vld [vmem:[#allocation5 + $0xf38] sm:$0xff]
        %v1240 = vld [vmem:[#allocation5 + $0xf40] sm:$0xff]
        %v1241 = vld [vmem:[#allocation5 + $0xf48] sm:$0xff]
        %v1242 = vld [vmem:[#allocation5 + $0xf50] sm:$0xff]
        %v1243 = vld [vmem:[#allocation5 + $0xf58] sm:$0xff]
        %v1244 = vld [vmem:[#allocation5 + $0xf60] sm:$0xff]
        %v1245 = vld [vmem:[#allocation5 + $0xf68] sm:$0xff]
        %v1246 = vld [vmem:[#allocation5 + $0xf70] sm:$0xff]
        %v1247 = vld [vmem:[#allocation5 + $0xf78] sm:$0xff]
        %v1248 = vld [vmem:[#allocation5 + $0xf80] sm:$0xff]
        %v1249 = vld [vmem:[#allocation5 + $0xf88] sm:$0xff]
        %v1250 = vld [vmem:[#allocation5 + $0xf90] sm:$0xff]
        %v1251 = vld [vmem:[#allocation5 + $0xf98] sm:$0xff]
        %v1252 = vld [vmem:[#allocation5 + $0xfa0] sm:$0xff]
        %v1253 = vld [vmem:[#allocation5 + $0xfa8] sm:$0xff]
        %v1254 = vld [vmem:[#allocation5 + $0xfb0] sm:$0xff]
        %v1255 = vld [vmem:[#allocation5 + $0xfb8] sm:$0xff]
        %v1256 = vld [vmem:[#allocation5 + $0xfc0] sm:$0xff]
        %v1257 = vld [vmem:[#allocation5 + $0xfc8] sm:$0xff]
        %v1258 = vld [vmem:[#allocation5 + $0xfd0] sm:$0xff]
        %v1259 = vld [vmem:[#allocation5 + $0xfd8] sm:$0xff]
        %v1260 = vld [vmem:[#allocation5 + $0xfe0] sm:$0xff]
        %v1261 = vld [vmem:[#allocation5 + $0xfe8] sm:$0xff]
        %v1262 = vld [vmem:[#allocation5 + $0xff0] sm:$0xff]
        %v1263 = vld [vmem:[#allocation5 + $0xff8] sm:$0xff]
        %v1264 = vld [vmem:[#allocation7] sm:$0xf]
        %v1266 = vlaneseq
        %v1267 = vshrl.u32 %v1266, 7
        %v1268 = vsub.s32 0, %v1267
        %v1269 = vrot.slane %v1264, %v1268
        %v1270 = vlaneseq
        %v1271 = vshrl.u32 %v1270, 7
        %v1272 = vsub.s32 1, %v1271
        %v1273 = vrot.slane %v1264, %v1272
        %v1274 = vlaneseq
        %v1275 = vshrl.u32 %v1274, 7
        %v1276 = vsub.s32 2, %v1275
        %v1277 = vrot.slane %v1264, %v1276
        %v1278 = vlaneseq
        %v1279 = vshrl.u32 %v1278, 7
        %v1280 = vsub.s32 3, %v1279
        %v1281 = vrot.slane %v1264, %v1280
        %1286 = vmatprep.subr.mxu0 %v813
        %1287 = vmatpush1.msra.mxu0 %v812
        %1288 = vmatprep.subr.mxu0 %v809
        %1289 = vmatpush1.msra.mxu0 %v808
        %1290 = vmatprep.subr.mxu0 %v805
        %1291 = vmatpush1.msra.mxu0 %v804
        %1292 = vmatprep.subr.mxu0 %v801
        %1293 = vmatpush1.msra.mxu0 %v800
        %1294 = vmatprep.subr.mxu0 %v797
        %1295 = vmatpush1.msra.mxu0 %v796
        %1296 = vmatprep.subr.mxu0 %v793
        %1297 = vmatpush1.msra.mxu0 %v792
        %1298 = vmatprep.subr.mxu0 %v789
        %1299 = vmatpush1.msra.mxu0 %v788
        %1300 = vmatprep.subr.mxu0 %v785
        %1301 = vmatpush1.msra.mxu0 %v784
        %1302 = vmatprep.subr.mxu0 %v781
        %1303 = vmatpush1.msra.mxu0 %v780
        %1304 = vmatprep.subr.mxu0 %v777
        %1305 = vmatpush1.msra.mxu0 %v776
        %1306 = vmatprep.subr.mxu0 %v773
        %1307 = vmatpush1.msra.mxu0 %v772
        %1308 = vmatprep.subr.mxu0 %v769
        %1309 = vmatpush1.msra.mxu0 %v768
        %1310 = vmatprep.subr.mxu0 %v765
        %1311 = vmatpush1.msra.mxu0 %v764
        %1312 = vmatprep.subr.mxu0 %v761
        %1313 = vmatpush1.msra.mxu0 %v760
        %1314 = vmatprep.subr.mxu0 %v757
        %1315 = vmatpush1.msra.mxu0 %v756
        %1316 = vmatprep.subr.mxu0 %v753
        %1317 = vmatpush1.msra.mxu0 %v752
        %1318 = vmatprep.subr.mxu0 %v877
        %1319 = vmatpush2.msra.mxu0 %v876
        %1320 = vmatprep.subr.mxu0 %v873
        %1321 = vmatpush2.msra.mxu0 %v872
        %1322 = vmatprep.subr.mxu0 %v869
        %1323 = vmatpush2.msra.mxu0 %v868
        %1324 = vmatprep.subr.mxu0 %v865
        %1325 = vmatpush2.msra.mxu0 %v864
        %1326 = vmatprep.subr.mxu0 %v861
        %1327 = vmatpush2.msra.mxu0 %v860
        %1328 = vmatprep.subr.mxu0 %v857
        %1329 = vmatpush2.msra.mxu0 %v856
        %1330 = vmatprep.subr.mxu0 %v853
        %1331 = vmatpush2.msra.mxu0 %v852
        %1332 = vmatprep.subr.mxu0 %v849
        %1333 = vmatpush2.msra.mxu0 %v848
        %1334 = vmatprep.subr.mxu0 %v845
        %1335 = vmatpush2.msra.mxu0 %v844
        %1336 = vmatprep.subr.mxu0 %v841
        %1337 = vmatpush2.msra.mxu0 %v840
        %1338 = vmatprep.subr.mxu0 %v837
        %1339 = vmatpush2.msra.mxu0 %v836
        %1340 = vmatprep.subr.mxu0 %v833
        %1341 = vmatpush2.msra.mxu0 %v832
        %1342 = vmatprep.subr.mxu0 %v829
        %1343 = vmatpush2.msra.mxu0 %v828
        %1344 = vmatprep.subr.mxu0 %v825
        %1345 = vmatpush2.msra.mxu0 %v824
        %1346 = vmatprep.subr.mxu0 %v821
        %1347 = vmatpush2.msra.mxu0 %v820
        %1348 = vmatprep.subr.mxu0 %v817
        %1349 = vmatpush2.msra.mxu0 %v816
        %1350 = vmatprep.mubr.f32.mxu0 %v625
        %1351 = vmatmul.mubr.f32.gmra.mxu0 %v624
        %v1352 = vpop.f32.mrf.mxu0
        %v1353 = vadd.f32 %v1269, %v1352
        %v1354 = vpop.f32.mrf.mxu0
        %v1355 = vadd.f32 %v1273, %v1354
        %1356 = vmatprep.mubr.f32.mxu0 %v633
        %1357 = vmatmul.mubr.f32.gmra.mxu0 %v632
        %v1358 = vpop.f32.mrf.mxu0
        %v1359 = vadd.f32 %v1269, %v1358
        %v1360 = vpop.f32.mrf.mxu0
        %v1361 = vadd.f32 %v1273, %v1360
        %1362 = vmatprep.mubr.f32.mxu0 %v641
        %1363 = vmatmul.mubr.f32.gmra.mxu0 %v640
        %v1364 = vpop.f32.mrf.mxu0
        %v1365 = vadd.f32 %v1269, %v1364
        %v1366 = vpop.f32.mrf.mxu0
        %v1367 = vadd.f32 %v1273, %v1366
        %1368 = vmatprep.mubr.f32.mxu0 %v649
        %1369 = vmatmul.mubr.f32.gmra.mxu0 %v648
        %v1370 = vpop.f32.mrf.mxu0
        %v1371 = vadd.f32 %v1269, %v1370
        %v1372 = vpop.f32.mrf.mxu0
        %v1373 = vadd.f32 %v1273, %v1372
        %1374 = vmatprep.mubr.f32.mxu0 %v657
        %1375 = vmatmul.mubr.f32.gmra.mxu0 %v656
        %v1376 = vpop.f32.mrf.mxu0
        %v1377 = vadd.f32 %v1269, %v1376
        %v1378 = vpop.f32.mrf.mxu0
        %v1379 = vadd.f32 %v1273, %v1378
        %1380 = vmatprep.mubr.f32.mxu0 %v665
        %1381 = vmatmul.mubr.f32.gmra.mxu0 %v664
        %v1382 = vpop.f32.mrf.mxu0
        %v1383 = vadd.f32 %v1269, %v1382
        %v1384 = vpop.f32.mrf.mxu0
        %v1385 = vadd.f32 %v1273, %v1384
        %1386 = vmatprep.mubr.f32.mxu0 %v673
        %1387 = vmatmul.mubr.f32.gmra.mxu0 %v672
        %v1388 = vpop.f32.mrf.mxu0
        %v1389 = vadd.f32 %v1269, %v1388
        %v1390 = vpop.f32.mrf.mxu0
        %v1391 = vadd.f32 %v1273, %v1390
        %1392 = vmatprep.mubr.f32.mxu0 %v681
        %1393 = vmatmul.mubr.f32.gmra.mxu0 %v680
        %v1394 = vpop.f32.mrf.mxu0
        %v1395 = vadd.f32 %v1269, %v1394
        %v1396 = vpop.f32.mrf.mxu0
        %v1397 = vadd.f32 %v1273, %v1396
        %1398 = vmatprep.mubr.f32.mxu0 %v689
        %1399 = vmatmul.mubr.f32.gmra.mxu0 %v688
        %v1400 = vpop.f32.mrf.mxu0
        %v1401 = vadd.f32 %v1269, %v1400
        %v1402 = vpop.f32.mrf.mxu0
        %v1403 = vadd.f32 %v1273, %v1402
        %1404 = vmatprep.mubr.f32.mxu0 %v697
        %1405 = vmatmul.mubr.f32.gmra.mxu0 %v696
        %v1406 = vpop.f32.mrf.mxu0
        %v1407 = vadd.f32 %v1269, %v1406
        %v1408 = vpop.f32.mrf.mxu0
        %v1409 = vadd.f32 %v1273, %v1408
        %1410 = vmatprep.mubr.f32.mxu0 %v705
        %1411 = vmatmul.mubr.f32.gmra.mxu0 %v704
        %v1412 = vpop.f32.mrf.mxu0
        %v1413 = vadd.f32 %v1269, %v1412
        %v1414 = vpop.f32.mrf.mxu0
        %v1415 = vadd.f32 %v1273, %v1414
        %1416 = vmatprep.mubr.f32.mxu0 %v713
        %1417 = vmatmul.mubr.f32.gmra.mxu0 %v712
        %v1418 = vpop.f32.mrf.mxu0
        %v1419 = vadd.f32 %v1269, %v1418
        %v1420 = vpop.f32.mrf.mxu0
        %v1421 = vadd.f32 %v1273, %v1420
        %1422 = vmatprep.mubr.f32.mxu0 %v721
        %1423 = vmatmul.mubr.f32.gmra.mxu0 %v720
        %v1424 = vpop.f32.mrf.mxu0
        %v1425 = vadd.f32 %v1269, %v1424
        %v1426 = vpop.f32.mrf.mxu0
        %v1427 = vadd.f32 %v1273, %v1426
        %1428 = vmatprep.mubr.f32.mxu0 %v729
        %1429 = vmatmul.mubr.f32.gmra.mxu0 %v728
        %v1430 = vpop.f32.mrf.mxu0
        %v1431 = vadd.f32 %v1269, %v1430
        %v1432 = vpop.f32.mrf.mxu0
        %v1433 = vadd.f32 %v1273, %v1432
        %1434 = vmatprep.mubr.f32.mxu0 %v737
        %1435 = vmatmul.mubr.f32.gmra.mxu0 %v736
        %v1436 = vpop.f32.mrf.mxu0
        %v1437 = vadd.f32 %v1269, %v1436
        %v1438 = vpop.f32.mrf.mxu0
        %v1439 = vadd.f32 %v1273, %v1438
        %1440 = vmatprep.mubr.f32.mxu0 %v745
        %1441 = vmatmul.mubr.f32.gmra.mxu0 %v744
        %v1442 = vpop.f32.mrf.mxu0
        %v1443 = vadd.f32 %v1269, %v1442
        %v1444 = vpop.f32.mrf.mxu0
        %v1445 = vadd.f32 %v1273, %v1444
        %1446 = vdwg.mxu0
        %1447 = vmatprep.subr.mxu0 %v941
        %1448 = vmatpush1.msra.mxu0 %v940
        %1449 = vmatprep.subr.mxu0 %v937
        %1450 = vmatpush1.msra.mxu0 %v936
        %1451 = vmatprep.subr.mxu0 %v933
        %1452 = vmatpush1.msra.mxu0 %v932
        %1453 = vmatprep.subr.mxu0 %v929
        %1454 = vmatpush1.msra.mxu0 %v928
        %1455 = vmatprep.subr.mxu0 %v925
        %1456 = vmatpush1.msra.mxu0 %v924
        %1457 = vmatprep.subr.mxu0 %v921
        %1458 = vmatpush1.msra.mxu0 %v920
        %1459 = vmatprep.subr.mxu0 %v917
        %1460 = vmatpush1.msra.mxu0 %v916
        %1461 = vmatprep.subr.mxu0 %v913
        %1462 = vmatpush1.msra.mxu0 %v912
        %1463 = vmatprep.subr.mxu0 %v909
        %1464 = vmatpush1.msra.mxu0 %v908
        %1465 = vmatprep.subr.mxu0 %v905
        %1466 = vmatpush1.msra.mxu0 %v904
        %1467 = vmatprep.subr.mxu0 %v901
        %1468 = vmatpush1.msra.mxu0 %v900
        %1469 = vmatprep.subr.mxu0 %v897
        %1470 = vmatpush1.msra.mxu0 %v896
        %1471 = vmatprep.subr.mxu0 %v893
        %1472 = vmatpush1.msra.mxu0 %v892
        %1473 = vmatprep.subr.mxu0 %v889
        %1474 = vmatpush1.msra.mxu0 %v888
        %1475 = vmatprep.subr.mxu0 %v885
        %1476 = vmatpush1.msra.mxu0 %v884
        %1477 = vmatprep.subr.mxu0 %v881
        %1478 = vmatpush1.msra.mxu0 %v880
        %1479 = vmatprep.subr.mxu0 %v1005
        %1480 = vmatpush2.msra.mxu0 %v1004
        %1481 = vmatprep.subr.mxu0 %v1001
        %1482 = vmatpush2.msra.mxu0 %v1000
        %1483 = vmatprep.subr.mxu0 %v997
        %1484 = vmatpush2.msra.mxu0 %v996
        %1485 = vmatprep.subr.mxu0 %v993
        %1486 = vmatpush2.msra.mxu0 %v992
        %1487 = vmatprep.subr.mxu0 %v989
        %1488 = vmatpush2.msra.mxu0 %v988
        %1489 = vmatprep.subr.mxu0 %v985
        %1490 = vmatpush2.msra.mxu0 %v984
        %1491 = vmatprep.subr.mxu0 %v981
        %1492 = vmatpush2.msra.mxu0 %v980
        %1493 = vmatprep.subr.mxu0 %v977
        %1494 = vmatpush2.msra.mxu0 %v976
        %1495 = vmatprep.subr.mxu0 %v973
        %1496 = vmatpush2.msra.mxu0 %v972
        %1497 = vmatprep.subr.mxu0 %v969
        %1498 = vmatpush2.msra.mxu0 %v968
        %1499 = vmatprep.subr.mxu0 %v965
        %1500 = vmatpush2.msra.mxu0 %v964
        %1501 = vmatprep.subr.mxu0 %v961
        %1502 = vmatpush2.msra.mxu0 %v960
        %1503 = vmatprep.subr.mxu0 %v957
        %1504 = vmatpush2.msra.mxu0 %v956
        %1505 = vmatprep.subr.mxu0 %v953
        %1506 = vmatpush2.msra.mxu0 %v952
        %1507 = vmatprep.subr.mxu0 %v949
        %1508 = vmatpush2.msra.mxu0 %v948
        %1509 = vmatprep.subr.mxu0 %v945
        %1510 = vmatpush2.msra.mxu0 %v944
        %1511 = vmatprep.mubr.f32.mxu0 %v627
        %1512 = vmatmul.mubr.f32.gmra.mxu0 %v626
        %v1513 = vpop.f32.mrf.mxu0
        %v1514 = vadd.f32 %v1353, %v1513
        %v1515 = vpop.f32.mrf.mxu0
        %v1516 = vadd.f32 %v1355, %v1515
        %1517 = vmatprep.mubr.f32.mxu0 %v635
        %1518 = vmatmul.mubr.f32.gmra.mxu0 %v634
        %v1519 = vpop.f32.mrf.mxu0
        %v1520 = vadd.f32 %v1359, %v1519
        %v1521 = vpop.f32.mrf.mxu0
        %v1522 = vadd.f32 %v1361, %v1521
        %1523 = vmatprep.mubr.f32.mxu0 %v643
        %1524 = vmatmul.mubr.f32.gmra.mxu0 %v642
        %v1525 = vpop.f32.mrf.mxu0
        %v1526 = vadd.f32 %v1365, %v1525
        %v1527 = vpop.f32.mrf.mxu0
        %v1528 = vadd.f32 %v1367, %v1527
        %1529 = vmatprep.mubr.f32.mxu0 %v651
        %1530 = vmatmul.mubr.f32.gmra.mxu0 %v650
        %v1531 = vpop.f32.mrf.mxu0
        %v1532 = vadd.f32 %v1371, %v1531
        %v1533 = vpop.f32.mrf.mxu0
        %v1534 = vadd.f32 %v1373, %v1533
        %1535 = vmatprep.mubr.f32.mxu0 %v659
        %1536 = vmatmul.mubr.f32.gmra.mxu0 %v658
        %v1537 = vpop.f32.mrf.mxu0
        %v1538 = vadd.f32 %v1377, %v1537
        %v1539 = vpop.f32.mrf.mxu0
        %v1540 = vadd.f32 %v1379, %v1539
        %1541 = vmatprep.mubr.f32.mxu0 %v667
        %1542 = vmatmul.mubr.f32.gmra.mxu0 %v666
        %v1543 = vpop.f32.mrf.mxu0
        %v1544 = vadd.f32 %v1383, %v1543
        %v1545 = vpop.f32.mrf.mxu0
        %v1546 = vadd.f32 %v1385, %v1545
        %1547 = vmatprep.mubr.f32.mxu0 %v675
        %1548 = vmatmul.mubr.f32.gmra.mxu0 %v674
        %v1549 = vpop.f32.mrf.mxu0
        %v1550 = vadd.f32 %v1389, %v1549
        %v1551 = vpop.f32.mrf.mxu0
        %v1552 = vadd.f32 %v1391, %v1551
        %1553 = vmatprep.mubr.f32.mxu0 %v683
        %1554 = vmatmul.mubr.f32.gmra.mxu0 %v682
        %v1555 = vpop.f32.mrf.mxu0
        %v1556 = vadd.f32 %v1395, %v1555
        %v1557 = vpop.f32.mrf.mxu0
        %v1558 = vadd.f32 %v1397, %v1557
        %1559 = vmatprep.mubr.f32.mxu0 %v691
        %1560 = vmatmul.mubr.f32.gmra.mxu0 %v690
        %v1561 = vpop.f32.mrf.mxu0
        %v1562 = vadd.f32 %v1401, %v1561
        %v1563 = vpop.f32.mrf.mxu0
        %v1564 = vadd.f32 %v1403, %v1563
        %1565 = vmatprep.mubr.f32.mxu0 %v699
        %1566 = vmatmul.mubr.f32.gmra.mxu0 %v698
        %v1567 = vpop.f32.mrf.mxu0
        %v1568 = vadd.f32 %v1407, %v1567
        %v1569 = vpop.f32.mrf.mxu0
        %v1570 = vadd.f32 %v1409, %v1569
        %1571 = vmatprep.mubr.f32.mxu0 %v707
        %1572 = vmatmul.mubr.f32.gmra.mxu0 %v706
        %v1573 = vpop.f32.mrf.mxu0
        %v1574 = vadd.f32 %v1413, %v1573
        %v1575 = vpop.f32.mrf.mxu0
        %v1576 = vadd.f32 %v1415, %v1575
        %1577 = vmatprep.mubr.f32.mxu0 %v715
        %1578 = vmatmul.mubr.f32.gmra.mxu0 %v714
        %v1579 = vpop.f32.mrf.mxu0
        %v1580 = vadd.f32 %v1419, %v1579
        %v1581 = vpop.f32.mrf.mxu0
        %v1582 = vadd.f32 %v1421, %v1581
        %1583 = vmatprep.mubr.f32.mxu0 %v723
        %1584 = vmatmul.mubr.f32.gmra.mxu0 %v722
        %v1585 = vpop.f32.mrf.mxu0
        %v1586 = vadd.f32 %v1425, %v1585
        %v1587 = vpop.f32.mrf.mxu0
        %v1588 = vadd.f32 %v1427, %v1587
        %1589 = vmatprep.mubr.f32.mxu0 %v731
        %1590 = vmatmul.mubr.f32.gmra.mxu0 %v730
        %v1591 = vpop.f32.mrf.mxu0
        %v1592 = vadd.f32 %v1431, %v1591
        %v1593 = vpop.f32.mrf.mxu0
        %v1594 = vadd.f32 %v1433, %v1593
        %1595 = vmatprep.mubr.f32.mxu0 %v739
        %1596 = vmatmul.mubr.f32.gmra.mxu0 %v738
        %v1597 = vpop.f32.mrf.mxu0
        %v1598 = vadd.f32 %v1437, %v1597
        %v1599 = vpop.f32.mrf.mxu0
        %v1600 = vadd.f32 %v1439, %v1599
        %1601 = vmatprep.mubr.f32.mxu0 %v747
        %1602 = vmatmul.mubr.f32.gmra.mxu0 %v746
        %v1603 = vpop.f32.mrf.mxu0
        %v1604 = vadd.f32 %v1443, %v1603
        %v1605 = vpop.f32.mrf.mxu0
        %v1606 = vadd.f32 %v1445, %v1605
        %1607 = vdwg.mxu0
        %1608 = vmatprep.subr.mxu0 %v1069
        %1609 = vmatpush1.msra.mxu0 %v1068
        %1610 = vmatprep.subr.mxu0 %v1065
        %1611 = vmatpush1.msra.mxu0 %v1064
        %1612 = vmatprep.subr.mxu0 %v1061
        %1613 = vmatpush1.msra.mxu0 %v1060
        %1614 = vmatprep.subr.mxu0 %v1057
        %1615 = vmatpush1.msra.mxu0 %v1056
        %1616 = vmatprep.subr.mxu0 %v1053
        %1617 = vmatpush1.msra.mxu0 %v1052
        %1618 = vmatprep.subr.mxu0 %v1049
        %1619 = vmatpush1.msra.mxu0 %v1048
        %1620 = vmatprep.subr.mxu0 %v1045
        %1621 = vmatpush1.msra.mxu0 %v1044
        %1622 = vmatprep.subr.mxu0 %v1041
        %1623 = vmatpush1.msra.mxu0 %v1040
        %1624 = vmatprep.subr.mxu0 %v1037
        %1625 = vmatpush1.msra.mxu0 %v1036
        %1626 = vmatprep.subr.mxu0 %v1033
        %1627 = vmatpush1.msra.mxu0 %v1032
        %1628 = vmatprep.subr.mxu0 %v1029
        %1629 = vmatpush1.msra.mxu0 %v1028
        %1630 = vmatprep.subr.mxu0 %v1025
        %1631 = vmatpush1.msra.mxu0 %v1024
        %1632 = vmatprep.subr.mxu0 %v1021
        %1633 = vmatpush1.msra.mxu0 %v1020
        %1634 = vmatprep.subr.mxu0 %v1017
        %1635 = vmatpush1.msra.mxu0 %v1016
        %1636 = vmatprep.subr.mxu0 %v1013
        %1637 = vmatpush1.msra.mxu0 %v1012
        %1638 = vmatprep.subr.mxu0 %v1009
        %1639 = vmatpush1.msra.mxu0 %v1008
        %1640 = vmatprep.subr.mxu0 %v1133
        %1641 = vmatpush2.msra.mxu0 %v1132
        %1642 = vmatprep.subr.mxu0 %v1129
        %1643 = vmatpush2.msra.mxu0 %v1128
        %1644 = vmatprep.subr.mxu0 %v1125
        %1645 = vmatpush2.msra.mxu0 %v1124
        %1646 = vmatprep.subr.mxu0 %v1121
        %1647 = vmatpush2.msra.mxu0 %v1120
        %1648 = vmatprep.subr.mxu0 %v1117
        %1649 = vmatpush2.msra.mxu0 %v1116
        %1650 = vmatprep.subr.mxu0 %v1113
        %1651 = vmatpush2.msra.mxu0 %v1112
        %1652 = vmatprep.subr.mxu0 %v1109
        %1653 = vmatpush2.msra.mxu0 %v1108
        %1654 = vmatprep.subr.mxu0 %v1105
        %1655 = vmatpush2.msra.mxu0 %v1104
        %1656 = vmatprep.subr.mxu0 %v1101
        %1657 = vmatpush2.msra.mxu0 %v1100
        %1658 = vmatprep.subr.mxu0 %v1097
        %1659 = vmatpush2.msra.mxu0 %v1096
        %1660 = vmatprep.subr.mxu0 %v1093
        %1661 = vmatpush2.msra.mxu0 %v1092
        %1662 = vmatprep.subr.mxu0 %v1089
        %1663 = vmatpush2.msra.mxu0 %v1088
        %1664 = vmatprep.subr.mxu0 %v1085
        %1665 = vmatpush2.msra.mxu0 %v1084
        %1666 = vmatprep.subr.mxu0 %v1081
        %1667 = vmatpush2.msra.mxu0 %v1080
        %1668 = vmatprep.subr.mxu0 %v1077
        %1669 = vmatpush2.msra.mxu0 %v1076
        %1670 = vmatprep.subr.mxu0 %v1073
        %1671 = vmatpush2.msra.mxu0 %v1072
        %1672 = vmatprep.mubr.f32.mxu0 %v629
        %1673 = vmatmul.mubr.f32.gmra.mxu0 %v628
        %v1674 = vpop.f32.mrf.mxu0
        %v1675 = vadd.f32 %v1514, %v1674
        %v1676 = vpop.f32.mrf.mxu0
        %v1677 = vadd.f32 %v1516, %v1676
        %1678 = vmatprep.mubr.f32.mxu0 %v637
        %1679 = vmatmul.mubr.f32.gmra.mxu0 %v636
        %v1680 = vpop.f32.mrf.mxu0
        %v1681 = vadd.f32 %v1520, %v1680
        %v1682 = vpop.f32.mrf.mxu0
        %v1683 = vadd.f32 %v1522, %v1682
        %1684 = vmatprep.mubr.f32.mxu0 %v645
        %1685 = vmatmul.mubr.f32.gmra.mxu0 %v644
        %v1686 = vpop.f32.mrf.mxu0
        %v1687 = vadd.f32 %v1526, %v1686
        %v1688 = vpop.f32.mrf.mxu0
        %v1689 = vadd.f32 %v1528, %v1688
        %1690 = vmatprep.mubr.f32.mxu0 %v653
        %1691 = vmatmul.mubr.f32.gmra.mxu0 %v652
        %v1692 = vpop.f32.mrf.mxu0
        %v1693 = vadd.f32 %v1532, %v1692
        %v1694 = vpop.f32.mrf.mxu0
        %v1695 = vadd.f32 %v1534, %v1694
        %1696 = vmatprep.mubr.f32.mxu0 %v661
        %1697 = vmatmul.mubr.f32.gmra.mxu0 %v660
        %v1698 = vpop.f32.mrf.mxu0
        %v1699 = vadd.f32 %v1538, %v1698
        %v1700 = vpop.f32.mrf.mxu0
        %v1701 = vadd.f32 %v1540, %v1700
        %1702 = vmatprep.mubr.f32.mxu0 %v669
        %1703 = vmatmul.mubr.f32.gmra.mxu0 %v668
        %v1704 = vpop.f32.mrf.mxu0
        %v1705 = vadd.f32 %v1544, %v1704
        %v1706 = vpop.f32.mrf.mxu0
        %v1707 = vadd.f32 %v1546, %v1706
        %1708 = vmatprep.mubr.f32.mxu0 %v677
        %1709 = vmatmul.mubr.f32.gmra.mxu0 %v676
        %v1710 = vpop.f32.mrf.mxu0
        %v1711 = vadd.f32 %v1550, %v1710
        %v1712 = vpop.f32.mrf.mxu0
        %v1713 = vadd.f32 %v1552, %v1712
        %1714 = vmatprep.mubr.f32.mxu0 %v685
        %1715 = vmatmul.mubr.f32.gmra.mxu0 %v684
        %v1716 = vpop.f32.mrf.mxu0
        %v1717 = vadd.f32 %v1556, %v1716
        %v1718 = vpop.f32.mrf.mxu0
        %v1719 = vadd.f32 %v1558, %v1718
        %1720 = vmatprep.mubr.f32.mxu0 %v693
        %1721 = vmatmul.mubr.f32.gmra.mxu0 %v692
        %v1722 = vpop.f32.mrf.mxu0
        %v1723 = vadd.f32 %v1562, %v1722
        %v1724 = vpop.f32.mrf.mxu0
        %v1725 = vadd.f32 %v1564, %v1724
        %1726 = vmatprep.mubr.f32.mxu0 %v701
        %1727 = vmatmul.mubr.f32.gmra.mxu0 %v700
        %v1728 = vpop.f32.mrf.mxu0
        %v1729 = vadd.f32 %v1568, %v1728
        %v1730 = vpop.f32.mrf.mxu0
        %v1731 = vadd.f32 %v1570, %v1730
        %1732 = vmatprep.mubr.f32.mxu0 %v709
        %1733 = vmatmul.mubr.f32.gmra.mxu0 %v708
        %v1734 = vpop.f32.mrf.mxu0
        %v1735 = vadd.f32 %v1574, %v1734
        %v1736 = vpop.f32.mrf.mxu0
        %v1737 = vadd.f32 %v1576, %v1736
        %1738 = vmatprep.mubr.f32.mxu0 %v717
        %1739 = vmatmul.mubr.f32.gmra.mxu0 %v716
        %v1740 = vpop.f32.mrf.mxu0
        %v1741 = vadd.f32 %v1580, %v1740
        %v1742 = vpop.f32.mrf.mxu0
        %v1743 = vadd.f32 %v1582, %v1742
        %1744 = vmatprep.mubr.f32.mxu0 %v725
        %1745 = vmatmul.mubr.f32.gmra.mxu0 %v724
        %v1746 = vpop.f32.mrf.mxu0
        %v1747 = vadd.f32 %v1586, %v1746
        %v1748 = vpop.f32.mrf.mxu0
        %v1749 = vadd.f32 %v1588, %v1748
        %1750 = vmatprep.mubr.f32.mxu0 %v733
        %1751 = vmatmul.mubr.f32.gmra.mxu0 %v732
        %v1752 = vpop.f32.mrf.mxu0
        %v1753 = vadd.f32 %v1592, %v1752
        %v1754 = vpop.f32.mrf.mxu0
        %v1755 = vadd.f32 %v1594, %v1754
        %1756 = vmatprep.mubr.f32.mxu0 %v741
        %1757 = vmatmul.mubr.f32.gmra.mxu0 %v740
        %v1758 = vpop.f32.mrf.mxu0
        %v1759 = vadd.f32 %v1598, %v1758
        %v1760 = vpop.f32.mrf.mxu0
        %v1761 = vadd.f32 %v1600, %v1760
        %1762 = vmatprep.mubr.f32.mxu0 %v749
        %1763 = vmatmul.mubr.f32.gmra.mxu0 %v748
        %v1764 = vpop.f32.mrf.mxu0
        %v1765 = vadd.f32 %v1604, %v1764
        %v1766 = vpop.f32.mrf.mxu0
        %v1767 = vadd.f32 %v1606, %v1766
        %1768 = vdwg.mxu0
        %1769 = vmatprep.subr.mxu0 %v1197
        %1770 = vmatpush1.msra.mxu0 %v1196
        %1771 = vmatprep.subr.mxu0 %v1193
        %1772 = vmatpush1.msra.mxu0 %v1192
        %1773 = vmatprep.subr.mxu0 %v1189
        %1774 = vmatpush1.msra.mxu0 %v1188
        %1775 = vmatprep.subr.mxu0 %v1185
        %1776 = vmatpush1.msra.mxu0 %v1184
        %1777 = vmatprep.subr.mxu0 %v1181
        %1778 = vmatpush1.msra.mxu0 %v1180
        %1779 = vmatprep.subr.mxu0 %v1177
        %1780 = vmatpush1.msra.mxu0 %v1176
        %1781 = vmatprep.subr.mxu0 %v1173
        %1782 = vmatpush1.msra.mxu0 %v1172
        %1783 = vmatprep.subr.mxu0 %v1169
        %1784 = vmatpush1.msra.mxu0 %v1168
        %1785 = vmatprep.subr.mxu0 %v1165
        %1786 = vmatpush1.msra.mxu0 %v1164
        %1787 = vmatprep.subr.mxu0 %v1161
        %1788 = vmatpush1.msra.mxu0 %v1160
        %1789 = vmatprep.subr.mxu0 %v1157
        %1790 = vmatpush1.msra.mxu0 %v1156
        %1791 = vmatprep.subr.mxu0 %v1153
        %1792 = vmatpush1.msra.mxu0 %v1152
        %1793 = vmatprep.subr.mxu0 %v1149
        %1794 = vmatpush1.msra.mxu0 %v1148
        %1795 = vmatprep.subr.mxu0 %v1145
        %1796 = vmatpush1.msra.mxu0 %v1144
        %1797 = vmatprep.subr.mxu0 %v1141
        %1798 = vmatpush1.msra.mxu0 %v1140
        %1799 = vmatprep.subr.mxu0 %v1137
        %1800 = vmatpush1.msra.mxu0 %v1136
        %1801 = vmatprep.subr.mxu0 %v1261
        %1802 = vmatpush2.msra.mxu0 %v1260
        %1803 = vmatprep.subr.mxu0 %v1257
        %1804 = vmatpush2.msra.mxu0 %v1256
        %1805 = vmatprep.subr.mxu0 %v1253
        %1806 = vmatpush2.msra.mxu0 %v1252
        %1807 = vmatprep.subr.mxu0 %v1249
        %1808 = vmatpush2.msra.mxu0 %v1248
        %1809 = vmatprep.subr.mxu0 %v1245
        %1810 = vmatpush2.msra.mxu0 %v1244
        %1811 = vmatprep.subr.mxu0 %v1241
        %1812 = vmatpush2.msra.mxu0 %v1240
        %1813 = vmatprep.subr.mxu0 %v1237
        %1814 = vmatpush2.msra.mxu0 %v1236
        %1815 = vmatprep.subr.mxu0 %v1233
        %1816 = vmatpush2.msra.mxu0 %v1232
        %1817 = vmatprep.subr.mxu0 %v1229
        %1818 = vmatpush2.msra.mxu0 %v1228
        %1819 = vmatprep.subr.mxu0 %v1225
        %1820 = vmatpush2.msra.mxu0 %v1224
        %1821 = vmatprep.subr.mxu0 %v1221
        %1822 = vmatpush2.msra.mxu0 %v1220
        %1823 = vmatprep.subr.mxu0 %v1217
        %1824 = vmatpush2.msra.mxu0 %v1216
        %1825 = vmatprep.subr.mxu0 %v1213
        %1826 = vmatpush2.msra.mxu0 %v1212
        %1827 = vmatprep.subr.mxu0 %v1209
        %1828 = vmatpush2.msra.mxu0 %v1208
        %1829 = vmatprep.subr.mxu0 %v1205
        %1830 = vmatpush2.msra.mxu0 %v1204
        %1831 = vmatprep.subr.mxu0 %v1201
        %1832 = vmatpush2.msra.mxu0 %v1200
        %1833 = vmatprep.mubr.f32.mxu0 %v631
        %1834 = vmatmul.mubr.f32.gmra.mxu0 %v630
        %v1835 = vpop.f32.mrf.mxu0
        %v1836 = vadd.f32 %v1675, %v1835
        %v1837 = vpop.f32.mrf.mxu0
        %v1838 = vadd.f32 %v1677, %v1837
        %1839 = vmatprep.mubr.f32.mxu0 %v639
        %1840 = vmatmul.mubr.f32.gmra.mxu0 %v638
        %v1841 = vpop.f32.mrf.mxu0
        %v1842 = vadd.f32 %v1681, %v1841
        %v1843 = vpop.f32.mrf.mxu0
        %v1844 = vadd.f32 %v1683, %v1843
        %1845 = vmatprep.mubr.f32.mxu0 %v647
        %1846 = vmatmul.mubr.f32.gmra.mxu0 %v646
        %v1847 = vpop.f32.mrf.mxu0
        %v1848 = vadd.f32 %v1687, %v1847
        %v1849 = vpop.f32.mrf.mxu0
        %v1850 = vadd.f32 %v1689, %v1849
        %1851 = vmatprep.mubr.f32.mxu0 %v655
        %1852 = vmatmul.mubr.f32.gmra.mxu0 %v654
        %v1853 = vpop.f32.mrf.mxu0
        %v1854 = vadd.f32 %v1693, %v1853
        %v1855 = vpop.f32.mrf.mxu0
        %v1856 = vadd.f32 %v1695, %v1855
        %1857 = vmatprep.mubr.f32.mxu0 %v663
        %1858 = vmatmul.mubr.f32.gmra.mxu0 %v662
        %v1859 = vpop.f32.mrf.mxu0
        %v1860 = vadd.f32 %v1699, %v1859
        %v1861 = vpop.f32.mrf.mxu0
        %v1862 = vadd.f32 %v1701, %v1861
        %1863 = vmatprep.mubr.f32.mxu0 %v671
        %1864 = vmatmul.mubr.f32.gmra.mxu0 %v670
        %v1865 = vpop.f32.mrf.mxu0
        %v1866 = vadd.f32 %v1705, %v1865
        %v1867 = vpop.f32.mrf.mxu0
        %v1868 = vadd.f32 %v1707, %v1867
        %1869 = vmatprep.mubr.f32.mxu0 %v679
        %1870 = vmatmul.mubr.f32.gmra.mxu0 %v678
        %v1871 = vpop.f32.mrf.mxu0
        %v1872 = vadd.f32 %v1711, %v1871
        %v1873 = vpop.f32.mrf.mxu0
        %v1874 = vadd.f32 %v1713, %v1873
        %1875 = vmatprep.mubr.f32.mxu0 %v687
        %1876 = vmatmul.mubr.f32.gmra.mxu0 %v686
        %v1877 = vpop.f32.mrf.mxu0
        %v1878 = vadd.f32 %v1717, %v1877
        %v1879 = vpop.f32.mrf.mxu0
        %v1880 = vadd.f32 %v1719, %v1879
        %1881 = vmatprep.mubr.f32.mxu0 %v695
        %1882 = vmatmul.mubr.f32.gmra.mxu0 %v694
        %v1883 = vpop.f32.mrf.mxu0
        %v1884 = vadd.f32 %v1723, %v1883
        %v1885 = vpop.f32.mrf.mxu0
        %v1886 = vadd.f32 %v1725, %v1885
        %1887 = vmatprep.mubr.f32.mxu0 %v703
        %1888 = vmatmul.mubr.f32.gmra.mxu0 %v702
        %v1889 = vpop.f32.mrf.mxu0
        %v1890 = vadd.f32 %v1729, %v1889
        %v1891 = vpop.f32.mrf.mxu0
        %v1892 = vadd.f32 %v1731, %v1891
        %1893 = vmatprep.mubr.f32.mxu0 %v711
        %1894 = vmatmul.mubr.f32.gmra.mxu0 %v710
        %v1895 = vpop.f32.mrf.mxu0
        %v1896 = vadd.f32 %v1735, %v1895
        %v1897 = vpop.f32.mrf.mxu0
        %v1898 = vadd.f32 %v1737, %v1897
        %1899 = vmatprep.mubr.f32.mxu0 %v719
        %1900 = vmatmul.mubr.f32.gmra.mxu0 %v718
        %v1901 = vpop.f32.mrf.mxu0
        %v1902 = vadd.f32 %v1741, %v1901
        %v1903 = vpop.f32.mrf.mxu0
        %v1904 = vadd.f32 %v1743, %v1903
        %1905 = vmatprep.mubr.f32.mxu0 %v727
        %1906 = vmatmul.mubr.f32.gmra.mxu0 %v726
        %v1907 = vpop.f32.mrf.mxu0
        %v1908 = vadd.f32 %v1747, %v1907
        %v1909 = vpop.f32.mrf.mxu0
        %v1910 = vadd.f32 %v1749, %v1909
        %1911 = vmatprep.mubr.f32.mxu0 %v735
        %1912 = vmatmul.mubr.f32.gmra.mxu0 %v734
        %v1913 = vpop.f32.mrf.mxu0
        %v1914 = vadd.f32 %v1753, %v1913
        %v1915 = vpop.f32.mrf.mxu0
        %v1916 = vadd.f32 %v1755, %v1915
        %1917 = vmatprep.mubr.f32.mxu0 %v743
        %1918 = vmatmul.mubr.f32.gmra.mxu0 %v742
        %v1919 = vpop.f32.mrf.mxu0
        %v1920 = vadd.f32 %v1759, %v1919
        %v1921 = vpop.f32.mrf.mxu0
        %v1922 = vadd.f32 %v1761, %v1921
        %1923 = vmatprep.mubr.f32.mxu0 %v751
        %1924 = vmatmul.mubr.f32.gmra.mxu0 %v750
        %v1925 = vpop.f32.mrf.mxu0
        %v1926 = vadd.f32 %v1765, %v1925
        %v1927 = vpop.f32.mrf.mxu0
        %v1928 = vadd.f32 %v1767, %v1927
        %1929 = vdwg.mxu0
        %1930 = vmatprep.subr.mxu0 %v815
        %1931 = vmatpush1.msra.mxu0 %v814
        %1932 = vmatprep.subr.mxu0 %v811
        %1933 = vmatpush1.msra.mxu0 %v810
        %1934 = vmatprep.subr.mxu0 %v807
        %1935 = vmatpush1.msra.mxu0 %v806
        %1936 = vmatprep.subr.mxu0 %v803
        %1937 = vmatpush1.msra.mxu0 %v802
        %1938 = vmatprep.subr.mxu0 %v799
        %1939 = vmatpush1.msra.mxu0 %v798
        %1940 = vmatprep.subr.mxu0 %v795
        %1941 = vmatpush1.msra.mxu0 %v794
        %1942 = vmatprep.subr.mxu0 %v791
        %1943 = vmatpush1.msra.mxu0 %v790
        %1944 = vmatprep.subr.mxu0 %v787
        %1945 = vmatpush1.msra.mxu0 %v786
        %1946 = vmatprep.subr.mxu0 %v783
        %1947 = vmatpush1.msra.mxu0 %v782
        %1948 = vmatprep.subr.mxu0 %v779
        %1949 = vmatpush1.msra.mxu0 %v778
        %1950 = vmatprep.subr.mxu0 %v775
        %1951 = vmatpush1.msra.mxu0 %v774
        %1952 = vmatprep.subr.mxu0 %v771
        %1953 = vmatpush1.msra.mxu0 %v770
        %1954 = vmatprep.subr.mxu0 %v767
        %1955 = vmatpush1.msra.mxu0 %v766
        %1956 = vmatprep.subr.mxu0 %v763
        %1957 = vmatpush1.msra.mxu0 %v762
        %1958 = vmatprep.subr.mxu0 %v759
        %1959 = vmatpush1.msra.mxu0 %v758
        %1960 = vmatprep.subr.mxu0 %v755
        %1961 = vmatpush1.msra.mxu0 %v754
        %1962 = vmatprep.subr.mxu0 %v879
        %1963 = vmatpush2.msra.mxu0 %v878
        %1964 = vmatprep.subr.mxu0 %v875
        %1965 = vmatpush2.msra.mxu0 %v874
        %1966 = vmatprep.subr.mxu0 %v871
        %1967 = vmatpush2.msra.mxu0 %v870
        %1968 = vmatprep.subr.mxu0 %v867
        %1969 = vmatpush2.msra.mxu0 %v866
        %1970 = vmatprep.subr.mxu0 %v863
        %1971 = vmatpush2.msra.mxu0 %v862
        %1972 = vmatprep.subr.mxu0 %v859
        %1973 = vmatpush2.msra.mxu0 %v858
        %1974 = vmatprep.subr.mxu0 %v855
        %1975 = vmatpush2.msra.mxu0 %v854
        %1976 = vmatprep.subr.mxu0 %v851
        %1977 = vmatpush2.msra.mxu0 %v850
        %1978 = vmatprep.subr.mxu0 %v847
        %1979 = vmatpush2.msra.mxu0 %v846
        %1980 = vmatprep.subr.mxu0 %v843
        %1981 = vmatpush2.msra.mxu0 %v842
        %1982 = vmatprep.subr.mxu0 %v839
        %1983 = vmatpush2.msra.mxu0 %v838
        %1984 = vmatprep.subr.mxu0 %v835
        %1985 = vmatpush2.msra.mxu0 %v834
        %1986 = vmatprep.subr.mxu0 %v831
        %1987 = vmatpush2.msra.mxu0 %v830
        %1988 = vmatprep.subr.mxu0 %v827
        %1989 = vmatpush2.msra.mxu0 %v826
        %1990 = vmatprep.subr.mxu0 %v823
        %1991 = vmatpush2.msra.mxu0 %v822
        %1992 = vmatprep.subr.mxu0 %v819
        %1993 = vmatpush2.msra.mxu0 %v818
        %1994 = vmatprep.mubr.f32.mxu0 %v625
        %1995 = vmatmul.mubr.f32.gmra.mxu0 %v624
        %v1996 = vpop.f32.mrf.mxu0
        %v1997 = vadd.f32 %v1277, %v1996
        %v1998 = vpop.f32.mrf.mxu0
        %v1999 = vadd.f32 %v1281, %v1998
        %2000 = vmatprep.mubr.f32.mxu0 %v633
        %2001 = vmatmul.mubr.f32.gmra.mxu0 %v632
        %v2002 = vpop.f32.mrf.mxu0
        %v2003 = vadd.f32 %v1277, %v2002
        %v2004 = vpop.f32.mrf.mxu0
        %v2005 = vadd.f32 %v1281, %v2004
        %2006 = vmatprep.mubr.f32.mxu0 %v641
        %2007 = vmatmul.mubr.f32.gmra.mxu0 %v640
        %v2008 = vpop.f32.mrf.mxu0
        %v2009 = vadd.f32 %v1277, %v2008
        %v2010 = vpop.f32.mrf.mxu0
        %v2011 = vadd.f32 %v1281, %v2010
        %2012 = vmatprep.mubr.f32.mxu0 %v649
        %2013 = vmatmul.mubr.f32.gmra.mxu0 %v648
        %v2014 = vpop.f32.mrf.mxu0
        %v2015 = vadd.f32 %v1277, %v2014
        %v2016 = vpop.f32.mrf.mxu0
        %v2017 = vadd.f32 %v1281, %v2016
        %2018 = vmatprep.mubr.f32.mxu0 %v657
        %2019 = vmatmul.mubr.f32.gmra.mxu0 %v656
        %v2020 = vpop.f32.mrf.mxu0
        %v2021 = vadd.f32 %v1277, %v2020
        %v2022 = vpop.f32.mrf.mxu0
        %v2023 = vadd.f32 %v1281, %v2022
        %2024 = vmatprep.mubr.f32.mxu0 %v665
        %2025 = vmatmul.mubr.f32.gmra.mxu0 %v664
        %v2026 = vpop.f32.mrf.mxu0
        %v2027 = vadd.f32 %v1277, %v2026
        %v2028 = vpop.f32.mrf.mxu0
        %v2029 = vadd.f32 %v1281, %v2028
        %2030 = vmatprep.mubr.f32.mxu0 %v673
        %2031 = vmatmul.mubr.f32.gmra.mxu0 %v672
        %v2032 = vpop.f32.mrf.mxu0
        %v2033 = vadd.f32 %v1277, %v2032
        %v2034 = vpop.f32.mrf.mxu0
        %v2035 = vadd.f32 %v1281, %v2034
        %2036 = vmatprep.mubr.f32.mxu0 %v681
        %2037 = vmatmul.mubr.f32.gmra.mxu0 %v680
        %v2038 = vpop.f32.mrf.mxu0
        %v2039 = vadd.f32 %v1277, %v2038
        %v2040 = vpop.f32.mrf.mxu0
        %v2041 = vadd.f32 %v1281, %v2040
        %2042 = vmatprep.mubr.f32.mxu0 %v689
        %2043 = vmatmul.mubr.f32.gmra.mxu0 %v688
        %v2044 = vpop.f32.mrf.mxu0
        %v2045 = vadd.f32 %v1277, %v2044
        %v2046 = vpop.f32.mrf.mxu0
        %v2047 = vadd.f32 %v1281, %v2046
        %2048 = vmatprep.mubr.f32.mxu0 %v697
        %2049 = vmatmul.mubr.f32.gmra.mxu0 %v696
        %v2050 = vpop.f32.mrf.mxu0
        %v2051 = vadd.f32 %v1277, %v2050
        %v2052 = vpop.f32.mrf.mxu0
        %v2053 = vadd.f32 %v1281, %v2052
        %2054 = vmatprep.mubr.f32.mxu0 %v705
        %2055 = vmatmul.mubr.f32.gmra.mxu0 %v704
        %v2056 = vpop.f32.mrf.mxu0
        %v2057 = vadd.f32 %v1277, %v2056
        %v2058 = vpop.f32.mrf.mxu0
        %v2059 = vadd.f32 %v1281, %v2058
        %2060 = vmatprep.mubr.f32.mxu0 %v713
        %2061 = vmatmul.mubr.f32.gmra.mxu0 %v712
        %v2062 = vpop.f32.mrf.mxu0
        %v2063 = vadd.f32 %v1277, %v2062
        %v2064 = vpop.f32.mrf.mxu0
        %v2065 = vadd.f32 %v1281, %v2064
        %2066 = vmatprep.mubr.f32.mxu0 %v721
        %2067 = vmatmul.mubr.f32.gmra.mxu0 %v720
        %v2068 = vpop.f32.mrf.mxu0
        %v2069 = vadd.f32 %v1277, %v2068
        %v2070 = vpop.f32.mrf.mxu0
        %v2071 = vadd.f32 %v1281, %v2070
        %2072 = vmatprep.mubr.f32.mxu0 %v729
        %2073 = vmatmul.mubr.f32.gmra.mxu0 %v728
        %v2074 = vpop.f32.mrf.mxu0
        %v2075 = vadd.f32 %v1277, %v2074
        %v2076 = vpop.f32.mrf.mxu0
        %v2077 = vadd.f32 %v1281, %v2076
        %2078 = vmatprep.mubr.f32.mxu0 %v737
        %2079 = vmatmul.mubr.f32.gmra.mxu0 %v736
        %v2080 = vpop.f32.mrf.mxu0
        %v2081 = vadd.f32 %v1277, %v2080
        %v2082 = vpop.f32.mrf.mxu0
        %v2083 = vadd.f32 %v1281, %v2082
        %2084 = vmatprep.mubr.f32.mxu0 %v745
        %2085 = vmatmul.mubr.f32.gmra.mxu0 %v744
        %v2086 = vpop.f32.mrf.mxu0
        %v2087 = vadd.f32 %v1277, %v2086
        %v2088 = vpop.f32.mrf.mxu0
        %v2089 = vadd.f32 %v1281, %v2088
        %2090 = vdwg.mxu0
        %2091 = vmatprep.subr.mxu0 %v943
        %2092 = vmatpush1.msra.mxu0 %v942
        %2093 = vmatprep.subr.mxu0 %v939
        %2094 = vmatpush1.msra.mxu0 %v938
        %2095 = vmatprep.subr.mxu0 %v935
        %2096 = vmatpush1.msra.mxu0 %v934
        %2097 = vmatprep.subr.mxu0 %v931
        %2098 = vmatpush1.msra.mxu0 %v930
        %2099 = vmatprep.subr.mxu0 %v927
        %2100 = vmatpush1.msra.mxu0 %v926
        %2101 = vmatprep.subr.mxu0 %v923
        %2102 = vmatpush1.msra.mxu0 %v922
        %2103 = vmatprep.subr.mxu0 %v919
        %2104 = vmatpush1.msra.mxu0 %v918
        %2105 = vmatprep.subr.mxu0 %v915
        %2106 = vmatpush1.msra.mxu0 %v914
        %2107 = vmatprep.subr.mxu0 %v911
        %2108 = vmatpush1.msra.mxu0 %v910
        %2109 = vmatprep.subr.mxu0 %v907
        %2110 = vmatpush1.msra.mxu0 %v906
        %2111 = vmatprep.subr.mxu0 %v903
        %2112 = vmatpush1.msra.mxu0 %v902
        %2113 = vmatprep.subr.mxu0 %v899
        %2114 = vmatpush1.msra.mxu0 %v898
        %2115 = vmatprep.subr.mxu0 %v895
        %2116 = vmatpush1.msra.mxu0 %v894
        %2117 = vmatprep.subr.mxu0 %v891
        %2118 = vmatpush1.msra.mxu0 %v890
        %2119 = vmatprep.subr.mxu0 %v887
        %2120 = vmatpush1.msra.mxu0 %v886
        %2121 = vmatprep.subr.mxu0 %v883
        %2122 = vmatpush1.msra.mxu0 %v882
        %2123 = vmatprep.subr.mxu0 %v1007
        %2124 = vmatpush2.msra.mxu0 %v1006
        %2125 = vmatprep.subr.mxu0 %v1003
        %2126 = vmatpush2.msra.mxu0 %v1002
        %2127 = vmatprep.subr.mxu0 %v999
        %2128 = vmatpush2.msra.mxu0 %v998
        %2129 = vmatprep.subr.mxu0 %v995
        %2130 = vmatpush2.msra.mxu0 %v994
        %2131 = vmatprep.subr.mxu0 %v991
        %2132 = vmatpush2.msra.mxu0 %v990
        %2133 = vmatprep.subr.mxu0 %v987
        %2134 = vmatpush2.msra.mxu0 %v986
        %2135 = vmatprep.subr.mxu0 %v983
        %2136 = vmatpush2.msra.mxu0 %v982
        %2137 = vmatprep.subr.mxu0 %v979
        %2138 = vmatpush2.msra.mxu0 %v978
        %2139 = vmatprep.subr.mxu0 %v975
        %2140 = vmatpush2.msra.mxu0 %v974
        %2141 = vmatprep.subr.mxu0 %v971
        %2142 = vmatpush2.msra.mxu0 %v970
        %2143 = vmatprep.subr.mxu0 %v967
        %2144 = vmatpush2.msra.mxu0 %v966
        %2145 = vmatprep.subr.mxu0 %v963
        %2146 = vmatpush2.msra.mxu0 %v962
        %2147 = vmatprep.subr.mxu0 %v959
        %2148 = vmatpush2.msra.mxu0 %v958
        %2149 = vmatprep.subr.mxu0 %v955
        %2150 = vmatpush2.msra.mxu0 %v954
        %2151 = vmatprep.subr.mxu0 %v951
        %2152 = vmatpush2.msra.mxu0 %v950
        %2153 = vmatprep.subr.mxu0 %v947
        %2154 = vmatpush2.msra.mxu0 %v946
        %2155 = vmatprep.mubr.f32.mxu0 %v627
        %2156 = vmatmul.mubr.f32.gmra.mxu0 %v626
        %v2157 = vpop.f32.mrf.mxu0
        %v2158 = vadd.f32 %v1997, %v2157
        %v2159 = vpop.f32.mrf.mxu0
        %v2160 = vadd.f32 %v1999, %v2159
        %2161 = vmatprep.mubr.f32.mxu0 %v635
        %2162 = vmatmul.mubr.f32.gmra.mxu0 %v634
        %v2163 = vpop.f32.mrf.mxu0
        %v2164 = vadd.f32 %v2003, %v2163
        %v2165 = vpop.f32.mrf.mxu0
        %v2166 = vadd.f32 %v2005, %v2165
        %2167 = vmatprep.mubr.f32.mxu0 %v643
        %2168 = vmatmul.mubr.f32.gmra.mxu0 %v642
        %v2169 = vpop.f32.mrf.mxu0
        %v2170 = vadd.f32 %v2009, %v2169
        %v2171 = vpop.f32.mrf.mxu0
        %v2172 = vadd.f32 %v2011, %v2171
        %2173 = vmatprep.mubr.f32.mxu0 %v651
        %2174 = vmatmul.mubr.f32.gmra.mxu0 %v650
        %v2175 = vpop.f32.mrf.mxu0
        %v2176 = vadd.f32 %v2015, %v2175
        %v2177 = vpop.f32.mrf.mxu0
        %v2178 = vadd.f32 %v2017, %v2177
        %2179 = vmatprep.mubr.f32.mxu0 %v659
        %2180 = vmatmul.mubr.f32.gmra.mxu0 %v658
        %v2181 = vpop.f32.mrf.mxu0
        %v2182 = vadd.f32 %v2021, %v2181
        %v2183 = vpop.f32.mrf.mxu0
        %v2184 = vadd.f32 %v2023, %v2183
        %2185 = vmatprep.mubr.f32.mxu0 %v667
        %2186 = vmatmul.mubr.f32.gmra.mxu0 %v666
        %v2187 = vpop.f32.mrf.mxu0
        %v2188 = vadd.f32 %v2027, %v2187
        %v2189 = vpop.f32.mrf.mxu0
        %v2190 = vadd.f32 %v2029, %v2189
        %2191 = vmatprep.mubr.f32.mxu0 %v675
        %2192 = vmatmul.mubr.f32.gmra.mxu0 %v674
        %v2193 = vpop.f32.mrf.mxu0
        %v2194 = vadd.f32 %v2033, %v2193
        %v2195 = vpop.f32.mrf.mxu0
        %v2196 = vadd.f32 %v2035, %v2195
        %2197 = vmatprep.mubr.f32.mxu0 %v683
        %2198 = vmatmul.mubr.f32.gmra.mxu0 %v682
        %v2199 = vpop.f32.mrf.mxu0
        %v2200 = vadd.f32 %v2039, %v2199
        %v2201 = vpop.f32.mrf.mxu0
        %v2202 = vadd.f32 %v2041, %v2201
        %2203 = vmatprep.mubr.f32.mxu0 %v691
        %2204 = vmatmul.mubr.f32.gmra.mxu0 %v690
        %v2205 = vpop.f32.mrf.mxu0
        %v2206 = vadd.f32 %v2045, %v2205
        %v2207 = vpop.f32.mrf.mxu0
        %v2208 = vadd.f32 %v2047, %v2207
        %2209 = vmatprep.mubr.f32.mxu0 %v699
        %2210 = vmatmul.mubr.f32.gmra.mxu0 %v698
        %v2211 = vpop.f32.mrf.mxu0
        %v2212 = vadd.f32 %v2051, %v2211
        %v2213 = vpop.f32.mrf.mxu0
        %v2214 = vadd.f32 %v2053, %v2213
        %2215 = vmatprep.mubr.f32.mxu0 %v707
        %2216 = vmatmul.mubr.f32.gmra.mxu0 %v706
        %v2217 = vpop.f32.mrf.mxu0
        %v2218 = vadd.f32 %v2057, %v2217
        %v2219 = vpop.f32.mrf.mxu0
        %v2220 = vadd.f32 %v2059, %v2219
        %2221 = vmatprep.mubr.f32.mxu0 %v715
        %2222 = vmatmul.mubr.f32.gmra.mxu0 %v714
        %v2223 = vpop.f32.mrf.mxu0
        %v2224 = vadd.f32 %v2063, %v2223
        %v2225 = vpop.f32.mrf.mxu0
        %v2226 = vadd.f32 %v2065, %v2225
        %2227 = vmatprep.mubr.f32.mxu0 %v723
        %2228 = vmatmul.mubr.f32.gmra.mxu0 %v722
        %v2229 = vpop.f32.mrf.mxu0
        %v2230 = vadd.f32 %v2069, %v2229
        %v2231 = vpop.f32.mrf.mxu0
        %v2232 = vadd.f32 %v2071, %v2231
        %2233 = vmatprep.mubr.f32.mxu0 %v731
        %2234 = vmatmul.mubr.f32.gmra.mxu0 %v730
        %v2235 = vpop.f32.mrf.mxu0
        %v2236 = vadd.f32 %v2075, %v2235
        %v2237 = vpop.f32.mrf.mxu0
        %v2238 = vadd.f32 %v2077, %v2237
        %2239 = vmatprep.mubr.f32.mxu0 %v739
        %2240 = vmatmul.mubr.f32.gmra.mxu0 %v738
        %v2241 = vpop.f32.mrf.mxu0
        %v2242 = vadd.f32 %v2081, %v2241
        %v2243 = vpop.f32.mrf.mxu0
        %v2244 = vadd.f32 %v2083, %v2243
        %2245 = vmatprep.mubr.f32.mxu0 %v747
        %2246 = vmatmul.mubr.f32.gmra.mxu0 %v746
        %v2247 = vpop.f32.mrf.mxu0
        %v2248 = vadd.f32 %v2087, %v2247
        %v2249 = vpop.f32.mrf.mxu0
        %v2250 = vadd.f32 %v2089, %v2249
        %2251 = vdwg.mxu0
        %2252 = vmatprep.subr.mxu0 %v1071
        %2253 = vmatpush1.msra.mxu0 %v1070
        %2254 = vmatprep.subr.mxu0 %v1067
        %2255 = vmatpush1.msra.mxu0 %v1066
        %2256 = vmatprep.subr.mxu0 %v1063
        %2257 = vmatpush1.msra.mxu0 %v1062
        %2258 = vmatprep.subr.mxu0 %v1059
        %2259 = vmatpush1.msra.mxu0 %v1058
        %2260 = vmatprep.subr.mxu0 %v1055
        %2261 = vmatpush1.msra.mxu0 %v1054
        %2262 = vmatprep.subr.mxu0 %v1051
        %2263 = vmatpush1.msra.mxu0 %v1050
        %2264 = vmatprep.subr.mxu0 %v1047
        %2265 = vmatpush1.msra.mxu0 %v1046
        %2266 = vmatprep.subr.mxu0 %v1043
        %2267 = vmatpush1.msra.mxu0 %v1042
        %2268 = vmatprep.subr.mxu0 %v1039
        %2269 = vmatpush1.msra.mxu0 %v1038
        %2270 = vmatprep.subr.mxu0 %v1035
        %2271 = vmatpush1.msra.mxu0 %v1034
        %2272 = vmatprep.subr.mxu0 %v1031
        %2273 = vmatpush1.msra.mxu0 %v1030
        %2274 = vmatprep.subr.mxu0 %v1027
        %2275 = vmatpush1.msra.mxu0 %v1026
        %2276 = vmatprep.subr.mxu0 %v1023
        %2277 = vmatpush1.msra.mxu0 %v1022
        %2278 = vmatprep.subr.mxu0 %v1019
        %2279 = vmatpush1.msra.mxu0 %v1018
        %2280 = vmatprep.subr.mxu0 %v1015
        %2281 = vmatpush1.msra.mxu0 %v1014
        %2282 = vmatprep.subr.mxu0 %v1011
        %2283 = vmatpush1.msra.mxu0 %v1010
        %2284 = vmatprep.subr.mxu0 %v1135
        %2285 = vmatpush2.msra.mxu0 %v1134
        %2286 = vmatprep.subr.mxu0 %v1131
        %2287 = vmatpush2.msra.mxu0 %v1130
        %2288 = vmatprep.subr.mxu0 %v1127
        %2289 = vmatpush2.msra.mxu0 %v1126
        %2290 = vmatprep.subr.mxu0 %v1123
        %2291 = vmatpush2.msra.mxu0 %v1122
        %2292 = vmatprep.subr.mxu0 %v1119
        %2293 = vmatpush2.msra.mxu0 %v1118
        %2294 = vmatprep.subr.mxu0 %v1115
        %2295 = vmatpush2.msra.mxu0 %v1114
        %2296 = vmatprep.subr.mxu0 %v1111
        %2297 = vmatpush2.msra.mxu0 %v1110
        %2298 = vmatprep.subr.mxu0 %v1107
        %2299 = vmatpush2.msra.mxu0 %v1106
        %2300 = vmatprep.subr.mxu0 %v1103
        %2301 = vmatpush2.msra.mxu0 %v1102
        %2302 = vmatprep.subr.mxu0 %v1099
        %2303 = vmatpush2.msra.mxu0 %v1098
        %2304 = vmatprep.subr.mxu0 %v1095
        %2305 = vmatpush2.msra.mxu0 %v1094
        %2306 = vmatprep.subr.mxu0 %v1091
        %2307 = vmatpush2.msra.mxu0 %v1090
        %2308 = vmatprep.subr.mxu0 %v1087
        %2309 = vmatpush2.msra.mxu0 %v1086
        %2310 = vmatprep.subr.mxu0 %v1083
        %2311 = vmatpush2.msra.mxu0 %v1082
        %2312 = vmatprep.subr.mxu0 %v1079
        %2313 = vmatpush2.msra.mxu0 %v1078
        %2314 = vmatprep.subr.mxu0 %v1075
        %2315 = vmatpush2.msra.mxu0 %v1074
        %2316 = vmatprep.mubr.f32.mxu0 %v629
        %2317 = vmatmul.mubr.f32.gmra.mxu0 %v628
        %v2318 = vpop.f32.mrf.mxu0
        %v2319 = vadd.f32 %v2158, %v2318
        %v2320 = vpop.f32.mrf.mxu0
        %v2321 = vadd.f32 %v2160, %v2320
        %2322 = vmatprep.mubr.f32.mxu0 %v637
        %2323 = vmatmul.mubr.f32.gmra.mxu0 %v636
        %v2324 = vpop.f32.mrf.mxu0
        %v2325 = vadd.f32 %v2164, %v2324
        %v2326 = vpop.f32.mrf.mxu0
        %v2327 = vadd.f32 %v2166, %v2326
        %2328 = vmatprep.mubr.f32.mxu0 %v645
        %2329 = vmatmul.mubr.f32.gmra.mxu0 %v644
        %v2330 = vpop.f32.mrf.mxu0
        %v2331 = vadd.f32 %v2170, %v2330
        %v2332 = vpop.f32.mrf.mxu0
        %v2333 = vadd.f32 %v2172, %v2332
        %2334 = vmatprep.mubr.f32.mxu0 %v653
        %2335 = vmatmul.mubr.f32.gmra.mxu0 %v652
        %v2336 = vpop.f32.mrf.mxu0
        %v2337 = vadd.f32 %v2176, %v2336
        %v2338 = vpop.f32.mrf.mxu0
        %v2339 = vadd.f32 %v2178, %v2338
        %2340 = vmatprep.mubr.f32.mxu0 %v661
        %2341 = vmatmul.mubr.f32.gmra.mxu0 %v660
        %v2342 = vpop.f32.mrf.mxu0
        %v2343 = vadd.f32 %v2182, %v2342
        %v2344 = vpop.f32.mrf.mxu0
        %v2345 = vadd.f32 %v2184, %v2344
        %2346 = vmatprep.mubr.f32.mxu0 %v669
        %2347 = vmatmul.mubr.f32.gmra.mxu0 %v668
        %v2348 = vpop.f32.mrf.mxu0
        %v2349 = vadd.f32 %v2188, %v2348
        %v2350 = vpop.f32.mrf.mxu0
        %v2351 = vadd.f32 %v2190, %v2350
        %2352 = vmatprep.mubr.f32.mxu0 %v677
        %2353 = vmatmul.mubr.f32.gmra.mxu0 %v676
        %v2354 = vpop.f32.mrf.mxu0
        %v2355 = vadd.f32 %v2194, %v2354
        %v2356 = vpop.f32.mrf.mxu0
        %v2357 = vadd.f32 %v2196, %v2356
        %2358 = vmatprep.mubr.f32.mxu0 %v685
        %2359 = vmatmul.mubr.f32.gmra.mxu0 %v684
        %v2360 = vpop.f32.mrf.mxu0
        %v2361 = vadd.f32 %v2200, %v2360
        %v2362 = vpop.f32.mrf.mxu0
        %v2363 = vadd.f32 %v2202, %v2362
        %2364 = vmatprep.mubr.f32.mxu0 %v693
        %2365 = vmatmul.mubr.f32.gmra.mxu0 %v692
        %v2366 = vpop.f32.mrf.mxu0
        %v2367 = vadd.f32 %v2206, %v2366
        %v2368 = vpop.f32.mrf.mxu0
        %v2369 = vadd.f32 %v2208, %v2368
        %2370 = vmatprep.mubr.f32.mxu0 %v701
        %2371 = vmatmul.mubr.f32.gmra.mxu0 %v700
        %v2372 = vpop.f32.mrf.mxu0
        %v2373 = vadd.f32 %v2212, %v2372
        %v2374 = vpop.f32.mrf.mxu0
        %v2375 = vadd.f32 %v2214, %v2374
        %2376 = vmatprep.mubr.f32.mxu0 %v709
        %2377 = vmatmul.mubr.f32.gmra.mxu0 %v708
        %v2378 = vpop.f32.mrf.mxu0
        %v2379 = vadd.f32 %v2218, %v2378
        %v2380 = vpop.f32.mrf.mxu0
        %v2381 = vadd.f32 %v2220, %v2380
        %2382 = vmatprep.mubr.f32.mxu0 %v717
        %2383 = vmatmul.mubr.f32.gmra.mxu0 %v716
        %v2384 = vpop.f32.mrf.mxu0
        %v2385 = vadd.f32 %v2224, %v2384
        %v2386 = vpop.f32.mrf.mxu0
        %v2387 = vadd.f32 %v2226, %v2386
        %2388 = vmatprep.mubr.f32.mxu0 %v725
        %2389 = vmatmul.mubr.f32.gmra.mxu0 %v724
        %v2390 = vpop.f32.mrf.mxu0
        %v2391 = vadd.f32 %v2230, %v2390
        %v2392 = vpop.f32.mrf.mxu0
        %v2393 = vadd.f32 %v2232, %v2392
        %2394 = vmatprep.mubr.f32.mxu0 %v733
        %2395 = vmatmul.mubr.f32.gmra.mxu0 %v732
        %v2396 = vpop.f32.mrf.mxu0
        %v2397 = vadd.f32 %v2236, %v2396
        %v2398 = vpop.f32.mrf.mxu0
        %v2399 = vadd.f32 %v2238, %v2398
        %2400 = vmatprep.mubr.f32.mxu0 %v741
        %2401 = vmatmul.mubr.f32.gmra.mxu0 %v740
        %v2402 = vpop.f32.mrf.mxu0
        %v2403 = vadd.f32 %v2242, %v2402
        %v2404 = vpop.f32.mrf.mxu0
        %v2405 = vadd.f32 %v2244, %v2404
        %2406 = vmatprep.mubr.f32.mxu0 %v749
        %2407 = vmatmul.mubr.f32.gmra.mxu0 %v748
        %v2408 = vpop.f32.mrf.mxu0
        %v2409 = vadd.f32 %v2248, %v2408
        %v2410 = vpop.f32.mrf.mxu0
        %v2411 = vadd.f32 %v2250, %v2410
        %2412 = vdwg.mxu0
        %2413 = vmatprep.subr.mxu0 %v1199
        %2414 = vmatpush1.msra.mxu0 %v1198
        %2415 = vmatprep.subr.mxu0 %v1195
        %2416 = vmatpush1.msra.mxu0 %v1194
        %2417 = vmatprep.subr.mxu0 %v1191
        %2418 = vmatpush1.msra.mxu0 %v1190
        %2419 = vmatprep.subr.mxu0 %v1187
        %2420 = vmatpush1.msra.mxu0 %v1186
        %2421 = vmatprep.subr.mxu0 %v1183
        %2422 = vmatpush1.msra.mxu0 %v1182
        %2423 = vmatprep.subr.mxu0 %v1179
        %2424 = vmatpush1.msra.mxu0 %v1178
        %2425 = vmatprep.subr.mxu0 %v1175
        %2426 = vmatpush1.msra.mxu0 %v1174
        %2427 = vmatprep.subr.mxu0 %v1171
        %2428 = vmatpush1.msra.mxu0 %v1170
        %2429 = vmatprep.subr.mxu0 %v1167
        %2430 = vmatpush1.msra.mxu0 %v1166
        %2431 = vmatprep.subr.mxu0 %v1163
        %2432 = vmatpush1.msra.mxu0 %v1162
        %2433 = vmatprep.subr.mxu0 %v1159
        %2434 = vmatpush1.msra.mxu0 %v1158
        %2435 = vmatprep.subr.mxu0 %v1155
        %2436 = vmatpush1.msra.mxu0 %v1154
        %2437 = vmatprep.subr.mxu0 %v1151
        %2438 = vmatpush1.msra.mxu0 %v1150
        %2439 = vmatprep.subr.mxu0 %v1147
        %2440 = vmatpush1.msra.mxu0 %v1146
        %2441 = vmatprep.subr.mxu0 %v1143
        %2442 = vmatpush1.msra.mxu0 %v1142
        %2443 = vmatprep.subr.mxu0 %v1139
        %2444 = vmatpush1.msra.mxu0 %v1138
        %2445 = vmatprep.subr.mxu0 %v1263
        %2446 = vmatpush2.msra.mxu0 %v1262
        %2447 = vmatprep.subr.mxu0 %v1259
        %2448 = vmatpush2.msra.mxu0 %v1258
        %2449 = vmatprep.subr.mxu0 %v1255
        %2450 = vmatpush2.msra.mxu0 %v1254
        %2451 = vmatprep.subr.mxu0 %v1251
        %2452 = vmatpush2.msra.mxu0 %v1250
        %2453 = vmatprep.subr.mxu0 %v1247
        %2454 = vmatpush2.msra.mxu0 %v1246
        %2455 = vmatprep.subr.mxu0 %v1243
        %2456 = vmatpush2.msra.mxu0 %v1242
        %2457 = vmatprep.subr.mxu0 %v1239
        %2458 = vmatpush2.msra.mxu0 %v1238
        %2459 = vmatprep.subr.mxu0 %v1235
        %2460 = vmatpush2.msra.mxu0 %v1234
        %2461 = vmatprep.subr.mxu0 %v1231
        %2462 = vmatpush2.msra.mxu0 %v1230
        %2463 = vmatprep.subr.mxu0 %v1227
        %2464 = vmatpush2.msra.mxu0 %v1226
        %2465 = vmatprep.subr.mxu0 %v1223
        %2466 = vmatpush2.msra.mxu0 %v1222
        %2467 = vmatprep.subr.mxu0 %v1219
        %2468 = vmatpush2.msra.mxu0 %v1218
        %2469 = vmatprep.subr.mxu0 %v1215
        %2470 = vmatpush2.msra.mxu0 %v1214
        %2471 = vmatprep.subr.mxu0 %v1211
        %2472 = vmatpush2.msra.mxu0 %v1210
        %2473 = vmatprep.subr.mxu0 %v1207
        %2474 = vmatpush2.msra.mxu0 %v1206
        %2475 = vmatprep.subr.mxu0 %v1203
        %2476 = vmatpush2.msra.mxu0 %v1202
        %2477 = vmatprep.mubr.f32.mxu0 %v631
        %2478 = vmatmul.mubr.f32.gmra.mxu0 %v630
        %v2479 = vpop.f32.mrf.mxu0
        %v2480 = vadd.f32 %v2319, %v2479
        %v2481 = vpop.f32.mrf.mxu0
        %v2482 = vadd.f32 %v2321, %v2481
        %2483 = vmatprep.mubr.f32.mxu0 %v639
        %2484 = vmatmul.mubr.f32.gmra.mxu0 %v638
        %v2485 = vpop.f32.mrf.mxu0
        %v2486 = vadd.f32 %v2325, %v2485
        %v2487 = vpop.f32.mrf.mxu0
        %v2488 = vadd.f32 %v2327, %v2487
        %2489 = vmatprep.mubr.f32.mxu0 %v647
        %2490 = vmatmul.mubr.f32.gmra.mxu0 %v646
        %v2491 = vpop.f32.mrf.mxu0
        %v2492 = vadd.f32 %v2331, %v2491
        %v2493 = vpop.f32.mrf.mxu0
        %v2494 = vadd.f32 %v2333, %v2493
        %2495 = vmatprep.mubr.f32.mxu0 %v655
        %2496 = vmatmul.mubr.f32.gmra.mxu0 %v654
        %v2497 = vpop.f32.mrf.mxu0
        %v2498 = vadd.f32 %v2337, %v2497
        %v2499 = vpop.f32.mrf.mxu0
        %v2500 = vadd.f32 %v2339, %v2499
        %2501 = vmatprep.mubr.f32.mxu0 %v663
        %2502 = vmatmul.mubr.f32.gmra.mxu0 %v662
        %v2503 = vpop.f32.mrf.mxu0
        %v2504 = vadd.f32 %v2343, %v2503
        %v2505 = vpop.f32.mrf.mxu0
        %v2506 = vadd.f32 %v2345, %v2505
        %2507 = vmatprep.mubr.f32.mxu0 %v671
        %2508 = vmatmul.mubr.f32.gmra.mxu0 %v670
        %v2509 = vpop.f32.mrf.mxu0
        %v2510 = vadd.f32 %v2349, %v2509
        %v2511 = vpop.f32.mrf.mxu0
        %v2512 = vadd.f32 %v2351, %v2511
        %2513 = vmatprep.mubr.f32.mxu0 %v679
        %2514 = vmatmul.mubr.f32.gmra.mxu0 %v678
        %v2515 = vpop.f32.mrf.mxu0
        %v2516 = vadd.f32 %v2355, %v2515
        %v2517 = vpop.f32.mrf.mxu0
        %v2518 = vadd.f32 %v2357, %v2517
        %2519 = vmatprep.mubr.f32.mxu0 %v687
        %2520 = vmatmul.mubr.f32.gmra.mxu0 %v686
        %v2521 = vpop.f32.mrf.mxu0
        %v2522 = vadd.f32 %v2361, %v2521
        %v2523 = vpop.f32.mrf.mxu0
        %v2524 = vadd.f32 %v2363, %v2523
        %2525 = vmatprep.mubr.f32.mxu0 %v695
        %2526 = vmatmul.mubr.f32.gmra.mxu0 %v694
        %v2527 = vpop.f32.mrf.mxu0
        %v2528 = vadd.f32 %v2367, %v2527
        %v2529 = vpop.f32.mrf.mxu0
        %v2530 = vadd.f32 %v2369, %v2529
        %2531 = vmatprep.mubr.f32.mxu0 %v703
        %2532 = vmatmul.mubr.f32.gmra.mxu0 %v702
        %v2533 = vpop.f32.mrf.mxu0
        %v2534 = vadd.f32 %v2373, %v2533
        %v2535 = vpop.f32.mrf.mxu0
        %v2536 = vadd.f32 %v2375, %v2535
        %2537 = vmatprep.mubr.f32.mxu0 %v711
        %2538 = vmatmul.mubr.f32.gmra.mxu0 %v710
        %v2539 = vpop.f32.mrf.mxu0
        %v2540 = vadd.f32 %v2379, %v2539
        %v2541 = vpop.f32.mrf.mxu0
        %v2542 = vadd.f32 %v2381, %v2541
        %2543 = vmatprep.mubr.f32.mxu0 %v719
        %2544 = vmatmul.mubr.f32.gmra.mxu0 %v718
        %v2545 = vpop.f32.mrf.mxu0
        %v2546 = vadd.f32 %v2385, %v2545
        %v2547 = vpop.f32.mrf.mxu0
        %v2548 = vadd.f32 %v2387, %v2547
        %2549 = vmatprep.mubr.f32.mxu0 %v727
        %2550 = vmatmul.mubr.f32.gmra.mxu0 %v726
        %v2551 = vpop.f32.mrf.mxu0
        %v2552 = vadd.f32 %v2391, %v2551
        %v2553 = vpop.f32.mrf.mxu0
        %v2554 = vadd.f32 %v2393, %v2553
        %2555 = vmatprep.mubr.f32.mxu0 %v735
        %2556 = vmatmul.mubr.f32.gmra.mxu0 %v734
        %v2557 = vpop.f32.mrf.mxu0
        %v2558 = vadd.f32 %v2397, %v2557
        %v2559 = vpop.f32.mrf.mxu0
        %v2560 = vadd.f32 %v2399, %v2559
        %2561 = vmatprep.mubr.f32.mxu0 %v743
        %2562 = vmatmul.mubr.f32.gmra.mxu0 %v742
        %v2563 = vpop.f32.mrf.mxu0
        %v2564 = vadd.f32 %v2403, %v2563
        %v2565 = vpop.f32.mrf.mxu0
        %v2566 = vadd.f32 %v2405, %v2565
        %2567 = vmatprep.mubr.f32.mxu0 %v751
        %2568 = vmatmul.mubr.f32.gmra.mxu0 %v750
        %v2569 = vpop.f32.mrf.mxu0
        %v2570 = vadd.f32 %v2409, %v2569
        %v2571 = vpop.f32.mrf.mxu0
        %v2572 = vadd.f32 %v2411, %v2571
        %2573 = vdwg.mxu0
        %v2574 = vmax.f32 %v1836, 0.0
        %v2575 = vmax.f32 %v1838, 0.0
        %v2576 = vmax.f32 %v2480, 0.0
        %v2577 = vmax.f32 %v2482, 0.0
        %v2578 = vmax.f32 %v1842, 0.0
        %v2579 = vmax.f32 %v1844, 0.0
        %v2580 = vmax.f32 %v2486, 0.0
        %v2581 = vmax.f32 %v2488, 0.0
        %v2582 = vmax.f32 %v1848, 0.0
        %v2583 = vmax.f32 %v1850, 0.0
        %v2584 = vmax.f32 %v2492, 0.0
        %v2585 = vmax.f32 %v2494, 0.0
        %v2586 = vmax.f32 %v1854, 0.0
        %v2587 = vmax.f32 %v1856, 0.0
        %v2588 = vmax.f32 %v2498, 0.0
        %v2589 = vmax.f32 %v2500, 0.0
        %v2590 = vmax.f32 %v1860, 0.0
        %v2591 = vmax.f32 %v1862, 0.0
        %v2592 = vmax.f32 %v2504, 0.0
        %v2593 = vmax.f32 %v2506, 0.0
        %v2594 = vmax.f32 %v1866, 0.0
        %v2595 = vmax.f32 %v1868, 0.0
        %v2596 = vmax.f32 %v2510, 0.0
        %v2597 = vmax.f32 %v2512, 0.0
        %v2598 = vmax.f32 %v1872, 0.0
        %v2599 = vmax.f32 %v1874, 0.0
        %v2600 = vmax.f32 %v2516, 0.0
        %v2601 = vmax.f32 %v2518, 0.0
        %v2602 = vmax.f32 %v1878, 0.0
        %v2603 = vmax.f32 %v1880, 0.0
        %v2604 = vmax.f32 %v2522, 0.0
        %v2605 = vmax.f32 %v2524, 0.0
        %v2606 = vmax.f32 %v1884, 0.0
        %v2607 = vmax.f32 %v1886, 0.0
        %v2608 = vmax.f32 %v2528, 0.0
        %v2609 = vmax.f32 %v2530, 0.0
        %v2610 = vmax.f32 %v1890, 0.0
        %v2611 = vmax.f32 %v1892, 0.0
        %v2612 = vmax.f32 %v2534, 0.0
        %v2613 = vmax.f32 %v2536, 0.0
        %v2614 = vmax.f32 %v1896, 0.0
        %v2615 = vmax.f32 %v1898, 0.0
        %v2616 = vmax.f32 %v2540, 0.0
        %v2617 = vmax.f32 %v2542, 0.0
        %v2618 = vmax.f32 %v1902, 0.0
        %v2619 = vmax.f32 %v1904, 0.0
        %v2620 = vmax.f32 %v2546, 0.0
        %v2621 = vmax.f32 %v2548, 0.0
        %v2622 = vmax.f32 %v1908, 0.0
        %v2623 = vmax.f32 %v1910, 0.0
        %v2624 = vmax.f32 %v2552, 0.0
        %v2625 = vmax.f32 %v2554, 0.0
        %v2626 = vmax.f32 %v1914, 0.0
        %v2627 = vmax.f32 %v1916, 0.0
        %v2628 = vmax.f32 %v2558, 0.0
        %v2629 = vmax.f32 %v2560, 0.0
        %v2630 = vmax.f32 %v1920, 0.0
        %v2631 = vmax.f32 %v1922, 0.0
        %v2632 = vmax.f32 %v2564, 0.0
        %v2633 = vmax.f32 %v2566, 0.0
        %v2634 = vmax.f32 %v1926, 0.0
        %v2635 = vmax.f32 %v1928, 0.0
        %v2636 = vmax.f32 %v2570, 0.0
        %v2637 = vmax.f32 %v2572, 0.0
        %v2638 = vld [vmem:[#allocation8] sm:$0xff]
        %v2639 = vld [vmem:[#allocation8 + $0x8] sm:$0xff]
        %v2640 = vld [vmem:[#allocation8 + $0x10] sm:$0xff]
        %v2641 = vld [vmem:[#allocation8 + $0x18] sm:$0xff]
        %v2642 = vld [vmem:[#allocation8 + $0x20] sm:$0xff]
        %v2643 = vld [vmem:[#allocation8 + $0x28] sm:$0xff]
        %v2644 = vld [vmem:[#allocation8 + $0x30] sm:$0xff]
        %v2645 = vld [vmem:[#allocation8 + $0x38] sm:$0xff]
        %v2646 = vld [vmem:[#allocation8 + $0x40] sm:$0xff]
        %v2647 = vld [vmem:[#allocation8 + $0x48] sm:$0xff]
        %v2648 = vld [vmem:[#allocation8 + $0x50] sm:$0xff]
        %v2649 = vld [vmem:[#allocation8 + $0x58] sm:$0xff]
        %v2650 = vld [vmem:[#allocation8 + $0x60] sm:$0xff]
        %v2651 = vld [vmem:[#allocation8 + $0x68] sm:$0xff]
        %v2652 = vld [vmem:[#allocation8 + $0x70] sm:$0xff]
        %v2653 = vld [vmem:[#allocation8 + $0x78] sm:$0xff]
        %v2654 = vld [vmem:[#allocation8 + $0x80] sm:$0xff]
        %v2655 = vld [vmem:[#allocation8 + $0x88] sm:$0xff]
        %v2656 = vld [vmem:[#allocation8 + $0x90] sm:$0xff]
        %v2657 = vld [vmem:[#allocation8 + $0x98] sm:$0xff]
        %v2658 = vld [vmem:[#allocation8 + $0xa0] sm:$0xff]
        %v2659 = vld [vmem:[#allocation8 + $0xa8] sm:$0xff]
        %v2660 = vld [vmem:[#allocation8 + $0xb0] sm:$0xff]
        %v2661 = vld [vmem:[#allocation8 + $0xb8] sm:$0xff]
        %v2662 = vld [vmem:[#allocation8 + $0xc0] sm:$0xff]
        %v2663 = vld [vmem:[#allocation8 + $0xc8] sm:$0xff]
        %v2664 = vld [vmem:[#allocation8 + $0xd0] sm:$0xff]
        %v2665 = vld [vmem:[#allocation8 + $0xd8] sm:$0xff]
        %v2666 = vld [vmem:[#allocation8 + $0xe0] sm:$0xff]
        %v2667 = vld [vmem:[#allocation8 + $0xe8] sm:$0xff]
        %v2668 = vld [vmem:[#allocation8 + $0xf0] sm:$0xff]
        %v2669 = vld [vmem:[#allocation8 + $0xf8] sm:$0xff]
        %v2670 = vld [vmem:[#allocation8 + $0x100] sm:$0xff]
        %v2671 = vld [vmem:[#allocation8 + $0x108] sm:$0xff]
        %v2672 = vld [vmem:[#allocation8 + $0x110] sm:$0xff]
        %v2673 = vld [vmem:[#allocation8 + $0x118] sm:$0xff]
        %v2674 = vld [vmem:[#allocation8 + $0x120] sm:$0xff]
        %v2675 = vld [vmem:[#allocation8 + $0x128] sm:$0xff]
        %v2676 = vld [vmem:[#allocation8 + $0x130] sm:$0xff]
        %v2677 = vld [vmem:[#allocation8 + $0x138] sm:$0xff]
        %v2678 = vld [vmem:[#allocation8 + $0x140] sm:$0xff]
        %v2679 = vld [vmem:[#allocation8 + $0x148] sm:$0xff]
        %v2680 = vld [vmem:[#allocation8 + $0x150] sm:$0xff]
        %v2681 = vld [vmem:[#allocation8 + $0x158] sm:$0xff]
        %v2682 = vld [vmem:[#allocation8 + $0x160] sm:$0xff]
        %v2683 = vld [vmem:[#allocation8 + $0x168] sm:$0xff]
        %v2684 = vld [vmem:[#allocation8 + $0x170] sm:$0xff]
        %v2685 = vld [vmem:[#allocation8 + $0x178] sm:$0xff]
        %v2686 = vld [vmem:[#allocation8 + $0x180] sm:$0xff]
        %v2687 = vld [vmem:[#allocation8 + $0x188] sm:$0xff]
        %v2688 = vld [vmem:[#allocation8 + $0x190] sm:$0xff]
        %v2689 = vld [vmem:[#allocation8 + $0x198] sm:$0xff]
        %v2690 = vld [vmem:[#allocation8 + $0x1a0] sm:$0xff]
        %v2691 = vld [vmem:[#allocation8 + $0x1a8] sm:$0xff]
        %v2692 = vld [vmem:[#allocation8 + $0x1b0] sm:$0xff]
        %v2693 = vld [vmem:[#allocation8 + $0x1b8] sm:$0xff]
        %v2694 = vld [vmem:[#allocation8 + $0x1c0] sm:$0xff]
        %v2695 = vld [vmem:[#allocation8 + $0x1c8] sm:$0xff]
        %v2696 = vld [vmem:[#allocation8 + $0x1d0] sm:$0xff]
        %v2697 = vld [vmem:[#allocation8 + $0x1d8] sm:$0xff]
        %v2698 = vld [vmem:[#allocation8 + $0x1e0] sm:$0xff]
        %v2699 = vld [vmem:[#allocation8 + $0x1e8] sm:$0xff]
        %v2700 = vld [vmem:[#allocation8 + $0x1f0] sm:$0xff]
        %v2701 = vld [vmem:[#allocation8 + $0x1f8] sm:$0xff]
        %v2702 = vld [vmem:[#allocation10] sm:$0x1]
        %v2704 = vlaneseq
        %v2705 = vshrl.u32 %v2704, 7
        %v2706 = vsub.s32 0, %v2705
        %v2707 = vrot.slane %v2702, %v2706
        %2709 = vmatprep.subr.mxu0 0.0
        %2710 = vmatpush1.msra.mxu0 %v2653
        %2711 = vmatprep.subr.mxu0 0.0
        %2712 = vmatpush1.msra.mxu0 %v2652
        %2713 = vmatprep.subr.mxu0 0.0
        %2714 = vmatpush1.msra.mxu0 %v2651
        %2715 = vmatprep.subr.mxu0 0.0
        %2716 = vmatpush1.msra.mxu0 %v2650
        %2717 = vmatprep.subr.mxu0 0.0
        %2718 = vmatpush1.msra.mxu0 %v2649
        %2719 = vmatprep.subr.mxu0 0.0
        %2720 = vmatpush1.msra.mxu0 %v2648
        %2721 = vmatprep.subr.mxu0 0.0
        %2722 = vmatpush1.msra.mxu0 %v2647
        %2723 = vmatprep.subr.mxu0 0.0
        %2724 = vmatpush1.msra.mxu0 %v2646
        %2725 = vmatprep.subr.mxu0 0.0
        %2726 = vmatpush1.msra.mxu0 %v2645
        %2727 = vmatprep.subr.mxu0 0.0
        %2728 = vmatpush1.msra.mxu0 %v2644
        %2729 = vmatprep.subr.mxu0 0.0
        %2730 = vmatpush1.msra.mxu0 %v2643
        %2731 = vmatprep.subr.mxu0 0.0
        %2732 = vmatpush1.msra.mxu0 %v2642
        %2733 = vmatprep.subr.mxu0 0.0
        %2734 = vmatpush1.msra.mxu0 %v2641
        %2735 = vmatprep.subr.mxu0 0.0
        %2736 = vmatpush1.msra.mxu0 %v2640
        %2737 = vmatprep.subr.mxu0 0.0
        %2738 = vmatpush1.msra.mxu0 %v2639
        %2739 = vmatprep.subr.mxu0 0.0
        %2740 = vmatpush1.msra.mxu0 %v2638
        %2741 = vmatprep.subr.mxu0 0.0
        %2742 = vmatpush2.msra.mxu0 %v2669
        %2743 = vmatprep.subr.mxu0 0.0
        %2744 = vmatpush2.msra.mxu0 %v2668
        %2745 = vmatprep.subr.mxu0 0.0
        %2746 = vmatpush2.msra.mxu0 %v2667
        %2747 = vmatprep.subr.mxu0 0.0
        %2748 = vmatpush2.msra.mxu0 %v2666
        %2749 = vmatprep.subr.mxu0 0.0
        %2750 = vmatpush2.msra.mxu0 %v2665
        %2751 = vmatprep.subr.mxu0 0.0
        %2752 = vmatpush2.msra.mxu0 %v2664
        %2753 = vmatprep.subr.mxu0 0.0
        %2754 = vmatpush2.msra.mxu0 %v2663
        %2755 = vmatprep.subr.mxu0 0.0
        %2756 = vmatpush2.msra.mxu0 %v2662
        %2757 = vmatprep.subr.mxu0 0.0
        %2758 = vmatpush2.msra.mxu0 %v2661
        %2759 = vmatprep.subr.mxu0 0.0
        %2760 = vmatpush2.msra.mxu0 %v2660
        %2761 = vmatprep.subr.mxu0 0.0
        %2762 = vmatpush2.msra.mxu0 %v2659
        %2763 = vmatprep.subr.mxu0 0.0
        %2764 = vmatpush2.msra.mxu0 %v2658
        %2765 = vmatprep.subr.mxu0 0.0
        %2766 = vmatpush2.msra.mxu0 %v2657
        %2767 = vmatprep.subr.mxu0 0.0
        %2768 = vmatpush2.msra.mxu0 %v2656
        %2769 = vmatprep.subr.mxu0 0.0
        %2770 = vmatpush2.msra.mxu0 %v2655
        %2771 = vmatprep.subr.mxu0 0.0
        %2772 = vmatpush2.msra.mxu0 %v2654
        %2773 = vmatprep.mubr.f32.mxu0 %v2575
        %2774 = vmatmul.mubr.f32.gmra.mxu0 %v2574
        %v2775 = vpop.f32.mrf.mxu0
        %v2776 = vadd.f32 %v2707, %v2775
        %v2777 = vpop.f32.mrf.mxu0
        %2778 = vmatprep.mubr.f32.mxu0 %v2579
        %2779 = vmatmul.mubr.f32.gmra.mxu0 %v2578
        %v2780 = vpop.f32.mrf.mxu0
        %v2781 = vadd.f32 %v2707, %v2780
        %v2782 = vpop.f32.mrf.mxu0
        %2783 = vmatprep.mubr.f32.mxu0 %v2583
        %2784 = vmatmul.mubr.f32.gmra.mxu0 %v2582
        %v2785 = vpop.f32.mrf.mxu0
        %v2786 = vadd.f32 %v2707, %v2785
        %v2787 = vpop.f32.mrf.mxu0
        %2788 = vmatprep.mubr.f32.mxu0 %v2587
        %2789 = vmatmul.mubr.f32.gmra.mxu0 %v2586
        %v2790 = vpop.f32.mrf.mxu0
        %v2791 = vadd.f32 %v2707, %v2790
        %v2792 = vpop.f32.mrf.mxu0
        %2793 = vmatprep.mubr.f32.mxu0 %v2591
        %2794 = vmatmul.mubr.f32.gmra.mxu0 %v2590
        %v2795 = vpop.f32.mrf.mxu0
        %v2796 = vadd.f32 %v2707, %v2795
        %v2797 = vpop.f32.mrf.mxu0
        %2798 = vmatprep.mubr.f32.mxu0 %v2595
        %2799 = vmatmul.mubr.f32.gmra.mxu0 %v2594
        %v2800 = vpop.f32.mrf.mxu0
        %v2801 = vadd.f32 %v2707, %v2800
        %v2802 = vpop.f32.mrf.mxu0
        %2803 = vmatprep.mubr.f32.mxu0 %v2599
        %2804 = vmatmul.mubr.f32.gmra.mxu0 %v2598
        %v2805 = vpop.f32.mrf.mxu0
        %v2806 = vadd.f32 %v2707, %v2805
        %v2807 = vpop.f32.mrf.mxu0
        %2808 = vmatprep.mubr.f32.mxu0 %v2603
        %2809 = vmatmul.mubr.f32.gmra.mxu0 %v2602
        %v2810 = vpop.f32.mrf.mxu0
        %v2811 = vadd.f32 %v2707, %v2810
        %v2812 = vpop.f32.mrf.mxu0
        %2813 = vmatprep.mubr.f32.mxu0 %v2607
        %2814 = vmatmul.mubr.f32.gmra.mxu0 %v2606
        %v2815 = vpop.f32.mrf.mxu0
        %v2816 = vadd.f32 %v2707, %v2815
        %v2817 = vpop.f32.mrf.mxu0
        %2818 = vmatprep.mubr.f32.mxu0 %v2611
        %2819 = vmatmul.mubr.f32.gmra.mxu0 %v2610
        %v2820 = vpop.f32.mrf.mxu0
        %v2821 = vadd.f32 %v2707, %v2820
        %v2822 = vpop.f32.mrf.mxu0
        %2823 = vmatprep.mubr.f32.mxu0 %v2615
        %2824 = vmatmul.mubr.f32.gmra.mxu0 %v2614
        %v2825 = vpop.f32.mrf.mxu0
        %v2826 = vadd.f32 %v2707, %v2825
        %v2827 = vpop.f32.mrf.mxu0
        %2828 = vmatprep.mubr.f32.mxu0 %v2619
        %2829 = vmatmul.mubr.f32.gmra.mxu0 %v2618
        %v2830 = vpop.f32.mrf.mxu0
        %v2831 = vadd.f32 %v2707, %v2830
        %v2832 = vpop.f32.mrf.mxu0
        %2833 = vmatprep.mubr.f32.mxu0 %v2623
        %2834 = vmatmul.mubr.f32.gmra.mxu0 %v2622
        %v2835 = vpop.f32.mrf.mxu0
        %v2836 = vadd.f32 %v2707, %v2835
        %v2837 = vpop.f32.mrf.mxu0
        %2838 = vmatprep.mubr.f32.mxu0 %v2627
        %2839 = vmatmul.mubr.f32.gmra.mxu0 %v2626
        %v2840 = vpop.f32.mrf.mxu0
        %v2841 = vadd.f32 %v2707, %v2840
        %v2842 = vpop.f32.mrf.mxu0
        %2843 = vmatprep.mubr.f32.mxu0 %v2631
        %2844 = vmatmul.mubr.f32.gmra.mxu0 %v2630
        %v2845 = vpop.f32.mrf.mxu0
        %v2846 = vadd.f32 %v2707, %v2845
        %v2847 = vpop.f32.mrf.mxu0
        %2848 = vmatprep.mubr.f32.mxu0 %v2635
        %2849 = vmatmul.mubr.f32.gmra.mxu0 %v2634
        %v2850 = vpop.f32.mrf.mxu0
        %v2851 = vadd.f32 %v2707, %v2850
        %v2852 = vpop.f32.mrf.mxu0
        %2853 = vdwg.mxu0
        %2854 = vmatprep.subr.mxu0 0.0
        %2855 = vmatpush1.msra.mxu0 %v2685
        %2856 = vmatprep.subr.mxu0 0.0
        %2857 = vmatpush1.msra.mxu0 %v2684
        %2858 = vmatprep.subr.mxu0 0.0
        %2859 = vmatpush1.msra.mxu0 %v2683
        %2860 = vmatprep.subr.mxu0 0.0
        %2861 = vmatpush1.msra.mxu0 %v2682
        %2862 = vmatprep.subr.mxu0 0.0
        %2863 = vmatpush1.msra.mxu0 %v2681
        %2864 = vmatprep.subr.mxu0 0.0
        %2865 = vmatpush1.msra.mxu0 %v2680
        %2866 = vmatprep.subr.mxu0 0.0
        %2867 = vmatpush1.msra.mxu0 %v2679
        %2868 = vmatprep.subr.mxu0 0.0
        %2869 = vmatpush1.msra.mxu0 %v2678
        %2870 = vmatprep.subr.mxu0 0.0
        %2871 = vmatpush1.msra.mxu0 %v2677
        %2872 = vmatprep.subr.mxu0 0.0
        %2873 = vmatpush1.msra.mxu0 %v2676
        %2874 = vmatprep.subr.mxu0 0.0
        %2875 = vmatpush1.msra.mxu0 %v2675
        %2876 = vmatprep.subr.mxu0 0.0
        %2877 = vmatpush1.msra.mxu0 %v2674
        %2878 = vmatprep.subr.mxu0 0.0
        %2879 = vmatpush1.msra.mxu0 %v2673
        %2880 = vmatprep.subr.mxu0 0.0
        %2881 = vmatpush1.msra.mxu0 %v2672
        %2882 = vmatprep.subr.mxu0 0.0
        %2883 = vmatpush1.msra.mxu0 %v2671
        %2884 = vmatprep.subr.mxu0 0.0
        %2885 = vmatpush1.msra.mxu0 %v2670
        %2886 = vmatprep.subr.mxu0 0.0
        %2887 = vmatpush2.msra.mxu0 %v2701
        %2888 = vmatprep.subr.mxu0 0.0
        %2889 = vmatpush2.msra.mxu0 %v2700
        %2890 = vmatprep.subr.mxu0 0.0
        %2891 = vmatpush2.msra.mxu0 %v2699
        %2892 = vmatprep.subr.mxu0 0.0
        %2893 = vmatpush2.msra.mxu0 %v2698
        %2894 = vmatprep.subr.mxu0 0.0
        %2895 = vmatpush2.msra.mxu0 %v2697
        %2896 = vmatprep.subr.mxu0 0.0
        %2897 = vmatpush2.msra.mxu0 %v2696
        %2898 = vmatprep.subr.mxu0 0.0
        %2899 = vmatpush2.msra.mxu0 %v2695
        %2900 = vmatprep.subr.mxu0 0.0
        %2901 = vmatpush2.msra.mxu0 %v2694
        %2902 = vmatprep.subr.mxu0 0.0
        %2903 = vmatpush2.msra.mxu0 %v2693
        %2904 = vmatprep.subr.mxu0 0.0
        %2905 = vmatpush2.msra.mxu0 %v2692
        %2906 = vmatprep.subr.mxu0 0.0
        %2907 = vmatpush2.msra.mxu0 %v2691
        %2908 = vmatprep.subr.mxu0 0.0
        %2909 = vmatpush2.msra.mxu0 %v2690
        %2910 = vmatprep.subr.mxu0 0.0
        %2911 = vmatpush2.msra.mxu0 %v2689
        %2912 = vmatprep.subr.mxu0 0.0
        %2913 = vmatpush2.msra.mxu0 %v2688
        %2914 = vmatprep.subr.mxu0 0.0
        %2915 = vmatpush2.msra.mxu0 %v2687
        %2916 = vmatprep.subr.mxu0 0.0
        %2917 = vmatpush2.msra.mxu0 %v2686
        %2918 = vmatprep.mubr.f32.mxu0 %v2577
        %2919 = vmatmul.mubr.f32.gmra.mxu0 %v2576
        %v2920 = vpop.f32.mrf.mxu0
        %v2921 = vadd.f32 %v2776, %v2920
        %v2922 = vpop.f32.mrf.mxu0
        %2923 = vmatprep.mubr.f32.mxu0 %v2581
        %2924 = vmatmul.mubr.f32.gmra.mxu0 %v2580
        %v2925 = vpop.f32.mrf.mxu0
        %v2926 = vadd.f32 %v2781, %v2925
        %v2927 = vpop.f32.mrf.mxu0
        %2928 = vmatprep.mubr.f32.mxu0 %v2585
        %2929 = vmatmul.mubr.f32.gmra.mxu0 %v2584
        %v2930 = vpop.f32.mrf.mxu0
        %v2931 = vadd.f32 %v2786, %v2930
        %v2932 = vpop.f32.mrf.mxu0
        %2933 = vmatprep.mubr.f32.mxu0 %v2589
        %2934 = vmatmul.mubr.f32.gmra.mxu0 %v2588
        %v2935 = vpop.f32.mrf.mxu0
        %v2936 = vadd.f32 %v2791, %v2935
        %v2937 = vpop.f32.mrf.mxu0
        %2938 = vmatprep.mubr.f32.mxu0 %v2593
        %2939 = vmatmul.mubr.f32.gmra.mxu0 %v2592
        %v2940 = vpop.f32.mrf.mxu0
        %v2941 = vadd.f32 %v2796, %v2940
        %v2942 = vpop.f32.mrf.mxu0
        %2943 = vmatprep.mubr.f32.mxu0 %v2597
        %2944 = vmatmul.mubr.f32.gmra.mxu0 %v2596
        %v2945 = vpop.f32.mrf.mxu0
        %v2946 = vadd.f32 %v2801, %v2945
        %v2947 = vpop.f32.mrf.mxu0
        %2948 = vmatprep.mubr.f32.mxu0 %v2601
        %2949 = vmatmul.mubr.f32.gmra.mxu0 %v2600
        %v2950 = vpop.f32.mrf.mxu0
        %v2951 = vadd.f32 %v2806, %v2950
        %v2952 = vpop.f32.mrf.mxu0
        %2953 = vmatprep.mubr.f32.mxu0 %v2605
        %2954 = vmatmul.mubr.f32.gmra.mxu0 %v2604
        %v2955 = vpop.f32.mrf.mxu0
        %v2956 = vadd.f32 %v2811, %v2955
        %v2957 = vpop.f32.mrf.mxu0
        %2958 = vmatprep.mubr.f32.mxu0 %v2609
        %2959 = vmatmul.mubr.f32.gmra.mxu0 %v2608
        %v2960 = vpop.f32.mrf.mxu0
        %v2961 = vadd.f32 %v2816, %v2960
        %v2962 = vpop.f32.mrf.mxu0
        %2963 = vmatprep.mubr.f32.mxu0 %v2613
        %2964 = vmatmul.mubr.f32.gmra.mxu0 %v2612
        %v2965 = vpop.f32.mrf.mxu0
        %v2966 = vadd.f32 %v2821, %v2965
        %v2967 = vpop.f32.mrf.mxu0
        %2968 = vmatprep.mubr.f32.mxu0 %v2617
        %2969 = vmatmul.mubr.f32.gmra.mxu0 %v2616
        %v2970 = vpop.f32.mrf.mxu0
        %v2971 = vadd.f32 %v2826, %v2970
        %v2972 = vpop.f32.mrf.mxu0
        %2973 = vmatprep.mubr.f32.mxu0 %v2621
        %2974 = vmatmul.mubr.f32.gmra.mxu0 %v2620
        %v2975 = vpop.f32.mrf.mxu0
        %v2976 = vadd.f32 %v2831, %v2975
        %v2977 = vpop.f32.mrf.mxu0
        %2978 = vmatprep.mubr.f32.mxu0 %v2625
        %2979 = vmatmul.mubr.f32.gmra.mxu0 %v2624
        %v2980 = vpop.f32.mrf.mxu0
        %v2981 = vadd.f32 %v2836, %v2980
        %v2982 = vpop.f32.mrf.mxu0
        %2983 = vmatprep.mubr.f32.mxu0 %v2629
        %2984 = vmatmul.mubr.f32.gmra.mxu0 %v2628
        %v2985 = vpop.f32.mrf.mxu0
        %v2986 = vadd.f32 %v2841, %v2985
        %v2987 = vpop.f32.mrf.mxu0
        %2988 = vmatprep.mubr.f32.mxu0 %v2633
        %2989 = vmatmul.mubr.f32.gmra.mxu0 %v2632
        %v2990 = vpop.f32.mrf.mxu0
        %v2991 = vadd.f32 %v2846, %v2990
        %v2992 = vpop.f32.mrf.mxu0
        %2993 = vmatprep.mubr.f32.mxu0 %v2637
        %2994 = vmatmul.mubr.f32.gmra.mxu0 %v2636
        %v2995 = vpop.f32.mrf.mxu0
        %v2996 = vadd.f32 %v2851, %v2995
        %v2997 = vpop.f32.mrf.mxu0
        %2998 = vdwg.mxu0
        %v2999 = vmax.f32 %v2921, 0.0
        %v3000 = vmax.f32 %v2926, 0.0
        %v3001 = vmax.f32 %v2931, 0.0
        %v3002 = vmax.f32 %v2936, 0.0
        %v3003 = vmax.f32 %v2941, 0.0
        %v3004 = vmax.f32 %v2946, 0.0
        %v3005 = vmax.f32 %v2951, 0.0
        %v3006 = vmax.f32 %v2956, 0.0
        %v3007 = vmax.f32 %v2961, 0.0
        %v3008 = vmax.f32 %v2966, 0.0
        %v3009 = vmax.f32 %v2971, 0.0
        %v3010 = vmax.f32 %v2976, 0.0
        %v3011 = vmax.f32 %v2981, 0.0
        %v3012 = vmax.f32 %v2986, 0.0
        %v3013 = vmax.f32 %v2991, 0.0
        %v3014 = vmax.f32 %v2996, 0.0
        %v3015 = vld [vmem:[#allocation11] sm:$0xff]
        %v3016 = vld [vmem:[#allocation11 + $0x8] sm:$0xff]
        %v3017 = vld [vmem:[#allocation11 + $0x10] sm:$0xff]
        %v3018 = vld [vmem:[#allocation11 + $0x18] sm:$0xff]
        %v3019 = vld [vmem:[#allocation11 + $0x20] sm:$0xff]
        %v3020 = vld [vmem:[#allocation11 + $0x28] sm:$0xff]
        %v3021 = vld [vmem:[#allocation11 + $0x30] sm:$0xff]
        %v3022 = vld [vmem:[#allocation11 + $0x38] sm:$0xff]
        %v3023 = vld [vmem:[#allocation11 + $0x40] sm:$0xff]
        %v3024 = vld [vmem:[#allocation11 + $0x48] sm:$0xff]
        %v3025 = vld [vmem:[#allocation11 + $0x50] sm:$0xff]
        %v3026 = vld [vmem:[#allocation11 + $0x58] sm:$0xff]
        %v3027 = vld [vmem:[#allocation11 + $0x60] sm:$0xff]
        %v3028 = vld [vmem:[#allocation11 + $0x68] sm:$0xff]
        %v3029 = vld [vmem:[#allocation11 + $0x70] sm:$0xff]
        %v3030 = vld [vmem:[#allocation11 + $0x78] sm:$0xff]
        %v3031 = vld [vmem:[#allocation13] sm:$0x1]
        %v3033 = vlaneseq
        %v3034 = vshrl.u32 %v3033, 7
        %v3035 = vsub.s32 0, %v3034
        %v3036 = vrot.slane %v3031, %v3035
        %3038 = vmatprep.subr.mxu0 0.0
        %3039 = vmatpush1.msra.mxu0 %v3030
        %3040 = vmatprep.subr.mxu0 0.0
        %3041 = vmatpush1.msra.mxu0 %v3029
        %3042 = vmatprep.subr.mxu0 0.0
        %3043 = vmatpush1.msra.mxu0 %v3028
        %3044 = vmatprep.subr.mxu0 0.0
        %3045 = vmatpush1.msra.mxu0 %v3027
        %3046 = vmatprep.subr.mxu0 0.0
        %3047 = vmatpush1.msra.mxu0 %v3026
        %3048 = vmatprep.subr.mxu0 0.0
        %3049 = vmatpush1.msra.mxu0 %v3025
        %3050 = vmatprep.subr.mxu0 0.0
        %3051 = vmatpush1.msra.mxu0 %v3024
        %3052 = vmatprep.subr.mxu0 0.0
        %3053 = vmatpush1.msra.mxu0 %v3023
        %3054 = vmatprep.subr.mxu0 0.0
        %3055 = vmatpush1.msra.mxu0 %v3022
        %3056 = vmatprep.subr.mxu0 0.0
        %3057 = vmatpush1.msra.mxu0 %v3021
        %3058 = vmatprep.subr.mxu0 0.0
        %3059 = vmatpush1.msra.mxu0 %v3020
        %3060 = vmatprep.subr.mxu0 0.0
        %3061 = vmatpush1.msra.mxu0 %v3019
        %3062 = vmatprep.subr.mxu0 0.0
        %3063 = vmatpush1.msra.mxu0 %v3018
        %3064 = vmatprep.subr.mxu0 0.0
        %3065 = vmatpush1.msra.mxu0 %v3017
        %3066 = vmatprep.subr.mxu0 0.0
        %3067 = vmatpush1.msra.mxu0 %v3016
        %3068 = vmatprep.subr.mxu0 0.0
        %3069 = vmatpush1.msra.mxu0 %v3015
        %3070 = vmatprep.subr.mxu0 0.0
        %3071 = vmatpush2.msra.mxu0 0.0
        %3072 = vmatprep.subr.mxu0 0.0
        %3073 = vmatpush2.msra.mxu0 0.0
        %3074 = vmatprep.subr.mxu0 0.0
        %3075 = vmatpush2.msra.mxu0 0.0
        %3076 = vmatprep.subr.mxu0 0.0
        %3077 = vmatpush2.msra.mxu0 0.0
        %3078 = vmatprep.subr.mxu0 0.0
        %3079 = vmatpush2.msra.mxu0 0.0
        %3080 = vmatprep.subr.mxu0 0.0
        %3081 = vmatpush2.msra.mxu0 0.0
        %3082 = vmatprep.subr.mxu0 0.0
        %3083 = vmatpush2.msra.mxu0 0.0
        %3084 = vmatprep.subr.mxu0 0.0
        %3085 = vmatpush2.msra.mxu0 0.0
        %3086 = vmatprep.subr.mxu0 0.0
        %3087 = vmatpush2.msra.mxu0 0.0
        %3088 = vmatprep.subr.mxu0 0.0
        %3089 = vmatpush2.msra.mxu0 0.0
        %3090 = vmatprep.subr.mxu0 0.0
        %3091 = vmatpush2.msra.mxu0 0.0
        %3092 = vmatprep.subr.mxu0 0.0
        %3093 = vmatpush2.msra.mxu0 0.0
        %3094 = vmatprep.subr.mxu0 0.0
        %3095 = vmatpush2.msra.mxu0 0.0
        %3096 = vmatprep.subr.mxu0 0.0
        %3097 = vmatpush2.msra.mxu0 0.0
        %3098 = vmatprep.subr.mxu0 0.0
        %3099 = vmatpush2.msra.mxu0 0.0
        %3100 = vmatprep.subr.mxu0 0.0
        %3101 = vmatpush2.msra.mxu0 0.0
        %3102 = vmatprep.mubr.f32.mxu0 0.0
        %3103 = vmatmul.mubr.f32.gmra.mxu0 %v2999
        %v3104 = vpop.f32.mrf.mxu0
        %v3105 = vadd.f32 %v3036, %v3104
        %v3106 = vpop.f32.mrf.mxu0
        %3107 = vmatprep.mubr.f32.mxu0 0.0
        %3108 = vmatmul.mubr.f32.gmra.mxu0 %v3000
        %v3109 = vpop.f32.mrf.mxu0
        %v3110 = vadd.f32 %v3036, %v3109
        %v3111 = vpop.f32.mrf.mxu0
        %3112 = vmatprep.mubr.f32.mxu0 0.0
        %3113 = vmatmul.mubr.f32.gmra.mxu0 %v3001
        %v3114 = vpop.f32.mrf.mxu0
        %v3115 = vadd.f32 %v3036, %v3114
        %v3116 = vpop.f32.mrf.mxu0
        %3117 = vmatprep.mubr.f32.mxu0 0.0
        %3118 = vmatmul.mubr.f32.gmra.mxu0 %v3002
        %v3119 = vpop.f32.mrf.mxu0
        %v3120 = vadd.f32 %v3036, %v3119
        %v3121 = vpop.f32.mrf.mxu0
        %3122 = vmatprep.mubr.f32.mxu0 0.0
        %3123 = vmatmul.mubr.f32.gmra.mxu0 %v3003
        %v3124 = vpop.f32.mrf.mxu0
        %v3125 = vadd.f32 %v3036, %v3124
        %v3126 = vpop.f32.mrf.mxu0
        %3127 = vmatprep.mubr.f32.mxu0 0.0
        %3128 = vmatmul.mubr.f32.gmra.mxu0 %v3004
        %v3129 = vpop.f32.mrf.mxu0
        %v3130 = vadd.f32 %v3036, %v3129
        %v3131 = vpop.f32.mrf.mxu0
        %3132 = vmatprep.mubr.f32.mxu0 0.0
        %3133 = vmatmul.mubr.f32.gmra.mxu0 %v3005
        %v3134 = vpop.f32.mrf.mxu0
        %v3135 = vadd.f32 %v3036, %v3134
        %v3136 = vpop.f32.mrf.mxu0
        %3137 = vmatprep.mubr.f32.mxu0 0.0
        %3138 = vmatmul.mubr.f32.gmra.mxu0 %v3006
        %v3139 = vpop.f32.mrf.mxu0
        %v3140 = vadd.f32 %v3036, %v3139
        %v3141 = vpop.f32.mrf.mxu0
        %3142 = vmatprep.mubr.f32.mxu0 0.0
        %3143 = vmatmul.mubr.f32.gmra.mxu0 %v3007
        %v3144 = vpop.f32.mrf.mxu0
        %v3145 = vadd.f32 %v3036, %v3144
        %v3146 = vpop.f32.mrf.mxu0
        %3147 = vmatprep.mubr.f32.mxu0 0.0
        %3148 = vmatmul.mubr.f32.gmra.mxu0 %v3008
        %v3149 = vpop.f32.mrf.mxu0
        %v3150 = vadd.f32 %v3036, %v3149
        %v3151 = vpop.f32.mrf.mxu0
        %3152 = vmatprep.mubr.f32.mxu0 0.0
        %3153 = vmatmul.mubr.f32.gmra.mxu0 %v3009
        %v3154 = vpop.f32.mrf.mxu0
        %v3155 = vadd.f32 %v3036, %v3154
        %v3156 = vpop.f32.mrf.mxu0
        %3157 = vmatprep.mubr.f32.mxu0 0.0
        %3158 = vmatmul.mubr.f32.gmra.mxu0 %v3010
        %v3159 = vpop.f32.mrf.mxu0
        %v3160 = vadd.f32 %v3036, %v3159
        %v3161 = vpop.f32.mrf.mxu0
        %3162 = vmatprep.mubr.f32.mxu0 0.0
        %3163 = vmatmul.mubr.f32.gmra.mxu0 %v3011
        %v3164 = vpop.f32.mrf.mxu0
        %v3165 = vadd.f32 %v3036, %v3164
        %v3166 = vpop.f32.mrf.mxu0
        %3167 = vmatprep.mubr.f32.mxu0 0.0
        %3168 = vmatmul.mubr.f32.gmra.mxu0 %v3012
        %v3169 = vpop.f32.mrf.mxu0
        %v3170 = vadd.f32 %v3036, %v3169
        %v3171 = vpop.f32.mrf.mxu0
        %3172 = vmatprep.mubr.f32.mxu0 0.0
        %3173 = vmatmul.mubr.f32.gmra.mxu0 %v3013
        %v3174 = vpop.f32.mrf.mxu0
        %v3175 = vadd.f32 %v3036, %v3174
        %v3176 = vpop.f32.mrf.mxu0
        %3177 = vmatprep.mubr.f32.mxu0 0.0
        %3178 = vmatmul.mubr.f32.gmra.mxu0 %v3014
        %v3179 = vpop.f32.mrf.mxu0
        %v3180 = vadd.f32 %v3036, %v3179
        %v3181 = vpop.f32.mrf.mxu0
        %3182 = vdwg.mxu0
        %v3183 = vld [vmem:[#allocation14] sm:$0xff]
        %v3184 = vld [vmem:[#allocation14 + $0x8] sm:$0xff]
        %v3185 = vld [vmem:[#allocation14 + $0x10] sm:$0xff]
        %v3186 = vld [vmem:[#allocation14 + $0x18] sm:$0xff]
        %v3187 = vld [vmem:[#allocation14 + $0x20] sm:$0xff]
        %v3188 = vld [vmem:[#allocation14 + $0x28] sm:$0xff]
        %v3189 = vld [vmem:[#allocation14 + $0x30] sm:$0xff]
        %v3190 = vld [vmem:[#allocation14 + $0x38] sm:$0xff]
        %v3191 = vld [vmem:[#allocation14 + $0x40] sm:$0xff]
        %v3192 = vld [vmem:[#allocation14 + $0x48] sm:$0xff]
        %v3193 = vld [vmem:[#allocation14 + $0x50] sm:$0xff]
        %v3194 = vld [vmem:[#allocation14 + $0x58] sm:$0xff]
        %v3195 = vld [vmem:[#allocation14 + $0x60] sm:$0xff]
        %v3196 = vld [vmem:[#allocation14 + $0x68] sm:$0xff]
        %v3197 = vld [vmem:[#allocation14 + $0x70] sm:$0xff]
        %v3198 = vld [vmem:[#allocation14 + $0x78] sm:$0xff]
        %v3199 = vld [vmem:[#allocation16] sm:$0x1]
        %v3201 = vlaneseq
        %v3202 = vshrl.u32 %v3201, 7
        %v3203 = vsub.s32 0, %v3202
        %v3204 = vrot.slane %v3199, %v3203
        %3206 = vmatprep.subr.mxu0 0.0
        %3207 = vmatpush1.msra.mxu0 %v3198
        %3208 = vmatprep.subr.mxu0 0.0
        %3209 = vmatpush1.msra.mxu0 %v3197
        %3210 = vmatprep.subr.mxu0 0.0
        %3211 = vmatpush1.msra.mxu0 %v3196
        %3212 = vmatprep.subr.mxu0 0.0
        %3213 = vmatpush1.msra.mxu0 %v3195
        %3214 = vmatprep.subr.mxu0 0.0
        %3215 = vmatpush1.msra.mxu0 %v3194
        %3216 = vmatprep.subr.mxu0 0.0
        %3217 = vmatpush1.msra.mxu0 %v3193
        %3218 = vmatprep.subr.mxu0 0.0
        %3219 = vmatpush1.msra.mxu0 %v3192
        %3220 = vmatprep.subr.mxu0 0.0
        %3221 = vmatpush1.msra.mxu0 %v3191
        %3222 = vmatprep.subr.mxu0 0.0
        %3223 = vmatpush1.msra.mxu0 %v3190
        %3224 = vmatprep.subr.mxu0 0.0
        %3225 = vmatpush1.msra.mxu0 %v3189
        %3226 = vmatprep.subr.mxu0 0.0
        %3227 = vmatpush1.msra.mxu0 %v3188
        %3228 = vmatprep.subr.mxu0 0.0
        %3229 = vmatpush1.msra.mxu0 %v3187
        %3230 = vmatprep.subr.mxu0 0.0
        %3231 = vmatpush1.msra.mxu0 %v3186
        %3232 = vmatprep.subr.mxu0 0.0
        %3233 = vmatpush1.msra.mxu0 %v3185
        %3234 = vmatprep.subr.mxu0 0.0
        %3235 = vmatpush1.msra.mxu0 %v3184
        %3236 = vmatprep.subr.mxu0 0.0
        %3237 = vmatpush1.msra.mxu0 %v3183
        %3238 = vmatprep.subr.mxu0 0.0
        %3239 = vmatpush2.msra.mxu0 0.0
        %3240 = vmatprep.subr.mxu0 0.0
        %3241 = vmatpush2.msra.mxu0 0.0
        %3242 = vmatprep.subr.mxu0 0.0
        %3243 = vmatpush2.msra.mxu0 0.0
        %3244 = vmatprep.subr.mxu0 0.0
        %3245 = vmatpush2.msra.mxu0 0.0
        %3246 = vmatprep.subr.mxu0 0.0
        %3247 = vmatpush2.msra.mxu0 0.0
        %3248 = vmatprep.subr.mxu0 0.0
        %3249 = vmatpush2.msra.mxu0 0.0
        %3250 = vmatprep.subr.mxu0 0.0
        %3251 = vmatpush2.msra.mxu0 0.0
        %3252 = vmatprep.subr.mxu0 0.0
        %3253 = vmatpush2.msra.mxu0 0.0
        %3254 = vmatprep.subr.mxu0 0.0
        %3255 = vmatpush2.msra.mxu0 0.0
        %3256 = vmatprep.subr.mxu0 0.0
        %3257 = vmatpush2.msra.mxu0 0.0
        %3258 = vmatprep.subr.mxu0 0.0
        %3259 = vmatpush2.msra.mxu0 0.0
        %3260 = vmatprep.subr.mxu0 0.0
        %3261 = vmatpush2.msra.mxu0 0.0
        %3262 = vmatprep.subr.mxu0 0.0
        %3263 = vmatpush2.msra.mxu0 0.0
        %3264 = vmatprep.subr.mxu0 0.0
        %3265 = vmatpush2.msra.mxu0 0.0
        %3266 = vmatprep.subr.mxu0 0.0
        %3267 = vmatpush2.msra.mxu0 0.0
        %3268 = vmatprep.subr.mxu0 0.0
        %3269 = vmatpush2.msra.mxu0 0.0
        %3270 = vmatprep.mubr.f32.mxu0 0.0
        %3271 = vmatmul.mubr.f32.gmra.mxu0 %v3105
        %v3272 = vpop.f32.mrf.mxu0
        %v3273 = vadd.f32 %v3204, %v3272
        %v3274 = vpop.f32.mrf.mxu0
        %3275 = vmatprep.mubr.f32.mxu0 0.0
        %3276 = vmatmul.mubr.f32.gmra.mxu0 %v3110
        %v3277 = vpop.f32.mrf.mxu0
        %v3278 = vadd.f32 %v3204, %v3277
        %v3279 = vpop.f32.mrf.mxu0
        %3280 = vmatprep.mubr.f32.mxu0 0.0
        %3281 = vmatmul.mubr.f32.gmra.mxu0 %v3115
        %v3282 = vpop.f32.mrf.mxu0
        %v3283 = vadd.f32 %v3204, %v3282
        %v3284 = vpop.f32.mrf.mxu0
        %3285 = vmatprep.mubr.f32.mxu0 0.0
        %3286 = vmatmul.mubr.f32.gmra.mxu0 %v3120
        %v3287 = vpop.f32.mrf.mxu0
        %v3288 = vadd.f32 %v3204, %v3287
        %v3289 = vpop.f32.mrf.mxu0
        %3290 = vmatprep.mubr.f32.mxu0 0.0
        %3291 = vmatmul.mubr.f32.gmra.mxu0 %v3125
        %v3292 = vpop.f32.mrf.mxu0
        %v3293 = vadd.f32 %v3204, %v3292
        %v3294 = vpop.f32.mrf.mxu0
        %3295 = vmatprep.mubr.f32.mxu0 0.0
        %3296 = vmatmul.mubr.f32.gmra.mxu0 %v3130
        %v3297 = vpop.f32.mrf.mxu0
        %v3298 = vadd.f32 %v3204, %v3297
        %v3299 = vpop.f32.mrf.mxu0
        %3300 = vmatprep.mubr.f32.mxu0 0.0
        %3301 = vmatmul.mubr.f32.gmra.mxu0 %v3135
        %v3302 = vpop.f32.mrf.mxu0
        %v3303 = vadd.f32 %v3204, %v3302
        %v3304 = vpop.f32.mrf.mxu0
        %3305 = vmatprep.mubr.f32.mxu0 0.0
        %3306 = vmatmul.mubr.f32.gmra.mxu0 %v3140
        %v3307 = vpop.f32.mrf.mxu0
        %v3308 = vadd.f32 %v3204, %v3307
        %v3309 = vpop.f32.mrf.mxu0
        %3310 = vmatprep.mubr.f32.mxu0 0.0
        %3311 = vmatmul.mubr.f32.gmra.mxu0 %v3145
        %v3312 = vpop.f32.mrf.mxu0
        %v3313 = vadd.f32 %v3204, %v3312
        %v3314 = vpop.f32.mrf.mxu0
        %3315 = vmatprep.mubr.f32.mxu0 0.0
        %3316 = vmatmul.mubr.f32.gmra.mxu0 %v3150
        %v3317 = vpop.f32.mrf.mxu0
        %v3318 = vadd.f32 %v3204, %v3317
        %v3319 = vpop.f32.mrf.mxu0
        %3320 = vmatprep.mubr.f32.mxu0 0.0
        %3321 = vmatmul.mubr.f32.gmra.mxu0 %v3155
        %v3322 = vpop.f32.mrf.mxu0
        %v3323 = vadd.f32 %v3204, %v3322
        %v3324 = vpop.f32.mrf.mxu0
        %3325 = vmatprep.mubr.f32.mxu0 0.0
        %3326 = vmatmul.mubr.f32.gmra.mxu0 %v3160
        %v3327 = vpop.f32.mrf.mxu0
        %v3328 = vadd.f32 %v3204, %v3327
        %v3329 = vpop.f32.mrf.mxu0
        %3330 = vmatprep.mubr.f32.mxu0 0.0
        %3331 = vmatmul.mubr.f32.gmra.mxu0 %v3165
        %v3332 = vpop.f32.mrf.mxu0
        %v3333 = vadd.f32 %v3204, %v3332
        %v3334 = vpop.f32.mrf.mxu0
        %3335 = vmatprep.mubr.f32.mxu0 0.0
        %3336 = vmatmul.mubr.f32.gmra.mxu0 %v3170
        %v3337 = vpop.f32.mrf.mxu0
        %v3338 = vadd.f32 %v3204, %v3337
        %v3339 = vpop.f32.mrf.mxu0
        %3340 = vmatprep.mubr.f32.mxu0 0.0
        %3341 = vmatmul.mubr.f32.gmra.mxu0 %v3175
        %v3342 = vpop.f32.mrf.mxu0
        %v3343 = vadd.f32 %v3204, %v3342
        %v3344 = vpop.f32.mrf.mxu0
        %3345 = vmatprep.mubr.f32.mxu0 0.0
        %3346 = vmatmul.mubr.f32.gmra.mxu0 %v3180
        %v3347 = vpop.f32.mrf.mxu0
        %v3348 = vadd.f32 %v3204, %v3347
        %v3349 = vpop.f32.mrf.mxu0
        %3350 = vdwg.mxu0
        %v3351 = vmax.f32 %v3273, 0.0
        %v3352 = vmax.f32 %v3278, 0.0
        %v3353 = vmax.f32 %v3283, 0.0
        %v3354 = vmax.f32 %v3288, 0.0
        %v3355 = vmax.f32 %v3293, 0.0
        %v3356 = vmax.f32 %v3298, 0.0
        %v3357 = vmax.f32 %v3303, 0.0
        %v3358 = vmax.f32 %v3308, 0.0
        %v3359 = vmax.f32 %v3313, 0.0
        %v3360 = vmax.f32 %v3318, 0.0
        %v3361 = vmax.f32 %v3323, 0.0
        %v3362 = vmax.f32 %v3328, 0.0
        %v3363 = vmax.f32 %v3333, 0.0
        %v3364 = vmax.f32 %v3338, 0.0
        %v3365 = vmax.f32 %v3343, 0.0
        %v3366 = vmax.f32 %v3348, 0.0
        %v3367 = vld [vmem:[#allocation17] sm:$0xff]
        %v3368 = vld [vmem:[#allocation17 + $0x8] sm:$0xff]
        %v3369 = vld [vmem:[#allocation17 + $0x10] sm:$0xff]
        %v3370 = vld [vmem:[#allocation17 + $0x18] sm:$0xff]
        %v3371 = vld [vmem:[#allocation17 + $0x20] sm:$0xff]
        %v3372 = vld [vmem:[#allocation17 + $0x28] sm:$0xff]
        %v3373 = vld [vmem:[#allocation17 + $0x30] sm:$0xff]
        %v3374 = vld [vmem:[#allocation17 + $0x38] sm:$0xff]
        %v3375 = vld [vmem:[#allocation17 + $0x40] sm:$0xff]
        %v3376 = vld [vmem:[#allocation17 + $0x48] sm:$0xff]
        %v3377 = vld [vmem:[#allocation17 + $0x50] sm:$0xff]
        %v3378 = vld [vmem:[#allocation17 + $0x58] sm:$0xff]
        %v3379 = vld [vmem:[#allocation17 + $0x60] sm:$0xff]
        %v3380 = vld [vmem:[#allocation17 + $0x68] sm:$0xff]
        %v3381 = vld [vmem:[#allocation17 + $0x70] sm:$0xff]
        %v3382 = vld [vmem:[#allocation17 + $0x78] sm:$0xff]
        %v3383 = vld [vmem:[#allocation17 + $0x80] sm:$0xff]
        %v3384 = vld [vmem:[#allocation17 + $0x88] sm:$0xff]
        %v3385 = vld [vmem:[#allocation17 + $0x90] sm:$0xff]
        %v3386 = vld [vmem:[#allocation17 + $0x98] sm:$0xff]
        %v3387 = vld [vmem:[#allocation17 + $0xa0] sm:$0xff]
        %v3388 = vld [vmem:[#allocation17 + $0xa8] sm:$0xff]
        %v3389 = vld [vmem:[#allocation17 + $0xb0] sm:$0xff]
        %v3390 = vld [vmem:[#allocation17 + $0xb8] sm:$0xff]
        %v3391 = vld [vmem:[#allocation17 + $0xc0] sm:$0xff]
        %v3392 = vld [vmem:[#allocation17 + $0xc8] sm:$0xff]
        %v3393 = vld [vmem:[#allocation17 + $0xd0] sm:$0xff]
        %v3394 = vld [vmem:[#allocation17 + $0xd8] sm:$0xff]
        %v3395 = vld [vmem:[#allocation17 + $0xe0] sm:$0xff]
        %v3396 = vld [vmem:[#allocation17 + $0xe8] sm:$0xff]
        %v3397 = vld [vmem:[#allocation17 + $0xf0] sm:$0xff]
        %v3398 = vld [vmem:[#allocation17 + $0xf8] sm:$0xff]
        %v3399 = vld [vmem:[#allocation17 + $0x100] sm:$0xff]
        %v3400 = vld [vmem:[#allocation17 + $0x108] sm:$0xff]
        %v3401 = vld [vmem:[#allocation17 + $0x110] sm:$0xff]
        %v3402 = vld [vmem:[#allocation17 + $0x118] sm:$0xff]
        %v3403 = vld [vmem:[#allocation17 + $0x120] sm:$0xff]
        %v3404 = vld [vmem:[#allocation17 + $0x128] sm:$0xff]
        %v3405 = vld [vmem:[#allocation17 + $0x130] sm:$0xff]
        %v3406 = vld [vmem:[#allocation17 + $0x138] sm:$0xff]
        %v3407 = vld [vmem:[#allocation17 + $0x140] sm:$0xff]
        %v3408 = vld [vmem:[#allocation17 + $0x148] sm:$0xff]
        %v3409 = vld [vmem:[#allocation17 + $0x150] sm:$0xff]
        %v3410 = vld [vmem:[#allocation17 + $0x158] sm:$0xff]
        %v3411 = vld [vmem:[#allocation17 + $0x160] sm:$0xff]
        %v3412 = vld [vmem:[#allocation17 + $0x168] sm:$0xff]
        %v3413 = vld [vmem:[#allocation17 + $0x170] sm:$0xff]
        %v3414 = vld [vmem:[#allocation17 + $0x178] sm:$0xff]
        %v3415 = vld [vmem:[#allocation17 + $0x180] sm:$0xff]
        %v3416 = vld [vmem:[#allocation17 + $0x188] sm:$0xff]
        %v3417 = vld [vmem:[#allocation17 + $0x190] sm:$0xff]
        %v3418 = vld [vmem:[#allocation17 + $0x198] sm:$0xff]
        %v3419 = vld [vmem:[#allocation17 + $0x1a0] sm:$0xff]
        %v3420 = vld [vmem:[#allocation17 + $0x1a8] sm:$0xff]
        %v3421 = vld [vmem:[#allocation17 + $0x1b0] sm:$0xff]
        %v3422 = vld [vmem:[#allocation17 + $0x1b8] sm:$0xff]
        %v3423 = vld [vmem:[#allocation17 + $0x1c0] sm:$0xff]
        %v3424 = vld [vmem:[#allocation17 + $0x1c8] sm:$0xff]
        %v3425 = vld [vmem:[#allocation17 + $0x1d0] sm:$0xff]
        %v3426 = vld [vmem:[#allocation17 + $0x1d8] sm:$0xff]
        %v3427 = vld [vmem:[#allocation17 + $0x1e0] sm:$0xff]
        %v3428 = vld [vmem:[#allocation17 + $0x1e8] sm:$0xff]
        %v3429 = vld [vmem:[#allocation17 + $0x1f0] sm:$0xff]
        %v3430 = vld [vmem:[#allocation17 + $0x1f8] sm:$0xff]
        %v3431 = vld [vmem:[#allocation19] sm:$0xf]
        %v3433 = vlaneseq
        %v3434 = vshrl.u32 %v3433, 7
        %v3435 = vsub.s32 0, %v3434
        %v3436 = vrot.slane %v3431, %v3435
        %v3437 = vlaneseq
        %v3438 = vshrl.u32 %v3437, 7
        %v3439 = vsub.s32 1, %v3438
        %v3440 = vrot.slane %v3431, %v3439
        %v3441 = vlaneseq
        %v3442 = vshrl.u32 %v3441, 7
        %v3443 = vsub.s32 2, %v3442
        %v3444 = vrot.slane %v3431, %v3443
        %v3445 = vlaneseq
        %v3446 = vshrl.u32 %v3445, 7
        %v3447 = vsub.s32 3, %v3446
        %v3448 = vrot.slane %v3431, %v3447
        %3453 = vmatprep.subr.mxu0 %v3428
        %3454 = vmatpush1.msra.mxu0 %v3427
        %3455 = vmatprep.subr.mxu0 %v3424
        %3456 = vmatpush1.msra.mxu0 %v3423
        %3457 = vmatprep.subr.mxu0 %v3420
        %3458 = vmatpush1.msra.mxu0 %v3419
        %3459 = vmatprep.subr.mxu0 %v3416
        %3460 = vmatpush1.msra.mxu0 %v3415
        %3461 = vmatprep.subr.mxu0 %v3412
        %3462 = vmatpush1.msra.mxu0 %v3411
        %3463 = vmatprep.subr.mxu0 %v3408
        %3464 = vmatpush1.msra.mxu0 %v3407
        %3465 = vmatprep.subr.mxu0 %v3404
        %3466 = vmatpush1.msra.mxu0 %v3403
        %3467 = vmatprep.subr.mxu0 %v3400
        %3468 = vmatpush1.msra.mxu0 %v3399
        %3469 = vmatprep.subr.mxu0 %v3396
        %3470 = vmatpush1.msra.mxu0 %v3395
        %3471 = vmatprep.subr.mxu0 %v3392
        %3472 = vmatpush1.msra.mxu0 %v3391
        %3473 = vmatprep.subr.mxu0 %v3388
        %3474 = vmatpush1.msra.mxu0 %v3387
        %3475 = vmatprep.subr.mxu0 %v3384
        %3476 = vmatpush1.msra.mxu0 %v3383
        %3477 = vmatprep.subr.mxu0 %v3380
        %3478 = vmatpush1.msra.mxu0 %v3379
        %3479 = vmatprep.subr.mxu0 %v3376
        %3480 = vmatpush1.msra.mxu0 %v3375
        %3481 = vmatprep.subr.mxu0 %v3372
        %3482 = vmatpush1.msra.mxu0 %v3371
        %3483 = vmatprep.subr.mxu0 %v3368
        %3484 = vmatpush1.msra.mxu0 %v3367
        %3485 = vmatprep.subr.mxu0 0.0
        %3486 = vmatpush2.msra.mxu0 0.0
        %3487 = vmatprep.subr.mxu0 0.0
        %3488 = vmatpush2.msra.mxu0 0.0
        %3489 = vmatprep.subr.mxu0 0.0
        %3490 = vmatpush2.msra.mxu0 0.0
        %3491 = vmatprep.subr.mxu0 0.0
        %3492 = vmatpush2.msra.mxu0 0.0
        %3493 = vmatprep.subr.mxu0 0.0
        %3494 = vmatpush2.msra.mxu0 0.0
        %3495 = vmatprep.subr.mxu0 0.0
        %3496 = vmatpush2.msra.mxu0 0.0
        %3497 = vmatprep.subr.mxu0 0.0
        %3498 = vmatpush2.msra.mxu0 0.0
        %3499 = vmatprep.subr.mxu0 0.0
        %3500 = vmatpush2.msra.mxu0 0.0
        %3501 = vmatprep.subr.mxu0 0.0
        %3502 = vmatpush2.msra.mxu0 0.0
        %3503 = vmatprep.subr.mxu0 0.0
        %3504 = vmatpush2.msra.mxu0 0.0
        %3505 = vmatprep.subr.mxu0 0.0
        %3506 = vmatpush2.msra.mxu0 0.0
        %3507 = vmatprep.subr.mxu0 0.0
        %3508 = vmatpush2.msra.mxu0 0.0
        %3509 = vmatprep.subr.mxu0 0.0
        %3510 = vmatpush2.msra.mxu0 0.0
        %3511 = vmatprep.subr.mxu0 0.0
        %3512 = vmatpush2.msra.mxu0 0.0
        %3513 = vmatprep.subr.mxu0 0.0
        %3514 = vmatpush2.msra.mxu0 0.0
        %3515 = vmatprep.subr.mxu0 0.0
        %3516 = vmatpush2.msra.mxu0 0.0
        %3517 = vmatprep.mubr.f32.mxu0 0.0
        %3518 = vmatmul.mubr.f32.gmra.mxu0 %v3351
        %v3519 = vpop.f32.mrf.mxu0
        %v3520 = vadd.f32 %v3436, %v3519
        %v3521 = vpop.f32.mrf.mxu0
        %v3522 = vadd.f32 %v3440, %v3521
        %3523 = vmatprep.mubr.f32.mxu0 0.0
        %3524 = vmatmul.mubr.f32.gmra.mxu0 %v3352
        %v3525 = vpop.f32.mrf.mxu0
        %v3526 = vadd.f32 %v3436, %v3525
        %v3527 = vpop.f32.mrf.mxu0
        %v3528 = vadd.f32 %v3440, %v3527
        %3529 = vmatprep.mubr.f32.mxu0 0.0
        %3530 = vmatmul.mubr.f32.gmra.mxu0 %v3353
        %v3531 = vpop.f32.mrf.mxu0
        %v3532 = vadd.f32 %v3436, %v3531
        %v3533 = vpop.f32.mrf.mxu0
        %v3534 = vadd.f32 %v3440, %v3533
        %3535 = vmatprep.mubr.f32.mxu0 0.0
        %3536 = vmatmul.mubr.f32.gmra.mxu0 %v3354
        %v3537 = vpop.f32.mrf.mxu0
        %v3538 = vadd.f32 %v3436, %v3537
        %v3539 = vpop.f32.mrf.mxu0
        %v3540 = vadd.f32 %v3440, %v3539
        %3541 = vmatprep.mubr.f32.mxu0 0.0
        %3542 = vmatmul.mubr.f32.gmra.mxu0 %v3355
        %v3543 = vpop.f32.mrf.mxu0
        %v3544 = vadd.f32 %v3436, %v3543
        %v3545 = vpop.f32.mrf.mxu0
        %v3546 = vadd.f32 %v3440, %v3545
        %3547 = vmatprep.mubr.f32.mxu0 0.0
        %3548 = vmatmul.mubr.f32.gmra.mxu0 %v3356
        %v3549 = vpop.f32.mrf.mxu0
        %v3550 = vadd.f32 %v3436, %v3549
        %v3551 = vpop.f32.mrf.mxu0
        %v3552 = vadd.f32 %v3440, %v3551
        %3553 = vmatprep.mubr.f32.mxu0 0.0
        %3554 = vmatmul.mubr.f32.gmra.mxu0 %v3357
        %v3555 = vpop.f32.mrf.mxu0
        %v3556 = vadd.f32 %v3436, %v3555
        %v3557 = vpop.f32.mrf.mxu0
        %v3558 = vadd.f32 %v3440, %v3557
        %3559 = vmatprep.mubr.f32.mxu0 0.0
        %3560 = vmatmul.mubr.f32.gmra.mxu0 %v3358
        %v3561 = vpop.f32.mrf.mxu0
        %v3562 = vadd.f32 %v3436, %v3561
        %v3563 = vpop.f32.mrf.mxu0
        %v3564 = vadd.f32 %v3440, %v3563
        %3565 = vmatprep.mubr.f32.mxu0 0.0
        %3566 = vmatmul.mubr.f32.gmra.mxu0 %v3359
        %v3567 = vpop.f32.mrf.mxu0
        %v3568 = vadd.f32 %v3436, %v3567
        %v3569 = vpop.f32.mrf.mxu0
        %v3570 = vadd.f32 %v3440, %v3569
        %3571 = vmatprep.mubr.f32.mxu0 0.0
        %3572 = vmatmul.mubr.f32.gmra.mxu0 %v3360
        %v3573 = vpop.f32.mrf.mxu0
        %v3574 = vadd.f32 %v3436, %v3573
        %v3575 = vpop.f32.mrf.mxu0
        %v3576 = vadd.f32 %v3440, %v3575
        %3577 = vmatprep.mubr.f32.mxu0 0.0
        %3578 = vmatmul.mubr.f32.gmra.mxu0 %v3361
        %v3579 = vpop.f32.mrf.mxu0
        %v3580 = vadd.f32 %v3436, %v3579
        %v3581 = vpop.f32.mrf.mxu0
        %v3582 = vadd.f32 %v3440, %v3581
        %3583 = vmatprep.mubr.f32.mxu0 0.0
        %3584 = vmatmul.mubr.f32.gmra.mxu0 %v3362
        %v3585 = vpop.f32.mrf.mxu0
        %v3586 = vadd.f32 %v3436, %v3585
        %v3587 = vpop.f32.mrf.mxu0
        %v3588 = vadd.f32 %v3440, %v3587
        %3589 = vmatprep.mubr.f32.mxu0 0.0
        %3590 = vmatmul.mubr.f32.gmra.mxu0 %v3363
        %v3591 = vpop.f32.mrf.mxu0
        %v3592 = vadd.f32 %v3436, %v3591
        %v3593 = vpop.f32.mrf.mxu0
        %v3594 = vadd.f32 %v3440, %v3593
        %3595 = vmatprep.mubr.f32.mxu0 0.0
        %3596 = vmatmul.mubr.f32.gmra.mxu0 %v3364
        %v3597 = vpop.f32.mrf.mxu0
        %v3598 = vadd.f32 %v3436, %v3597
        %v3599 = vpop.f32.mrf.mxu0
        %v3600 = vadd.f32 %v3440, %v3599
        %3601 = vmatprep.mubr.f32.mxu0 0.0
        %3602 = vmatmul.mubr.f32.gmra.mxu0 %v3365
        %v3603 = vpop.f32.mrf.mxu0
        %v3604 = vadd.f32 %v3436, %v3603
        %v3605 = vpop.f32.mrf.mxu0
        %v3606 = vadd.f32 %v3440, %v3605
        %3607 = vmatprep.mubr.f32.mxu0 0.0
        %3608 = vmatmul.mubr.f32.gmra.mxu0 %v3366
        %v3609 = vpop.f32.mrf.mxu0
        %v3610 = vadd.f32 %v3436, %v3609
        %v3611 = vpop.f32.mrf.mxu0
        %v3612 = vadd.f32 %v3440, %v3611
        %3613 = vdwg.mxu0
        %3614 = vmatprep.subr.mxu0 %v3430
        %3615 = vmatpush1.msra.mxu0 %v3429
        %3616 = vmatprep.subr.mxu0 %v3426
        %3617 = vmatpush1.msra.mxu0 %v3425
        %3618 = vmatprep.subr.mxu0 %v3422
        %3619 = vmatpush1.msra.mxu0 %v3421
        %3620 = vmatprep.subr.mxu0 %v3418
        %3621 = vmatpush1.msra.mxu0 %v3417
        %3622 = vmatprep.subr.mxu0 %v3414
        %3623 = vmatpush1.msra.mxu0 %v3413
        %3624 = vmatprep.subr.mxu0 %v3410
        %3625 = vmatpush1.msra.mxu0 %v3409
        %3626 = vmatprep.subr.mxu0 %v3406
        %3627 = vmatpush1.msra.mxu0 %v3405
        %3628 = vmatprep.subr.mxu0 %v3402
        %3629 = vmatpush1.msra.mxu0 %v3401
        %3630 = vmatprep.subr.mxu0 %v3398
        %3631 = vmatpush1.msra.mxu0 %v3397
        %3632 = vmatprep.subr.mxu0 %v3394
        %3633 = vmatpush1.msra.mxu0 %v3393
        %3634 = vmatprep.subr.mxu0 %v3390
        %3635 = vmatpush1.msra.mxu0 %v3389
        %3636 = vmatprep.subr.mxu0 %v3386
        %3637 = vmatpush1.msra.mxu0 %v3385
        %3638 = vmatprep.subr.mxu0 %v3382
        %3639 = vmatpush1.msra.mxu0 %v3381
        %3640 = vmatprep.subr.mxu0 %v3378
        %3641 = vmatpush1.msra.mxu0 %v3377
        %3642 = vmatprep.subr.mxu0 %v3374
        %3643 = vmatpush1.msra.mxu0 %v3373
        %3644 = vmatprep.subr.mxu0 %v3370
        %3645 = vmatpush1.msra.mxu0 %v3369
        %3646 = vmatprep.subr.mxu0 0.0
        %3647 = vmatpush2.msra.mxu0 0.0
        %3648 = vmatprep.subr.mxu0 0.0
        %3649 = vmatpush2.msra.mxu0 0.0
        %3650 = vmatprep.subr.mxu0 0.0
        %3651 = vmatpush2.msra.mxu0 0.0
        %3652 = vmatprep.subr.mxu0 0.0
        %3653 = vmatpush2.msra.mxu0 0.0
        %3654 = vmatprep.subr.mxu0 0.0
        %3655 = vmatpush2.msra.mxu0 0.0
        %3656 = vmatprep.subr.mxu0 0.0
        %3657 = vmatpush2.msra.mxu0 0.0
        %3658 = vmatprep.subr.mxu0 0.0
        %3659 = vmatpush2.msra.mxu0 0.0
        %3660 = vmatprep.subr.mxu0 0.0
        %3661 = vmatpush2.msra.mxu0 0.0
        %3662 = vmatprep.subr.mxu0 0.0
        %3663 = vmatpush2.msra.mxu0 0.0
        %3664 = vmatprep.subr.mxu0 0.0
        %3665 = vmatpush2.msra.mxu0 0.0
        %3666 = vmatprep.subr.mxu0 0.0
        %3667 = vmatpush2.msra.mxu0 0.0
        %3668 = vmatprep.subr.mxu0 0.0
        %3669 = vmatpush2.msra.mxu0 0.0
        %3670 = vmatprep.subr.mxu0 0.0
        %3671 = vmatpush2.msra.mxu0 0.0
        %3672 = vmatprep.subr.mxu0 0.0
        %3673 = vmatpush2.msra.mxu0 0.0
        %3674 = vmatprep.subr.mxu0 0.0
        %3675 = vmatpush2.msra.mxu0 0.0
        %3676 = vmatprep.subr.mxu0 0.0
        %3677 = vmatpush2.msra.mxu0 0.0
        %3678 = vmatprep.mubr.f32.mxu0 0.0
        %3679 = vmatmul.mubr.f32.gmra.mxu0 %v3351
        %v3680 = vpop.f32.mrf.mxu0
        %v3681 = vadd.f32 %v3444, %v3680
        %v3682 = vpop.f32.mrf.mxu0
        %v3683 = vadd.f32 %v3448, %v3682
        %3684 = vmatprep.mubr.f32.mxu0 0.0
        %3685 = vmatmul.mubr.f32.gmra.mxu0 %v3352
        %v3686 = vpop.f32.mrf.mxu0
        %v3687 = vadd.f32 %v3444, %v3686
        %v3688 = vpop.f32.mrf.mxu0
        %v3689 = vadd.f32 %v3448, %v3688
        %3690 = vmatprep.mubr.f32.mxu0 0.0
        %3691 = vmatmul.mubr.f32.gmra.mxu0 %v3353
        %v3692 = vpop.f32.mrf.mxu0
        %v3693 = vadd.f32 %v3444, %v3692
        %v3694 = vpop.f32.mrf.mxu0
        %v3695 = vadd.f32 %v3448, %v3694
        %3696 = vmatprep.mubr.f32.mxu0 0.0
        %3697 = vmatmul.mubr.f32.gmra.mxu0 %v3354
        %v3698 = vpop.f32.mrf.mxu0
        %v3699 = vadd.f32 %v3444, %v3698
        %v3700 = vpop.f32.mrf.mxu0
        %v3701 = vadd.f32 %v3448, %v3700
        %3702 = vmatprep.mubr.f32.mxu0 0.0
        %3703 = vmatmul.mubr.f32.gmra.mxu0 %v3355
        %v3704 = vpop.f32.mrf.mxu0
        %v3705 = vadd.f32 %v3444, %v3704
        %v3706 = vpop.f32.mrf.mxu0
        %v3707 = vadd.f32 %v3448, %v3706
        %3708 = vmatprep.mubr.f32.mxu0 0.0
        %3709 = vmatmul.mubr.f32.gmra.mxu0 %v3356
        %v3710 = vpop.f32.mrf.mxu0
        %v3711 = vadd.f32 %v3444, %v3710
        %v3712 = vpop.f32.mrf.mxu0
        %v3713 = vadd.f32 %v3448, %v3712
        %3714 = vmatprep.mubr.f32.mxu0 0.0
        %3715 = vmatmul.mubr.f32.gmra.mxu0 %v3357
        %v3716 = vpop.f32.mrf.mxu0
        %v3717 = vadd.f32 %v3444, %v3716
        %v3718 = vpop.f32.mrf.mxu0
        %v3719 = vadd.f32 %v3448, %v3718
        %3720 = vmatprep.mubr.f32.mxu0 0.0
        %3721 = vmatmul.mubr.f32.gmra.mxu0 %v3358
        %v3722 = vpop.f32.mrf.mxu0
        %v3723 = vadd.f32 %v3444, %v3722
        %v3724 = vpop.f32.mrf.mxu0
        %v3725 = vadd.f32 %v3448, %v3724
        %3726 = vmatprep.mubr.f32.mxu0 0.0
        %3727 = vmatmul.mubr.f32.gmra.mxu0 %v3359
        %v3728 = vpop.f32.mrf.mxu0
        %v3729 = vadd.f32 %v3444, %v3728
        %v3730 = vpop.f32.mrf.mxu0
        %v3731 = vadd.f32 %v3448, %v3730
        %3732 = vmatprep.mubr.f32.mxu0 0.0
        %3733 = vmatmul.mubr.f32.gmra.mxu0 %v3360
        %v3734 = vpop.f32.mrf.mxu0
        %v3735 = vadd.f32 %v3444, %v3734
        %v3736 = vpop.f32.mrf.mxu0
        %v3737 = vadd.f32 %v3448, %v3736
        %3738 = vmatprep.mubr.f32.mxu0 0.0
        %3739 = vmatmul.mubr.f32.gmra.mxu0 %v3361
        %v3740 = vpop.f32.mrf.mxu0
        %v3741 = vadd.f32 %v3444, %v3740
        %v3742 = vpop.f32.mrf.mxu0
        %v3743 = vadd.f32 %v3448, %v3742
        %3744 = vmatprep.mubr.f32.mxu0 0.0
        %3745 = vmatmul.mubr.f32.gmra.mxu0 %v3362
        %v3746 = vpop.f32.mrf.mxu0
        %v3747 = vadd.f32 %v3444, %v3746
        %v3748 = vpop.f32.mrf.mxu0
        %v3749 = vadd.f32 %v3448, %v3748
        %3750 = vmatprep.mubr.f32.mxu0 0.0
        %3751 = vmatmul.mubr.f32.gmra.mxu0 %v3363
        %v3752 = vpop.f32.mrf.mxu0
        %v3753 = vadd.f32 %v3444, %v3752
        %v3754 = vpop.f32.mrf.mxu0
        %v3755 = vadd.f32 %v3448, %v3754
        %3756 = vmatprep.mubr.f32.mxu0 0.0
        %3757 = vmatmul.mubr.f32.gmra.mxu0 %v3364
        %v3758 = vpop.f32.mrf.mxu0
        %v3759 = vadd.f32 %v3444, %v3758
        %v3760 = vpop.f32.mrf.mxu0
        %v3761 = vadd.f32 %v3448, %v3760
        %3762 = vmatprep.mubr.f32.mxu0 0.0
        %3763 = vmatmul.mubr.f32.gmra.mxu0 %v3365
        %v3764 = vpop.f32.mrf.mxu0
        %v3765 = vadd.f32 %v3444, %v3764
        %v3766 = vpop.f32.mrf.mxu0
        %v3767 = vadd.f32 %v3448, %v3766
        %3768 = vmatprep.mubr.f32.mxu0 0.0
        %3769 = vmatmul.mubr.f32.gmra.mxu0 %v3366
        %v3770 = vpop.f32.mrf.mxu0
        %v3771 = vadd.f32 %v3444, %v3770
        %v3772 = vpop.f32.mrf.mxu0
        %v3773 = vadd.f32 %v3448, %v3772
        %3774 = vdwg.mxu0
        %v3775 = vmax.f32 %v3520, 0.0
        %v3776 = vmax.f32 %v3522, 0.0
        %v3777 = vmax.f32 %v3681, 0.0
        %v3778 = vmax.f32 %v3683, 0.0
        %v3779 = vmax.f32 %v3526, 0.0
        %v3780 = vmax.f32 %v3528, 0.0
        %v3781 = vmax.f32 %v3687, 0.0
        %v3782 = vmax.f32 %v3689, 0.0
        %v3783 = vmax.f32 %v3532, 0.0
        %v3784 = vmax.f32 %v3534, 0.0
        %v3785 = vmax.f32 %v3693, 0.0
        %v3786 = vmax.f32 %v3695, 0.0
        %v3787 = vmax.f32 %v3538, 0.0
        %v3788 = vmax.f32 %v3540, 0.0
        %v3789 = vmax.f32 %v3699, 0.0
        %v3790 = vmax.f32 %v3701, 0.0
        %v3791 = vmax.f32 %v3544, 0.0
        %v3792 = vmax.f32 %v3546, 0.0
        %v3793 = vmax.f32 %v3705, 0.0
        %v3794 = vmax.f32 %v3707, 0.0
        %v3795 = vmax.f32 %v3550, 0.0
        %v3796 = vmax.f32 %v3552, 0.0
        %v3797 = vmax.f32 %v3711, 0.0
        %v3798 = vmax.f32 %v3713, 0.0
        %v3799 = vmax.f32 %v3556, 0.0
        %v3800 = vmax.f32 %v3558, 0.0
        %v3801 = vmax.f32 %v3717, 0.0
        %v3802 = vmax.f32 %v3719, 0.0
        %v3803 = vmax.f32 %v3562, 0.0
        %v3804 = vmax.f32 %v3564, 0.0
        %v3805 = vmax.f32 %v3723, 0.0
        %v3806 = vmax.f32 %v3725, 0.0
        %v3807 = vmax.f32 %v3568, 0.0
        %v3808 = vmax.f32 %v3570, 0.0
        %v3809 = vmax.f32 %v3729, 0.0
        %v3810 = vmax.f32 %v3731, 0.0
        %v3811 = vmax.f32 %v3574, 0.0
        %v3812 = vmax.f32 %v3576, 0.0
        %v3813 = vmax.f32 %v3735, 0.0
        %v3814 = vmax.f32 %v3737, 0.0
        %v3815 = vmax.f32 %v3580, 0.0
        %v3816 = vmax.f32 %v3582, 0.0
        %v3817 = vmax.f32 %v3741, 0.0
        %v3818 = vmax.f32 %v3743, 0.0
        %v3819 = vmax.f32 %v3586, 0.0
        %v3820 = vmax.f32 %v3588, 0.0
        %v3821 = vmax.f32 %v3747, 0.0
        %v3822 = vmax.f32 %v3749, 0.0
        %v3823 = vmax.f32 %v3592, 0.0
        %v3824 = vmax.f32 %v3594, 0.0
        %v3825 = vmax.f32 %v3753, 0.0
        %v3826 = vmax.f32 %v3755, 0.0
        %v3827 = vmax.f32 %v3598, 0.0
        %v3828 = vmax.f32 %v3600, 0.0
        %v3829 = vmax.f32 %v3759, 0.0
        %v3830 = vmax.f32 %v3761, 0.0
        %v3831 = vmax.f32 %v3604, 0.0
        %v3832 = vmax.f32 %v3606, 0.0
        %v3833 = vmax.f32 %v3765, 0.0
        %v3834 = vmax.f32 %v3767, 0.0
        %v3835 = vmax.f32 %v3610, 0.0
        %v3836 = vmax.f32 %v3612, 0.0
        %v3837 = vmax.f32 %v3771, 0.0
        %v3838 = vmax.f32 %v3773, 0.0
        %v3839 = vld [vmem:[#allocation20] sm:$0xff]
        %v3840 = vld [vmem:[#allocation20 + $0x8] sm:$0xff]
        %v3841 = vld [vmem:[#allocation20 + $0x10] sm:$0xff]
        %v3842 = vld [vmem:[#allocation20 + $0x18] sm:$0xff]
        %v3843 = vld [vmem:[#allocation20 + $0x20] sm:$0xff]
        %v3844 = vld [vmem:[#allocation20 + $0x28] sm:$0xff]
        %v3845 = vld [vmem:[#allocation20 + $0x30] sm:$0xff]
        %v3846 = vld [vmem:[#allocation20 + $0x38] sm:$0xff]
        %v3847 = vld [vmem:[#allocation20 + $0x40] sm:$0xff]
        %v3848 = vld [vmem:[#allocation20 + $0x48] sm:$0xff]
        %v3849 = vld [vmem:[#allocation20 + $0x50] sm:$0xff]
        %v3850 = vld [vmem:[#allocation20 + $0x58] sm:$0xff]
        %v3851 = vld [vmem:[#allocation20 + $0x60] sm:$0xff]
        %v3852 = vld [vmem:[#allocation20 + $0x68] sm:$0xff]
        %v3853 = vld [vmem:[#allocation20 + $0x70] sm:$0xff]
        %v3854 = vld [vmem:[#allocation20 + $0x78] sm:$0xff]
        %v3855 = vld [vmem:[#allocation20 + $0x80] sm:$0xff]
        %v3856 = vld [vmem:[#allocation20 + $0x88] sm:$0xff]
        %v3857 = vld [vmem:[#allocation20 + $0x90] sm:$0xff]
        %v3858 = vld [vmem:[#allocation20 + $0x98] sm:$0xff]
        %v3859 = vld [vmem:[#allocation20 + $0xa0] sm:$0xff]
        %v3860 = vld [vmem:[#allocation20 + $0xa8] sm:$0xff]
        %v3861 = vld [vmem:[#allocation20 + $0xb0] sm:$0xff]
        %v3862 = vld [vmem:[#allocation20 + $0xb8] sm:$0xff]
        %v3863 = vld [vmem:[#allocation20 + $0xc0] sm:$0xff]
        %v3864 = vld [vmem:[#allocation20 + $0xc8] sm:$0xff]
        %v3865 = vld [vmem:[#allocation20 + $0xd0] sm:$0xff]
        %v3866 = vld [vmem:[#allocation20 + $0xd8] sm:$0xff]
        %v3867 = vld [vmem:[#allocation20 + $0xe0] sm:$0xff]
        %v3868 = vld [vmem:[#allocation20 + $0xe8] sm:$0xff]
        %v3869 = vld [vmem:[#allocation20 + $0xf0] sm:$0xff]
        %v3870 = vld [vmem:[#allocation20 + $0xf8] sm:$0xff]
        %v3871 = vld [vmem:[#allocation20 + $0x100] sm:$0xff]
        %v3872 = vld [vmem:[#allocation20 + $0x108] sm:$0xff]
        %v3873 = vld [vmem:[#allocation20 + $0x110] sm:$0xff]
        %v3874 = vld [vmem:[#allocation20 + $0x118] sm:$0xff]
        %v3875 = vld [vmem:[#allocation20 + $0x120] sm:$0xff]
        %v3876 = vld [vmem:[#allocation20 + $0x128] sm:$0xff]
        %v3877 = vld [vmem:[#allocation20 + $0x130] sm:$0xff]
        %v3878 = vld [vmem:[#allocation20 + $0x138] sm:$0xff]
        %v3879 = vld [vmem:[#allocation20 + $0x140] sm:$0xff]
        %v3880 = vld [vmem:[#allocation20 + $0x148] sm:$0xff]
        %v3881 = vld [vmem:[#allocation20 + $0x150] sm:$0xff]
        %v3882 = vld [vmem:[#allocation20 + $0x158] sm:$0xff]
        %v3883 = vld [vmem:[#allocation20 + $0x160] sm:$0xff]
        %v3884 = vld [vmem:[#allocation20 + $0x168] sm:$0xff]
        %v3885 = vld [vmem:[#allocation20 + $0x170] sm:$0xff]
        %v3886 = vld [vmem:[#allocation20 + $0x178] sm:$0xff]
        %v3887 = vld [vmem:[#allocation20 + $0x180] sm:$0xff]
        %v3888 = vld [vmem:[#allocation20 + $0x188] sm:$0xff]
        %v3889 = vld [vmem:[#allocation20 + $0x190] sm:$0xff]
        %v3890 = vld [vmem:[#allocation20 + $0x198] sm:$0xff]
        %v3891 = vld [vmem:[#allocation20 + $0x1a0] sm:$0xff]
        %v3892 = vld [vmem:[#allocation20 + $0x1a8] sm:$0xff]
        %v3893 = vld [vmem:[#allocation20 + $0x1b0] sm:$0xff]
        %v3894 = vld [vmem:[#allocation20 + $0x1b8] sm:$0xff]
        %v3895 = vld [vmem:[#allocation20 + $0x1c0] sm:$0xff]
        %v3896 = vld [vmem:[#allocation20 + $0x1c8] sm:$0xff]
        %v3897 = vld [vmem:[#allocation20 + $0x1d0] sm:$0xff]
        %v3898 = vld [vmem:[#allocation20 + $0x1d8] sm:$0xff]
        %v3899 = vld [vmem:[#allocation20 + $0x1e0] sm:$0xff]
        %v3900 = vld [vmem:[#allocation20 + $0x1e8] sm:$0xff]
        %v3901 = vld [vmem:[#allocation20 + $0x1f0] sm:$0xff]
        %v3902 = vld [vmem:[#allocation20 + $0x1f8] sm:$0xff]
        %v3903 = vld [vmem:[#allocation20 + $0x200] sm:$0xff]
        %v3904 = vld [vmem:[#allocation20 + $0x208] sm:$0xff]
        %v3905 = vld [vmem:[#allocation20 + $0x210] sm:$0xff]
        %v3906 = vld [vmem:[#allocation20 + $0x218] sm:$0xff]
        %v3907 = vld [vmem:[#allocation20 + $0x220] sm:$0xff]
        %v3908 = vld [vmem:[#allocation20 + $0x228] sm:$0xff]
        %v3909 = vld [vmem:[#allocation20 + $0x230] sm:$0xff]
        %v3910 = vld [vmem:[#allocation20 + $0x238] sm:$0xff]
        %v3911 = vld [vmem:[#allocation20 + $0x240] sm:$0xff]
        %v3912 = vld [vmem:[#allocation20 + $0x248] sm:$0xff]
        %v3913 = vld [vmem:[#allocation20 + $0x250] sm:$0xff]
        %v3914 = vld [vmem:[#allocation20 + $0x258] sm:$0xff]
        %v3915 = vld [vmem:[#allocation20 + $0x260] sm:$0xff]
        %v3916 = vld [vmem:[#allocation20 + $0x268] sm:$0xff]
        %v3917 = vld [vmem:[#allocation20 + $0x270] sm:$0xff]
        %v3918 = vld [vmem:[#allocation20 + $0x278] sm:$0xff]
        %v3919 = vld [vmem:[#allocation20 + $0x280] sm:$0xff]
        %v3920 = vld [vmem:[#allocation20 + $0x288] sm:$0xff]
        %v3921 = vld [vmem:[#allocation20 + $0x290] sm:$0xff]
        %v3922 = vld [vmem:[#allocation20 + $0x298] sm:$0xff]
        %v3923 = vld [vmem:[#allocation20 + $0x2a0] sm:$0xff]
        %v3924 = vld [vmem:[#allocation20 + $0x2a8] sm:$0xff]
        %v3925 = vld [vmem:[#allocation20 + $0x2b0] sm:$0xff]
        %v3926 = vld [vmem:[#allocation20 + $0x2b8] sm:$0xff]
        %v3927 = vld [vmem:[#allocation20 + $0x2c0] sm:$0xff]
        %v3928 = vld [vmem:[#allocation20 + $0x2c8] sm:$0xff]
        %v3929 = vld [vmem:[#allocation20 + $0x2d0] sm:$0xff]
        %v3930 = vld [vmem:[#allocation20 + $0x2d8] sm:$0xff]
        %v3931 = vld [vmem:[#allocation20 + $0x2e0] sm:$0xff]
        %v3932 = vld [vmem:[#allocation20 + $0x2e8] sm:$0xff]
        %v3933 = vld [vmem:[#allocation20 + $0x2f0] sm:$0xff]
        %v3934 = vld [vmem:[#allocation20 + $0x2f8] sm:$0xff]
        %v3935 = vld [vmem:[#allocation20 + $0x300] sm:$0xff]
        %v3936 = vld [vmem:[#allocation20 + $0x308] sm:$0xff]
        %v3937 = vld [vmem:[#allocation20 + $0x310] sm:$0xff]
        %v3938 = vld [vmem:[#allocation20 + $0x318] sm:$0xff]
        %v3939 = vld [vmem:[#allocation20 + $0x320] sm:$0xff]
        %v3940 = vld [vmem:[#allocation20 + $0x328] sm:$0xff]
        %v3941 = vld [vmem:[#allocation20 + $0x330] sm:$0xff]
        %v3942 = vld [vmem:[#allocation20 + $0x338] sm:$0xff]
        %v3943 = vld [vmem:[#allocation20 + $0x340] sm:$0xff]
        %v3944 = vld [vmem:[#allocation20 + $0x348] sm:$0xff]
        %v3945 = vld [vmem:[#allocation20 + $0x350] sm:$0xff]
        %v3946 = vld [vmem:[#allocation20 + $0x358] sm:$0xff]
        %v3947 = vld [vmem:[#allocation20 + $0x360] sm:$0xff]
        %v3948 = vld [vmem:[#allocation20 + $0x368] sm:$0xff]
        %v3949 = vld [vmem:[#allocation20 + $0x370] sm:$0xff]
        %v3950 = vld [vmem:[#allocation20 + $0x378] sm:$0xff]
        %v3951 = vld [vmem:[#allocation20 + $0x380] sm:$0xff]
        %v3952 = vld [vmem:[#allocation20 + $0x388] sm:$0xff]
        %v3953 = vld [vmem:[#allocation20 + $0x390] sm:$0xff]
        %v3954 = vld [vmem:[#allocation20 + $0x398] sm:$0xff]
        %v3955 = vld [vmem:[#allocation20 + $0x3a0] sm:$0xff]
        %v3956 = vld [vmem:[#allocation20 + $0x3a8] sm:$0xff]
        %v3957 = vld [vmem:[#allocation20 + $0x3b0] sm:$0xff]
        %v3958 = vld [vmem:[#allocation20 + $0x3b8] sm:$0xff]
        %v3959 = vld [vmem:[#allocation20 + $0x3c0] sm:$0xff]
        %v3960 = vld [vmem:[#allocation20 + $0x3c8] sm:$0xff]
        %v3961 = vld [vmem:[#allocation20 + $0x3d0] sm:$0xff]
        %v3962 = vld [vmem:[#allocation20 + $0x3d8] sm:$0xff]
        %v3963 = vld [vmem:[#allocation20 + $0x3e0] sm:$0xff]
        %v3964 = vld [vmem:[#allocation20 + $0x3e8] sm:$0xff]
        %v3965 = vld [vmem:[#allocation20 + $0x3f0] sm:$0xff]
        %v3966 = vld [vmem:[#allocation20 + $0x3f8] sm:$0xff]
        %v3967 = vld [vmem:[#allocation20 + $0x400] sm:$0xff]
        %v3968 = vld [vmem:[#allocation20 + $0x408] sm:$0xff]
        %v3969 = vld [vmem:[#allocation20 + $0x410] sm:$0xff]
        %v3970 = vld [vmem:[#allocation20 + $0x418] sm:$0xff]
        %v3971 = vld [vmem:[#allocation20 + $0x420] sm:$0xff]
        %v3972 = vld [vmem:[#allocation20 + $0x428] sm:$0xff]
        %v3973 = vld [vmem:[#allocation20 + $0x430] sm:$0xff]
        %v3974 = vld [vmem:[#allocation20 + $0x438] sm:$0xff]
        %v3975 = vld [vmem:[#allocation20 + $0x440] sm:$0xff]
        %v3976 = vld [vmem:[#allocation20 + $0x448] sm:$0xff]
        %v3977 = vld [vmem:[#allocation20 + $0x450] sm:$0xff]
        %v3978 = vld [vmem:[#allocation20 + $0x458] sm:$0xff]
        %v3979 = vld [vmem:[#allocation20 + $0x460] sm:$0xff]
        %v3980 = vld [vmem:[#allocation20 + $0x468] sm:$0xff]
        %v3981 = vld [vmem:[#allocation20 + $0x470] sm:$0xff]
        %v3982 = vld [vmem:[#allocation20 + $0x478] sm:$0xff]
        %v3983 = vld [vmem:[#allocation20 + $0x480] sm:$0xff]
        %v3984 = vld [vmem:[#allocation20 + $0x488] sm:$0xff]
        %v3985 = vld [vmem:[#allocation20 + $0x490] sm:$0xff]
        %v3986 = vld [vmem:[#allocation20 + $0x498] sm:$0xff]
        %v3987 = vld [vmem:[#allocation20 + $0x4a0] sm:$0xff]
        %v3988 = vld [vmem:[#allocation20 + $0x4a8] sm:$0xff]
        %v3989 = vld [vmem:[#allocation20 + $0x4b0] sm:$0xff]
        %v3990 = vld [vmem:[#allocation20 + $0x4b8] sm:$0xff]
        %v3991 = vld [vmem:[#allocation20 + $0x4c0] sm:$0xff]
        %v3992 = vld [vmem:[#allocation20 + $0x4c8] sm:$0xff]
        %v3993 = vld [vmem:[#allocation20 + $0x4d0] sm:$0xff]
        %v3994 = vld [vmem:[#allocation20 + $0x4d8] sm:$0xff]
        %v3995 = vld [vmem:[#allocation20 + $0x4e0] sm:$0xff]
        %v3996 = vld [vmem:[#allocation20 + $0x4e8] sm:$0xff]
        %v3997 = vld [vmem:[#allocation20 + $0x4f0] sm:$0xff]
        %v3998 = vld [vmem:[#allocation20 + $0x4f8] sm:$0xff]
        %v3999 = vld [vmem:[#allocation20 + $0x500] sm:$0xff]
        %v4000 = vld [vmem:[#allocation20 + $0x508] sm:$0xff]
        %v4001 = vld [vmem:[#allocation20 + $0x510] sm:$0xff]
        %v4002 = vld [vmem:[#allocation20 + $0x518] sm:$0xff]
        %v4003 = vld [vmem:[#allocation20 + $0x520] sm:$0xff]
        %v4004 = vld [vmem:[#allocation20 + $0x528] sm:$0xff]
        %v4005 = vld [vmem:[#allocation20 + $0x530] sm:$0xff]
        %v4006 = vld [vmem:[#allocation20 + $0x538] sm:$0xff]
        %v4007 = vld [vmem:[#allocation20 + $0x540] sm:$0xff]
        %v4008 = vld [vmem:[#allocation20 + $0x548] sm:$0xff]
        %v4009 = vld [vmem:[#allocation20 + $0x550] sm:$0xff]
        %v4010 = vld [vmem:[#allocation20 + $0x558] sm:$0xff]
        %v4011 = vld [vmem:[#allocation20 + $0x560] sm:$0xff]
        %v4012 = vld [vmem:[#allocation20 + $0x568] sm:$0xff]
        %v4013 = vld [vmem:[#allocation20 + $0x570] sm:$0xff]
        %v4014 = vld [vmem:[#allocation20 + $0x578] sm:$0xff]
        %v4015 = vld [vmem:[#allocation20 + $0x580] sm:$0xff]
        %v4016 = vld [vmem:[#allocation20 + $0x588] sm:$0xff]
        %v4017 = vld [vmem:[#allocation20 + $0x590] sm:$0xff]
        %v4018 = vld [vmem:[#allocation20 + $0x598] sm:$0xff]
        %v4019 = vld [vmem:[#allocation20 + $0x5a0] sm:$0xff]
        %v4020 = vld [vmem:[#allocation20 + $0x5a8] sm:$0xff]
        %v4021 = vld [vmem:[#allocation20 + $0x5b0] sm:$0xff]
        %v4022 = vld [vmem:[#allocation20 + $0x5b8] sm:$0xff]
        %v4023 = vld [vmem:[#allocation20 + $0x5c0] sm:$0xff]
        %v4024 = vld [vmem:[#allocation20 + $0x5c8] sm:$0xff]
        %v4025 = vld [vmem:[#allocation20 + $0x5d0] sm:$0xff]
        %v4026 = vld [vmem:[#allocation20 + $0x5d8] sm:$0xff]
        %v4027 = vld [vmem:[#allocation20 + $0x5e0] sm:$0xff]
        %v4028 = vld [vmem:[#allocation20 + $0x5e8] sm:$0xff]
        %v4029 = vld [vmem:[#allocation20 + $0x5f0] sm:$0xff]
        %v4030 = vld [vmem:[#allocation20 + $0x5f8] sm:$0xff]
        %v4031 = vld [vmem:[#allocation20 + $0x600] sm:$0xff]
        %v4032 = vld [vmem:[#allocation20 + $0x608] sm:$0xff]
        %v4033 = vld [vmem:[#allocation20 + $0x610] sm:$0xff]
        %v4034 = vld [vmem:[#allocation20 + $0x618] sm:$0xff]
        %v4035 = vld [vmem:[#allocation20 + $0x620] sm:$0xff]
        %v4036 = vld [vmem:[#allocation20 + $0x628] sm:$0xff]
        %v4037 = vld [vmem:[#allocation20 + $0x630] sm:$0xff]
        %v4038 = vld [vmem:[#allocation20 + $0x638] sm:$0xff]
        %v4039 = vld [vmem:[#allocation20 + $0x640] sm:$0xff]
        %v4040 = vld [vmem:[#allocation20 + $0x648] sm:$0xff]
        %v4041 = vld [vmem:[#allocation20 + $0x650] sm:$0xff]
        %v4042 = vld [vmem:[#allocation20 + $0x658] sm:$0xff]
        %v4043 = vld [vmem:[#allocation20 + $0x660] sm:$0xff]
        %v4044 = vld [vmem:[#allocation20 + $0x668] sm:$0xff]
        %v4045 = vld [vmem:[#allocation20 + $0x670] sm:$0xff]
        %v4046 = vld [vmem:[#allocation20 + $0x678] sm:$0xff]
        %v4047 = vld [vmem:[#allocation20 + $0x680] sm:$0xff]
        %v4048 = vld [vmem:[#allocation20 + $0x688] sm:$0xff]
        %v4049 = vld [vmem:[#allocation20 + $0x690] sm:$0xff]
        %v4050 = vld [vmem:[#allocation20 + $0x698] sm:$0xff]
        %v4051 = vld [vmem:[#allocation20 + $0x6a0] sm:$0xff]
        %v4052 = vld [vmem:[#allocation20 + $0x6a8] sm:$0xff]
        %v4053 = vld [vmem:[#allocation20 + $0x6b0] sm:$0xff]
        %v4054 = vld [vmem:[#allocation20 + $0x6b8] sm:$0xff]
        %v4055 = vld [vmem:[#allocation20 + $0x6c0] sm:$0xff]
        %v4056 = vld [vmem:[#allocation20 + $0x6c8] sm:$0xff]
        %v4057 = vld [vmem:[#allocation20 + $0x6d0] sm:$0xff]
        %v4058 = vld [vmem:[#allocation20 + $0x6d8] sm:$0xff]
        %v4059 = vld [vmem:[#allocation20 + $0x6e0] sm:$0xff]
        %v4060 = vld [vmem:[#allocation20 + $0x6e8] sm:$0xff]
        %v4061 = vld [vmem:[#allocation20 + $0x6f0] sm:$0xff]
        %v4062 = vld [vmem:[#allocation20 + $0x6f8] sm:$0xff]
        %v4063 = vld [vmem:[#allocation20 + $0x700] sm:$0xff]
        %v4064 = vld [vmem:[#allocation20 + $0x708] sm:$0xff]
        %v4065 = vld [vmem:[#allocation20 + $0x710] sm:$0xff]
        %v4066 = vld [vmem:[#allocation20 + $0x718] sm:$0xff]
        %v4067 = vld [vmem:[#allocation20 + $0x720] sm:$0xff]
        %v4068 = vld [vmem:[#allocation20 + $0x728] sm:$0xff]
        %v4069 = vld [vmem:[#allocation20 + $0x730] sm:$0xff]
        %v4070 = vld [vmem:[#allocation20 + $0x738] sm:$0xff]
        %v4071 = vld [vmem:[#allocation20 + $0x740] sm:$0xff]
        %v4072 = vld [vmem:[#allocation20 + $0x748] sm:$0xff]
        %v4073 = vld [vmem:[#allocation20 + $0x750] sm:$0xff]
        %v4074 = vld [vmem:[#allocation20 + $0x758] sm:$0xff]
        %v4075 = vld [vmem:[#allocation20 + $0x760] sm:$0xff]
        %v4076 = vld [vmem:[#allocation20 + $0x768] sm:$0xff]
        %v4077 = vld [vmem:[#allocation20 + $0x770] sm:$0xff]
        %v4078 = vld [vmem:[#allocation20 + $0x778] sm:$0xff]
        %v4079 = vld [vmem:[#allocation20 + $0x780] sm:$0xff]
        %v4080 = vld [vmem:[#allocation20 + $0x788] sm:$0xff]
        %v4081 = vld [vmem:[#allocation20 + $0x790] sm:$0xff]
        %v4082 = vld [vmem:[#allocation20 + $0x798] sm:$0xff]
        %v4083 = vld [vmem:[#allocation20 + $0x7a0] sm:$0xff]
        %v4084 = vld [vmem:[#allocation20 + $0x7a8] sm:$0xff]
        %v4085 = vld [vmem:[#allocation20 + $0x7b0] sm:$0xff]
        %v4086 = vld [vmem:[#allocation20 + $0x7b8] sm:$0xff]
        %v4087 = vld [vmem:[#allocation20 + $0x7c0] sm:$0xff]
        %v4088 = vld [vmem:[#allocation20 + $0x7c8] sm:$0xff]
        %v4089 = vld [vmem:[#allocation20 + $0x7d0] sm:$0xff]
        %v4090 = vld [vmem:[#allocation20 + $0x7d8] sm:$0xff]
        %v4091 = vld [vmem:[#allocation20 + $0x7e0] sm:$0xff]
        %v4092 = vld [vmem:[#allocation20 + $0x7e8] sm:$0xff]
        %v4093 = vld [vmem:[#allocation20 + $0x7f0] sm:$0xff]
        %v4094 = vld [vmem:[#allocation20 + $0x7f8] sm:$0xff]
        %v4095 = vld [vmem:[#allocation20 + $0x800] sm:$0xff]
        %v4096 = vld [vmem:[#allocation20 + $0x808] sm:$0xff]
        %v4097 = vld [vmem:[#allocation20 + $0x810] sm:$0xff]
        %v4098 = vld [vmem:[#allocation20 + $0x818] sm:$0xff]
        %v4099 = vld [vmem:[#allocation20 + $0x820] sm:$0xff]
        %v4100 = vld [vmem:[#allocation20 + $0x828] sm:$0xff]
        %v4101 = vld [vmem:[#allocation20 + $0x830] sm:$0xff]
        %v4102 = vld [vmem:[#allocation20 + $0x838] sm:$0xff]
        %v4103 = vld [vmem:[#allocation20 + $0x840] sm:$0xff]
        %v4104 = vld [vmem:[#allocation20 + $0x848] sm:$0xff]
        %v4105 = vld [vmem:[#allocation20 + $0x850] sm:$0xff]
        %v4106 = vld [vmem:[#allocation20 + $0x858] sm:$0xff]
        %v4107 = vld [vmem:[#allocation20 + $0x860] sm:$0xff]
        %v4108 = vld [vmem:[#allocation20 + $0x868] sm:$0xff]
        %v4109 = vld [vmem:[#allocation20 + $0x870] sm:$0xff]
        %v4110 = vld [vmem:[#allocation20 + $0x878] sm:$0xff]
        %v4111 = vld [vmem:[#allocation20 + $0x880] sm:$0xff]
        %v4112 = vld [vmem:[#allocation20 + $0x888] sm:$0xff]
        %v4113 = vld [vmem:[#allocation20 + $0x890] sm:$0xff]
        %v4114 = vld [vmem:[#allocation20 + $0x898] sm:$0xff]
        %v4115 = vld [vmem:[#allocation20 + $0x8a0] sm:$0xff]
        %v4116 = vld [vmem:[#allocation20 + $0x8a8] sm:$0xff]
        %v4117 = vld [vmem:[#allocation20 + $0x8b0] sm:$0xff]
        %v4118 = vld [vmem:[#allocation20 + $0x8b8] sm:$0xff]
        %v4119 = vld [vmem:[#allocation20 + $0x8c0] sm:$0xff]
        %v4120 = vld [vmem:[#allocation20 + $0x8c8] sm:$0xff]
        %v4121 = vld [vmem:[#allocation20 + $0x8d0] sm:$0xff]
        %v4122 = vld [vmem:[#allocation20 + $0x8d8] sm:$0xff]
        %v4123 = vld [vmem:[#allocation20 + $0x8e0] sm:$0xff]
        %v4124 = vld [vmem:[#allocation20 + $0x8e8] sm:$0xff]
        %v4125 = vld [vmem:[#allocation20 + $0x8f0] sm:$0xff]
        %v4126 = vld [vmem:[#allocation20 + $0x8f8] sm:$0xff]
        %v4127 = vld [vmem:[#allocation20 + $0x900] sm:$0xff]
        %v4128 = vld [vmem:[#allocation20 + $0x908] sm:$0xff]
        %v4129 = vld [vmem:[#allocation20 + $0x910] sm:$0xff]
        %v4130 = vld [vmem:[#allocation20 + $0x918] sm:$0xff]
        %v4131 = vld [vmem:[#allocation20 + $0x920] sm:$0xff]
        %v4132 = vld [vmem:[#allocation20 + $0x928] sm:$0xff]
        %v4133 = vld [vmem:[#allocation20 + $0x930] sm:$0xff]
        %v4134 = vld [vmem:[#allocation20 + $0x938] sm:$0xff]
        %v4135 = vld [vmem:[#allocation20 + $0x940] sm:$0xff]
        %v4136 = vld [vmem:[#allocation20 + $0x948] sm:$0xff]
        %v4137 = vld [vmem:[#allocation20 + $0x950] sm:$0xff]
        %v4138 = vld [vmem:[#allocation20 + $0x958] sm:$0xff]
        %v4139 = vld [vmem:[#allocation20 + $0x960] sm:$0xff]
        %v4140 = vld [vmem:[#allocation20 + $0x968] sm:$0xff]
        %v4141 = vld [vmem:[#allocation20 + $0x970] sm:$0xff]
        %v4142 = vld [vmem:[#allocation20 + $0x978] sm:$0xff]
        %v4143 = vld [vmem:[#allocation20 + $0x980] sm:$0xff]
        %v4144 = vld [vmem:[#allocation20 + $0x988] sm:$0xff]
        %v4145 = vld [vmem:[#allocation20 + $0x990] sm:$0xff]
        %v4146 = vld [vmem:[#allocation20 + $0x998] sm:$0xff]
        %v4147 = vld [vmem:[#allocation20 + $0x9a0] sm:$0xff]
        %v4148 = vld [vmem:[#allocation20 + $0x9a8] sm:$0xff]
        %v4149 = vld [vmem:[#allocation20 + $0x9b0] sm:$0xff]
        %v4150 = vld [vmem:[#allocation20 + $0x9b8] sm:$0xff]
        %v4151 = vld [vmem:[#allocation20 + $0x9c0] sm:$0xff]
        %v4152 = vld [vmem:[#allocation20 + $0x9c8] sm:$0xff]
        %v4153 = vld [vmem:[#allocation20 + $0x9d0] sm:$0xff]
        %v4154 = vld [vmem:[#allocation20 + $0x9d8] sm:$0xff]
        %v4155 = vld [vmem:[#allocation20 + $0x9e0] sm:$0xff]
        %v4156 = vld [vmem:[#allocation20 + $0x9e8] sm:$0xff]
        %v4157 = vld [vmem:[#allocation20 + $0x9f0] sm:$0xff]
        %v4158 = vld [vmem:[#allocation20 + $0x9f8] sm:$0xff]
        %v4159 = vld [vmem:[#allocation20 + $0xa00] sm:$0xff]
        %v4160 = vld [vmem:[#allocation20 + $0xa08] sm:$0xff]
        %v4161 = vld [vmem:[#allocation20 + $0xa10] sm:$0xff]
        %v4162 = vld [vmem:[#allocation20 + $0xa18] sm:$0xff]
        %v4163 = vld [vmem:[#allocation20 + $0xa20] sm:$0xff]
        %v4164 = vld [vmem:[#allocation20 + $0xa28] sm:$0xff]
        %v4165 = vld [vmem:[#allocation20 + $0xa30] sm:$0xff]
        %v4166 = vld [vmem:[#allocation20 + $0xa38] sm:$0xff]
        %v4167 = vld [vmem:[#allocation20 + $0xa40] sm:$0xff]
        %v4168 = vld [vmem:[#allocation20 + $0xa48] sm:$0xff]
        %v4169 = vld [vmem:[#allocation20 + $0xa50] sm:$0xff]
        %v4170 = vld [vmem:[#allocation20 + $0xa58] sm:$0xff]
        %v4171 = vld [vmem:[#allocation20 + $0xa60] sm:$0xff]
        %v4172 = vld [vmem:[#allocation20 + $0xa68] sm:$0xff]
        %v4173 = vld [vmem:[#allocation20 + $0xa70] sm:$0xff]
        %v4174 = vld [vmem:[#allocation20 + $0xa78] sm:$0xff]
        %v4175 = vld [vmem:[#allocation20 + $0xa80] sm:$0xff]
        %v4176 = vld [vmem:[#allocation20 + $0xa88] sm:$0xff]
        %v4177 = vld [vmem:[#allocation20 + $0xa90] sm:$0xff]
        %v4178 = vld [vmem:[#allocation20 + $0xa98] sm:$0xff]
        %v4179 = vld [vmem:[#allocation20 + $0xaa0] sm:$0xff]
        %v4180 = vld [vmem:[#allocation20 + $0xaa8] sm:$0xff]
        %v4181 = vld [vmem:[#allocation20 + $0xab0] sm:$0xff]
        %v4182 = vld [vmem:[#allocation20 + $0xab8] sm:$0xff]
        %v4183 = vld [vmem:[#allocation20 + $0xac0] sm:$0xff]
        %v4184 = vld [vmem:[#allocation20 + $0xac8] sm:$0xff]
        %v4185 = vld [vmem:[#allocation20 + $0xad0] sm:$0xff]
        %v4186 = vld [vmem:[#allocation20 + $0xad8] sm:$0xff]
        %v4187 = vld [vmem:[#allocation20 + $0xae0] sm:$0xff]
        %v4188 = vld [vmem:[#allocation20 + $0xae8] sm:$0xff]
        %v4189 = vld [vmem:[#allocation20 + $0xaf0] sm:$0xff]
        %v4190 = vld [vmem:[#allocation20 + $0xaf8] sm:$0xff]
        %v4191 = vld [vmem:[#allocation20 + $0xb00] sm:$0xff]
        %v4192 = vld [vmem:[#allocation20 + $0xb08] sm:$0xff]
        %v4193 = vld [vmem:[#allocation20 + $0xb10] sm:$0xff]
        %v4194 = vld [vmem:[#allocation20 + $0xb18] sm:$0xff]
        %v4195 = vld [vmem:[#allocation20 + $0xb20] sm:$0xff]
        %v4196 = vld [vmem:[#allocation20 + $0xb28] sm:$0xff]
        %v4197 = vld [vmem:[#allocation20 + $0xb30] sm:$0xff]
        %v4198 = vld [vmem:[#allocation20 + $0xb38] sm:$0xff]
        %v4199 = vld [vmem:[#allocation20 + $0xb40] sm:$0xff]
        %v4200 = vld [vmem:[#allocation20 + $0xb48] sm:$0xff]
        %v4201 = vld [vmem:[#allocation20 + $0xb50] sm:$0xff]
        %v4202 = vld [vmem:[#allocation20 + $0xb58] sm:$0xff]
        %v4203 = vld [vmem:[#allocation20 + $0xb60] sm:$0xff]
        %v4204 = vld [vmem:[#allocation20 + $0xb68] sm:$0xff]
        %v4205 = vld [vmem:[#allocation20 + $0xb70] sm:$0xff]
        %v4206 = vld [vmem:[#allocation20 + $0xb78] sm:$0xff]
        %v4207 = vld [vmem:[#allocation20 + $0xb80] sm:$0xff]
        %v4208 = vld [vmem:[#allocation20 + $0xb88] sm:$0xff]
        %v4209 = vld [vmem:[#allocation20 + $0xb90] sm:$0xff]
        %v4210 = vld [vmem:[#allocation20 + $0xb98] sm:$0xff]
        %v4211 = vld [vmem:[#allocation20 + $0xba0] sm:$0xff]
        %v4212 = vld [vmem:[#allocation20 + $0xba8] sm:$0xff]
        %v4213 = vld [vmem:[#allocation20 + $0xbb0] sm:$0xff]
        %v4214 = vld [vmem:[#allocation20 + $0xbb8] sm:$0xff]
        %v4215 = vld [vmem:[#allocation20 + $0xbc0] sm:$0xff]
        %v4216 = vld [vmem:[#allocation20 + $0xbc8] sm:$0xff]
        %v4217 = vld [vmem:[#allocation20 + $0xbd0] sm:$0xff]
        %v4218 = vld [vmem:[#allocation20 + $0xbd8] sm:$0xff]
        %v4219 = vld [vmem:[#allocation20 + $0xbe0] sm:$0xff]
        %v4220 = vld [vmem:[#allocation20 + $0xbe8] sm:$0xff]
        %v4221 = vld [vmem:[#allocation20 + $0xbf0] sm:$0xff]
        %v4222 = vld [vmem:[#allocation20 + $0xbf8] sm:$0xff]
        %v4223 = vld [vmem:[#allocation20 + $0xc00] sm:$0xff]
        %v4224 = vld [vmem:[#allocation20 + $0xc08] sm:$0xff]
        %v4225 = vld [vmem:[#allocation20 + $0xc10] sm:$0xff]
        %v4226 = vld [vmem:[#allocation20 + $0xc18] sm:$0xff]
        %v4227 = vld [vmem:[#allocation20 + $0xc20] sm:$0xff]
        %v4228 = vld [vmem:[#allocation20 + $0xc28] sm:$0xff]
        %v4229 = vld [vmem:[#allocation20 + $0xc30] sm:$0xff]
        %v4230 = vld [vmem:[#allocation20 + $0xc38] sm:$0xff]
        %v4231 = vld [vmem:[#allocation20 + $0xc40] sm:$0xff]
        %v4232 = vld [vmem:[#allocation20 + $0xc48] sm:$0xff]
        %v4233 = vld [vmem:[#allocation20 + $0xc50] sm:$0xff]
        %v4234 = vld [vmem:[#allocation20 + $0xc58] sm:$0xff]
        %v4235 = vld [vmem:[#allocation20 + $0xc60] sm:$0xff]
        %v4236 = vld [vmem:[#allocation20 + $0xc68] sm:$0xff]
        %v4237 = vld [vmem:[#allocation20 + $0xc70] sm:$0xff]
        %v4238 = vld [vmem:[#allocation20 + $0xc78] sm:$0xff]
        %v4239 = vld [vmem:[#allocation20 + $0xc80] sm:$0xff]
        %v4240 = vld [vmem:[#allocation20 + $0xc88] sm:$0xff]
        %v4241 = vld [vmem:[#allocation20 + $0xc90] sm:$0xff]
        %v4242 = vld [vmem:[#allocation20 + $0xc98] sm:$0xff]
        %v4243 = vld [vmem:[#allocation20 + $0xca0] sm:$0xff]
        %v4244 = vld [vmem:[#allocation20 + $0xca8] sm:$0xff]
        %v4245 = vld [vmem:[#allocation20 + $0xcb0] sm:$0xff]
        %v4246 = vld [vmem:[#allocation20 + $0xcb8] sm:$0xff]
        %v4247 = vld [vmem:[#allocation20 + $0xcc0] sm:$0xff]
        %v4248 = vld [vmem:[#allocation20 + $0xcc8] sm:$0xff]
        %v4249 = vld [vmem:[#allocation20 + $0xcd0] sm:$0xff]
        %v4250 = vld [vmem:[#allocation20 + $0xcd8] sm:$0xff]
        %v4251 = vld [vmem:[#allocation20 + $0xce0] sm:$0xff]
        %v4252 = vld [vmem:[#allocation20 + $0xce8] sm:$0xff]
        %v4253 = vld [vmem:[#allocation20 + $0xcf0] sm:$0xff]
        %v4254 = vld [vmem:[#allocation20 + $0xcf8] sm:$0xff]
        %v4255 = vld [vmem:[#allocation20 + $0xd00] sm:$0xff]
        %v4256 = vld [vmem:[#allocation20 + $0xd08] sm:$0xff]
        %v4257 = vld [vmem:[#allocation20 + $0xd10] sm:$0xff]
        %v4258 = vld [vmem:[#allocation20 + $0xd18] sm:$0xff]
        %v4259 = vld [vmem:[#allocation20 + $0xd20] sm:$0xff]
        %v4260 = vld [vmem:[#allocation20 + $0xd28] sm:$0xff]
        %v4261 = vld [vmem:[#allocation20 + $0xd30] sm:$0xff]
        %v4262 = vld [vmem:[#allocation20 + $0xd38] sm:$0xff]
        %v4263 = vld [vmem:[#allocation20 + $0xd40] sm:$0xff]
        %v4264 = vld [vmem:[#allocation20 + $0xd48] sm:$0xff]
        %v4265 = vld [vmem:[#allocation20 + $0xd50] sm:$0xff]
        %v4266 = vld [vmem:[#allocation20 + $0xd58] sm:$0xff]
        %v4267 = vld [vmem:[#allocation20 + $0xd60] sm:$0xff]
        %v4268 = vld [vmem:[#allocation20 + $0xd68] sm:$0xff]
        %v4269 = vld [vmem:[#allocation20 + $0xd70] sm:$0xff]
        %v4270 = vld [vmem:[#allocation20 + $0xd78] sm:$0xff]
        %v4271 = vld [vmem:[#allocation20 + $0xd80] sm:$0xff]
        %v4272 = vld [vmem:[#allocation20 + $0xd88] sm:$0xff]
        %v4273 = vld [vmem:[#allocation20 + $0xd90] sm:$0xff]
        %v4274 = vld [vmem:[#allocation20 + $0xd98] sm:$0xff]
        %v4275 = vld [vmem:[#allocation20 + $0xda0] sm:$0xff]
        %v4276 = vld [vmem:[#allocation20 + $0xda8] sm:$0xff]
        %v4277 = vld [vmem:[#allocation20 + $0xdb0] sm:$0xff]
        %v4278 = vld [vmem:[#allocation20 + $0xdb8] sm:$0xff]
        %v4279 = vld [vmem:[#allocation20 + $0xdc0] sm:$0xff]
        %v4280 = vld [vmem:[#allocation20 + $0xdc8] sm:$0xff]
        %v4281 = vld [vmem:[#allocation20 + $0xdd0] sm:$0xff]
        %v4282 = vld [vmem:[#allocation20 + $0xdd8] sm:$0xff]
        %v4283 = vld [vmem:[#allocation20 + $0xde0] sm:$0xff]
        %v4284 = vld [vmem:[#allocation20 + $0xde8] sm:$0xff]
        %v4285 = vld [vmem:[#allocation20 + $0xdf0] sm:$0xff]
        %v4286 = vld [vmem:[#allocation20 + $0xdf8] sm:$0xff]
        %v4287 = vld [vmem:[#allocation20 + $0xe00] sm:$0xff]
        %v4288 = vld [vmem:[#allocation20 + $0xe08] sm:$0xff]
        %v4289 = vld [vmem:[#allocation20 + $0xe10] sm:$0xff]
        %v4290 = vld [vmem:[#allocation20 + $0xe18] sm:$0xff]
        %v4291 = vld [vmem:[#allocation20 + $0xe20] sm:$0xff]
        %v4292 = vld [vmem:[#allocation20 + $0xe28] sm:$0xff]
        %v4293 = vld [vmem:[#allocation20 + $0xe30] sm:$0xff]
        %v4294 = vld [vmem:[#allocation20 + $0xe38] sm:$0xff]
        %v4295 = vld [vmem:[#allocation20 + $0xe40] sm:$0xff]
        %v4296 = vld [vmem:[#allocation20 + $0xe48] sm:$0xff]
        %v4297 = vld [vmem:[#allocation20 + $0xe50] sm:$0xff]
        %v4298 = vld [vmem:[#allocation20 + $0xe58] sm:$0xff]
        %v4299 = vld [vmem:[#allocation20 + $0xe60] sm:$0xff]
        %v4300 = vld [vmem:[#allocation20 + $0xe68] sm:$0xff]
        %v4301 = vld [vmem:[#allocation20 + $0xe70] sm:$0xff]
        %v4302 = vld [vmem:[#allocation20 + $0xe78] sm:$0xff]
        %v4303 = vld [vmem:[#allocation20 + $0xe80] sm:$0xff]
        %v4304 = vld [vmem:[#allocation20 + $0xe88] sm:$0xff]
        %v4305 = vld [vmem:[#allocation20 + $0xe90] sm:$0xff]
        %v4306 = vld [vmem:[#allocation20 + $0xe98] sm:$0xff]
        %v4307 = vld [vmem:[#allocation20 + $0xea0] sm:$0xff]
        %v4308 = vld [vmem:[#allocation20 + $0xea8] sm:$0xff]
        %v4309 = vld [vmem:[#allocation20 + $0xeb0] sm:$0xff]
        %v4310 = vld [vmem:[#allocation20 + $0xeb8] sm:$0xff]
        %v4311 = vld [vmem:[#allocation20 + $0xec0] sm:$0xff]
        %v4312 = vld [vmem:[#allocation20 + $0xec8] sm:$0xff]
        %v4313 = vld [vmem:[#allocation20 + $0xed0] sm:$0xff]
        %v4314 = vld [vmem:[#allocation20 + $0xed8] sm:$0xff]
        %v4315 = vld [vmem:[#allocation20 + $0xee0] sm:$0xff]
        %v4316 = vld [vmem:[#allocation20 + $0xee8] sm:$0xff]
        %v4317 = vld [vmem:[#allocation20 + $0xef0] sm:$0xff]
        %v4318 = vld [vmem:[#allocation20 + $0xef8] sm:$0xff]
        %v4319 = vld [vmem:[#allocation20 + $0xf00] sm:$0xff]
        %v4320 = vld [vmem:[#allocation20 + $0xf08] sm:$0xff]
        %v4321 = vld [vmem:[#allocation20 + $0xf10] sm:$0xff]
        %v4322 = vld [vmem:[#allocation20 + $0xf18] sm:$0xff]
        %v4323 = vld [vmem:[#allocation20 + $0xf20] sm:$0xff]
        %v4324 = vld [vmem:[#allocation20 + $0xf28] sm:$0xff]
        %v4325 = vld [vmem:[#allocation20 + $0xf30] sm:$0xff]
        %v4326 = vld [vmem:[#allocation20 + $0xf38] sm:$0xff]
        %v4327 = vld [vmem:[#allocation20 + $0xf40] sm:$0xff]
        %v4328 = vld [vmem:[#allocation20 + $0xf48] sm:$0xff]
        %v4329 = vld [vmem:[#allocation20 + $0xf50] sm:$0xff]
        %v4330 = vld [vmem:[#allocation20 + $0xf58] sm:$0xff]
        %v4331 = vld [vmem:[#allocation20 + $0xf60] sm:$0xff]
        %v4332 = vld [vmem:[#allocation20 + $0xf68] sm:$0xff]
        %v4333 = vld [vmem:[#allocation20 + $0xf70] sm:$0xff]
        %v4334 = vld [vmem:[#allocation20 + $0xf78] sm:$0xff]
        %v4335 = vld [vmem:[#allocation20 + $0xf80] sm:$0xff]
        %v4336 = vld [vmem:[#allocation20 + $0xf88] sm:$0xff]
        %v4337 = vld [vmem:[#allocation20 + $0xf90] sm:$0xff]
        %v4338 = vld [vmem:[#allocation20 + $0xf98] sm:$0xff]
        %v4339 = vld [vmem:[#allocation20 + $0xfa0] sm:$0xff]
        %v4340 = vld [vmem:[#allocation20 + $0xfa8] sm:$0xff]
        %v4341 = vld [vmem:[#allocation20 + $0xfb0] sm:$0xff]
        %v4342 = vld [vmem:[#allocation20 + $0xfb8] sm:$0xff]
        %v4343 = vld [vmem:[#allocation20 + $0xfc0] sm:$0xff]
        %v4344 = vld [vmem:[#allocation20 + $0xfc8] sm:$0xff]
        %v4345 = vld [vmem:[#allocation20 + $0xfd0] sm:$0xff]
        %v4346 = vld [vmem:[#allocation20 + $0xfd8] sm:$0xff]
        %v4347 = vld [vmem:[#allocation20 + $0xfe0] sm:$0xff]
        %v4348 = vld [vmem:[#allocation20 + $0xfe8] sm:$0xff]
        %v4349 = vld [vmem:[#allocation20 + $0xff0] sm:$0xff]
        %v4350 = vld [vmem:[#allocation20 + $0xff8] sm:$0xff]
        %v4351 = vld [vmem:[#allocation22] sm:$0xff]
        %v4353 = vlaneseq
        %v4354 = vshrl.u32 %v4353, 7
        %v4355 = vsub.s32 0, %v4354
        %v4356 = vrot.slane %v4351, %v4355
        %v4357 = vlaneseq
        %v4358 = vshrl.u32 %v4357, 7
        %v4359 = vsub.s32 1, %v4358
        %v4360 = vrot.slane %v4351, %v4359
        %v4361 = vlaneseq
        %v4362 = vshrl.u32 %v4361, 7
        %v4363 = vsub.s32 2, %v4362
        %v4364 = vrot.slane %v4351, %v4363
        %v4365 = vlaneseq
        %v4366 = vshrl.u32 %v4365, 7
        %v4367 = vsub.s32 3, %v4366
        %v4368 = vrot.slane %v4351, %v4367
        %v4369 = vlaneseq
        %v4370 = vshrl.u32 %v4369, 7
        %v4371 = vsub.s32 4, %v4370
        %v4372 = vrot.slane %v4351, %v4371
        %v4373 = vlaneseq
        %v4374 = vshrl.u32 %v4373, 7
        %v4375 = vsub.s32 5, %v4374
        %v4376 = vrot.slane %v4351, %v4375
        %v4377 = vlaneseq
        %v4378 = vshrl.u32 %v4377, 7
        %v4379 = vsub.s32 6, %v4378
        %v4380 = vrot.slane %v4351, %v4379
        %v4381 = vlaneseq
        %v4382 = vshrl.u32 %v4381, 7
        %v4383 = vsub.s32 7, %v4382
        %v4384 = vrot.slane %v4351, %v4383
        %4393 = vmatprep.subr.mxu0 %v3960
        %4394 = vmatpush1.msra.mxu0 %v3959
        %4395 = vmatprep.subr.mxu0 %v3952
        %4396 = vmatpush1.msra.mxu0 %v3951
        %4397 = vmatprep.subr.mxu0 %v3944
        %4398 = vmatpush1.msra.mxu0 %v3943
        %4399 = vmatprep.subr.mxu0 %v3936
        %4400 = vmatpush1.msra.mxu0 %v3935
        %4401 = vmatprep.subr.mxu0 %v3928
        %4402 = vmatpush1.msra.mxu0 %v3927
        %4403 = vmatprep.subr.mxu0 %v3920
        %4404 = vmatpush1.msra.mxu0 %v3919
        %4405 = vmatprep.subr.mxu0 %v3912
        %4406 = vmatpush1.msra.mxu0 %v3911
        %4407 = vmatprep.subr.mxu0 %v3904
        %4408 = vmatpush1.msra.mxu0 %v3903
        %4409 = vmatprep.subr.mxu0 %v3896
        %4410 = vmatpush1.msra.mxu0 %v3895
        %4411 = vmatprep.subr.mxu0 %v3888
        %4412 = vmatpush1.msra.mxu0 %v3887
        %4413 = vmatprep.subr.mxu0 %v3880
        %4414 = vmatpush1.msra.mxu0 %v3879
        %4415 = vmatprep.subr.mxu0 %v3872
        %4416 = vmatpush1.msra.mxu0 %v3871
        %4417 = vmatprep.subr.mxu0 %v3864
        %4418 = vmatpush1.msra.mxu0 %v3863
        %4419 = vmatprep.subr.mxu0 %v3856
        %4420 = vmatpush1.msra.mxu0 %v3855
        %4421 = vmatprep.subr.mxu0 %v3848
        %4422 = vmatpush1.msra.mxu0 %v3847
        %4423 = vmatprep.subr.mxu0 %v3840
        %4424 = vmatpush1.msra.mxu0 %v3839
        %4425 = vmatprep.subr.mxu0 %v4088
        %4426 = vmatpush2.msra.mxu0 %v4087
        %4427 = vmatprep.subr.mxu0 %v4080
        %4428 = vmatpush2.msra.mxu0 %v4079
        %4429 = vmatprep.subr.mxu0 %v4072
        %4430 = vmatpush2.msra.mxu0 %v4071
        %4431 = vmatprep.subr.mxu0 %v4064
        %4432 = vmatpush2.msra.mxu0 %v4063
        %4433 = vmatprep.subr.mxu0 %v4056
        %4434 = vmatpush2.msra.mxu0 %v4055
        %4435 = vmatprep.subr.mxu0 %v4048
        %4436 = vmatpush2.msra.mxu0 %v4047
        %4437 = vmatprep.subr.mxu0 %v4040
        %4438 = vmatpush2.msra.mxu0 %v4039
        %4439 = vmatprep.subr.mxu0 %v4032
        %4440 = vmatpush2.msra.mxu0 %v4031
        %4441 = vmatprep.subr.mxu0 %v4024
        %4442 = vmatpush2.msra.mxu0 %v4023
        %4443 = vmatprep.subr.mxu0 %v4016
        %4444 = vmatpush2.msra.mxu0 %v4015
        %4445 = vmatprep.subr.mxu0 %v4008
        %4446 = vmatpush2.msra.mxu0 %v4007
        %4447 = vmatprep.subr.mxu0 %v4000
        %4448 = vmatpush2.msra.mxu0 %v3999
        %4449 = vmatprep.subr.mxu0 %v3992
        %4450 = vmatpush2.msra.mxu0 %v3991
        %4451 = vmatprep.subr.mxu0 %v3984
        %4452 = vmatpush2.msra.mxu0 %v3983
        %4453 = vmatprep.subr.mxu0 %v3976
        %4454 = vmatpush2.msra.mxu0 %v3975
        %4455 = vmatprep.subr.mxu0 %v3968
        %4456 = vmatpush2.msra.mxu0 %v3967
        %4457 = vmatprep.mubr.f32.mxu0 %v3776
        %4458 = vmatmul.mubr.f32.gmra.mxu0 %v3775
        %v4459 = vpop.f32.mrf.mxu0
        %v4460 = vadd.f32 %v4356, %v4459
        %v4461 = vpop.f32.mrf.mxu0
        %v4462 = vadd.f32 %v4360, %v4461
        %4463 = vmatprep.mubr.f32.mxu0 %v3780
        %4464 = vmatmul.mubr.f32.gmra.mxu0 %v3779
        %v4465 = vpop.f32.mrf.mxu0
        %v4466 = vadd.f32 %v4356, %v4465
        %v4467 = vpop.f32.mrf.mxu0
        %v4468 = vadd.f32 %v4360, %v4467
        %4469 = vmatprep.mubr.f32.mxu0 %v3784
        %4470 = vmatmul.mubr.f32.gmra.mxu0 %v3783
        %v4471 = vpop.f32.mrf.mxu0
        %v4472 = vadd.f32 %v4356, %v4471
        %v4473 = vpop.f32.mrf.mxu0
        %v4474 = vadd.f32 %v4360, %v4473
        %4475 = vmatprep.mubr.f32.mxu0 %v3788
        %4476 = vmatmul.mubr.f32.gmra.mxu0 %v3787
        %v4477 = vpop.f32.mrf.mxu0
        %v4478 = vadd.f32 %v4356, %v4477
        %v4479 = vpop.f32.mrf.mxu0
        %v4480 = vadd.f32 %v4360, %v4479
        %4481 = vmatprep.mubr.f32.mxu0 %v3792
        %4482 = vmatmul.mubr.f32.gmra.mxu0 %v3791
        %v4483 = vpop.f32.mrf.mxu0
        %v4484 = vadd.f32 %v4356, %v4483
        %v4485 = vpop.f32.mrf.mxu0
        %v4486 = vadd.f32 %v4360, %v4485
        %4487 = vmatprep.mubr.f32.mxu0 %v3796
        %4488 = vmatmul.mubr.f32.gmra.mxu0 %v3795
        %v4489 = vpop.f32.mrf.mxu0
        %v4490 = vadd.f32 %v4356, %v4489
        %v4491 = vpop.f32.mrf.mxu0
        %v4492 = vadd.f32 %v4360, %v4491
        %4493 = vmatprep.mubr.f32.mxu0 %v3800
        %4494 = vmatmul.mubr.f32.gmra.mxu0 %v3799
        %v4495 = vpop.f32.mrf.mxu0
        %v4496 = vadd.f32 %v4356, %v4495
        %v4497 = vpop.f32.mrf.mxu0
        %v4498 = vadd.f32 %v4360, %v4497
        %4499 = vmatprep.mubr.f32.mxu0 %v3804
        %4500 = vmatmul.mubr.f32.gmra.mxu0 %v3803
        %v4501 = vpop.f32.mrf.mxu0
        %v4502 = vadd.f32 %v4356, %v4501
        %v4503 = vpop.f32.mrf.mxu0
        %v4504 = vadd.f32 %v4360, %v4503
        %4505 = vmatprep.mubr.f32.mxu0 %v3808
        %4506 = vmatmul.mubr.f32.gmra.mxu0 %v3807
        %v4507 = vpop.f32.mrf.mxu0
        %v4508 = vadd.f32 %v4356, %v4507
        %v4509 = vpop.f32.mrf.mxu0
        %v4510 = vadd.f32 %v4360, %v4509
        %4511 = vmatprep.mubr.f32.mxu0 %v3812
        %4512 = vmatmul.mubr.f32.gmra.mxu0 %v3811
        %v4513 = vpop.f32.mrf.mxu0
        %v4514 = vadd.f32 %v4356, %v4513
        %v4515 = vpop.f32.mrf.mxu0
        %v4516 = vadd.f32 %v4360, %v4515
        %4517 = vmatprep.mubr.f32.mxu0 %v3816
        %4518 = vmatmul.mubr.f32.gmra.mxu0 %v3815
        %v4519 = vpop.f32.mrf.mxu0
        %v4520 = vadd.f32 %v4356, %v4519
        %v4521 = vpop.f32.mrf.mxu0
        %v4522 = vadd.f32 %v4360, %v4521
        %4523 = vmatprep.mubr.f32.mxu0 %v3820
        %4524 = vmatmul.mubr.f32.gmra.mxu0 %v3819
        %v4525 = vpop.f32.mrf.mxu0
        %v4526 = vadd.f32 %v4356, %v4525
        %v4527 = vpop.f32.mrf.mxu0
        %v4528 = vadd.f32 %v4360, %v4527
        %4529 = vmatprep.mubr.f32.mxu0 %v3824
        %4530 = vmatmul.mubr.f32.gmra.mxu0 %v3823
        %v4531 = vpop.f32.mrf.mxu0
        %v4532 = vadd.f32 %v4356, %v4531
        %v4533 = vpop.f32.mrf.mxu0
        %v4534 = vadd.f32 %v4360, %v4533
        %4535 = vmatprep.mubr.f32.mxu0 %v3828
        %4536 = vmatmul.mubr.f32.gmra.mxu0 %v3827
        %v4537 = vpop.f32.mrf.mxu0
        %v4538 = vadd.f32 %v4356, %v4537
        %v4539 = vpop.f32.mrf.mxu0
        %v4540 = vadd.f32 %v4360, %v4539
        %4541 = vmatprep.mubr.f32.mxu0 %v3832
        %4542 = vmatmul.mubr.f32.gmra.mxu0 %v3831
        %v4543 = vpop.f32.mrf.mxu0
        %v4544 = vadd.f32 %v4356, %v4543
        %v4545 = vpop.f32.mrf.mxu0
        %v4546 = vadd.f32 %v4360, %v4545
        %4547 = vmatprep.mubr.f32.mxu0 %v3836
        %4548 = vmatmul.mubr.f32.gmra.mxu0 %v3835
        %v4549 = vpop.f32.mrf.mxu0
        %v4550 = vadd.f32 %v4356, %v4549
        %v4551 = vpop.f32.mrf.mxu0
        %v4552 = vadd.f32 %v4360, %v4551
        %4553 = vdwg.mxu0
        %4554 = vmatprep.subr.mxu0 %v4216
        %4555 = vmatpush1.msra.mxu0 %v4215
        %4556 = vmatprep.subr.mxu0 %v4208
        %4557 = vmatpush1.msra.mxu0 %v4207
        %4558 = vmatprep.subr.mxu0 %v4200
        %4559 = vmatpush1.msra.mxu0 %v4199
        %4560 = vmatprep.subr.mxu0 %v4192
        %4561 = vmatpush1.msra.mxu0 %v4191
        %4562 = vmatprep.subr.mxu0 %v4184
        %4563 = vmatpush1.msra.mxu0 %v4183
        %4564 = vmatprep.subr.mxu0 %v4176
        %4565 = vmatpush1.msra.mxu0 %v4175
        %4566 = vmatprep.subr.mxu0 %v4168
        %4567 = vmatpush1.msra.mxu0 %v4167
        %4568 = vmatprep.subr.mxu0 %v4160
        %4569 = vmatpush1.msra.mxu0 %v4159
        %4570 = vmatprep.subr.mxu0 %v4152
        %4571 = vmatpush1.msra.mxu0 %v4151
        %4572 = vmatprep.subr.mxu0 %v4144
        %4573 = vmatpush1.msra.mxu0 %v4143
        %4574 = vmatprep.subr.mxu0 %v4136
        %4575 = vmatpush1.msra.mxu0 %v4135
        %4576 = vmatprep.subr.mxu0 %v4128
        %4577 = vmatpush1.msra.mxu0 %v4127
        %4578 = vmatprep.subr.mxu0 %v4120
        %4579 = vmatpush1.msra.mxu0 %v4119
        %4580 = vmatprep.subr.mxu0 %v4112
        %4581 = vmatpush1.msra.mxu0 %v4111
        %4582 = vmatprep.subr.mxu0 %v4104
        %4583 = vmatpush1.msra.mxu0 %v4103
        %4584 = vmatprep.subr.mxu0 %v4096
        %4585 = vmatpush1.msra.mxu0 %v4095
        %4586 = vmatprep.subr.mxu0 %v4344
        %4587 = vmatpush2.msra.mxu0 %v4343
        %4588 = vmatprep.subr.mxu0 %v4336
        %4589 = vmatpush2.msra.mxu0 %v4335
        %4590 = vmatprep.subr.mxu0 %v4328
        %4591 = vmatpush2.msra.mxu0 %v4327
        %4592 = vmatprep.subr.mxu0 %v4320
        %4593 = vmatpush2.msra.mxu0 %v4319
        %4594 = vmatprep.subr.mxu0 %v4312
        %4595 = vmatpush2.msra.mxu0 %v4311
        %4596 = vmatprep.subr.mxu0 %v4304
        %4597 = vmatpush2.msra.mxu0 %v4303
        %4598 = vmatprep.subr.mxu0 %v4296
        %4599 = vmatpush2.msra.mxu0 %v4295
        %4600 = vmatprep.subr.mxu0 %v4288
        %4601 = vmatpush2.msra.mxu0 %v4287
        %4602 = vmatprep.subr.mxu0 %v4280
        %4603 = vmatpush2.msra.mxu0 %v4279
        %4604 = vmatprep.subr.mxu0 %v4272
        %4605 = vmatpush2.msra.mxu0 %v4271
        %4606 = vmatprep.subr.mxu0 %v4264
        %4607 = vmatpush2.msra.mxu0 %v4263
        %4608 = vmatprep.subr.mxu0 %v4256
        %4609 = vmatpush2.msra.mxu0 %v4255
        %4610 = vmatprep.subr.mxu0 %v4248
        %4611 = vmatpush2.msra.mxu0 %v4247
        %4612 = vmatprep.subr.mxu0 %v4240
        %4613 = vmatpush2.msra.mxu0 %v4239
        %4614 = vmatprep.subr.mxu0 %v4232
        %4615 = vmatpush2.msra.mxu0 %v4231
        %4616 = vmatprep.subr.mxu0 %v4224
        %4617 = vmatpush2.msra.mxu0 %v4223
        %4618 = vmatprep.mubr.f32.mxu0 %v3778
        %4619 = vmatmul.mubr.f32.gmra.mxu0 %v3777
        %v4620 = vpop.f32.mrf.mxu0
        %v4621 = vadd.f32 %v4460, %v4620
        %v4622 = vpop.f32.mrf.mxu0
        %v4623 = vadd.f32 %v4462, %v4622
        %4624 = vmatprep.mubr.f32.mxu0 %v3782
        %4625 = vmatmul.mubr.f32.gmra.mxu0 %v3781
        %v4626 = vpop.f32.mrf.mxu0
        %v4627 = vadd.f32 %v4466, %v4626
        %v4628 = vpop.f32.mrf.mxu0
        %v4629 = vadd.f32 %v4468, %v4628
        %4630 = vmatprep.mubr.f32.mxu0 %v3786
        %4631 = vmatmul.mubr.f32.gmra.mxu0 %v3785
        %v4632 = vpop.f32.mrf.mxu0
        %v4633 = vadd.f32 %v4472, %v4632
        %v4634 = vpop.f32.mrf.mxu0
        %v4635 = vadd.f32 %v4474, %v4634
        %4636 = vmatprep.mubr.f32.mxu0 %v3790
        %4637 = vmatmul.mubr.f32.gmra.mxu0 %v3789
        %v4638 = vpop.f32.mrf.mxu0
        %v4639 = vadd.f32 %v4478, %v4638
        %v4640 = vpop.f32.mrf.mxu0
        %v4641 = vadd.f32 %v4480, %v4640
        %4642 = vmatprep.mubr.f32.mxu0 %v3794
        %4643 = vmatmul.mubr.f32.gmra.mxu0 %v3793
        %v4644 = vpop.f32.mrf.mxu0
        %v4645 = vadd.f32 %v4484, %v4644
        %v4646 = vpop.f32.mrf.mxu0
        %v4647 = vadd.f32 %v4486, %v4646
        %4648 = vmatprep.mubr.f32.mxu0 %v3798
        %4649 = vmatmul.mubr.f32.gmra.mxu0 %v3797
        %v4650 = vpop.f32.mrf.mxu0
        %v4651 = vadd.f32 %v4490, %v4650
        %v4652 = vpop.f32.mrf.mxu0
        %v4653 = vadd.f32 %v4492, %v4652
        %4654 = vmatprep.mubr.f32.mxu0 %v3802
        %4655 = vmatmul.mubr.f32.gmra.mxu0 %v3801
        %v4656 = vpop.f32.mrf.mxu0
        %v4657 = vadd.f32 %v4496, %v4656
        %v4658 = vpop.f32.mrf.mxu0
        %v4659 = vadd.f32 %v4498, %v4658
        %4660 = vmatprep.mubr.f32.mxu0 %v3806
        %4661 = vmatmul.mubr.f32.gmra.mxu0 %v3805
        %v4662 = vpop.f32.mrf.mxu0
        %v4663 = vadd.f32 %v4502, %v4662
        %v4664 = vpop.f32.mrf.mxu0
        %v4665 = vadd.f32 %v4504, %v4664
        %4666 = vmatprep.mubr.f32.mxu0 %v3810
        %4667 = vmatmul.mubr.f32.gmra.mxu0 %v3809
        %v4668 = vpop.f32.mrf.mxu0
        %v4669 = vadd.f32 %v4508, %v4668
        %v4670 = vpop.f32.mrf.mxu0
        %v4671 = vadd.f32 %v4510, %v4670
        %4672 = vmatprep.mubr.f32.mxu0 %v3814
        %4673 = vmatmul.mubr.f32.gmra.mxu0 %v3813
        %v4674 = vpop.f32.mrf.mxu0
        %v4675 = vadd.f32 %v4514, %v4674
        %v4676 = vpop.f32.mrf.mxu0
        %v4677 = vadd.f32 %v4516, %v4676
        %4678 = vmatprep.mubr.f32.mxu0 %v3818
        %4679 = vmatmul.mubr.f32.gmra.mxu0 %v3817
        %v4680 = vpop.f32.mrf.mxu0
        %v4681 = vadd.f32 %v4520, %v4680
        %v4682 = vpop.f32.mrf.mxu0
        %v4683 = vadd.f32 %v4522, %v4682
        %4684 = vmatprep.mubr.f32.mxu0 %v3822
        %4685 = vmatmul.mubr.f32.gmra.mxu0 %v3821
        %v4686 = vpop.f32.mrf.mxu0
        %v4687 = vadd.f32 %v4526, %v4686
        %v4688 = vpop.f32.mrf.mxu0
        %v4689 = vadd.f32 %v4528, %v4688
        %4690 = vmatprep.mubr.f32.mxu0 %v3826
        %4691 = vmatmul.mubr.f32.gmra.mxu0 %v3825
        %v4692 = vpop.f32.mrf.mxu0
        %v4693 = vadd.f32 %v4532, %v4692
        %v4694 = vpop.f32.mrf.mxu0
        %v4695 = vadd.f32 %v4534, %v4694
        %4696 = vmatprep.mubr.f32.mxu0 %v3830
        %4697 = vmatmul.mubr.f32.gmra.mxu0 %v3829
        %v4698 = vpop.f32.mrf.mxu0
        %v4699 = vadd.f32 %v4538, %v4698
        %v4700 = vpop.f32.mrf.mxu0
        %v4701 = vadd.f32 %v4540, %v4700
        %4702 = vmatprep.mubr.f32.mxu0 %v3834
        %4703 = vmatmul.mubr.f32.gmra.mxu0 %v3833
        %v4704 = vpop.f32.mrf.mxu0
        %v4705 = vadd.f32 %v4544, %v4704
        %v4706 = vpop.f32.mrf.mxu0
        %v4707 = vadd.f32 %v4546, %v4706
        %4708 = vmatprep.mubr.f32.mxu0 %v3838
        %4709 = vmatmul.mubr.f32.gmra.mxu0 %v3837
        %v4710 = vpop.f32.mrf.mxu0
        %v4711 = vadd.f32 %v4550, %v4710
        %v4712 = vpop.f32.mrf.mxu0
        %v4713 = vadd.f32 %v4552, %v4712
        %4714 = vdwg.mxu0
        %4715 = vmatprep.subr.mxu0 %v3962
        %4716 = vmatpush1.msra.mxu0 %v3961
        %4717 = vmatprep.subr.mxu0 %v3954
        %4718 = vmatpush1.msra.mxu0 %v3953
        %4719 = vmatprep.subr.mxu0 %v3946
        %4720 = vmatpush1.msra.mxu0 %v3945
        %4721 = vmatprep.subr.mxu0 %v3938
        %4722 = vmatpush1.msra.mxu0 %v3937
        %4723 = vmatprep.subr.mxu0 %v3930
        %4724 = vmatpush1.msra.mxu0 %v3929
        %4725 = vmatprep.subr.mxu0 %v3922
        %4726 = vmatpush1.msra.mxu0 %v3921
        %4727 = vmatprep.subr.mxu0 %v3914
        %4728 = vmatpush1.msra.mxu0 %v3913
        %4729 = vmatprep.subr.mxu0 %v3906
        %4730 = vmatpush1.msra.mxu0 %v3905
        %4731 = vmatprep.subr.mxu0 %v3898
        %4732 = vmatpush1.msra.mxu0 %v3897
        %4733 = vmatprep.subr.mxu0 %v3890
        %4734 = vmatpush1.msra.mxu0 %v3889
        %4735 = vmatprep.subr.mxu0 %v3882
        %4736 = vmatpush1.msra.mxu0 %v3881
        %4737 = vmatprep.subr.mxu0 %v3874
        %4738 = vmatpush1.msra.mxu0 %v3873
        %4739 = vmatprep.subr.mxu0 %v3866
        %4740 = vmatpush1.msra.mxu0 %v3865
        %4741 = vmatprep.subr.mxu0 %v3858
        %4742 = vmatpush1.msra.mxu0 %v3857
        %4743 = vmatprep.subr.mxu0 %v3850
        %4744 = vmatpush1.msra.mxu0 %v3849
        %4745 = vmatprep.subr.mxu0 %v3842
        %4746 = vmatpush1.msra.mxu0 %v3841
        %4747 = vmatprep.subr.mxu0 %v4090
        %4748 = vmatpush2.msra.mxu0 %v4089
        %4749 = vmatprep.subr.mxu0 %v4082
        %4750 = vmatpush2.msra.mxu0 %v4081
        %4751 = vmatprep.subr.mxu0 %v4074
        %4752 = vmatpush2.msra.mxu0 %v4073
        %4753 = vmatprep.subr.mxu0 %v4066
        %4754 = vmatpush2.msra.mxu0 %v4065
        %4755 = vmatprep.subr.mxu0 %v4058
        %4756 = vmatpush2.msra.mxu0 %v4057
        %4757 = vmatprep.subr.mxu0 %v4050
        %4758 = vmatpush2.msra.mxu0 %v4049
        %4759 = vmatprep.subr.mxu0 %v4042
        %4760 = vmatpush2.msra.mxu0 %v4041
        %4761 = vmatprep.subr.mxu0 %v4034
        %4762 = vmatpush2.msra.mxu0 %v4033
        %4763 = vmatprep.subr.mxu0 %v4026
        %4764 = vmatpush2.msra.mxu0 %v4025
        %4765 = vmatprep.subr.mxu0 %v4018
        %4766 = vmatpush2.msra.mxu0 %v4017
        %4767 = vmatprep.subr.mxu0 %v4010
        %4768 = vmatpush2.msra.mxu0 %v4009
        %4769 = vmatprep.subr.mxu0 %v4002
        %4770 = vmatpush2.msra.mxu0 %v4001
        %4771 = vmatprep.subr.mxu0 %v3994
        %4772 = vmatpush2.msra.mxu0 %v3993
        %4773 = vmatprep.subr.mxu0 %v3986
        %4774 = vmatpush2.msra.mxu0 %v3985
        %4775 = vmatprep.subr.mxu0 %v3978
        %4776 = vmatpush2.msra.mxu0 %v3977
        %4777 = vmatprep.subr.mxu0 %v3970
        %4778 = vmatpush2.msra.mxu0 %v3969
        %4779 = vmatprep.mubr.f32.mxu0 %v3776
        %4780 = vmatmul.mubr.f32.gmra.mxu0 %v3775
        %v4781 = vpop.f32.mrf.mxu0
        %v4782 = vadd.f32 %v4364, %v4781
        %v4783 = vpop.f32.mrf.mxu0
        %v4784 = vadd.f32 %v4368, %v4783
        %4785 = vmatprep.mubr.f32.mxu0 %v3780
        %4786 = vmatmul.mubr.f32.gmra.mxu0 %v3779
        %v4787 = vpop.f32.mrf.mxu0
        %v4788 = vadd.f32 %v4364, %v4787
        %v4789 = vpop.f32.mrf.mxu0
        %v4790 = vadd.f32 %v4368, %v4789
        %4791 = vmatprep.mubr.f32.mxu0 %v3784
        %4792 = vmatmul.mubr.f32.gmra.mxu0 %v3783
        %v4793 = vpop.f32.mrf.mxu0
        %v4794 = vadd.f32 %v4364, %v4793
        %v4795 = vpop.f32.mrf.mxu0
        %v4796 = vadd.f32 %v4368, %v4795
        %4797 = vmatprep.mubr.f32.mxu0 %v3788
        %4798 = vmatmul.mubr.f32.gmra.mxu0 %v3787
        %v4799 = vpop.f32.mrf.mxu0
        %v4800 = vadd.f32 %v4364, %v4799
        %v4801 = vpop.f32.mrf.mxu0
        %v4802 = vadd.f32 %v4368, %v4801
        %4803 = vmatprep.mubr.f32.mxu0 %v3792
        %4804 = vmatmul.mubr.f32.gmra.mxu0 %v3791
        %v4805 = vpop.f32.mrf.mxu0
        %v4806 = vadd.f32 %v4364, %v4805
        %v4807 = vpop.f32.mrf.mxu0
        %v4808 = vadd.f32 %v4368, %v4807
        %4809 = vmatprep.mubr.f32.mxu0 %v3796
        %4810 = vmatmul.mubr.f32.gmra.mxu0 %v3795
        %v4811 = vpop.f32.mrf.mxu0
        %v4812 = vadd.f32 %v4364, %v4811
        %v4813 = vpop.f32.mrf.mxu0
        %v4814 = vadd.f32 %v4368, %v4813
        %4815 = vmatprep.mubr.f32.mxu0 %v3800
        %4816 = vmatmul.mubr.f32.gmra.mxu0 %v3799
        %v4817 = vpop.f32.mrf.mxu0
        %v4818 = vadd.f32 %v4364, %v4817
        %v4819 = vpop.f32.mrf.mxu0
        %v4820 = vadd.f32 %v4368, %v4819
        %4821 = vmatprep.mubr.f32.mxu0 %v3804
        %4822 = vmatmul.mubr.f32.gmra.mxu0 %v3803
        %v4823 = vpop.f32.mrf.mxu0
        %v4824 = vadd.f32 %v4364, %v4823
        %v4825 = vpop.f32.mrf.mxu0
        %v4826 = vadd.f32 %v4368, %v4825
        %4827 = vmatprep.mubr.f32.mxu0 %v3808
        %4828 = vmatmul.mubr.f32.gmra.mxu0 %v3807
        %v4829 = vpop.f32.mrf.mxu0
        %v4830 = vadd.f32 %v4364, %v4829
        %v4831 = vpop.f32.mrf.mxu0
        %v4832 = vadd.f32 %v4368, %v4831
        %4833 = vmatprep.mubr.f32.mxu0 %v3812
        %4834 = vmatmul.mubr.f32.gmra.mxu0 %v3811
        %v4835 = vpop.f32.mrf.mxu0
        %v4836 = vadd.f32 %v4364, %v4835
        %v4837 = vpop.f32.mrf.mxu0
        %v4838 = vadd.f32 %v4368, %v4837
        %4839 = vmatprep.mubr.f32.mxu0 %v3816
        %4840 = vmatmul.mubr.f32.gmra.mxu0 %v3815
        %v4841 = vpop.f32.mrf.mxu0
        %v4842 = vadd.f32 %v4364, %v4841
        %v4843 = vpop.f32.mrf.mxu0
        %v4844 = vadd.f32 %v4368, %v4843
        %4845 = vmatprep.mubr.f32.mxu0 %v3820
        %4846 = vmatmul.mubr.f32.gmra.mxu0 %v3819
        %v4847 = vpop.f32.mrf.mxu0
        %v4848 = vadd.f32 %v4364, %v4847
        %v4849 = vpop.f32.mrf.mxu0
        %v4850 = vadd.f32 %v4368, %v4849
        %4851 = vmatprep.mubr.f32.mxu0 %v3824
        %4852 = vmatmul.mubr.f32.gmra.mxu0 %v3823
        %v4853 = vpop.f32.mrf.mxu0
        %v4854 = vadd.f32 %v4364, %v4853
        %v4855 = vpop.f32.mrf.mxu0
        %v4856 = vadd.f32 %v4368, %v4855
        %4857 = vmatprep.mubr.f32.mxu0 %v3828
        %4858 = vmatmul.mubr.f32.gmra.mxu0 %v3827
        %v4859 = vpop.f32.mrf.mxu0
        %v4860 = vadd.f32 %v4364, %v4859
        %v4861 = vpop.f32.mrf.mxu0
        %v4862 = vadd.f32 %v4368, %v4861
        %4863 = vmatprep.mubr.f32.mxu0 %v3832
        %4864 = vmatmul.mubr.f32.gmra.mxu0 %v3831
        %v4865 = vpop.f32.mrf.mxu0
        %v4866 = vadd.f32 %v4364, %v4865
        %v4867 = vpop.f32.mrf.mxu0
        %v4868 = vadd.f32 %v4368, %v4867
        %4869 = vmatprep.mubr.f32.mxu0 %v3836
        %4870 = vmatmul.mubr.f32.gmra.mxu0 %v3835
        %v4871 = vpop.f32.mrf.mxu0
        %v4872 = vadd.f32 %v4364, %v4871
        %v4873 = vpop.f32.mrf.mxu0
        %v4874 = vadd.f32 %v4368, %v4873
        %4875 = vdwg.mxu0
        %4876 = vmatprep.subr.mxu0 %v4218
        %4877 = vmatpush1.msra.mxu0 %v4217
        %4878 = vmatprep.subr.mxu0 %v4210
        %4879 = vmatpush1.msra.mxu0 %v4209
        %4880 = vmatprep.subr.mxu0 %v4202
        %4881 = vmatpush1.msra.mxu0 %v4201
        %4882 = vmatprep.subr.mxu0 %v4194
        %4883 = vmatpush1.msra.mxu0 %v4193
        %4884 = vmatprep.subr.mxu0 %v4186
        %4885 = vmatpush1.msra.mxu0 %v4185
        %4886 = vmatprep.subr.mxu0 %v4178
        %4887 = vmatpush1.msra.mxu0 %v4177
        %4888 = vmatprep.subr.mxu0 %v4170
        %4889 = vmatpush1.msra.mxu0 %v4169
        %4890 = vmatprep.subr.mxu0 %v4162
        %4891 = vmatpush1.msra.mxu0 %v4161
        %4892 = vmatprep.subr.mxu0 %v4154
        %4893 = vmatpush1.msra.mxu0 %v4153
        %4894 = vmatprep.subr.mxu0 %v4146
        %4895 = vmatpush1.msra.mxu0 %v4145
        %4896 = vmatprep.subr.mxu0 %v4138
        %4897 = vmatpush1.msra.mxu0 %v4137
        %4898 = vmatprep.subr.mxu0 %v4130
        %4899 = vmatpush1.msra.mxu0 %v4129
        %4900 = vmatprep.subr.mxu0 %v4122
        %4901 = vmatpush1.msra.mxu0 %v4121
        %4902 = vmatprep.subr.mxu0 %v4114
        %4903 = vmatpush1.msra.mxu0 %v4113
        %4904 = vmatprep.subr.mxu0 %v4106
        %4905 = vmatpush1.msra.mxu0 %v4105
        %4906 = vmatprep.subr.mxu0 %v4098
        %4907 = vmatpush1.msra.mxu0 %v4097
        %4908 = vmatprep.subr.mxu0 %v4346
        %4909 = vmatpush2.msra.mxu0 %v4345
        %4910 = vmatprep.subr.mxu0 %v4338
        %4911 = vmatpush2.msra.mxu0 %v4337
        %4912 = vmatprep.subr.mxu0 %v4330
        %4913 = vmatpush2.msra.mxu0 %v4329
        %4914 = vmatprep.subr.mxu0 %v4322
        %4915 = vmatpush2.msra.mxu0 %v4321
        %4916 = vmatprep.subr.mxu0 %v4314
        %4917 = vmatpush2.msra.mxu0 %v4313
        %4918 = vmatprep.subr.mxu0 %v4306
        %4919 = vmatpush2.msra.mxu0 %v4305
        %4920 = vmatprep.subr.mxu0 %v4298
        %4921 = vmatpush2.msra.mxu0 %v4297
        %4922 = vmatprep.subr.mxu0 %v4290
        %4923 = vmatpush2.msra.mxu0 %v4289
        %4924 = vmatprep.subr.mxu0 %v4282
        %4925 = vmatpush2.msra.mxu0 %v4281
        %4926 = vmatprep.subr.mxu0 %v4274
        %4927 = vmatpush2.msra.mxu0 %v4273
        %4928 = vmatprep.subr.mxu0 %v4266
        %4929 = vmatpush2.msra.mxu0 %v4265
        %4930 = vmatprep.subr.mxu0 %v4258
        %4931 = vmatpush2.msra.mxu0 %v4257
        %4932 = vmatprep.subr.mxu0 %v4250
        %4933 = vmatpush2.msra.mxu0 %v4249
        %4934 = vmatprep.subr.mxu0 %v4242
        %4935 = vmatpush2.msra.mxu0 %v4241
        %4936 = vmatprep.subr.mxu0 %v4234
        %4937 = vmatpush2.msra.mxu0 %v4233
        %4938 = vmatprep.subr.mxu0 %v4226
        %4939 = vmatpush2.msra.mxu0 %v4225
        %4940 = vmatprep.mubr.f32.mxu0 %v3778
        %4941 = vmatmul.mubr.f32.gmra.mxu0 %v3777
        %v4942 = vpop.f32.mrf.mxu0
        %v4943 = vadd.f32 %v4782, %v4942
        %v4944 = vpop.f32.mrf.mxu0
        %v4945 = vadd.f32 %v4784, %v4944
        %4946 = vmatprep.mubr.f32.mxu0 %v3782
        %4947 = vmatmul.mubr.f32.gmra.mxu0 %v3781
        %v4948 = vpop.f32.mrf.mxu0
        %v4949 = vadd.f32 %v4788, %v4948
        %v4950 = vpop.f32.mrf.mxu0
        %v4951 = vadd.f32 %v4790, %v4950
        %4952 = vmatprep.mubr.f32.mxu0 %v3786
        %4953 = vmatmul.mubr.f32.gmra.mxu0 %v3785
        %v4954 = vpop.f32.mrf.mxu0
        %v4955 = vadd.f32 %v4794, %v4954
        %v4956 = vpop.f32.mrf.mxu0
        %v4957 = vadd.f32 %v4796, %v4956
        %4958 = vmatprep.mubr.f32.mxu0 %v3790
        %4959 = vmatmul.mubr.f32.gmra.mxu0 %v3789
        %v4960 = vpop.f32.mrf.mxu0
        %v4961 = vadd.f32 %v4800, %v4960
        %v4962 = vpop.f32.mrf.mxu0
        %v4963 = vadd.f32 %v4802, %v4962
        %4964 = vmatprep.mubr.f32.mxu0 %v3794
        %4965 = vmatmul.mubr.f32.gmra.mxu0 %v3793
        %v4966 = vpop.f32.mrf.mxu0
        %v4967 = vadd.f32 %v4806, %v4966
        %v4968 = vpop.f32.mrf.mxu0
        %v4969 = vadd.f32 %v4808, %v4968
        %4970 = vmatprep.mubr.f32.mxu0 %v3798
        %4971 = vmatmul.mubr.f32.gmra.mxu0 %v3797
        %v4972 = vpop.f32.mrf.mxu0
        %v4973 = vadd.f32 %v4812, %v4972
        %v4974 = vpop.f32.mrf.mxu0
        %v4975 = vadd.f32 %v4814, %v4974
        %4976 = vmatprep.mubr.f32.mxu0 %v3802
        %4977 = vmatmul.mubr.f32.gmra.mxu0 %v3801
        %v4978 = vpop.f32.mrf.mxu0
        %v4979 = vadd.f32 %v4818, %v4978
        %v4980 = vpop.f32.mrf.mxu0
        %v4981 = vadd.f32 %v4820, %v4980
        %4982 = vmatprep.mubr.f32.mxu0 %v3806
        %4983 = vmatmul.mubr.f32.gmra.mxu0 %v3805
        %v4984 = vpop.f32.mrf.mxu0
        %v4985 = vadd.f32 %v4824, %v4984
        %v4986 = vpop.f32.mrf.mxu0
        %v4987 = vadd.f32 %v4826, %v4986
        %4988 = vmatprep.mubr.f32.mxu0 %v3810
        %4989 = vmatmul.mubr.f32.gmra.mxu0 %v3809
        %v4990 = vpop.f32.mrf.mxu0
        %v4991 = vadd.f32 %v4830, %v4990
        %v4992 = vpop.f32.mrf.mxu0
        %v4993 = vadd.f32 %v4832, %v4992
        %4994 = vmatprep.mubr.f32.mxu0 %v3814
        %4995 = vmatmul.mubr.f32.gmra.mxu0 %v3813
        %v4996 = vpop.f32.mrf.mxu0
        %v4997 = vadd.f32 %v4836, %v4996
        %v4998 = vpop.f32.mrf.mxu0
        %v4999 = vadd.f32 %v4838, %v4998
        %5000 = vmatprep.mubr.f32.mxu0 %v3818
        %5001 = vmatmul.mubr.f32.gmra.mxu0 %v3817
        %v5002 = vpop.f32.mrf.mxu0
        %v5003 = vadd.f32 %v4842, %v5002
        %v5004 = vpop.f32.mrf.mxu0
        %v5005 = vadd.f32 %v4844, %v5004
        %5006 = vmatprep.mubr.f32.mxu0 %v3822
        %5007 = vmatmul.mubr.f32.gmra.mxu0 %v3821
        %v5008 = vpop.f32.mrf.mxu0
        %v5009 = vadd.f32 %v4848, %v5008
        %v5010 = vpop.f32.mrf.mxu0
        %v5011 = vadd.f32 %v4850, %v5010
        %5012 = vmatprep.mubr.f32.mxu0 %v3826
        %5013 = vmatmul.mubr.f32.gmra.mxu0 %v3825
        %v5014 = vpop.f32.mrf.mxu0
        %v5015 = vadd.f32 %v4854, %v5014
        %v5016 = vpop.f32.mrf.mxu0
        %v5017 = vadd.f32 %v4856, %v5016
        %5018 = vmatprep.mubr.f32.mxu0 %v3830
        %5019 = vmatmul.mubr.f32.gmra.mxu0 %v3829
        %v5020 = vpop.f32.mrf.mxu0
        %v5021 = vadd.f32 %v4860, %v5020
        %v5022 = vpop.f32.mrf.mxu0
        %v5023 = vadd.f32 %v4862, %v5022
        %5024 = vmatprep.mubr.f32.mxu0 %v3834
        %5025 = vmatmul.mubr.f32.gmra.mxu0 %v3833
        %v5026 = vpop.f32.mrf.mxu0
        %v5027 = vadd.f32 %v4866, %v5026
        %v5028 = vpop.f32.mrf.mxu0
        %v5029 = vadd.f32 %v4868, %v5028
        %5030 = vmatprep.mubr.f32.mxu0 %v3838
        %5031 = vmatmul.mubr.f32.gmra.mxu0 %v3837
        %v5032 = vpop.f32.mrf.mxu0
        %v5033 = vadd.f32 %v4872, %v5032
        %v5034 = vpop.f32.mrf.mxu0
        %v5035 = vadd.f32 %v4874, %v5034
        %5036 = vdwg.mxu0
        %5037 = vmatprep.subr.mxu0 %v3964
        %5038 = vmatpush1.msra.mxu0 %v3963
        %5039 = vmatprep.subr.mxu0 %v3956
        %5040 = vmatpush1.msra.mxu0 %v3955
        %5041 = vmatprep.subr.mxu0 %v3948
        %5042 = vmatpush1.msra.mxu0 %v3947
        %5043 = vmatprep.subr.mxu0 %v3940
        %5044 = vmatpush1.msra.mxu0 %v3939
        %5045 = vmatprep.subr.mxu0 %v3932
        %5046 = vmatpush1.msra.mxu0 %v3931
        %5047 = vmatprep.subr.mxu0 %v3924
        %5048 = vmatpush1.msra.mxu0 %v3923
        %5049 = vmatprep.subr.mxu0 %v3916
        %5050 = vmatpush1.msra.mxu0 %v3915
        %5051 = vmatprep.subr.mxu0 %v3908
        %5052 = vmatpush1.msra.mxu0 %v3907
        %5053 = vmatprep.subr.mxu0 %v3900
        %5054 = vmatpush1.msra.mxu0 %v3899
        %5055 = vmatprep.subr.mxu0 %v3892
        %5056 = vmatpush1.msra.mxu0 %v3891
        %5057 = vmatprep.subr.mxu0 %v3884
        %5058 = vmatpush1.msra.mxu0 %v3883
        %5059 = vmatprep.subr.mxu0 %v3876
        %5060 = vmatpush1.msra.mxu0 %v3875
        %5061 = vmatprep.subr.mxu0 %v3868
        %5062 = vmatpush1.msra.mxu0 %v3867
        %5063 = vmatprep.subr.mxu0 %v3860
        %5064 = vmatpush1.msra.mxu0 %v3859
        %5065 = vmatprep.subr.mxu0 %v3852
        %5066 = vmatpush1.msra.mxu0 %v3851
        %5067 = vmatprep.subr.mxu0 %v3844
        %5068 = vmatpush1.msra.mxu0 %v3843
        %5069 = vmatprep.subr.mxu0 %v4092
        %5070 = vmatpush2.msra.mxu0 %v4091
        %5071 = vmatprep.subr.mxu0 %v4084
        %5072 = vmatpush2.msra.mxu0 %v4083
        %5073 = vmatprep.subr.mxu0 %v4076
        %5074 = vmatpush2.msra.mxu0 %v4075
        %5075 = vmatprep.subr.mxu0 %v4068
        %5076 = vmatpush2.msra.mxu0 %v4067
        %5077 = vmatprep.subr.mxu0 %v4060
        %5078 = vmatpush2.msra.mxu0 %v4059
        %5079 = vmatprep.subr.mxu0 %v4052
        %5080 = vmatpush2.msra.mxu0 %v4051
        %5081 = vmatprep.subr.mxu0 %v4044
        %5082 = vmatpush2.msra.mxu0 %v4043
        %5083 = vmatprep.subr.mxu0 %v4036
        %5084 = vmatpush2.msra.mxu0 %v4035
        %5085 = vmatprep.subr.mxu0 %v4028
        %5086 = vmatpush2.msra.mxu0 %v4027
        %5087 = vmatprep.subr.mxu0 %v4020
        %5088 = vmatpush2.msra.mxu0 %v4019
        %5089 = vmatprep.subr.mxu0 %v4012
        %5090 = vmatpush2.msra.mxu0 %v4011
        %5091 = vmatprep.subr.mxu0 %v4004
        %5092 = vmatpush2.msra.mxu0 %v4003
        %5093 = vmatprep.subr.mxu0 %v3996
        %5094 = vmatpush2.msra.mxu0 %v3995
        %5095 = vmatprep.subr.mxu0 %v3988
        %5096 = vmatpush2.msra.mxu0 %v3987
        %5097 = vmatprep.subr.mxu0 %v3980
        %5098 = vmatpush2.msra.mxu0 %v3979
        %5099 = vmatprep.subr.mxu0 %v3972
        %5100 = vmatpush2.msra.mxu0 %v3971
        %5101 = vmatprep.mubr.f32.mxu0 %v3776
        %5102 = vmatmul.mubr.f32.gmra.mxu0 %v3775
        %v5103 = vpop.f32.mrf.mxu0
        %v5104 = vadd.f32 %v4372, %v5103
        %v5105 = vpop.f32.mrf.mxu0
        %v5106 = vadd.f32 %v4376, %v5105
        %5107 = vmatprep.mubr.f32.mxu0 %v3780
        %5108 = vmatmul.mubr.f32.gmra.mxu0 %v3779
        %v5109 = vpop.f32.mrf.mxu0
        %v5110 = vadd.f32 %v4372, %v5109
        %v5111 = vpop.f32.mrf.mxu0
        %v5112 = vadd.f32 %v4376, %v5111
        %5113 = vmatprep.mubr.f32.mxu0 %v3784
        %5114 = vmatmul.mubr.f32.gmra.mxu0 %v3783
        %v5115 = vpop.f32.mrf.mxu0
        %v5116 = vadd.f32 %v4372, %v5115
        %v5117 = vpop.f32.mrf.mxu0
        %v5118 = vadd.f32 %v4376, %v5117
        %5119 = vmatprep.mubr.f32.mxu0 %v3788
        %5120 = vmatmul.mubr.f32.gmra.mxu0 %v3787
        %v5121 = vpop.f32.mrf.mxu0
        %v5122 = vadd.f32 %v4372, %v5121
        %v5123 = vpop.f32.mrf.mxu0
        %v5124 = vadd.f32 %v4376, %v5123
        %5125 = vmatprep.mubr.f32.mxu0 %v3792
        %5126 = vmatmul.mubr.f32.gmra.mxu0 %v3791
        %v5127 = vpop.f32.mrf.mxu0
        %v5128 = vadd.f32 %v4372, %v5127
        %v5129 = vpop.f32.mrf.mxu0
        %v5130 = vadd.f32 %v4376, %v5129
        %5131 = vmatprep.mubr.f32.mxu0 %v3796
        %5132 = vmatmul.mubr.f32.gmra.mxu0 %v3795
        %v5133 = vpop.f32.mrf.mxu0
        %v5134 = vadd.f32 %v4372, %v5133
        %v5135 = vpop.f32.mrf.mxu0
        %v5136 = vadd.f32 %v4376, %v5135
        %5137 = vmatprep.mubr.f32.mxu0 %v3800
        %5138 = vmatmul.mubr.f32.gmra.mxu0 %v3799
        %v5139 = vpop.f32.mrf.mxu0
        %v5140 = vadd.f32 %v4372, %v5139
        %v5141 = vpop.f32.mrf.mxu0
        %v5142 = vadd.f32 %v4376, %v5141
        %5143 = vmatprep.mubr.f32.mxu0 %v3804
        %5144 = vmatmul.mubr.f32.gmra.mxu0 %v3803
        %v5145 = vpop.f32.mrf.mxu0
        %v5146 = vadd.f32 %v4372, %v5145
        %v5147 = vpop.f32.mrf.mxu0
        %v5148 = vadd.f32 %v4376, %v5147
        %5149 = vmatprep.mubr.f32.mxu0 %v3808
        %5150 = vmatmul.mubr.f32.gmra.mxu0 %v3807
        %v5151 = vpop.f32.mrf.mxu0
        %v5152 = vadd.f32 %v4372, %v5151
        %v5153 = vpop.f32.mrf.mxu0
        %v5154 = vadd.f32 %v4376, %v5153
        %5155 = vmatprep.mubr.f32.mxu0 %v3812
        %5156 = vmatmul.mubr.f32.gmra.mxu0 %v3811
        %v5157 = vpop.f32.mrf.mxu0
        %v5158 = vadd.f32 %v4372, %v5157
        %v5159 = vpop.f32.mrf.mxu0
        %v5160 = vadd.f32 %v4376, %v5159
        %5161 = vmatprep.mubr.f32.mxu0 %v3816
        %5162 = vmatmul.mubr.f32.gmra.mxu0 %v3815
        %v5163 = vpop.f32.mrf.mxu0
        %v5164 = vadd.f32 %v4372, %v5163
        %v5165 = vpop.f32.mrf.mxu0
        %v5166 = vadd.f32 %v4376, %v5165
        %5167 = vmatprep.mubr.f32.mxu0 %v3820
        %5168 = vmatmul.mubr.f32.gmra.mxu0 %v3819
        %v5169 = vpop.f32.mrf.mxu0
        %v5170 = vadd.f32 %v4372, %v5169
        %v5171 = vpop.f32.mrf.mxu0
        %v5172 = vadd.f32 %v4376, %v5171
        %5173 = vmatprep.mubr.f32.mxu0 %v3824
        %5174 = vmatmul.mubr.f32.gmra.mxu0 %v3823
        %v5175 = vpop.f32.mrf.mxu0
        %v5176 = vadd.f32 %v4372, %v5175
        %v5177 = vpop.f32.mrf.mxu0
        %v5178 = vadd.f32 %v4376, %v5177
        %5179 = vmatprep.mubr.f32.mxu0 %v3828
        %5180 = vmatmul.mubr.f32.gmra.mxu0 %v3827
        %v5181 = vpop.f32.mrf.mxu0
        %v5182 = vadd.f32 %v4372, %v5181
        %v5183 = vpop.f32.mrf.mxu0
        %v5184 = vadd.f32 %v4376, %v5183
        %5185 = vmatprep.mubr.f32.mxu0 %v3832
        %5186 = vmatmul.mubr.f32.gmra.mxu0 %v3831
        %v5187 = vpop.f32.mrf.mxu0
        %v5188 = vadd.f32 %v4372, %v5187
        %v5189 = vpop.f32.mrf.mxu0
        %v5190 = vadd.f32 %v4376, %v5189
        %5191 = vmatprep.mubr.f32.mxu0 %v3836
        %5192 = vmatmul.mubr.f32.gmra.mxu0 %v3835
        %v5193 = vpop.f32.mrf.mxu0
        %v5194 = vadd.f32 %v4372, %v5193
        %v5195 = vpop.f32.mrf.mxu0
        %v5196 = vadd.f32 %v4376, %v5195
        %5197 = vdwg.mxu0
        %5198 = vmatprep.subr.mxu0 %v4220
        %5199 = vmatpush1.msra.mxu0 %v4219
        %5200 = vmatprep.subr.mxu0 %v4212
        %5201 = vmatpush1.msra.mxu0 %v4211
        %5202 = vmatprep.subr.mxu0 %v4204
        %5203 = vmatpush1.msra.mxu0 %v4203
        %5204 = vmatprep.subr.mxu0 %v4196
        %5205 = vmatpush1.msra.mxu0 %v4195
        %5206 = vmatprep.subr.mxu0 %v4188
        %5207 = vmatpush1.msra.mxu0 %v4187
        %5208 = vmatprep.subr.mxu0 %v4180
        %5209 = vmatpush1.msra.mxu0 %v4179
        %5210 = vmatprep.subr.mxu0 %v4172
        %5211 = vmatpush1.msra.mxu0 %v4171
        %5212 = vmatprep.subr.mxu0 %v4164
        %5213 = vmatpush1.msra.mxu0 %v4163
        %5214 = vmatprep.subr.mxu0 %v4156
        %5215 = vmatpush1.msra.mxu0 %v4155
        %5216 = vmatprep.subr.mxu0 %v4148
        %5217 = vmatpush1.msra.mxu0 %v4147
        %5218 = vmatprep.subr.mxu0 %v4140
        %5219 = vmatpush1.msra.mxu0 %v4139
        %5220 = vmatprep.subr.mxu0 %v4132
        %5221 = vmatpush1.msra.mxu0 %v4131
        %5222 = vmatprep.subr.mxu0 %v4124
        %5223 = vmatpush1.msra.mxu0 %v4123
        %5224 = vmatprep.subr.mxu0 %v4116
        %5225 = vmatpush1.msra.mxu0 %v4115
        %5226 = vmatprep.subr.mxu0 %v4108
        %5227 = vmatpush1.msra.mxu0 %v4107
        %5228 = vmatprep.subr.mxu0 %v4100
        %5229 = vmatpush1.msra.mxu0 %v4099
        %5230 = vmatprep.subr.mxu0 %v4348
        %5231 = vmatpush2.msra.mxu0 %v4347
        %5232 = vmatprep.subr.mxu0 %v4340
        %5233 = vmatpush2.msra.mxu0 %v4339
        %5234 = vmatprep.subr.mxu0 %v4332
        %5235 = vmatpush2.msra.mxu0 %v4331
        %5236 = vmatprep.subr.mxu0 %v4324
        %5237 = vmatpush2.msra.mxu0 %v4323
        %5238 = vmatprep.subr.mxu0 %v4316
        %5239 = vmatpush2.msra.mxu0 %v4315
        %5240 = vmatprep.subr.mxu0 %v4308
        %5241 = vmatpush2.msra.mxu0 %v4307
        %5242 = vmatprep.subr.mxu0 %v4300
        %5243 = vmatpush2.msra.mxu0 %v4299
        %5244 = vmatprep.subr.mxu0 %v4292
        %5245 = vmatpush2.msra.mxu0 %v4291
        %5246 = vmatprep.subr.mxu0 %v4284
        %5247 = vmatpush2.msra.mxu0 %v4283
        %5248 = vmatprep.subr.mxu0 %v4276
        %5249 = vmatpush2.msra.mxu0 %v4275
        %5250 = vmatprep.subr.mxu0 %v4268
        %5251 = vmatpush2.msra.mxu0 %v4267
        %5252 = vmatprep.subr.mxu0 %v4260
        %5253 = vmatpush2.msra.mxu0 %v4259
        %5254 = vmatprep.subr.mxu0 %v4252
        %5255 = vmatpush2.msra.mxu0 %v4251
        %5256 = vmatprep.subr.mxu0 %v4244
        %5257 = vmatpush2.msra.mxu0 %v4243
        %5258 = vmatprep.subr.mxu0 %v4236
        %5259 = vmatpush2.msra.mxu0 %v4235
        %5260 = vmatprep.subr.mxu0 %v4228
        %5261 = vmatpush2.msra.mxu0 %v4227
        %5262 = vmatprep.mubr.f32.mxu0 %v3778
        %5263 = vmatmul.mubr.f32.gmra.mxu0 %v3777
        %v5264 = vpop.f32.mrf.mxu0
        %v5265 = vadd.f32 %v5104, %v5264
        %v5266 = vpop.f32.mrf.mxu0
        %v5267 = vadd.f32 %v5106, %v5266
        %5268 = vmatprep.mubr.f32.mxu0 %v3782
        %5269 = vmatmul.mubr.f32.gmra.mxu0 %v3781
        %v5270 = vpop.f32.mrf.mxu0
        %v5271 = vadd.f32 %v5110, %v5270
        %v5272 = vpop.f32.mrf.mxu0
        %v5273 = vadd.f32 %v5112, %v5272
        %5274 = vmatprep.mubr.f32.mxu0 %v3786
        %5275 = vmatmul.mubr.f32.gmra.mxu0 %v3785
        %v5276 = vpop.f32.mrf.mxu0
        %v5277 = vadd.f32 %v5116, %v5276
        %v5278 = vpop.f32.mrf.mxu0
        %v5279 = vadd.f32 %v5118, %v5278
        %5280 = vmatprep.mubr.f32.mxu0 %v3790
        %5281 = vmatmul.mubr.f32.gmra.mxu0 %v3789
        %v5282 = vpop.f32.mrf.mxu0
        %v5283 = vadd.f32 %v5122, %v5282
        %v5284 = vpop.f32.mrf.mxu0
        %v5285 = vadd.f32 %v5124, %v5284
        %5286 = vmatprep.mubr.f32.mxu0 %v3794
        %5287 = vmatmul.mubr.f32.gmra.mxu0 %v3793
        %v5288 = vpop.f32.mrf.mxu0
        %v5289 = vadd.f32 %v5128, %v5288
        %v5290 = vpop.f32.mrf.mxu0
        %v5291 = vadd.f32 %v5130, %v5290
        %5292 = vmatprep.mubr.f32.mxu0 %v3798
        %5293 = vmatmul.mubr.f32.gmra.mxu0 %v3797
        %v5294 = vpop.f32.mrf.mxu0
        %v5295 = vadd.f32 %v5134, %v5294
        %v5296 = vpop.f32.mrf.mxu0
        %v5297 = vadd.f32 %v5136, %v5296
        %5298 = vmatprep.mubr.f32.mxu0 %v3802
        %5299 = vmatmul.mubr.f32.gmra.mxu0 %v3801
        %v5300 = vpop.f32.mrf.mxu0
        %v5301 = vadd.f32 %v5140, %v5300
        %v5302 = vpop.f32.mrf.mxu0
        %v5303 = vadd.f32 %v5142, %v5302
        %5304 = vmatprep.mubr.f32.mxu0 %v3806
        %5305 = vmatmul.mubr.f32.gmra.mxu0 %v3805
        %v5306 = vpop.f32.mrf.mxu0
        %v5307 = vadd.f32 %v5146, %v5306
        %v5308 = vpop.f32.mrf.mxu0
        %v5309 = vadd.f32 %v5148, %v5308
        %5310 = vmatprep.mubr.f32.mxu0 %v3810
        %5311 = vmatmul.mubr.f32.gmra.mxu0 %v3809
        %v5312 = vpop.f32.mrf.mxu0
        %v5313 = vadd.f32 %v5152, %v5312
        %v5314 = vpop.f32.mrf.mxu0
        %v5315 = vadd.f32 %v5154, %v5314
        %5316 = vmatprep.mubr.f32.mxu0 %v3814
        %5317 = vmatmul.mubr.f32.gmra.mxu0 %v3813
        %v5318 = vpop.f32.mrf.mxu0
        %v5319 = vadd.f32 %v5158, %v5318
        %v5320 = vpop.f32.mrf.mxu0
        %v5321 = vadd.f32 %v5160, %v5320
        %5322 = vmatprep.mubr.f32.mxu0 %v3818
        %5323 = vmatmul.mubr.f32.gmra.mxu0 %v3817
        %v5324 = vpop.f32.mrf.mxu0
        %v5325 = vadd.f32 %v5164, %v5324
        %v5326 = vpop.f32.mrf.mxu0
        %v5327 = vadd.f32 %v5166, %v5326
        %5328 = vmatprep.mubr.f32.mxu0 %v3822
        %5329 = vmatmul.mubr.f32.gmra.mxu0 %v3821
        %v5330 = vpop.f32.mrf.mxu0
        %v5331 = vadd.f32 %v5170, %v5330
        %v5332 = vpop.f32.mrf.mxu0
        %v5333 = vadd.f32 %v5172, %v5332
        %5334 = vmatprep.mubr.f32.mxu0 %v3826
        %5335 = vmatmul.mubr.f32.gmra.mxu0 %v3825
        %v5336 = vpop.f32.mrf.mxu0
        %v5337 = vadd.f32 %v5176, %v5336
        %v5338 = vpop.f32.mrf.mxu0
        %v5339 = vadd.f32 %v5178, %v5338
        %5340 = vmatprep.mubr.f32.mxu0 %v3830
        %5341 = vmatmul.mubr.f32.gmra.mxu0 %v3829
        %v5342 = vpop.f32.mrf.mxu0
        %v5343 = vadd.f32 %v5182, %v5342
        %v5344 = vpop.f32.mrf.mxu0
        %v5345 = vadd.f32 %v5184, %v5344
        %5346 = vmatprep.mubr.f32.mxu0 %v3834
        %5347 = vmatmul.mubr.f32.gmra.mxu0 %v3833
        %v5348 = vpop.f32.mrf.mxu0
        %v5349 = vadd.f32 %v5188, %v5348
        %v5350 = vpop.f32.mrf.mxu0
        %v5351 = vadd.f32 %v5190, %v5350
        %5352 = vmatprep.mubr.f32.mxu0 %v3838
        %5353 = vmatmul.mubr.f32.gmra.mxu0 %v3837
        %v5354 = vpop.f32.mrf.mxu0
        %v5355 = vadd.f32 %v5194, %v5354
        %v5356 = vpop.f32.mrf.mxu0
        %v5357 = vadd.f32 %v5196, %v5356
        %5358 = vdwg.mxu0
        %5359 = vmatprep.subr.mxu0 %v3966
        %5360 = vmatpush1.msra.mxu0 %v3965
        %5361 = vmatprep.subr.mxu0 %v3958
        %5362 = vmatpush1.msra.mxu0 %v3957
        %5363 = vmatprep.subr.mxu0 %v3950
        %5364 = vmatpush1.msra.mxu0 %v3949
        %5365 = vmatprep.subr.mxu0 %v3942
        %5366 = vmatpush1.msra.mxu0 %v3941
        %5367 = vmatprep.subr.mxu0 %v3934
        %5368 = vmatpush1.msra.mxu0 %v3933
        %5369 = vmatprep.subr.mxu0 %v3926
        %5370 = vmatpush1.msra.mxu0 %v3925
        %5371 = vmatprep.subr.mxu0 %v3918
        %5372 = vmatpush1.msra.mxu0 %v3917
        %5373 = vmatprep.subr.mxu0 %v3910
        %5374 = vmatpush1.msra.mxu0 %v3909
        %5375 = vmatprep.subr.mxu0 %v3902
        %5376 = vmatpush1.msra.mxu0 %v3901
        %5377 = vmatprep.subr.mxu0 %v3894
        %5378 = vmatpush1.msra.mxu0 %v3893
        %5379 = vmatprep.subr.mxu0 %v3886
        %5380 = vmatpush1.msra.mxu0 %v3885
        %5381 = vmatprep.subr.mxu0 %v3878
        %5382 = vmatpush1.msra.mxu0 %v3877
        %5383 = vmatprep.subr.mxu0 %v3870
        %5384 = vmatpush1.msra.mxu0 %v3869
        %5385 = vmatprep.subr.mxu0 %v3862
        %5386 = vmatpush1.msra.mxu0 %v3861
        %5387 = vmatprep.subr.mxu0 %v3854
        %5388 = vmatpush1.msra.mxu0 %v3853
        %5389 = vmatprep.subr.mxu0 %v3846
        %5390 = vmatpush1.msra.mxu0 %v3845
        %5391 = vmatprep.subr.mxu0 %v4094
        %5392 = vmatpush2.msra.mxu0 %v4093
        %5393 = vmatprep.subr.mxu0 %v4086
        %5394 = vmatpush2.msra.mxu0 %v4085
        %5395 = vmatprep.subr.mxu0 %v4078
        %5396 = vmatpush2.msra.mxu0 %v4077
        %5397 = vmatprep.subr.mxu0 %v4070
        %5398 = vmatpush2.msra.mxu0 %v4069
        %5399 = vmatprep.subr.mxu0 %v4062
        %5400 = vmatpush2.msra.mxu0 %v4061
        %5401 = vmatprep.subr.mxu0 %v4054
        %5402 = vmatpush2.msra.mxu0 %v4053
        %5403 = vmatprep.subr.mxu0 %v4046
        %5404 = vmatpush2.msra.mxu0 %v4045
        %5405 = vmatprep.subr.mxu0 %v4038
        %5406 = vmatpush2.msra.mxu0 %v4037
        %5407 = vmatprep.subr.mxu0 %v4030
        %5408 = vmatpush2.msra.mxu0 %v4029
        %5409 = vmatprep.subr.mxu0 %v4022
        %5410 = vmatpush2.msra.mxu0 %v4021
        %5411 = vmatprep.subr.mxu0 %v4014
        %5412 = vmatpush2.msra.mxu0 %v4013
        %5413 = vmatprep.subr.mxu0 %v4006
        %5414 = vmatpush2.msra.mxu0 %v4005
        %5415 = vmatprep.subr.mxu0 %v3998
        %5416 = vmatpush2.msra.mxu0 %v3997
        %5417 = vmatprep.subr.mxu0 %v3990
        %5418 = vmatpush2.msra.mxu0 %v3989
        %5419 = vmatprep.subr.mxu0 %v3982
        %5420 = vmatpush2.msra.mxu0 %v3981
        %5421 = vmatprep.subr.mxu0 %v3974
        %5422 = vmatpush2.msra.mxu0 %v3973
        %5423 = vmatprep.mubr.f32.mxu0 %v3776
        %5424 = vmatmul.mubr.f32.gmra.mxu0 %v3775
        %v5425 = vpop.f32.mrf.mxu0
        %v5426 = vadd.f32 %v4380, %v5425
        %v5427 = vpop.f32.mrf.mxu0
        %v5428 = vadd.f32 %v4384, %v5427
        %5429 = vmatprep.mubr.f32.mxu0 %v3780
        %5430 = vmatmul.mubr.f32.gmra.mxu0 %v3779
        %v5431 = vpop.f32.mrf.mxu0
        %v5432 = vadd.f32 %v4380, %v5431
        %v5433 = vpop.f32.mrf.mxu0
        %v5434 = vadd.f32 %v4384, %v5433
        %5435 = vmatprep.mubr.f32.mxu0 %v3784
        %5436 = vmatmul.mubr.f32.gmra.mxu0 %v3783
        %v5437 = vpop.f32.mrf.mxu0
        %v5438 = vadd.f32 %v4380, %v5437
        %v5439 = vpop.f32.mrf.mxu0
        %v5440 = vadd.f32 %v4384, %v5439
        %5441 = vmatprep.mubr.f32.mxu0 %v3788
        %5442 = vmatmul.mubr.f32.gmra.mxu0 %v3787
        %v5443 = vpop.f32.mrf.mxu0
        %v5444 = vadd.f32 %v4380, %v5443
        %v5445 = vpop.f32.mrf.mxu0
        %v5446 = vadd.f32 %v4384, %v5445
        %5447 = vmatprep.mubr.f32.mxu0 %v3792
        %5448 = vmatmul.mubr.f32.gmra.mxu0 %v3791
        %v5449 = vpop.f32.mrf.mxu0
        %v5450 = vadd.f32 %v4380, %v5449
        %v5451 = vpop.f32.mrf.mxu0
        %v5452 = vadd.f32 %v4384, %v5451
        %5453 = vmatprep.mubr.f32.mxu0 %v3796
        %5454 = vmatmul.mubr.f32.gmra.mxu0 %v3795
        %v5455 = vpop.f32.mrf.mxu0
        %v5456 = vadd.f32 %v4380, %v5455
        %v5457 = vpop.f32.mrf.mxu0
        %v5458 = vadd.f32 %v4384, %v5457
        %5459 = vmatprep.mubr.f32.mxu0 %v3800
        %5460 = vmatmul.mubr.f32.gmra.mxu0 %v3799
        %v5461 = vpop.f32.mrf.mxu0
        %v5462 = vadd.f32 %v4380, %v5461
        %v5463 = vpop.f32.mrf.mxu0
        %v5464 = vadd.f32 %v4384, %v5463
        %5465 = vmatprep.mubr.f32.mxu0 %v3804
        %5466 = vmatmul.mubr.f32.gmra.mxu0 %v3803
        %v5467 = vpop.f32.mrf.mxu0
        %v5468 = vadd.f32 %v4380, %v5467
        %v5469 = vpop.f32.mrf.mxu0
        %v5470 = vadd.f32 %v4384, %v5469
        %5471 = vmatprep.mubr.f32.mxu0 %v3808
        %5472 = vmatmul.mubr.f32.gmra.mxu0 %v3807
        %v5473 = vpop.f32.mrf.mxu0
        %v5474 = vadd.f32 %v4380, %v5473
        %v5475 = vpop.f32.mrf.mxu0
        %v5476 = vadd.f32 %v4384, %v5475
        %5477 = vmatprep.mubr.f32.mxu0 %v3812
        %5478 = vmatmul.mubr.f32.gmra.mxu0 %v3811
        %v5479 = vpop.f32.mrf.mxu0
        %v5480 = vadd.f32 %v4380, %v5479
        %v5481 = vpop.f32.mrf.mxu0
        %v5482 = vadd.f32 %v4384, %v5481
        %5483 = vmatprep.mubr.f32.mxu0 %v3816
        %5484 = vmatmul.mubr.f32.gmra.mxu0 %v3815
        %v5485 = vpop.f32.mrf.mxu0
        %v5486 = vadd.f32 %v4380, %v5485
        %v5487 = vpop.f32.mrf.mxu0
        %v5488 = vadd.f32 %v4384, %v5487
        %5489 = vmatprep.mubr.f32.mxu0 %v3820
        %5490 = vmatmul.mubr.f32.gmra.mxu0 %v3819
        %v5491 = vpop.f32.mrf.mxu0
        %v5492 = vadd.f32 %v4380, %v5491
        %v5493 = vpop.f32.mrf.mxu0
        %v5494 = vadd.f32 %v4384, %v5493
        %5495 = vmatprep.mubr.f32.mxu0 %v3824
        %5496 = vmatmul.mubr.f32.gmra.mxu0 %v3823
        %v5497 = vpop.f32.mrf.mxu0
        %v5498 = vadd.f32 %v4380, %v5497
        %v5499 = vpop.f32.mrf.mxu0
        %v5500 = vadd.f32 %v4384, %v5499
        %5501 = vmatprep.mubr.f32.mxu0 %v3828
        %5502 = vmatmul.mubr.f32.gmra.mxu0 %v3827
        %v5503 = vpop.f32.mrf.mxu0
        %v5504 = vadd.f32 %v4380, %v5503
        %v5505 = vpop.f32.mrf.mxu0
        %v5506 = vadd.f32 %v4384, %v5505
        %5507 = vmatprep.mubr.f32.mxu0 %v3832
        %5508 = vmatmul.mubr.f32.gmra.mxu0 %v3831
        %v5509 = vpop.f32.mrf.mxu0
        %v5510 = vadd.f32 %v4380, %v5509
        %v5511 = vpop.f32.mrf.mxu0
        %v5512 = vadd.f32 %v4384, %v5511
        %5513 = vmatprep.mubr.f32.mxu0 %v3836
        %5514 = vmatmul.mubr.f32.gmra.mxu0 %v3835
        %v5515 = vpop.f32.mrf.mxu0
        %v5516 = vadd.f32 %v4380, %v5515
        %v5517 = vpop.f32.mrf.mxu0
        %v5518 = vadd.f32 %v4384, %v5517
        %5519 = vdwg.mxu0
        %5520 = vmatprep.subr.mxu0 %v4222
        %5521 = vmatpush1.msra.mxu0 %v4221
        %5522 = vmatprep.subr.mxu0 %v4214
        %5523 = vmatpush1.msra.mxu0 %v4213
        %5524 = vmatprep.subr.mxu0 %v4206
        %5525 = vmatpush1.msra.mxu0 %v4205
        %5526 = vmatprep.subr.mxu0 %v4198
        %5527 = vmatpush1.msra.mxu0 %v4197
        %5528 = vmatprep.subr.mxu0 %v4190
        %5529 = vmatpush1.msra.mxu0 %v4189
        %5530 = vmatprep.subr.mxu0 %v4182
        %5531 = vmatpush1.msra.mxu0 %v4181
        %5532 = vmatprep.subr.mxu0 %v4174
        %5533 = vmatpush1.msra.mxu0 %v4173
        %5534 = vmatprep.subr.mxu0 %v4166
        %5535 = vmatpush1.msra.mxu0 %v4165
        %5536 = vmatprep.subr.mxu0 %v4158
        %5537 = vmatpush1.msra.mxu0 %v4157
        %5538 = vmatprep.subr.mxu0 %v4150
        %5539 = vmatpush1.msra.mxu0 %v4149
        %5540 = vmatprep.subr.mxu0 %v4142
        %5541 = vmatpush1.msra.mxu0 %v4141
        %5542 = vmatprep.subr.mxu0 %v4134
        %5543 = vmatpush1.msra.mxu0 %v4133
        %5544 = vmatprep.subr.mxu0 %v4126
        %5545 = vmatpush1.msra.mxu0 %v4125
        %5546 = vmatprep.subr.mxu0 %v4118
        %5547 = vmatpush1.msra.mxu0 %v4117
        %5548 = vmatprep.subr.mxu0 %v4110
        %5549 = vmatpush1.msra.mxu0 %v4109
        %5550 = vmatprep.subr.mxu0 %v4102
        %5551 = vmatpush1.msra.mxu0 %v4101
        %5552 = vmatprep.subr.mxu0 %v4350
        %5553 = vmatpush2.msra.mxu0 %v4349
        %5554 = vmatprep.subr.mxu0 %v4342
        %5555 = vmatpush2.msra.mxu0 %v4341
        %5556 = vmatprep.subr.mxu0 %v4334
        %5557 = vmatpush2.msra.mxu0 %v4333
        %5558 = vmatprep.subr.mxu0 %v4326
        %5559 = vmatpush2.msra.mxu0 %v4325
        %5560 = vmatprep.subr.mxu0 %v4318
        %5561 = vmatpush2.msra.mxu0 %v4317
        %5562 = vmatprep.subr.mxu0 %v4310
        %5563 = vmatpush2.msra.mxu0 %v4309
        %5564 = vmatprep.subr.mxu0 %v4302
        %5565 = vmatpush2.msra.mxu0 %v4301
        %5566 = vmatprep.subr.mxu0 %v4294
        %5567 = vmatpush2.msra.mxu0 %v4293
        %5568 = vmatprep.subr.mxu0 %v4286
        %5569 = vmatpush2.msra.mxu0 %v4285
        %5570 = vmatprep.subr.mxu0 %v4278
        %5571 = vmatpush2.msra.mxu0 %v4277
        %5572 = vmatprep.subr.mxu0 %v4270
        %5573 = vmatpush2.msra.mxu0 %v4269
        %5574 = vmatprep.subr.mxu0 %v4262
        %5575 = vmatpush2.msra.mxu0 %v4261
        %5576 = vmatprep.subr.mxu0 %v4254
        %5577 = vmatpush2.msra.mxu0 %v4253
        %5578 = vmatprep.subr.mxu0 %v4246
        %5579 = vmatpush2.msra.mxu0 %v4245
        %5580 = vmatprep.subr.mxu0 %v4238
        %5581 = vmatpush2.msra.mxu0 %v4237
        %5582 = vmatprep.subr.mxu0 %v4230
        %5583 = vmatpush2.msra.mxu0 %v4229
        %5584 = vmatprep.mubr.f32.mxu0 %v3778
        %5585 = vmatmul.mubr.f32.gmra.mxu0 %v3777
        %v5586 = vpop.f32.mrf.mxu0
        %v5587 = vadd.f32 %v5426, %v5586
        %v5588 = vpop.f32.mrf.mxu0
        %v5589 = vadd.f32 %v5428, %v5588
        %5590 = vmatprep.mubr.f32.mxu0 %v3782
        %5591 = vmatmul.mubr.f32.gmra.mxu0 %v3781
        %v5592 = vpop.f32.mrf.mxu0
        %v5593 = vadd.f32 %v5432, %v5592
        %v5594 = vpop.f32.mrf.mxu0
        %v5595 = vadd.f32 %v5434, %v5594
        %5596 = vmatprep.mubr.f32.mxu0 %v3786
        %5597 = vmatmul.mubr.f32.gmra.mxu0 %v3785
        %v5598 = vpop.f32.mrf.mxu0
        %v5599 = vadd.f32 %v5438, %v5598
        %v5600 = vpop.f32.mrf.mxu0
        %v5601 = vadd.f32 %v5440, %v5600
        %5602 = vmatprep.mubr.f32.mxu0 %v3790
        %5603 = vmatmul.mubr.f32.gmra.mxu0 %v3789
        %v5604 = vpop.f32.mrf.mxu0
        %v5605 = vadd.f32 %v5444, %v5604
        %v5606 = vpop.f32.mrf.mxu0
        %v5607 = vadd.f32 %v5446, %v5606
        %5608 = vmatprep.mubr.f32.mxu0 %v3794
        %5609 = vmatmul.mubr.f32.gmra.mxu0 %v3793
        %v5610 = vpop.f32.mrf.mxu0
        %v5611 = vadd.f32 %v5450, %v5610
        %v5612 = vpop.f32.mrf.mxu0
        %v5613 = vadd.f32 %v5452, %v5612
        %5614 = vmatprep.mubr.f32.mxu0 %v3798
        %5615 = vmatmul.mubr.f32.gmra.mxu0 %v3797
        %v5616 = vpop.f32.mrf.mxu0
        %v5617 = vadd.f32 %v5456, %v5616
        %v5618 = vpop.f32.mrf.mxu0
        %v5619 = vadd.f32 %v5458, %v5618
        %5620 = vmatprep.mubr.f32.mxu0 %v3802
        %5621 = vmatmul.mubr.f32.gmra.mxu0 %v3801
        %v5622 = vpop.f32.mrf.mxu0
        %v5623 = vadd.f32 %v5462, %v5622
        %v5624 = vpop.f32.mrf.mxu0
        %v5625 = vadd.f32 %v5464, %v5624
        %5626 = vmatprep.mubr.f32.mxu0 %v3806
        %5627 = vmatmul.mubr.f32.gmra.mxu0 %v3805
        %v5628 = vpop.f32.mrf.mxu0
        %v5629 = vadd.f32 %v5468, %v5628
        %v5630 = vpop.f32.mrf.mxu0
        %v5631 = vadd.f32 %v5470, %v5630
        %5632 = vmatprep.mubr.f32.mxu0 %v3810
        %5633 = vmatmul.mubr.f32.gmra.mxu0 %v3809
        %v5634 = vpop.f32.mrf.mxu0
        %v5635 = vadd.f32 %v5474, %v5634
        %v5636 = vpop.f32.mrf.mxu0
        %v5637 = vadd.f32 %v5476, %v5636
        %5638 = vmatprep.mubr.f32.mxu0 %v3814
        %5639 = vmatmul.mubr.f32.gmra.mxu0 %v3813
        %v5640 = vpop.f32.mrf.mxu0
        %v5641 = vadd.f32 %v5480, %v5640
        %v5642 = vpop.f32.mrf.mxu0
        %v5643 = vadd.f32 %v5482, %v5642
        %5644 = vmatprep.mubr.f32.mxu0 %v3818
        %5645 = vmatmul.mubr.f32.gmra.mxu0 %v3817
        %v5646 = vpop.f32.mrf.mxu0
        %v5647 = vadd.f32 %v5486, %v5646
        %v5648 = vpop.f32.mrf.mxu0
        %v5649 = vadd.f32 %v5488, %v5648
        %5650 = vmatprep.mubr.f32.mxu0 %v3822
        %5651 = vmatmul.mubr.f32.gmra.mxu0 %v3821
        %v5652 = vpop.f32.mrf.mxu0
        %v5653 = vadd.f32 %v5492, %v5652
        %v5654 = vpop.f32.mrf.mxu0
        %v5655 = vadd.f32 %v5494, %v5654
        %5656 = vmatprep.mubr.f32.mxu0 %v3826
        %5657 = vmatmul.mubr.f32.gmra.mxu0 %v3825
        %v5658 = vpop.f32.mrf.mxu0
        %v5659 = vadd.f32 %v5498, %v5658
        %v5660 = vpop.f32.mrf.mxu0
        %v5661 = vadd.f32 %v5500, %v5660
        %5662 = vmatprep.mubr.f32.mxu0 %v3830
        %5663 = vmatmul.mubr.f32.gmra.mxu0 %v3829
        %v5664 = vpop.f32.mrf.mxu0
        %v5665 = vadd.f32 %v5504, %v5664
        %v5666 = vpop.f32.mrf.mxu0
        %v5667 = vadd.f32 %v5506, %v5666
        %5668 = vmatprep.mubr.f32.mxu0 %v3834
        %5669 = vmatmul.mubr.f32.gmra.mxu0 %v3833
        %v5670 = vpop.f32.mrf.mxu0
        %v5671 = vadd.f32 %v5510, %v5670
        %v5672 = vpop.f32.mrf.mxu0
        %v5673 = vadd.f32 %v5512, %v5672
        %5674 = vmatprep.mubr.f32.mxu0 %v3838
        %5675 = vmatmul.mubr.f32.gmra.mxu0 %v3837
        %v5676 = vpop.f32.mrf.mxu0
        %v5677 = vadd.f32 %v5516, %v5676
        %v5678 = vpop.f32.mrf.mxu0
        %v5679 = vadd.f32 %v5518, %v5678
        %5680 = vdwg.mxu0
        %5681 = vst [vmem:[%s621] sm:$0xff] %v4621
        %5682 = vst [vmem:[%s621 + $0x8] sm:$0xff] %v4623
        %5683 = vst [vmem:[%s621 + $0x10] sm:$0xff] %v4943
        %5684 = vst [vmem:[%s621 + $0x18] sm:$0xff] %v4945
        %5685 = vst [vmem:[%s621 + $0x20] sm:$0xff] %v5265
        %5686 = vst [vmem:[%s621 + $0x28] sm:$0xff] %v5267
        %5687 = vst [vmem:[%s621 + $0x30] sm:$0xff] %v5587
        %5688 = vst [vmem:[%s621 + $0x38] sm:$0xff] %v5589
        %5689 = vst [vmem:[%s621 + $0x40] sm:$0xff] %v4627
        %5690 = vst [vmem:[%s621 + $0x48] sm:$0xff] %v4629
        %5691 = vst [vmem:[%s621 + $0x50] sm:$0xff] %v4949
        %5692 = vst [vmem:[%s621 + $0x58] sm:$0xff] %v4951
        %5693 = vst [vmem:[%s621 + $0x60] sm:$0xff] %v5271
        %5694 = vst [vmem:[%s621 + $0x68] sm:$0xff] %v5273
        %5695 = vst [vmem:[%s621 + $0x70] sm:$0xff] %v5593
        %5696 = vst [vmem:[%s621 + $0x78] sm:$0xff] %v5595
        %5697 = vst [vmem:[%s621 + $0x80] sm:$0xff] %v4633
        %5698 = vst [vmem:[%s621 + $0x88] sm:$0xff] %v4635
        %5699 = vst [vmem:[%s621 + $0x90] sm:$0xff] %v4955
        %5700 = vst [vmem:[%s621 + $0x98] sm:$0xff] %v4957
        %5701 = vst [vmem:[%s621 + $0xa0] sm:$0xff] %v5277
        %5702 = vst [vmem:[%s621 + $0xa8] sm:$0xff] %v5279
        %5703 = vst [vmem:[%s621 + $0xb0] sm:$0xff] %v5599
        %5704 = vst [vmem:[%s621 + $0xb8] sm:$0xff] %v5601
        %5705 = vst [vmem:[%s621 + $0xc0] sm:$0xff] %v4639
        %5706 = vst [vmem:[%s621 + $0xc8] sm:$0xff] %v4641
        %5707 = vst [vmem:[%s621 + $0xd0] sm:$0xff] %v4961
        %5708 = vst [vmem:[%s621 + $0xd8] sm:$0xff] %v4963
        %5709 = vst [vmem:[%s621 + $0xe0] sm:$0xff] %v5283
        %5710 = vst [vmem:[%s621 + $0xe8] sm:$0xff] %v5285
        %5711 = vst [vmem:[%s621 + $0xf0] sm:$0xff] %v5605
        %5712 = vst [vmem:[%s621 + $0xf8] sm:$0xff] %v5607
        %5713 = vst [vmem:[%s621 + $0x100] sm:$0xff] %v4645
        %5714 = vst [vmem:[%s621 + $0x108] sm:$0xff] %v4647
        %5715 = vst [vmem:[%s621 + $0x110] sm:$0xff] %v4967
        %5716 = vst [vmem:[%s621 + $0x118] sm:$0xff] %v4969
        %5717 = vst [vmem:[%s621 + $0x120] sm:$0xff] %v5289
        %5718 = vst [vmem:[%s621 + $0x128] sm:$0xff] %v5291
        %5719 = vst [vmem:[%s621 + $0x130] sm:$0xff] %v5611
        %5720 = vst [vmem:[%s621 + $0x138] sm:$0xff] %v5613
        %5721 = vst [vmem:[%s621 + $0x140] sm:$0xff] %v4651
        %5722 = vst [vmem:[%s621 + $0x148] sm:$0xff] %v4653
        %5723 = vst [vmem:[%s621 + $0x150] sm:$0xff] %v4973
        %5724 = vst [vmem:[%s621 + $0x158] sm:$0xff] %v4975
        %5725 = vst [vmem:[%s621 + $0x160] sm:$0xff] %v5295
        %5726 = vst [vmem:[%s621 + $0x168] sm:$0xff] %v5297
        %5727 = vst [vmem:[%s621 + $0x170] sm:$0xff] %v5617
        %5728 = vst [vmem:[%s621 + $0x178] sm:$0xff] %v5619
        %5729 = vst [vmem:[%s621 + $0x180] sm:$0xff] %v4657
        %5730 = vst [vmem:[%s621 + $0x188] sm:$0xff] %v4659
        %5731 = vst [vmem:[%s621 + $0x190] sm:$0xff] %v4979
        %5732 = vst [vmem:[%s621 + $0x198] sm:$0xff] %v4981
        %5733 = vst [vmem:[%s621 + $0x1a0] sm:$0xff] %v5301
        %5734 = vst [vmem:[%s621 + $0x1a8] sm:$0xff] %v5303
        %5735 = vst [vmem:[%s621 + $0x1b0] sm:$0xff] %v5623
        %5736 = vst [vmem:[%s621 + $0x1b8] sm:$0xff] %v5625
        %5737 = vst [vmem:[%s621 + $0x1c0] sm:$0xff] %v4663
        %5738 = vst [vmem:[%s621 + $0x1c8] sm:$0xff] %v4665
        %5739 = vst [vmem:[%s621 + $0x1d0] sm:$0xff] %v4985
        %5740 = vst [vmem:[%s621 + $0x1d8] sm:$0xff] %v4987
        %5741 = vst [vmem:[%s621 + $0x1e0] sm:$0xff] %v5307
        %5742 = vst [vmem:[%s621 + $0x1e8] sm:$0xff] %v5309
        %5743 = vst [vmem:[%s621 + $0x1f0] sm:$0xff] %v5629
        %5744 = vst [vmem:[%s621 + $0x1f8] sm:$0xff] %v5631
        %5745 = vst [vmem:[%s621 + $0x200] sm:$0xff] %v4669
        %5746 = vst [vmem:[%s621 + $0x208] sm:$0xff] %v4671
        %5747 = vst [vmem:[%s621 + $0x210] sm:$0xff] %v4991
        %5748 = vst [vmem:[%s621 + $0x218] sm:$0xff] %v4993
        %5749 = vst [vmem:[%s621 + $0x220] sm:$0xff] %v5313
        %5750 = vst [vmem:[%s621 + $0x228] sm:$0xff] %v5315
        %5751 = vst [vmem:[%s621 + $0x230] sm:$0xff] %v5635
        %5752 = vst [vmem:[%s621 + $0x238] sm:$0xff] %v5637
        %5753 = vst [vmem:[%s621 + $0x240] sm:$0xff] %v4675
        %5754 = vst [vmem:[%s621 + $0x248] sm:$0xff] %v4677
        %5755 = vst [vmem:[%s621 + $0x250] sm:$0xff] %v4997
        %5756 = vst [vmem:[%s621 + $0x258] sm:$0xff] %v4999
        %5757 = vst [vmem:[%s621 + $0x260] sm:$0xff] %v5319
        %5758 = vst [vmem:[%s621 + $0x268] sm:$0xff] %v5321
        %5759 = vst [vmem:[%s621 + $0x270] sm:$0xff] %v5641
        %5760 = vst [vmem:[%s621 + $0x278] sm:$0xff] %v5643
        %5761 = vst [vmem:[%s621 + $0x280] sm:$0xff] %v4681
        %5762 = vst [vmem:[%s621 + $0x288] sm:$0xff] %v4683
        %5763 = vst [vmem:[%s621 + $0x290] sm:$0xff] %v5003
        %5764 = vst [vmem:[%s621 + $0x298] sm:$0xff] %v5005
        %5765 = vst [vmem:[%s621 + $0x2a0] sm:$0xff] %v5325
        %5766 = vst [vmem:[%s621 + $0x2a8] sm:$0xff] %v5327
        %5767 = vst [vmem:[%s621 + $0x2b0] sm:$0xff] %v5647
        %5768 = vst [vmem:[%s621 + $0x2b8] sm:$0xff] %v5649
        %5769 = vst [vmem:[%s621 + $0x2c0] sm:$0xff] %v4687
        %5770 = vst [vmem:[%s621 + $0x2c8] sm:$0xff] %v4689
        %5771 = vst [vmem:[%s621 + $0x2d0] sm:$0xff] %v5009
        %5772 = vst [vmem:[%s621 + $0x2d8] sm:$0xff] %v5011
        %5773 = vst [vmem:[%s621 + $0x2e0] sm:$0xff] %v5331
        %5774 = vst [vmem:[%s621 + $0x2e8] sm:$0xff] %v5333
        %5775 = vst [vmem:[%s621 + $0x2f0] sm:$0xff] %v5653
        %5776 = vst [vmem:[%s621 + $0x2f8] sm:$0xff] %v5655
        %5777 = vst [vmem:[%s621 + $0x300] sm:$0xff] %v4693
        %5778 = vst [vmem:[%s621 + $0x308] sm:$0xff] %v4695
        %5779 = vst [vmem:[%s621 + $0x310] sm:$0xff] %v5015
        %5780 = vst [vmem:[%s621 + $0x318] sm:$0xff] %v5017
        %5781 = vst [vmem:[%s621 + $0x320] sm:$0xff] %v5337
        %5782 = vst [vmem:[%s621 + $0x328] sm:$0xff] %v5339
        %5783 = vst [vmem:[%s621 + $0x330] sm:$0xff] %v5659
        %5784 = vst [vmem:[%s621 + $0x338] sm:$0xff] %v5661
        %5785 = vst [vmem:[%s621 + $0x340] sm:$0xff] %v4699
        %5786 = vst [vmem:[%s621 + $0x348] sm:$0xff] %v4701
        %5787 = vst [vmem:[%s621 + $0x350] sm:$0xff] %v5021
        %5788 = vst [vmem:[%s621 + $0x358] sm:$0xff] %v5023
        %5789 = vst [vmem:[%s621 + $0x360] sm:$0xff] %v5343
        %5790 = vst [vmem:[%s621 + $0x368] sm:$0xff] %v5345
        %5791 = vst [vmem:[%s621 + $0x370] sm:$0xff] %v5665
        %5792 = vst [vmem:[%s621 + $0x378] sm:$0xff] %v5667
        %5793 = vst [vmem:[%s621 + $0x380] sm:$0xff] %v4705
        %5794 = vst [vmem:[%s621 + $0x388] sm:$0xff] %v4707
        %5795 = vst [vmem:[%s621 + $0x390] sm:$0xff] %v5027
        %5796 = vst [vmem:[%s621 + $0x398] sm:$0xff] %v5029
        %5797 = vst [vmem:[%s621 + $0x3a0] sm:$0xff] %v5349
        %5798 = vst [vmem:[%s621 + $0x3a8] sm:$0xff] %v5351
        %5799 = vst [vmem:[%s621 + $0x3b0] sm:$0xff] %v5671
        %5800 = vst [vmem:[%s621 + $0x3b8] sm:$0xff] %v5673
        %5801 = vst [vmem:[%s621 + $0x3c0] sm:$0xff] %v4711
        %5802 = vst [vmem:[%s621 + $0x3c8] sm:$0xff] %v4713
        %5803 = vst [vmem:[%s621 + $0x3d0] sm:$0xff] %v5033
        %5804 = vst [vmem:[%s621 + $0x3d8] sm:$0xff] %v5035
        %5805 = vst [vmem:[%s621 + $0x3e0] sm:$0xff] %v5355
        %5806 = vst [vmem:[%s621 + $0x3e8] sm:$0xff] %v5357
        %5807 = vst [vmem:[%s621 + $0x3f0] sm:$0xff] %v5677
        %5808 = vst [vmem:[%s621 + $0x3f8] sm:$0xff] %v5679
        %s5809 = sand.u32 %s322, 1
        %s5810 = scalar_lea.sflag [#allocation4], %s5809
        %s5811 = sand.u32 %s322, 1
        %s5812 = smul.addr %s5811, 1024
        %s5813 = scalar_lea.vmem [#allocation23], %s5812
        // Predicated region
        $region125: #{tpu_custom_call.1} parent=71 // pred_check
          %p5814 = pneg %p332
        $region126: #{tpu_custom_call.1} parent=71 // pred_check_branch
          %5816 = sbr.rel (%p5814) target = $region128
        $region127: #{tpu_custom_call.1} parent=71 // pred_region
          %s5817 = smul.u32 16, %s36
          %s5819 = ssub.s32 16384, 16384
          %5820 = vsyncadd %s5810, %s5819
          %s5821 = smul.addr %s5817, 8
          %s5822 = smul.addr %s5821, 128
          %s5823 = scalar_lea.hbm %s13, %s5822
          %s5824 = sshll.u32 %s5813, 4
          %s5825 = int_to_ptr.vmem [resolvable:$true] %s5824
          %5830 = dma.vmem_to_hbm [thread:$0]  %s5825, 16384, %s5823, %s5810, 1024, 1024, 64
        $region128: #{tpu_custom_call.1} parent=71 // pred_fallthru
          _
      $region72: #{tpu_custom_call.1} parent=5 // pred_fallthru
        _
      %p5831 = scmp.le.s32.totalorder 2, %s31
      // Predicated region
      $region129: #{tpu_custom_call.1} parent=5 // pred_check
        %p5832 = pneg %p5831
      $region130: #{tpu_custom_call.1} parent=5 // pred_check_branch
        %5834 = sbr.rel (%p5832) target = $region132
      $region131: #{tpu_custom_call.1} parent=5 // pred_region
        %s5835 = ssub.s32 %s31, 2
        // Predicated region
        $region133: #{tpu_custom_call.1} parent=131 // pred_check
          %p5836 = pneg %p338
        $region134: #{tpu_custom_call.1} parent=131 // pred_check_branch
          %5838 = sbr.rel (%p5836) target = $region136
        $region135: #{tpu_custom_call.1} parent=131 // pred_region
          %s5839 = sand.u32 %s323, 1
          %s5840 = scalar_lea.sflag [#allocation4], %s5839
          %s5841 = sand.u32 %s323, 1
          %s5842 = smul.addr %s5841, 1024
          %s5843 = scalar_lea.vmem [#allocation23], %s5842
          %5844 = dma.done %s5840, 16384
        $region136: #{tpu_custom_call.1} parent=131 // pred_fallthru
          _
      $region132: #{tpu_custom_call.1} parent=5 // pred_fallthru
        _
    $region6: #{tpu_custom_call.1} parent=1 // loop_footer
      %s35 = sadd.s32 1, %s31
    $region7: #{tpu_custom_call.1} parent=1 // loop_footer_branch
      %30 = sbr.rel target = $region3
    $region8: #{tpu_custom_call.1} parent=1 // loop_exit
      _
    %5845 = vsyncpa [#allocation3], 1
    %s5846 = scalar_lea.sflag [#allocation3], 1
    %5847 = vsyncpa %s5846, 1
    %5848 = vsyncpa [#allocation6], 1
    %5849 = vsyncpa [#allocation9], 1
    %5850 = vsyncpa [#allocation12], 1
    %5851 = vsyncpa [#allocation15], 1
    %5852 = vsyncpa [#allocation18], 1
    %5853 = vsyncpa [#allocation21], 1
    %5854 = vsyncpa [#allocation4], 1
    %s5855 = scalar_lea.sflag [#allocation4], 1
    %5856 = vsyncpa %s5855, 1

</llo_original>
